<compile_context>
chip_gen: v7x
topology: tpu7x:2x2x1
jax: 0.10.0
libtpu: 0.0.40
codegen_flags: <defaults>
</compile_context>

<pallas_src>
import jax
import jax.numpy as jnp
from jax.experimental import pallas as pl
from jax.experimental.pallas import tpu as pltpu


# ----------------------------------------------------------------------------
# In-kernel helpers (operate on traced VMEM-resident values).
# ----------------------------------------------------------------------------
def _replicate_pad_hw(x):
    """(Bt, H, W, C) -> (Bt, H+2, W+2, C) edge ('replicate') padding, in VMEM."""
    x = jnp.concatenate([x[:, :1], x, x[:, -1:]], axis=1)
    x = jnp.concatenate([x[:, :, :1], x, x[:, :, -1:]], axis=2)
    return x


def _conv3x3_relu(x_bf16, w, bias):
    """3x3 replicate-padded conv + bias + ReLU via im2col MXU matmuls.

    x_bf16 : (Bt, H, W, Cin) bf16 activations (unpadded)
    w      : bf16 weights, either
               (9*Cin, Cout)    -> single K=9*Cin matmul (tiny-Cin conv), or
               (3, 3*Cin, Cout) -> 3 accumulated K=3*Cin matmuls (chunked
                                    im2col; keeps vreg/VMEM pressure ~3x lower)
    bias   : (1, Cout) f32
    returns: (Bt*H*W, Cout) f32 (post-ReLU)
    """
    Bt, H, W, Cin = x_bf16.shape
    M = Bt * H * W
    xp = _replicate_pad_hw(x_bf16)                        # (Bt, H+2, W+2, Cin)

    def dy_taps(dy):
        return [xp[:, dy:dy + H, dx:dx + W, :].reshape(M, Cin) for dx in range(3)]

    if w.ndim == 2:                                       # full im2col (Cin=4 conv)
        patch = jnp.concatenate(dy_taps(0) + dy_taps(1) + dy_taps(2), axis=-1)
        acc = jnp.dot(patch, w, preferred_element_type=jnp.float32)
    else:                                                 # chunked over dy groups
        acc = None
        for dy in range(3):
            grp = jnp.concatenate(dy_taps(dy), axis=-1)   # (M, 3*Cin)
            part = jnp.dot(grp, w[dy], preferred_element_type=jnp.float32)
            acc = part if acc is None else acc + part
    return jnp.maximum(acc + bias, 0.0)                   # f32 epilogue


# ----------------------------------------------------------------------------
# Fully fused encoder kernel:
#   conv0+ReLU -> conv1+ReLU -> [feat0 store] -> MaxPool2x2 -> conv2+ReLU
#   -> conv3+ReLU -> [feat1 store]
# One batch tile per grid step; all intermediates stay on-chip as live values.
# ----------------------------------------------------------------------------
def _encoder_kernel(x_ref, w0_ref, b0_ref, w1_ref, b1_ref,
                    w2_ref, b2_ref, w3_ref, b3_ref, f0_ref, f1_ref):
    Bt, H, W, _ = x_ref.shape
    C0 = f0_ref.shape[1]                                  # 64
    C1 = f1_ref.shape[1]                                  # 128
    Ho, Wo = H // 2, W // 2

    # ---- block0: conv0(4->64)+ReLU -> conv1(64->64)+ReLU --------------------
    x = x_ref[...].astype(jnp.bfloat16)                   # (Bt, H, W, Cin)
    h0 = _conv3x3_relu(x, w0_ref[...], b0_ref[...])       # (Bt*H*W, C0) f32
    h0 = h0.reshape(Bt, H, W, C0).astype(jnp.bfloat16)
    h1 = _conv3x3_relu(h0, w1_ref[...], b1_ref[...])      # (Bt*H*W, C0) f32

    # feat0: NCHW-flat (Bt, C0, H*W) -> lane-dense store (H*W multiple of 128),
    # no NHWC->NCHW transpose needed in the wrapper.
    h1_img = h1.reshape(Bt, H * W, C0)
    for b in range(Bt):                                   # static unroll; 2-D XLU transpose
        f0_ref[b] = h1_img[b].T.astype(f0_ref.dtype)

    # ---- block1: MaxPool2x2 (on the live value) -> conv2+ReLU -> conv3+ReLU --
    rmax = jnp.max(h1.reshape(Bt, Ho, 2, W, C0), axis=2)          # pool rows
    pooled = jnp.max(rmax.reshape(Bt, Ho, Wo, 2, C0), axis=3)     # pool cols
    # (reshape+max is the known-good lowering; a strided value-slice max would
    #  avoid the sublane-splitting reshape but the cost vanishes with fusion)

    h2 = _conv3x3_relu(pooled.astype(jnp.bfloat16), w2_ref[...], b2_ref[...])
    h2 = h2.reshape(Bt, Ho, Wo, C1).astype(jnp.bfloat16)
    h3 = _conv3x3_relu(h2, w3_ref[...], b3_ref[...])      # (Bt*Ho*Wo, C1) f32

    h3_img = h3.reshape(Bt, Ho * Wo, C1)
    for b in range(Bt):
        f1_ref[b] = h3_img[b].T.astype(f1_ref.dtype)


def _const_spec(arr):
    nd = arr.ndim
    return pl.BlockSpec(arr.shape, lambda i, _nd=nd: (0,) * _nd)


def _pick_batch_tile(B, H, W, budget_bytes=6 * 1024 * 1024):
    """Largest divisor of B whose rough fused-body VMEM footprint fits budget
    (conservative for v7x's smaller VMEM)."""
    per_img = (H * W) * (4 * 4 + 64 * (4 + 2 + 2) + 3 * 64 * 2) \
        + (H // 2) * (W // 2) * (128 * (4 + 2 + 2) + 3 * 128 * 2)
    bt = int(max(1, min(B, budget_bytes // max(per_img, 1))))
    while B % bt:
        bt -= 1
    return bt


def _encoder_call(x_nhwc, prepped, batch_tile):
    B, H, W, Cin = x_nhwc.shape
    (w0, b0), (w1, b1), (w2, b2), (w3, b3) = prepped
    C0 = b1.shape[-1]
    C1 = b3.shape[-1]
    Ho, Wo = H // 2, W // 2
    Bt = batch_tile

    out_shape = (jax.ShapeDtypeStruct((B, C0, H * W), jnp.float32),
                 jax.ShapeDtypeStruct((B, C1, Ho * Wo), jnp.float32))
    out_specs = (pl.BlockSpec((Bt, C0, H * W), lambda i: (i, 0, 0)),
                 pl.BlockSpec((Bt, C1, Ho * Wo), lambda i: (i, 0, 0)))
    in_specs = [
        pl.BlockSpec((Bt, H, W, Cin), lambda i: (i, 0, 0, 0)),
        _const_spec(w0), _const_spec(b0),
        _const_spec(w1), _const_spec(b1),
        _const_spec(w2), _const_spec(b2),
        _const_spec(w3), _const_spec(b3),
    ]

    return pl.pallas_call(
        _encoder_kernel,
        out_shape=out_shape,
        grid_spec=pltpu.PrefetchScalarGridSpec(
            num_scalar_prefetch=0,
            grid=(B // Bt,),
            in_specs=in_specs,
            out_specs=out_specs,
        ),
        compiler_params=pltpu.CompilerParams(
            dimension_semantics=("parallel",)),
    )(x_nhwc, w0, b0, w1, b1, w2, b2, w3, b3)


# ----------------------------------------------------------------------------
# Deterministic parameter construction (synthetic; torchvision vgg16 with
# weights=None is random-initialized anyway).
# ----------------------------------------------------------------------------
def init_params(key, input_dim):
    cfg = [(input_dim, 64), (64, 64), (64, 128), (128, 128)]
    params = {}
    keys = jax.random.split(key, len(cfg))
    for i, ((cin, cout), k) in enumerate(zip(cfg, keys)):
        kw, kb = jax.random.split(k)
        std = (2.0 / (9.0 * cin)) ** 0.5
        params[f"w{i}"] = (std * jax.random.normal(kw, (3, 3, cin, cout))
                           ).astype(jnp.float32)          # HWIO
        params[f"b{i}"] = (0.01 * jax.random.normal(kb, (cout,))
                           ).astype(jnp.float32)
    return params


def _prep_conv_params(w_hwio, bias, *, chunk_k):
    """HWIO (3,3,Cin,Cout) -> bf16 (9*Cin,Cout) or (3, 3*Cin, Cout); bias -> f32 (1,Cout)."""
    cin, cout = w_hwio.shape[2], w_hwio.shape[3]
    if chunk_k:
        w = w_hwio.reshape(3, 3 * cin, cout).astype(jnp.bfloat16)
    else:
        w = w_hwio.reshape(9 * cin, cout).astype(jnp.bfloat16)
    return w, bias.reshape(1, cout).astype(jnp.float32)


# ----------------------------------------------------------------------------
# MapFeatureEncoder.forward — returns list of per-block feature maps (NCHW).
# ----------------------------------------------------------------------------
def map_feature_encoder_forward(params, image_nchw, *, batch_tile=None):
    B, _, H, W = image_nchw.shape
    assert H % 2 == 0 and W % 2 == 0, "MaxPool2d(2) path assumes even spatial dims"
    x = jnp.transpose(image_nchw, (0, 2, 3, 1)).astype(jnp.float32)   # NCHW -> NHWC

    p0 = _prep_conv_params(params["w0"], params["b0"], chunk_k=False)  # Cin=4: single K=36 dot
    p1 = _prep_conv_params(params["w1"], params["b1"], chunk_k=True)
    p2 = _prep_conv_params(params["w2"], params["b2"], chunk_k=True)
    p3 = _prep_conv_params(params["w3"], params["b3"], chunk_k=True)

    if batch_tile is None:
        batch_tile = _pick_batch_tile(B, H, W)

    f0_flat, f1_flat = _encoder_call(x, (p0, p1, p2, p3), batch_tile)
    C0, C1 = f0_flat.shape[1], f1_flat.shape[1]
    feat0 = f0_flat.reshape(B, C0, H, W)                 # already NCHW — reshape only
    feat1 = f1_flat.reshape(B, C1, H // 2, W // 2)
    return [feat0, feat1]


# ----------------------------------------------------------------------------
# Pure-JAX f32 reference for correctness check.
# ----------------------------------------------------------------------------
def _ref_forward(params, image_nchw):
    x = jnp.transpose(image_nchw, (0, 2, 3, 1))

    def conv(x, w, b):
        xp = jnp.pad(x, ((0, 0), (1, 1), (1, 1), (0, 0)), mode="edge")
        y = jax.lax.conv_general_dilated(
            xp, w, window_strides=(1, 1), padding="VALID",
            dimension_numbers=("NHWC", "HWIO", "NHWC"))
        return jnp.maximum(y + b, 0.0)

    def pool(x):
        B, H, W, C = x.shape
        return jnp.max(x.reshape(B, H // 2, 2, W // 2, 2, C), axis=(2, 4))

    h = conv(x, params["w0"], params["b0"])
    h = conv(h, params["w1"], params["b1"])
    f0 = h
    h = pool(h)
    h = conv(h, params["w2"], params["b2"])
    h = conv(h, params["w3"], params["b3"])
    f1 = h
    return [jnp.transpose(f0, (0, 3, 1, 2)), jnp.transpose(f1, (0, 3, 1, 2))]


if __name__ == "__main__":
    key = jax.random.PRNGKey(0)
    k_params, k_x = jax.random.split(key)

    B, C_IN, H, W = 2, 4, 16, 16
    params = init_params(k_params, C_IN)
    image = jax.random.normal(k_x, (B, C_IN, H, W), dtype=jnp.float32)  # NCHW

    feats = jax.block_until_ready(map_feature_encoder_forward(params, image))
    refs = jax.block_until_ready(_ref_forward(params, image))

    assert feats[0].shape == (B, 64, H, W)
    assert feats[1].shape == (B, 128, H // 2, W // 2)
    for got, ref in zip(feats, refs):
        assert got.shape == ref.shape and got.dtype == ref.dtype
        # bf16 MXU matmuls with f32 accumulation vs. full-f32 reference.
        assert bool(jnp.allclose(got, ref, rtol=5e-2, atol=5e-2)), \
            "Pallas output mismatch vs reference"

    print("KERNEL_OK")
</pallas_src>

<mosaic_0001>
module attributes {stable_mosaic.version = 11 : i64} {
  func.func @_encoder_kernel(%arg0: i32, %arg1: memref<2x16x16x4xf32, #tpu.memory_space<vmem>>, %arg2: memref<36x64xbf16, #tpu.memory_space<vmem>>, %arg3: memref<1x64xf32, #tpu.memory_space<vmem>>, %arg4: memref<3x192x64xbf16, #tpu.memory_space<vmem>>, %arg5: memref<1x64xf32, #tpu.memory_space<vmem>>, %arg6: memref<3x192x128xbf16, #tpu.memory_space<vmem>>, %arg7: memref<1x128xf32, #tpu.memory_space<vmem>>, %arg8: memref<3x384x128xbf16, #tpu.memory_space<vmem>>, %arg9: memref<1x128xf32, #tpu.memory_space<vmem>>, %arg10: memref<2x64x256xf32, #tpu.memory_space<vmem>>, %arg11: memref<2x128x64xf32, #tpu.memory_space<vmem>>) attributes {dimension_semantics = [#tpu.dimension_semantics<parallel>], iteration_bounds = array<i64: 1>, scalar_prefetch = 0 : i64, scratch_operands = 0 : i64, tpu.core_type = #tpu.core_type<tc>, window_params = [{transform_indices = @transform_0, window_bounds = array<i64: 2, 16, 16, 4>}, {pipeline_mode = #tpu.pipeline_mode<synchronous>, transform_indices = @transform_1, window_bounds = array<i64: 36, 64>}, {pipeline_mode = #tpu.pipeline_mode<synchronous>, transform_indices = @transform_2, window_bounds = array<i64: 1, 64>}, {pipeline_mode = #tpu.pipeline_mode<synchronous>, transform_indices = @transform_3, window_bounds = array<i64: 3, 192, 64>}, {pipeline_mode = #tpu.pipeline_mode<synchronous>, transform_indices = @transform_4, window_bounds = array<i64: 1, 64>}, {pipeline_mode = #tpu.pipeline_mode<synchronous>, transform_indices = @transform_5, window_bounds = array<i64: 3, 192, 128>}, {pipeline_mode = #tpu.pipeline_mode<synchronous>, transform_indices = @transform_6, window_bounds = array<i64: 1, 128>}, {pipeline_mode = #tpu.pipeline_mode<synchronous>, transform_indices = @transform_7, window_bounds = array<i64: 3, 384, 128>}, {pipeline_mode = #tpu.pipeline_mode<synchronous>, transform_indices = @transform_8, window_bounds = array<i64: 1, 128>}, {transform_indices = @transform_9, window_bounds = array<i64: 2, 64, 256>}, {transform_indices = @transform_10, window_bounds = array<i64: 2, 128, 64>}]} {
    %c0 = arith.constant 0 : index
    %c0_0 = arith.constant 0 : index
    %c0_1 = arith.constant 0 : index
    %c0_2 = arith.constant 0 : index
    %0 = vector.load %arg1[%c0, %c0_0, %c0_1, %c0_2] : memref<2x16x16x4xf32, #tpu.memory_space<vmem>>, vector<2x16x16x4xf32>
    %1 = arith.truncf %0 : vector<2x16x16x4xf32> to vector<2x16x16x4xbf16>
    %c0_3 = arith.constant 0 : index
    %c0_4 = arith.constant 0 : index
    %2 = vector.load %arg2[%c0_3, %c0_4] : memref<36x64xbf16, #tpu.memory_space<vmem>>, vector<36x64xbf16>
    %c0_5 = arith.constant 0 : index
    %c0_6 = arith.constant 0 : index
    %3 = vector.load %arg3[%c0_5, %c0_6] : memref<1x64xf32, #tpu.memory_space<vmem>>, vector<1x64xf32>
    %4 = vector.extract_strided_slice %1 {offsets = [0, 0, 0, 0], sizes = [2, 1, 16, 4], strides = [1, 1, 1, 1]} : vector<2x16x16x4xbf16> to vector<2x1x16x4xbf16>
    %5 = vector.extract_strided_slice %1 {offsets = [0, 15, 0, 0], sizes = [2, 1, 16, 4], strides = [1, 1, 1, 1]} : vector<2x16x16x4xbf16> to vector<2x1x16x4xbf16>
    %6 = tpu.concatenate %4, %1, %5 in 1 : vector<2x1x16x4xbf16>, vector<2x16x16x4xbf16>, vector<2x1x16x4xbf16> -> vector<2x18x16x4xbf16>
    %7 = vector.extract_strided_slice %6 {offsets = [0, 0, 0, 0], sizes = [2, 18, 1, 4], strides = [1, 1, 1, 1]} : vector<2x18x16x4xbf16> to vector<2x18x1x4xbf16>
    %8 = vector.extract_strided_slice %6 {offsets = [0, 0, 15, 0], sizes = [2, 18, 1, 4], strides = [1, 1, 1, 1]} : vector<2x18x16x4xbf16> to vector<2x18x1x4xbf16>
    %9 = tpu.concatenate %7, %6, %8 in 2 : vector<2x18x1x4xbf16>, vector<2x18x16x4xbf16>, vector<2x18x1x4xbf16> -> vector<2x18x18x4xbf16>
    %10 = vector.extract_strided_slice %9 {offsets = [0, 0, 0, 0], sizes = [2, 16, 16, 4], strides = [1, 1, 1, 1]} : vector<2x18x18x4xbf16> to vector<2x16x16x4xbf16>
    %11 = vector.shape_cast %10 : vector<2x16x16x4xbf16> to vector<512x4xbf16>
    %12 = vector.extract_strided_slice %9 {offsets = [0, 0, 1, 0], sizes = [2, 16, 16, 4], strides = [1, 1, 1, 1]} : vector<2x18x18x4xbf16> to vector<2x16x16x4xbf16>
    %13 = vector.shape_cast %12 : vector<2x16x16x4xbf16> to vector<512x4xbf16>
    %14 = vector.extract_strided_slice %9 {offsets = [0, 0, 2, 0], sizes = [2, 16, 16, 4], strides = [1, 1, 1, 1]} : vector<2x18x18x4xbf16> to vector<2x16x16x4xbf16>
    %15 = vector.shape_cast %14 : vector<2x16x16x4xbf16> to vector<512x4xbf16>
    %16 = vector.extract_strided_slice %9 {offsets = [0, 1, 0, 0], sizes = [2, 16, 16, 4], strides = [1, 1, 1, 1]} : vector<2x18x18x4xbf16> to vector<2x16x16x4xbf16>
    %17 = vector.shape_cast %16 : vector<2x16x16x4xbf16> to vector<512x4xbf16>
    %18 = vector.extract_strided_slice %9 {offsets = [0, 1, 1, 0], sizes = [2, 16, 16, 4], strides = [1, 1, 1, 1]} : vector<2x18x18x4xbf16> to vector<2x16x16x4xbf16>
    %19 = vector.shape_cast %18 : vector<2x16x16x4xbf16> to vector<512x4xbf16>
    %20 = vector.extract_strided_slice %9 {offsets = [0, 1, 2, 0], sizes = [2, 16, 16, 4], strides = [1, 1, 1, 1]} : vector<2x18x18x4xbf16> to vector<2x16x16x4xbf16>
    %21 = vector.shape_cast %20 : vector<2x16x16x4xbf16> to vector<512x4xbf16>
    %22 = vector.extract_strided_slice %9 {offsets = [0, 2, 0, 0], sizes = [2, 16, 16, 4], strides = [1, 1, 1, 1]} : vector<2x18x18x4xbf16> to vector<2x16x16x4xbf16>
    %23 = vector.shape_cast %22 : vector<2x16x16x4xbf16> to vector<512x4xbf16>
    %24 = vector.extract_strided_slice %9 {offsets = [0, 2, 1, 0], sizes = [2, 16, 16, 4], strides = [1, 1, 1, 1]} : vector<2x18x18x4xbf16> to vector<2x16x16x4xbf16>
    %25 = vector.shape_cast %24 : vector<2x16x16x4xbf16> to vector<512x4xbf16>
    %26 = vector.extract_strided_slice %9 {offsets = [0, 2, 2, 0], sizes = [2, 16, 16, 4], strides = [1, 1, 1, 1]} : vector<2x18x18x4xbf16> to vector<2x16x16x4xbf16>
    %27 = vector.shape_cast %26 : vector<2x16x16x4xbf16> to vector<512x4xbf16>
    %28 = tpu.concatenate %11, %13, %15, %17, %19, %21, %23, %25, %27 in 1 : vector<512x4xbf16>, vector<512x4xbf16>, vector<512x4xbf16>, vector<512x4xbf16>, vector<512x4xbf16>, vector<512x4xbf16>, vector<512x4xbf16>, vector<512x4xbf16>, vector<512x4xbf16> -> vector<512x36xbf16>
    %cst = arith.constant dense<0.000000e+00> : vector<512x64xf32>
    %29 = tpu.matmul %28, %2, %cst {dimension_numbers = #tpu.dot_dimension_numbers<[1], [0], [0], [1], [0, 0, 1, 1], [], []>} : vector<512x36xbf16>, vector<36x64xbf16>, vector<512x64xf32> -> vector<512x64xf32>
    %30 = vector.broadcast %3 : vector<1x64xf32> to vector<512x64xf32>
    %31 = arith.addf %29, %30 : vector<512x64xf32>
    %cst_7 = arith.constant 0.000000e+00 : f32
    %32 = vector.broadcast %cst_7 : f32 to vector<512x64xf32>
    %33 = arith.maximumf %31, %32 : vector<512x64xf32>
    %34 = vector.shape_cast %33 : vector<512x64xf32> to vector<2x16x16x64xf32>
    %35 = arith.truncf %34 : vector<2x16x16x64xf32> to vector<2x16x16x64xbf16>
    %c0_8 = arith.constant 0 : index
    %c0_9 = arith.constant 0 : index
    %c0_10 = arith.constant 0 : index
    %36 = vector.load %arg4[%c0_8, %c0_9, %c0_10] : memref<3x192x64xbf16, #tpu.memory_space<vmem>>, vector<3x192x64xbf16>
    %c0_11 = arith.constant 0 : index
    %c0_12 = arith.constant 0 : index
    %37 = vector.load %arg5[%c0_11, %c0_12] : memref<1x64xf32, #tpu.memory_space<vmem>>, vector<1x64xf32>
    %38 = vector.extract_strided_slice %35 {offsets = [0, 0, 0, 0], sizes = [2, 1, 16, 64], strides = [1, 1, 1, 1]} : vector<2x16x16x64xbf16> to vector<2x1x16x64xbf16>
    %39 = vector.extract_strided_slice %35 {offsets = [0, 15, 0, 0], sizes = [2, 1, 16, 64], strides = [1, 1, 1, 1]} : vector<2x16x16x64xbf16> to vector<2x1x16x64xbf16>
    %40 = tpu.concatenate %38, %35, %39 in 1 : vector<2x1x16x64xbf16>, vector<2x16x16x64xbf16>, vector<2x1x16x64xbf16> -> vector<2x18x16x64xbf16>
    %41 = vector.extract_strided_slice %40 {offsets = [0, 0, 0, 0], sizes = [2, 18, 1, 64], strides = [1, 1, 1, 1]} : vector<2x18x16x64xbf16> to vector<2x18x1x64xbf16>
    %42 = vector.extract_strided_slice %40 {offsets = [0, 0, 15, 0], sizes = [2, 18, 1, 64], strides = [1, 1, 1, 1]} : vector<2x18x16x64xbf16> to vector<2x18x1x64xbf16>
    %43 = tpu.concatenate %41, %40, %42 in 2 : vector<2x18x1x64xbf16>, vector<2x18x16x64xbf16>, vector<2x18x1x64xbf16> -> vector<2x18x18x64xbf16>
    %44 = vector.extract_strided_slice %43 {offsets = [0, 0, 0, 0], sizes = [2, 16, 16, 64], strides = [1, 1, 1, 1]} : vector<2x18x18x64xbf16> to vector<2x16x16x64xbf16>
    %45 = vector.shape_cast %44 : vector<2x16x16x64xbf16> to vector<512x64xbf16>
    %46 = vector.extract_strided_slice %43 {offsets = [0, 0, 1, 0], sizes = [2, 16, 16, 64], strides = [1, 1, 1, 1]} : vector<2x18x18x64xbf16> to vector<2x16x16x64xbf16>
    %47 = vector.shape_cast %46 : vector<2x16x16x64xbf16> to vector<512x64xbf16>
    %48 = vector.extract_strided_slice %43 {offsets = [0, 0, 2, 0], sizes = [2, 16, 16, 64], strides = [1, 1, 1, 1]} : vector<2x18x18x64xbf16> to vector<2x16x16x64xbf16>
    %49 = vector.shape_cast %48 : vector<2x16x16x64xbf16> to vector<512x64xbf16>
    %50 = tpu.concatenate %45, %47, %49 in 1 : vector<512x64xbf16>, vector<512x64xbf16>, vector<512x64xbf16> -> vector<512x192xbf16>
    %51 = vector.extract_strided_slice %36 {offsets = [0, 0, 0], sizes = [1, 192, 64], strides = [1, 1, 1]} : vector<3x192x64xbf16> to vector<1x192x64xbf16>
    %52 = vector.shape_cast %51 : vector<1x192x64xbf16> to vector<192x64xbf16>
    %cst_13 = arith.constant dense<0.000000e+00> : vector<512x64xf32>
    %53 = tpu.matmul %50, %52, %cst_13 {dimension_numbers = #tpu.dot_dimension_numbers<[1], [0], [0], [1], [0, 0, 1, 1], [], []>} : vector<512x192xbf16>, vector<192x64xbf16>, vector<512x64xf32> -> vector<512x64xf32>
    %54 = vector.extract_strided_slice %43 {offsets = [0, 1, 0, 0], sizes = [2, 16, 16, 64], strides = [1, 1, 1, 1]} : vector<2x18x18x64xbf16> to vector<2x16x16x64xbf16>
    %55 = vector.shape_cast %54 : vector<2x16x16x64xbf16> to vector<512x64xbf16>
    %56 = vector.extract_strided_slice %43 {offsets = [0, 1, 1, 0], sizes = [2, 16, 16, 64], strides = [1, 1, 1, 1]} : vector<2x18x18x64xbf16> to vector<2x16x16x64xbf16>
    %57 = vector.shape_cast %56 : vector<2x16x16x64xbf16> to vector<512x64xbf16>
    %58 = vector.extract_strided_slice %43 {offsets = [0, 1, 2, 0], sizes = [2, 16, 16, 64], strides = [1, 1, 1, 1]} : vector<2x18x18x64xbf16> to vector<2x16x16x64xbf16>
    %59 = vector.shape_cast %58 : vector<2x16x16x64xbf16> to vector<512x64xbf16>
    %60 = tpu.concatenate %55, %57, %59 in 1 : vector<512x64xbf16>, vector<512x64xbf16>, vector<512x64xbf16> -> vector<512x192xbf16>
    %61 = vector.extract_strided_slice %36 {offsets = [1, 0, 0], sizes = [1, 192, 64], strides = [1, 1, 1]} : vector<3x192x64xbf16> to vector<1x192x64xbf16>
    %62 = vector.shape_cast %61 : vector<1x192x64xbf16> to vector<192x64xbf16>
    %cst_14 = arith.constant dense<0.000000e+00> : vector<512x64xf32>
    %63 = tpu.matmul %60, %62, %cst_14 {dimension_numbers = #tpu.dot_dimension_numbers<[1], [0], [0], [1], [0, 0, 1, 1], [], []>} : vector<512x192xbf16>, vector<192x64xbf16>, vector<512x64xf32> -> vector<512x64xf32>
    %64 = arith.addf %53, %63 : vector<512x64xf32>
    %65 = vector.extract_strided_slice %43 {offsets = [0, 2, 0, 0], sizes = [2, 16, 16, 64], strides = [1, 1, 1, 1]} : vector<2x18x18x64xbf16> to vector<2x16x16x64xbf16>
    %66 = vector.shape_cast %65 : vector<2x16x16x64xbf16> to vector<512x64xbf16>
    %67 = vector.extract_strided_slice %43 {offsets = [0, 2, 1, 0], sizes = [2, 16, 16, 64], strides = [1, 1, 1, 1]} : vector<2x18x18x64xbf16> to vector<2x16x16x64xbf16>
    %68 = vector.shape_cast %67 : vector<2x16x16x64xbf16> to vector<512x64xbf16>
    %69 = vector.extract_strided_slice %43 {offsets = [0, 2, 2, 0], sizes = [2, 16, 16, 64], strides = [1, 1, 1, 1]} : vector<2x18x18x64xbf16> to vector<2x16x16x64xbf16>
    %70 = vector.shape_cast %69 : vector<2x16x16x64xbf16> to vector<512x64xbf16>
    %71 = tpu.concatenate %66, %68, %70 in 1 : vector<512x64xbf16>, vector<512x64xbf16>, vector<512x64xbf16> -> vector<512x192xbf16>
    %72 = vector.extract_strided_slice %36 {offsets = [2, 0, 0], sizes = [1, 192, 64], strides = [1, 1, 1]} : vector<3x192x64xbf16> to vector<1x192x64xbf16>
    %73 = vector.shape_cast %72 : vector<1x192x64xbf16> to vector<192x64xbf16>
    %cst_15 = arith.constant dense<0.000000e+00> : vector<512x64xf32>
    %74 = tpu.matmul %71, %73, %cst_15 {dimension_numbers = #tpu.dot_dimension_numbers<[1], [0], [0], [1], [0, 0, 1, 1], [], []>} : vector<512x192xbf16>, vector<192x64xbf16>, vector<512x64xf32> -> vector<512x64xf32>
    %75 = arith.addf %64, %74 : vector<512x64xf32>
    %76 = vector.broadcast %37 : vector<1x64xf32> to vector<512x64xf32>
    %77 = arith.addf %75, %76 : vector<512x64xf32>
    %cst_16 = arith.constant 0.000000e+00 : f32
    %78 = vector.broadcast %cst_16 : f32 to vector<512x64xf32>
    %79 = arith.maximumf %77, %78 : vector<512x64xf32>
    %80 = vector.shape_cast %79 : vector<512x64xf32> to vector<2x256x64xf32>
    %81 = vector.extract_strided_slice %80 {offsets = [0, 0, 0], sizes = [1, 256, 64], strides = [1, 1, 1]} : vector<2x256x64xf32> to vector<1x256x64xf32>
    %82 = vector.shape_cast %81 : vector<1x256x64xf32> to vector<256x64xf32>
    %83 = tpu.transpose %82, [1, 0] : vector<256x64xf32> -> vector<64x256xf32>
    %c0_17 = arith.constant 0 : index
    %c0_18 = arith.constant 0 : index
    %c0_19 = arith.constant 0 : index
    %84 = vector.load %arg10[%c0_17, %c0_18, %c0_19] : memref<2x64x256xf32, #tpu.memory_space<vmem>>, vector<1x64x256xf32>
    %85 = vector.shape_cast %84 : vector<1x64x256xf32> to vector<64x256xf32>
    %86 = vector.shape_cast %83 : vector<64x256xf32> to vector<1x64x256xf32>
    tpu.vector_store %arg10[%c0_17, %c0_18, %c0_19], %86 {strides = array<i32>} : memref<2x64x256xf32, #tpu.memory_space<vmem>>, vector<1x64x256xf32>,
    %87 = vector.extract_strided_slice %80 {offsets = [1, 0, 0], sizes = [1, 256, 64], strides = [1, 1, 1]} : vector<2x256x64xf32> to vector<1x256x64xf32>
    %88 = vector.shape_cast %87 : vector<1x256x64xf32> to vector<256x64xf32>
    %89 = tpu.transpose %88, [1, 0] : vector<256x64xf32> -> vector<64x256xf32>
    %c1 = arith.constant 1 : index
    %c0_20 = arith.constant 0 : index
    %c0_21 = arith.constant 0 : index
    %90 = vector.load %arg10[%c1, %c0_20, %c0_21] : memref<2x64x256xf32, #tpu.memory_space<vmem>>, vector<1x64x256xf32>
    %91 = vector.shape_cast %90 : vector<1x64x256xf32> to vector<64x256xf32>
    %92 = vector.shape_cast %89 : vector<64x256xf32> to vector<1x64x256xf32>
    tpu.vector_store %arg10[%c1, %c0_20, %c0_21], %92 {strides = array<i32>} : memref<2x64x256xf32, #tpu.memory_space<vmem>>, vector<1x64x256xf32>,
    %93 = vector.shape_cast %79 : vector<512x64xf32> to vector<2x8x2x16x64xf32>
    %cst_22 = arith.constant dense<0xFF800000> : vector<2x8x16x64xf32>
    %94 = vector.multi_reduction <maximumf>, %93, %cst_22 [2] : vector<2x8x2x16x64xf32> to vector<2x8x16x64xf32>
    %95 = vector.shape_cast %94 : vector<2x8x16x64xf32> to vector<2x8x8x2x64xf32>
    %cst_23 = arith.constant dense<0xFF800000> : vector<2x8x8x64xf32>
    %96 = vector.multi_reduction <maximumf>, %95, %cst_23 [3] : vector<2x8x8x2x64xf32> to vector<2x8x8x64xf32>
    %97 = arith.truncf %96 : vector<2x8x8x64xf32> to vector<2x8x8x64xbf16>
    %c0_24 = arith.constant 0 : index
    %c0_25 = arith.constant 0 : index
    %c0_26 = arith.constant 0 : index
    %98 = vector.load %arg6[%c0_24, %c0_25, %c0_26] : memref<3x192x128xbf16, #tpu.memory_space<vmem>>, vector<3x192x128xbf16>
    %c0_27 = arith.constant 0 : index
    %c0_28 = arith.constant 0 : index
    %99 = vector.load %arg7[%c0_27, %c0_28] : memref<1x128xf32, #tpu.memory_space<vmem>>, vector<1x128xf32>
    %100 = vector.extract_strided_slice %97 {offsets = [0, 0, 0, 0], sizes = [2, 1, 8, 64], strides = [1, 1, 1, 1]} : vector<2x8x8x64xbf16> to vector<2x1x8x64xbf16>
    %101 = vector.extract_strided_slice %97 {offsets = [0, 7, 0, 0], sizes = [2, 1, 8, 64], strides = [1, 1, 1, 1]} : vector<2x8x8x64xbf16> to vector<2x1x8x64xbf16>
    %102 = tpu.concatenate %100, %97, %101 in 1 : vector<2x1x8x64xbf16>, vector<2x8x8x64xbf16>, vector<2x1x8x64xbf16> -> vector<2x10x8x64xbf16>
    %103 = vector.extract_strided_slice %102 {offsets = [0, 0, 0, 0], sizes = [2, 10, 1, 64], strides = [1, 1, 1, 1]} : vector<2x10x8x64xbf16> to vector<2x10x1x64xbf16>
    %104 = vector.extract_strided_slice %102 {offsets = [0, 0, 7, 0], sizes = [2, 10, 1, 64], strides = [1, 1, 1, 1]} : vector<2x10x8x64xbf16> to vector<2x10x1x64xbf16>
    %105 = tpu.concatenate %103, %102, %104 in 2 : vector<2x10x1x64xbf16>, vector<2x10x8x64xbf16>, vector<2x10x1x64xbf16> -> vector<2x10x10x64xbf16>
    %106 = vector.extract_strided_slice %105 {offsets = [0, 0, 0, 0], sizes = [2, 8, 8, 64], strides = [1, 1, 1, 1]} : vector<2x10x10x64xbf16> to vector<2x8x8x64xbf16>
    %107 = vector.shape_cast %106 : vector<2x8x8x64xbf16> to vector<128x64xbf16>
    %108 = vector.extract_strided_slice %105 {offsets = [0, 0, 1, 0], sizes = [2, 8, 8, 64], strides = [1, 1, 1, 1]} : vector<2x10x10x64xbf16> to vector<2x8x8x64xbf16>
    %109 = vector.shape_cast %108 : vector<2x8x8x64xbf16> to vector<128x64xbf16>
    %110 = vector.extract_strided_slice %105 {offsets = [0, 0, 2, 0], sizes = [2, 8, 8, 64], strides = [1, 1, 1, 1]} : vector<2x10x10x64xbf16> to vector<2x8x8x64xbf16>
    %111 = vector.shape_cast %110 : vector<2x8x8x64xbf16> to vector<128x64xbf16>
    %112 = tpu.concatenate %107, %109, %111 in 1 : vector<128x64xbf16>, vector<128x64xbf16>, vector<128x64xbf16> -> vector<128x192xbf16>
    %113 = vector.extract_strided_slice %98 {offsets = [0, 0, 0], sizes = [1, 192, 128], strides = [1, 1, 1]} : vector<3x192x128xbf16> to vector<1x192x128xbf16>
    %114 = vector.shape_cast %113 : vector<1x192x128xbf16> to vector<192x128xbf16>
    %cst_29 = arith.constant dense<0.000000e+00> : vector<128x128xf32>
    %115 = tpu.matmul %112, %114, %cst_29 {dimension_numbers = #tpu.dot_dimension_numbers<[1], [0], [0], [1], [0, 0, 1, 1], [], []>} : vector<128x192xbf16>, vector<192x128xbf16>, vector<128x128xf32> -> vector<128x128xf32>
    %116 = vector.extract_strided_slice %105 {offsets = [0, 1, 0, 0], sizes = [2, 8, 8, 64], strides = [1, 1, 1, 1]} : vector<2x10x10x64xbf16> to vector<2x8x8x64xbf16>
    %117 = vector.shape_cast %116 : vector<2x8x8x64xbf16> to vector<128x64xbf16>
    %118 = vector.extract_strided_slice %105 {offsets = [0, 1, 1, 0], sizes = [2, 8, 8, 64], strides = [1, 1, 1, 1]} : vector<2x10x10x64xbf16> to vector<2x8x8x64xbf16>
    %119 = vector.shape_cast %118 : vector<2x8x8x64xbf16> to vector<128x64xbf16>
    %120 = vector.extract_strided_slice %105 {offsets = [0, 1, 2, 0], sizes = [2, 8, 8, 64], strides = [1, 1, 1, 1]} : vector<2x10x10x64xbf16> to vector<2x8x8x64xbf16>
    %121 = vector.shape_cast %120 : vector<2x8x8x64xbf16> to vector<128x64xbf16>
    %122 = tpu.concatenate %117, %119, %121 in 1 : vector<128x64xbf16>, vector<128x64xbf16>, vector<128x64xbf16> -> vector<128x192xbf16>
    %123 = vector.extract_strided_slice %98 {offsets = [1, 0, 0], sizes = [1, 192, 128], strides = [1, 1, 1]} : vector<3x192x128xbf16> to vector<1x192x128xbf16>
    %124 = vector.shape_cast %123 : vector<1x192x128xbf16> to vector<192x128xbf16>
    %cst_30 = arith.constant dense<0.000000e+00> : vector<128x128xf32>
    %125 = tpu.matmul %122, %124, %cst_30 {dimension_numbers = #tpu.dot_dimension_numbers<[1], [0], [0], [1], [0, 0, 1, 1], [], []>} : vector<128x192xbf16>, vector<192x128xbf16>, vector<128x128xf32> -> vector<128x128xf32>
    %126 = arith.addf %115, %125 : vector<128x128xf32>
    %127 = vector.extract_strided_slice %105 {offsets = [0, 2, 0, 0], sizes = [2, 8, 8, 64], strides = [1, 1, 1, 1]} : vector<2x10x10x64xbf16> to vector<2x8x8x64xbf16>
    %128 = vector.shape_cast %127 : vector<2x8x8x64xbf16> to vector<128x64xbf16>
    %129 = vector.extract_strided_slice %105 {offsets = [0, 2, 1, 0], sizes = [2, 8, 8, 64], strides = [1, 1, 1, 1]} : vector<2x10x10x64xbf16> to vector<2x8x8x64xbf16>
    %130 = vector.shape_cast %129 : vector<2x8x8x64xbf16> to vector<128x64xbf16>
    %131 = vector.extract_strided_slice %105 {offsets = [0, 2, 2, 0], sizes = [2, 8, 8, 64], strides = [1, 1, 1, 1]} : vector<2x10x10x64xbf16> to vector<2x8x8x64xbf16>
    %132 = vector.shape_cast %131 : vector<2x8x8x64xbf16> to vector<128x64xbf16>
    %133 = tpu.concatenate %128, %130, %132 in 1 : vector<128x64xbf16>, vector<128x64xbf16>, vector<128x64xbf16> -> vector<128x192xbf16>
    %134 = vector.extract_strided_slice %98 {offsets = [2, 0, 0], sizes = [1, 192, 128], strides = [1, 1, 1]} : vector<3x192x128xbf16> to vector<1x192x128xbf16>
    %135 = vector.shape_cast %134 : vector<1x192x128xbf16> to vector<192x128xbf16>
    %cst_31 = arith.constant dense<0.000000e+00> : vector<128x128xf32>
    %136 = tpu.matmul %133, %135, %cst_31 {dimension_numbers = #tpu.dot_dimension_numbers<[1], [0], [0], [1], [0, 0, 1, 1], [], []>} : vector<128x192xbf16>, vector<192x128xbf16>, vector<128x128xf32> -> vector<128x128xf32>
    %137 = arith.addf %126, %136 : vector<128x128xf32>
    %138 = vector.broadcast %99 : vector<1x128xf32> to vector<128x128xf32>
    %139 = arith.addf %137, %138 : vector<128x128xf32>
    %cst_32 = arith.constant 0.000000e+00 : f32
    %140 = vector.broadcast %cst_32 : f32 to vector<128x128xf32>
    %141 = arith.maximumf %139, %140 : vector<128x128xf32>
    %142 = vector.shape_cast %141 : vector<128x128xf32> to vector<2x8x8x128xf32>
    %143 = arith.truncf %142 : vector<2x8x8x128xf32> to vector<2x8x8x128xbf16>
    %c0_33 = arith.constant 0 : index
    %c0_34 = arith.constant 0 : index
    %c0_35 = arith.constant 0 : index
    %144 = vector.load %arg8[%c0_33, %c0_34, %c0_35] : memref<3x384x128xbf16, #tpu.memory_space<vmem>>, vector<3x384x128xbf16>
    %c0_36 = arith.constant 0 : index
    %c0_37 = arith.constant 0 : index
    %145 = vector.load %arg9[%c0_36, %c0_37] : memref<1x128xf32, #tpu.memory_space<vmem>>, vector<1x128xf32>
    %146 = vector.extract_strided_slice %143 {offsets = [0, 0, 0, 0], sizes = [2, 1, 8, 128], strides = [1, 1, 1, 1]} : vector<2x8x8x128xbf16> to vector<2x1x8x128xbf16>
    %147 = vector.extract_strided_slice %143 {offsets = [0, 7, 0, 0], sizes = [2, 1, 8, 128], strides = [1, 1, 1, 1]} : vector<2x8x8x128xbf16> to vector<2x1x8x128xbf16>
    %148 = tpu.concatenate %146, %143, %147 in 1 : vector<2x1x8x128xbf16>, vector<2x8x8x128xbf16>, vector<2x1x8x128xbf16> -> vector<2x10x8x128xbf16>
    %149 = vector.extract_strided_slice %148 {offsets = [0, 0, 0, 0], sizes = [2, 10, 1, 128], strides = [1, 1, 1, 1]} : vector<2x10x8x128xbf16> to vector<2x10x1x128xbf16>
    %150 = vector.extract_strided_slice %148 {offsets = [0, 0, 7, 0], sizes = [2, 10, 1, 128], strides = [1, 1, 1, 1]} : vector<2x10x8x128xbf16> to vector<2x10x1x128xbf16>
    %151 = tpu.concatenate %149, %148, %150 in 2 : vector<2x10x1x128xbf16>, vector<2x10x8x128xbf16>, vector<2x10x1x128xbf16> -> vector<2x10x10x128xbf16>
    %152 = vector.extract_strided_slice %151 {offsets = [0, 0, 0, 0], sizes = [2, 8, 8, 128], strides = [1, 1, 1, 1]} : vector<2x10x10x128xbf16> to vector<2x8x8x128xbf16>
    %153 = vector.shape_cast %152 : vector<2x8x8x128xbf16> to vector<128x128xbf16>
    %154 = vector.extract_strided_slice %151 {offsets = [0, 0, 1, 0], sizes = [2, 8, 8, 128], strides = [1, 1, 1, 1]} : vector<2x10x10x128xbf16> to vector<2x8x8x128xbf16>
    %155 = vector.shape_cast %154 : vector<2x8x8x128xbf16> to vector<128x128xbf16>
    %156 = vector.extract_strided_slice %151 {offsets = [0, 0, 2, 0], sizes = [2, 8, 8, 128], strides = [1, 1, 1, 1]} : vector<2x10x10x128xbf16> to vector<2x8x8x128xbf16>
    %157 = vector.shape_cast %156 : vector<2x8x8x128xbf16> to vector<128x128xbf16>
    %158 = tpu.concatenate %153, %155, %157 in 1 : vector<128x128xbf16>, vector<128x128xbf16>, vector<128x128xbf16> -> vector<128x384xbf16>
    %159 = vector.extract_strided_slice %144 {offsets = [0, 0, 0], sizes = [1, 384, 128], strides = [1, 1, 1]} : vector<3x384x128xbf16> to vector<1x384x128xbf16>
    %160 = vector.shape_cast %159 : vector<1x384x128xbf16> to vector<384x128xbf16>
    %cst_38 = arith.constant dense<0.000000e+00> : vector<128x128xf32>
    %161 = tpu.matmul %158, %160, %cst_38 {dimension_numbers = #tpu.dot_dimension_numbers<[1], [0], [0], [1], [0, 0, 1, 1], [], []>} : vector<128x384xbf16>, vector<384x128xbf16>, vector<128x128xf32> -> vector<128x128xf32>
    %162 = vector.extract_strided_slice %151 {offsets = [0, 1, 0, 0], sizes = [2, 8, 8, 128], strides = [1, 1, 1, 1]} : vector<2x10x10x128xbf16> to vector<2x8x8x128xbf16>
    %163 = vector.shape_cast %162 : vector<2x8x8x128xbf16> to vector<128x128xbf16>
    %164 = vector.extract_strided_slice %151 {offsets = [0, 1, 1, 0], sizes = [2, 8, 8, 128], strides = [1, 1, 1, 1]} : vector<2x10x10x128xbf16> to vector<2x8x8x128xbf16>
    %165 = vector.shape_cast %164 : vector<2x8x8x128xbf16> to vector<128x128xbf16>
    %166 = vector.extract_strided_slice %151 {offsets = [0, 1, 2, 0], sizes = [2, 8, 8, 128], strides = [1, 1, 1, 1]} : vector<2x10x10x128xbf16> to vector<2x8x8x128xbf16>
    %167 = vector.shape_cast %166 : vector<2x8x8x128xbf16> to vector<128x128xbf16>
    %168 = tpu.concatenate %163, %165, %167 in 1 : vector<128x128xbf16>, vector<128x128xbf16>, vector<128x128xbf16> -> vector<128x384xbf16>
    %169 = vector.extract_strided_slice %144 {offsets = [1, 0, 0], sizes = [1, 384, 128], strides = [1, 1, 1]} : vector<3x384x128xbf16> to vector<1x384x128xbf16>
    %170 = vector.shape_cast %169 : vector<1x384x128xbf16> to vector<384x128xbf16>
    %cst_39 = arith.constant dense<0.000000e+00> : vector<128x128xf32>
    %171 = tpu.matmul %168, %170, %cst_39 {dimension_numbers = #tpu.dot_dimension_numbers<[1], [0], [0], [1], [0, 0, 1, 1], [], []>} : vector<128x384xbf16>, vector<384x128xbf16>, vector<128x128xf32> -> vector<128x128xf32>
    %172 = arith.addf %161, %171 : vector<128x128xf32>
    %173 = vector.extract_strided_slice %151 {offsets = [0, 2, 0, 0], sizes = [2, 8, 8, 128], strides = [1, 1, 1, 1]} : vector<2x10x10x128xbf16> to vector<2x8x8x128xbf16>
    %174 = vector.shape_cast %173 : vector<2x8x8x128xbf16> to vector<128x128xbf16>
    %175 = vector.extract_strided_slice %151 {offsets = [0, 2, 1, 0], sizes = [2, 8, 8, 128], strides = [1, 1, 1, 1]} : vector<2x10x10x128xbf16> to vector<2x8x8x128xbf16>
    %176 = vector.shape_cast %175 : vector<2x8x8x128xbf16> to vector<128x128xbf16>
    %177 = vector.extract_strided_slice %151 {offsets = [0, 2, 2, 0], sizes = [2, 8, 8, 128], strides = [1, 1, 1, 1]} : vector<2x10x10x128xbf16> to vector<2x8x8x128xbf16>
    %178 = vector.shape_cast %177 : vector<2x8x8x128xbf16> to vector<128x128xbf16>
    %179 = tpu.concatenate %174, %176, %178 in 1 : vector<128x128xbf16>, vector<128x128xbf16>, vector<128x128xbf16> -> vector<128x384xbf16>
    %180 = vector.extract_strided_slice %144 {offsets = [2, 0, 0], sizes = [1, 384, 128], strides = [1, 1, 1]} : vector<3x384x128xbf16> to vector<1x384x128xbf16>
    %181 = vector.shape_cast %180 : vector<1x384x128xbf16> to vector<384x128xbf16>
    %cst_40 = arith.constant dense<0.000000e+00> : vector<128x128xf32>
    %182 = tpu.matmul %179, %181, %cst_40 {dimension_numbers = #tpu.dot_dimension_numbers<[1], [0], [0], [1], [0, 0, 1, 1], [], []>} : vector<128x384xbf16>, vector<384x128xbf16>, vector<128x128xf32> -> vector<128x128xf32>
    %183 = arith.addf %172, %182 : vector<128x128xf32>
    %184 = vector.broadcast %145 : vector<1x128xf32> to vector<128x128xf32>
    %185 = arith.addf %183, %184 : vector<128x128xf32>
    %cst_41 = arith.constant 0.000000e+00 : f32
    %186 = vector.broadcast %cst_41 : f32 to vector<128x128xf32>
    %187 = arith.maximumf %185, %186 : vector<128x128xf32>
    %188 = vector.shape_cast %187 : vector<128x128xf32> to vector<2x64x128xf32>
    %189 = vector.extract_strided_slice %188 {offsets = [0, 0, 0], sizes = [1, 64, 128], strides = [1, 1, 1]} : vector<2x64x128xf32> to vector<1x64x128xf32>
    %190 = vector.shape_cast %189 : vector<1x64x128xf32> to vector<64x128xf32>
    %191 = tpu.transpose %190, [1, 0] : vector<64x128xf32> -> vector<128x64xf32>
    %c0_42 = arith.constant 0 : index
    %c0_43 = arith.constant 0 : index
    %c0_44 = arith.constant 0 : index
    %192 = vector.load %arg11[%c0_42, %c0_43, %c0_44] : memref<2x128x64xf32, #tpu.memory_space<vmem>>, vector<1x128x64xf32>
    %193 = vector.shape_cast %192 : vector<1x128x64xf32> to vector<128x64xf32>
    %194 = vector.shape_cast %191 : vector<128x64xf32> to vector<1x128x64xf32>
    tpu.vector_store %arg11[%c0_42, %c0_43, %c0_44], %194 {strides = array<i32>} : memref<2x128x64xf32, #tpu.memory_space<vmem>>, vector<1x128x64xf32>,
    %195 = vector.extract_strided_slice %188 {offsets = [1, 0, 0], sizes = [1, 64, 128], strides = [1, 1, 1]} : vector<2x64x128xf32> to vector<1x64x128xf32>
    %196 = vector.shape_cast %195 : vector<1x64x128xf32> to vector<64x128xf32>
    %197 = tpu.transpose %196, [1, 0] : vector<64x128xf32> -> vector<128x64xf32>
    %c1_45 = arith.constant 1 : index
    %c0_46 = arith.constant 0 : index
    %c0_47 = arith.constant 0 : index
    %198 = vector.load %arg11[%c1_45, %c0_46, %c0_47] : memref<2x128x64xf32, #tpu.memory_space<vmem>>, vector<1x128x64xf32>
    %199 = vector.shape_cast %198 : vector<1x128x64xf32> to vector<128x64xf32>
    %200 = vector.shape_cast %197 : vector<128x64xf32> to vector<1x128x64xf32>
    tpu.vector_store %arg11[%c1_45, %c0_46, %c0_47], %200 {strides = array<i32>} : memref<2x128x64xf32, #tpu.memory_space<vmem>>, vector<1x128x64xf32>,
    return
  }
  func.func @transform_0(%arg0: i32) -> (i32, i32, i32, i32) {
    %c0_i32 = arith.constant 0 : i32
    %c0_i32_0 = arith.constant 0 : i32
    %c0_i32_1 = arith.constant 0 : i32
    %c0_i32_2 = arith.constant 0 : i32
    return %arg0, %c0_i32, %c0_i32_0, %c0_i32_1 : i32, i32, i32, i32
  }
  func.func @transform_1(%arg0: i32) -> (i32, i32) {
    %c0_i32 = arith.constant 0 : i32
    %c0_i32_0 = arith.constant 0 : i32
    %c0_i32_1 = arith.constant 0 : i32
    return %c0_i32, %c0_i32_0 : i32, i32
  }
  func.func @transform_2(%arg0: i32) -> (i32, i32) {
    %c0_i32 = arith.constant 0 : i32
    %c0_i32_0 = arith.constant 0 : i32
    %c0_i32_1 = arith.constant 0 : i32
    return %c0_i32, %c0_i32_0 : i32, i32
  }
  func.func @transform_3(%arg0: i32) -> (i32, i32, i32) {
    %c0_i32 = arith.constant 0 : i32
    %c0_i32_0 = arith.constant 0 : i32
    %c0_i32_1 = arith.constant 0 : i32
    %c0_i32_2 = arith.constant 0 : i32
    return %c0_i32, %c0_i32_0, %c0_i32_1 : i32, i32, i32
  }
  func.func @transform_4(%arg0: i32) -> (i32, i32) {
    %c0_i32 = arith.constant 0 : i32
    %c0_i32_0 = arith.constant 0 : i32
    %c0_i32_1 = arith.constant 0 : i32
    return %c0_i32, %c0_i32_0 : i32, i32
  }
  func.func @transform_5(%arg0: i32) -> (i32, i32, i32) {
    %c0_i32 = arith.constant 0 : i32
    %c0_i32_0 = arith.constant 0 : i32
    %c0_i32_1 = arith.constant 0 : i32
    %c0_i32_2 = arith.constant 0 : i32
    return %c0_i32, %c0_i32_0, %c0_i32_1 : i32, i32, i32
  }
  func.func @transform_6(%arg0: i32) -> (i32, i32) {
    %c0_i32 = arith.constant 0 : i32
    %c0_i32_0 = arith.constant 0 : i32
    %c0_i32_1 = arith.constant 0 : i32
    return %c0_i32, %c0_i32_0 : i32, i32
  }
  func.func @transform_7(%arg0: i32) -> (i32, i32, i32) {
    %c0_i32 = arith.constant 0 : i32
    %c0_i32_0 = arith.constant 0 : i32
    %c0_i32_1 = arith.constant 0 : i32
    %c0_i32_2 = arith.constant 0 : i32
    return %c0_i32, %c0_i32_0, %c0_i32_1 : i32, i32, i32
  }
  func.func @transform_8(%arg0: i32) -> (i32, i32) {
    %c0_i32 = arith.constant 0 : i32
    %c0_i32_0 = arith.constant 0 : i32
    %c0_i32_1 = arith.constant 0 : i32
    return %c0_i32, %c0_i32_0 : i32, i32
  }
  func.func @transform_9(%arg0: i32) -> (i32, i32, i32) {
    %c0_i32 = arith.constant 0 : i32
    %c0_i32_0 = arith.constant 0 : i32
    %c0_i32_1 = arith.constant 0 : i32
    return %arg0, %c0_i32, %c0_i32_0 : i32, i32, i32
  }
  func.func @transform_10(%arg0: i32) -> (i32, i32, i32) {
    %c0_i32 = arith.constant 0 : i32
    %c0_i32_0 = arith.constant 0 : i32
    %c0_i32_1 = arith.constant 0 : i32
    return %arg0, %c0_i32, %c0_i32_0 : i32, i32, i32
  }
}

</mosaic_0001>

<llo_original>
// kernel: tpu_custom_call.1
$region0: #{tpu_custom_call.1}
  #allocation0 [shape = 'u32[]', space=smem, size = 0x4, offset = 0x4, fixed_abs, tag = 'smem constant byte address 0x4 - core index']
  #allocation1 [shape = 'u32[144,128]{1,0:T(1,128)}', space=vmem, size = 0x12000, scoped, tag = 'internal scratch']
  %s0 = inlined_call_operand.vmem [shape: f32[2,16,16,4], index: 0, kind: input, shape index: {}]
  %s1 = inlined_call_operand.vmem [shape: bf16[36,64], index: 1, kind: input, shape index: {}]
  %s2 = inlined_call_operand.vmem [shape: f32[1,64], index: 2, kind: input, shape index: {}]
  %s3 = inlined_call_operand.vmem [shape: bf16[3,192,64], index: 3, kind: input, shape index: {}]
  %s4 = inlined_call_operand.vmem [shape: f32[1,64], index: 4, kind: input, shape index: {}]
  %s5 = inlined_call_operand.vmem [shape: bf16[3,192,128], index: 5, kind: input, shape index: {}]
  %s6 = inlined_call_operand.vmem [shape: f32[1,128], index: 6, kind: input, shape index: {}]
  %s7 = inlined_call_operand.vmem [shape: bf16[3,384,128], index: 7, kind: input, shape index: {}]
  %s8 = inlined_call_operand.vmem [shape: f32[1,128], index: 8, kind: input, shape index: {}]
  %s9 = inlined_call_operand.hbm [shape: f32[2,64,256], index: 9, kind: output, shape index: {0}]
  %s10 = inlined_call_operand.vmem [shape: f32[2,128,64], index: 10, kind: output, shape index: {1}]
  %11 = xla_tuple %s9, %s10
  %s12 = sld [smem:[#allocation0]]
  $region54: #{tpu_custom_call.1} parent=0
    _
  %s14 = ssub.s32 1, %s12
  %s15 = scalar_select 0, %s14, %s12
  $region1: #{tpu_custom_call.1} parent=0
    #allocation2 [shape = 'u8[131072]{0}', space=vmem, size = 0x20000, scoped, tag = 'output window, operand 0, single buffered']
    #allocation3 [shape = 's32[1]{0}', space=sflag, size = 0x4, scoped, tag = 'scoped memory for tpu_custom_call.1']
    %16 = vsyncpa [#allocation3], 0
    // Predicated region
    $region2: #{tpu_custom_call.1} parent=1 // pred_check
      _
    $region3: #{tpu_custom_call.1} parent=1 // pred_check_branch
      %18 = sbr.rel (0) target = $region5
    $region4: #{tpu_custom_call.1} parent=1 // pred_region
      _
    $region5: #{tpu_custom_call.1} parent=1 // pred_fallthru
      _
    // Predicated region
    $region6: #{tpu_custom_call.1} parent=1 // pred_check
      _
    $region7: #{tpu_custom_call.1} parent=1 // pred_check_branch
      %20 = sbr.rel (0) target = $region9
    $region8: #{tpu_custom_call.1} parent=1 // pred_region
      _
    $region9: #{tpu_custom_call.1} parent=1 // pred_fallthru
      _
    // Predicated region
    $region10: #{tpu_custom_call.1} parent=1 // pred_check
      _
    $region11: #{tpu_custom_call.1} parent=1 // pred_check_branch
      %22 = sbr.rel (0) target = $region13
    $region12: #{tpu_custom_call.1} parent=1 // pred_region
      _
    $region13: #{tpu_custom_call.1} parent=1 // pred_fallthru
      _
    // Predicated region
    $region14: #{tpu_custom_call.1} parent=1 // pred_check
      _
    $region15: #{tpu_custom_call.1} parent=1 // pred_check_branch
      %24 = sbr.rel (0) target = $region17
    $region16: #{tpu_custom_call.1} parent=1 // pred_region
      _
    $region17: #{tpu_custom_call.1} parent=1 // pred_fallthru
      _
    // Predicated region
    $region18: #{tpu_custom_call.1} parent=1 // pred_check
      _
    $region19: #{tpu_custom_call.1} parent=1 // pred_check_branch
      %26 = sbr.rel (0) target = $region21
    $region20: #{tpu_custom_call.1} parent=1 // pred_region
      _
    $region21: #{tpu_custom_call.1} parent=1 // pred_fallthru
      _
    // Predicated region
    $region22: #{tpu_custom_call.1} parent=1 // pred_check
      _
    $region23: #{tpu_custom_call.1} parent=1 // pred_check_branch
      %28 = sbr.rel (0) target = $region25
    $region24: #{tpu_custom_call.1} parent=1 // pred_region
      _
    $region25: #{tpu_custom_call.1} parent=1 // pred_fallthru
      _
    // Predicated region
    $region26: #{tpu_custom_call.1} parent=1 // pred_check
      _
    $region27: #{tpu_custom_call.1} parent=1 // pred_check_branch
      %30 = sbr.rel (0) target = $region29
    $region28: #{tpu_custom_call.1} parent=1 // pred_region
      _
    $region29: #{tpu_custom_call.1} parent=1 // pred_fallthru
      _
    // Predicated region
    $region30: #{tpu_custom_call.1} parent=1 // pred_check
      _
    $region31: #{tpu_custom_call.1} parent=1 // pred_check_branch
      %32 = sbr.rel (0) target = $region33
    $region32: #{tpu_custom_call.1} parent=1 // pred_region
      _
    $region33: #{tpu_custom_call.1} parent=1 // pred_fallthru
      _
    // Predicated region
    $region34: #{tpu_custom_call.1} parent=1 // pred_check
      _
    $region35: #{tpu_custom_call.1} parent=1 // pred_check_branch
      %34 = sbr.rel (0) target = $region37
    $region36: #{tpu_custom_call.1} parent=1 // pred_region
      _
    $region37: #{tpu_custom_call.1} parent=1 // pred_fallthru
      _
    %v36 = vld [vmem:[%s0] sm:$0xff]
    %v37 = vld [vmem:[%s0 + $0x8] sm:$0xff]
    %v38 = vld [vmem:[%s0 + $0x10] sm:$0xff]
    %v39 = vld [vmem:[%s0 + $0x18] sm:$0xff]
    %v40 = vld [vmem:[%s0 + $0x20] sm:$0xff]
    %v41 = vld [vmem:[%s0 + $0x28] sm:$0xff]
    %v42 = vld [vmem:[%s0 + $0x30] sm:$0xff]
    %v43 = vld [vmem:[%s0 + $0x38] sm:$0xff]
    %v44 = vld [vmem:[%s0 + $0x40] sm:$0xff]
    %v45 = vld [vmem:[%s0 + $0x48] sm:$0xff]
    %v46 = vld [vmem:[%s0 + $0x50] sm:$0xff]
    %v47 = vld [vmem:[%s0 + $0x58] sm:$0xff]
    %v48 = vld [vmem:[%s0 + $0x60] sm:$0xff]
    %v49 = vld [vmem:[%s0 + $0x68] sm:$0xff]
    %v50 = vld [vmem:[%s0 + $0x70] sm:$0xff]
    %v51 = vld [vmem:[%s0 + $0x78] sm:$0xff]
    %v52 = vld [vmem:[%s0 + $0x80] sm:$0xff]
    %v53 = vld [vmem:[%s0 + $0x88] sm:$0xff]
    %v54 = vld [vmem:[%s0 + $0x90] sm:$0xff]
    %v55 = vld [vmem:[%s0 + $0x98] sm:$0xff]
    %v56 = vld [vmem:[%s0 + $0xa0] sm:$0xff]
    %v57 = vld [vmem:[%s0 + $0xa8] sm:$0xff]
    %v58 = vld [vmem:[%s0 + $0xb0] sm:$0xff]
    %v59 = vld [vmem:[%s0 + $0xb8] sm:$0xff]
    %v60 = vld [vmem:[%s0 + $0xc0] sm:$0xff]
    %v61 = vld [vmem:[%s0 + $0xc8] sm:$0xff]
    %v62 = vld [vmem:[%s0 + $0xd0] sm:$0xff]
    %v63 = vld [vmem:[%s0 + $0xd8] sm:$0xff]
    %v64 = vld [vmem:[%s0 + $0xe0] sm:$0xff]
    %v65 = vld [vmem:[%s0 + $0xe8] sm:$0xff]
    %v66 = vld [vmem:[%s0 + $0xf0] sm:$0xff]
    %v67 = vld [vmem:[%s0 + $0xf8] sm:$0xff]
    %v68 = vld [vmem:[%s0 + $0x100] sm:$0xff]
    %v69 = vld [vmem:[%s0 + $0x108] sm:$0xff]
    %v70 = vld [vmem:[%s0 + $0x110] sm:$0xff]
    %v71 = vld [vmem:[%s0 + $0x118] sm:$0xff]
    %v72 = vld [vmem:[%s0 + $0x120] sm:$0xff]
    %v73 = vld [vmem:[%s0 + $0x128] sm:$0xff]
    %v74 = vld [vmem:[%s0 + $0x130] sm:$0xff]
    %v75 = vld [vmem:[%s0 + $0x138] sm:$0xff]
    %v76 = vld [vmem:[%s0 + $0x140] sm:$0xff]
    %v77 = vld [vmem:[%s0 + $0x148] sm:$0xff]
    %v78 = vld [vmem:[%s0 + $0x150] sm:$0xff]
    %v79 = vld [vmem:[%s0 + $0x158] sm:$0xff]
    %v80 = vld [vmem:[%s0 + $0x160] sm:$0xff]
    %v81 = vld [vmem:[%s0 + $0x168] sm:$0xff]
    %v82 = vld [vmem:[%s0 + $0x170] sm:$0xff]
    %v83 = vld [vmem:[%s0 + $0x178] sm:$0xff]
    %v84 = vld [vmem:[%s0 + $0x180] sm:$0xff]
    %v85 = vld [vmem:[%s0 + $0x188] sm:$0xff]
    %v86 = vld [vmem:[%s0 + $0x190] sm:$0xff]
    %v87 = vld [vmem:[%s0 + $0x198] sm:$0xff]
    %v88 = vld [vmem:[%s0 + $0x1a0] sm:$0xff]
    %v89 = vld [vmem:[%s0 + $0x1a8] sm:$0xff]
    %v90 = vld [vmem:[%s0 + $0x1b0] sm:$0xff]
    %v91 = vld [vmem:[%s0 + $0x1b8] sm:$0xff]
    %v92 = vld [vmem:[%s0 + $0x1c0] sm:$0xff]
    %v93 = vld [vmem:[%s0 + $0x1c8] sm:$0xff]
    %v94 = vld [vmem:[%s0 + $0x1d0] sm:$0xff]
    %v95 = vld [vmem:[%s0 + $0x1d8] sm:$0xff]
    %v96 = vld [vmem:[%s0 + $0x1e0] sm:$0xff]
    %v97 = vld [vmem:[%s0 + $0x1e8] sm:$0xff]
    %v98 = vld [vmem:[%s0 + $0x1f0] sm:$0xff]
    %v99 = vld [vmem:[%s0 + $0x1f8] sm:$0xff]
    %v100 = vpack.c.bf16 %v37, %v36
    %v101 = vpack.c.bf16 %v39, %v38
    %v102 = vpack.c.bf16 %v41, %v40
    %v103 = vpack.c.bf16 %v43, %v42
    %v104 = vpack.c.bf16 %v45, %v44
    %v105 = vpack.c.bf16 %v47, %v46
    %v106 = vpack.c.bf16 %v49, %v48
    %v107 = vpack.c.bf16 %v51, %v50
    %v108 = vpack.c.bf16 %v53, %v52
    %v109 = vpack.c.bf16 %v55, %v54
    %v110 = vpack.c.bf16 %v57, %v56
    %v111 = vpack.c.bf16 %v59, %v58
    %v112 = vpack.c.bf16 %v61, %v60
    %v113 = vpack.c.bf16 %v63, %v62
    %v114 = vpack.c.bf16 %v65, %v64
    %v115 = vpack.c.bf16 %v67, %v66
    %v116 = vpack.c.bf16 %v69, %v68
    %v117 = vpack.c.bf16 %v71, %v70
    %v118 = vpack.c.bf16 %v73, %v72
    %v119 = vpack.c.bf16 %v75, %v74
    %v120 = vpack.c.bf16 %v77, %v76
    %v121 = vpack.c.bf16 %v79, %v78
    %v122 = vpack.c.bf16 %v81, %v80
    %v123 = vpack.c.bf16 %v83, %v82
    %v124 = vpack.c.bf16 %v85, %v84
    %v125 = vpack.c.bf16 %v87, %v86
    %v126 = vpack.c.bf16 %v89, %v88
    %v127 = vpack.c.bf16 %v91, %v90
    %v128 = vpack.c.bf16 %v93, %v92
    %v129 = vpack.c.bf16 %v95, %v94
    %v130 = vpack.c.bf16 %v97, %v96
    %v131 = vpack.c.bf16 %v99, %v98
    %v132 = vld [vmem:[%s1] sm:$0xf]
    %v133 = vld [vmem:[%s1 + $0x4] sm:$0xf]
    %v134 = vld [vmem:[%s1 + $0x8] sm:$0xf]
    %v135 = vld [vmem:[%s1 + $0xc] sm:$0xf]
    %v136 = vld [vmem:[%s1 + $0x10] sm:$0x3]
    %v137 = vld [vmem:[%s2] sm:$0x1]
    %v139 = vshrl.u32 %v100, 16
    %v141 = vrot.slane %v139, 7
    %v142 = vshll.u32 %v100, 16
    %v144 = vor.u32 %v141, %v142
    %v146 = vshrl.u32 %v101, 16
    %v148 = vrot.slane %v146, 7
    %v149 = vshll.u32 %v101, 16
    %v151 = vor.u32 %v148, %v149
    %v153 = vshrl.u32 %v102, 16
    %v155 = vrot.slane %v153, 7
    %v156 = vshll.u32 %v102, 16
    %v158 = vor.u32 %v155, %v156
    %v160 = vshrl.u32 %v103, 16
    %v162 = vrot.slane %v160, 7
    %v163 = vshll.u32 %v103, 16
    %v165 = vor.u32 %v162, %v163
    %v167 = vshrl.u32 %v104, 16
    %v169 = vrot.slane %v167, 7
    %v170 = vshll.u32 %v104, 16
    %v172 = vor.u32 %v169, %v170
    %v174 = vshrl.u32 %v105, 16
    %v176 = vrot.slane %v174, 7
    %v177 = vshll.u32 %v105, 16
    %v179 = vor.u32 %v176, %v177
    %v181 = vshrl.u32 %v106, 16
    %v183 = vrot.slane %v181, 7
    %v184 = vshll.u32 %v106, 16
    %v186 = vor.u32 %v183, %v184
    %v188 = vshrl.u32 %v107, 16
    %v190 = vrot.slane %v188, 7
    %v191 = vshll.u32 %v107, 16
    %v193 = vor.u32 %v190, %v191
    %v195 = vshrl.u32 %v108, 16
    %v197 = vrot.slane %v195, 7
    %v198 = vshll.u32 %v108, 16
    %v200 = vor.u32 %v197, %v198
    %v202 = vshrl.u32 %v109, 16
    %v204 = vrot.slane %v202, 7
    %v205 = vshll.u32 %v109, 16
    %v207 = vor.u32 %v204, %v205
    %v209 = vshrl.u32 %v110, 16
    %v211 = vrot.slane %v209, 7
    %v212 = vshll.u32 %v110, 16
    %v214 = vor.u32 %v211, %v212
    %v216 = vshrl.u32 %v111, 16
    %v218 = vrot.slane %v216, 7
    %v219 = vshll.u32 %v111, 16
    %v221 = vor.u32 %v218, %v219
    %v223 = vshrl.u32 %v112, 16
    %v225 = vrot.slane %v223, 7
    %v226 = vshll.u32 %v112, 16
    %v228 = vor.u32 %v225, %v226
    %v230 = vshrl.u32 %v113, 16
    %v232 = vrot.slane %v230, 7
    %v233 = vshll.u32 %v113, 16
    %v235 = vor.u32 %v232, %v233
    %v237 = vshrl.u32 %v114, 16
    %v239 = vrot.slane %v237, 7
    %v240 = vshll.u32 %v114, 16
    %v242 = vor.u32 %v239, %v240
    %v244 = vshrl.u32 %v115, 16
    %v246 = vrot.slane %v244, 7
    %v247 = vshll.u32 %v115, 16
    %v249 = vor.u32 %v246, %v247
    %v251 = vshrl.u32 %v116, 16
    %v253 = vrot.slane %v251, 7
    %v254 = vshll.u32 %v116, 16
    %v256 = vor.u32 %v253, %v254
    %v258 = vshrl.u32 %v117, 16
    %v260 = vrot.slane %v258, 7
    %v261 = vshll.u32 %v117, 16
    %v263 = vor.u32 %v260, %v261
    %v265 = vshrl.u32 %v118, 16
    %v267 = vrot.slane %v265, 7
    %v268 = vshll.u32 %v118, 16
    %v270 = vor.u32 %v267, %v268
    %v272 = vshrl.u32 %v119, 16
    %v274 = vrot.slane %v272, 7
    %v275 = vshll.u32 %v119, 16
    %v277 = vor.u32 %v274, %v275
    %v279 = vshrl.u32 %v120, 16
    %v281 = vrot.slane %v279, 7
    %v282 = vshll.u32 %v120, 16
    %v284 = vor.u32 %v281, %v282
    %v286 = vshrl.u32 %v121, 16
    %v288 = vrot.slane %v286, 7
    %v289 = vshll.u32 %v121, 16
    %v291 = vor.u32 %v288, %v289
    %v293 = vshrl.u32 %v122, 16
    %v295 = vrot.slane %v293, 7
    %v296 = vshll.u32 %v122, 16
    %v298 = vor.u32 %v295, %v296
    %v300 = vshrl.u32 %v123, 16
    %v302 = vrot.slane %v300, 7
    %v303 = vshll.u32 %v123, 16
    %v305 = vor.u32 %v302, %v303
    %v307 = vshrl.u32 %v124, 16
    %v309 = vrot.slane %v307, 7
    %v310 = vshll.u32 %v124, 16
    %v312 = vor.u32 %v309, %v310
    %v314 = vshrl.u32 %v125, 16
    %v316 = vrot.slane %v314, 7
    %v317 = vshll.u32 %v125, 16
    %v319 = vor.u32 %v316, %v317
    %v321 = vshrl.u32 %v126, 16
    %v323 = vrot.slane %v321, 7
    %v324 = vshll.u32 %v126, 16
    %v326 = vor.u32 %v323, %v324
    %v328 = vshrl.u32 %v127, 16
    %v330 = vrot.slane %v328, 7
    %v331 = vshll.u32 %v127, 16
    %v333 = vor.u32 %v330, %v331
    %v335 = vshrl.u32 %v128, 16
    %v337 = vrot.slane %v335, 7
    %v338 = vshll.u32 %v128, 16
    %v340 = vor.u32 %v337, %v338
    %v342 = vshrl.u32 %v129, 16
    %v344 = vrot.slane %v342, 7
    %v345 = vshll.u32 %v129, 16
    %v347 = vor.u32 %v344, %v345
    %v349 = vshrl.u32 %v130, 16
    %v351 = vrot.slane %v349, 7
    %v352 = vshll.u32 %v130, 16
    %v354 = vor.u32 %v351, %v352
    %v356 = vshrl.u32 %v131, 16
    %v358 = vrot.slane %v356, 7
    %v359 = vshll.u32 %v131, 16
    %v361 = vor.u32 %v358, %v359
    %v458 = vrot.slane %v100, 7
    %v459 = vrot.slane %v101, 7
    %v460 = vrot.slane %v102, 7
    %v461 = vrot.slane %v103, 7
    %v462 = vrot.slane %v104, 7
    %v463 = vrot.slane %v105, 7
    %v464 = vrot.slane %v106, 7
    %v465 = vrot.slane %v107, 7
    %v466 = vrot.slane %v108, 7
    %v467 = vrot.slane %v109, 7
    %v468 = vrot.slane %v110, 7
    %v469 = vrot.slane %v111, 7
    %v470 = vrot.slane %v112, 7
    %v471 = vrot.slane %v113, 7
    %v472 = vrot.slane %v114, 7
    %v473 = vrot.slane %v115, 7
    %v474 = vrot.slane %v116, 7
    %v475 = vrot.slane %v117, 7
    %v476 = vrot.slane %v118, 7
    %v477 = vrot.slane %v119, 7
    %v478 = vrot.slane %v120, 7
    %v479 = vrot.slane %v121, 7
    %v480 = vrot.slane %v122, 7
    %v481 = vrot.slane %v123, 7
    %v482 = vrot.slane %v124, 7
    %v483 = vrot.slane %v125, 7
    %v484 = vrot.slane %v126, 7
    %v485 = vrot.slane %v127, 7
    %v486 = vrot.slane %v128, 7
    %v487 = vrot.slane %v129, 7
    %v488 = vrot.slane %v130, 7
    %v489 = vrot.slane %v131, 7
    %vm522 = vcmask 1040384
    %vm523 = vsmask.f32 256
    %vm524 = vmand %vm522, %vm523
    %v525 = vsel %vm524, %v100, %v144
    %v526 = vsel %vm524, %v101, %v151
    %v527 = vsel %vm524, %v102, %v158
    %v528 = vsel %vm524, %v103, %v165
    %v529 = vsel %vm524, %v104, %v172
    %v530 = vsel %vm524, %v105, %v179
    %v531 = vsel %vm524, %v106, %v186
    %v532 = vsel %vm524, %v107, %v193
    %v533 = vsel %vm524, %v108, %v200
    %v534 = vsel %vm524, %v109, %v207
    %v535 = vsel %vm524, %v110, %v214
    %v536 = vsel %vm524, %v111, %v221
    %v537 = vsel %vm524, %v112, %v228
    %v538 = vsel %vm524, %v113, %v235
    %v539 = vsel %vm524, %v114, %v242
    %v540 = vsel %vm524, %v115, %v249
    %v541 = vsel %vm524, %v116, %v256
    %v542 = vsel %vm524, %v117, %v263
    %v543 = vsel %vm524, %v118, %v270
    %v544 = vsel %vm524, %v119, %v277
    %v545 = vsel %vm524, %v120, %v284
    %v546 = vsel %vm524, %v121, %v291
    %v547 = vsel %vm524, %v122, %v298
    %v548 = vsel %vm524, %v123, %v305
    %v549 = vsel %vm524, %v124, %v312
    %v550 = vsel %vm524, %v125, %v319
    %v551 = vsel %vm524, %v126, %v326
    %v552 = vsel %vm524, %v127, %v333
    %v553 = vsel %vm524, %v128, %v340
    %v554 = vsel %vm524, %v129, %v347
    %v555 = vsel %vm524, %v130, %v354
    %v556 = vsel %vm524, %v131, %v361
    %v557 = vsel %vm524, %v141, %v458
    %v558 = vsel %vm524, %v148, %v459
    %v559 = vsel %vm524, %v155, %v460
    %v560 = vsel %vm524, %v162, %v461
    %v561 = vsel %vm524, %v169, %v462
    %v562 = vsel %vm524, %v176, %v463
    %v563 = vsel %vm524, %v183, %v464
    %v564 = vsel %vm524, %v190, %v465
    %v565 = vsel %vm524, %v197, %v466
    %v566 = vsel %vm524, %v204, %v467
    %v567 = vsel %vm524, %v211, %v468
    %v568 = vsel %vm524, %v218, %v469
    %v569 = vsel %vm524, %v225, %v470
    %v570 = vsel %vm524, %v232, %v471
    %v571 = vsel %vm524, %v239, %v472
    %v572 = vsel %vm524, %v246, %v473
    %v573 = vsel %vm524, %v253, %v474
    %v574 = vsel %vm524, %v260, %v475
    %v575 = vsel %vm524, %v267, %v476
    %v576 = vsel %vm524, %v274, %v477
    %v577 = vsel %vm524, %v281, %v478
    %v578 = vsel %vm524, %v288, %v479
    %v579 = vsel %vm524, %v295, %v480
    %v580 = vsel %vm524, %v302, %v481
    %v581 = vsel %vm524, %v309, %v482
    %v582 = vsel %vm524, %v316, %v483
    %v583 = vsel %vm524, %v323, %v484
    %v584 = vsel %vm524, %v330, %v485
    %v585 = vsel %vm524, %v337, %v486
    %v586 = vsel %vm524, %v344, %v487
    %v587 = vsel %vm524, %v351, %v488
    %v588 = vsel %vm524, %v358, %v489
    %vm589 = vsmask.f32 7424
    %v591 = vshrl.u32 %v525, 16
    %v593 = vshll.u32 %v525, 16
    %v595 = vrot.slane %v593, 1
    %v596 = vor.u32 %v591, %v595
    %v598 = vshll.u32 %v557, 16
    %v600 = vrot.slane %v598, 1
    %v601 = vsel %vm589, %v596, %v600
    %v603 = vshrl.u32 %v526, 16
    %v605 = vshll.u32 %v526, 16
    %v607 = vrot.slane %v605, 1
    %v608 = vor.u32 %v603, %v607
    %v610 = vshll.u32 %v558, 16
    %v612 = vrot.slane %v610, 1
    %v613 = vsel %vm589, %v608, %v612
    %v615 = vshrl.u32 %v527, 16
    %v617 = vshll.u32 %v527, 16
    %v619 = vrot.slane %v617, 1
    %v620 = vor.u32 %v615, %v619
    %v622 = vshll.u32 %v559, 16
    %v624 = vrot.slane %v622, 1
    %v625 = vsel %vm589, %v620, %v624
    %v627 = vshrl.u32 %v528, 16
    %v629 = vshll.u32 %v528, 16
    %v631 = vrot.slane %v629, 1
    %v632 = vor.u32 %v627, %v631
    %v634 = vshll.u32 %v560, 16
    %v636 = vrot.slane %v634, 1
    %v637 = vsel %vm589, %v632, %v636
    %v639 = vshrl.u32 %v529, 16
    %v641 = vshll.u32 %v529, 16
    %v643 = vrot.slane %v641, 1
    %v644 = vor.u32 %v639, %v643
    %v646 = vshll.u32 %v561, 16
    %v648 = vrot.slane %v646, 1
    %v649 = vsel %vm589, %v644, %v648
    %v651 = vshrl.u32 %v530, 16
    %v653 = vshll.u32 %v530, 16
    %v655 = vrot.slane %v653, 1
    %v656 = vor.u32 %v651, %v655
    %v658 = vshll.u32 %v562, 16
    %v660 = vrot.slane %v658, 1
    %v661 = vsel %vm589, %v656, %v660
    %v663 = vshrl.u32 %v531, 16
    %v665 = vshll.u32 %v531, 16
    %v667 = vrot.slane %v665, 1
    %v668 = vor.u32 %v663, %v667
    %v670 = vshll.u32 %v563, 16
    %v672 = vrot.slane %v670, 1
    %v673 = vsel %vm589, %v668, %v672
    %v675 = vshrl.u32 %v532, 16
    %v677 = vshll.u32 %v532, 16
    %v679 = vrot.slane %v677, 1
    %v680 = vor.u32 %v675, %v679
    %v682 = vshll.u32 %v564, 16
    %v684 = vrot.slane %v682, 1
    %v685 = vsel %vm589, %v680, %v684
    %v687 = vshrl.u32 %v533, 16
    %v689 = vshll.u32 %v533, 16
    %v691 = vrot.slane %v689, 1
    %v692 = vor.u32 %v687, %v691
    %v694 = vshll.u32 %v565, 16
    %v696 = vrot.slane %v694, 1
    %v697 = vsel %vm589, %v692, %v696
    %v699 = vshrl.u32 %v534, 16
    %v701 = vshll.u32 %v534, 16
    %v703 = vrot.slane %v701, 1
    %v704 = vor.u32 %v699, %v703
    %v706 = vshll.u32 %v566, 16
    %v708 = vrot.slane %v706, 1
    %v709 = vsel %vm589, %v704, %v708
    %v711 = vshrl.u32 %v535, 16
    %v713 = vshll.u32 %v535, 16
    %v715 = vrot.slane %v713, 1
    %v716 = vor.u32 %v711, %v715
    %v718 = vshll.u32 %v567, 16
    %v720 = vrot.slane %v718, 1
    %v721 = vsel %vm589, %v716, %v720
    %v723 = vshrl.u32 %v536, 16
    %v725 = vshll.u32 %v536, 16
    %v727 = vrot.slane %v725, 1
    %v728 = vor.u32 %v723, %v727
    %v730 = vshll.u32 %v568, 16
    %v732 = vrot.slane %v730, 1
    %v733 = vsel %vm589, %v728, %v732
    %v735 = vshrl.u32 %v537, 16
    %v737 = vshll.u32 %v537, 16
    %v739 = vrot.slane %v737, 1
    %v740 = vor.u32 %v735, %v739
    %v742 = vshll.u32 %v569, 16
    %v744 = vrot.slane %v742, 1
    %v745 = vsel %vm589, %v740, %v744
    %v747 = vshrl.u32 %v538, 16
    %v749 = vshll.u32 %v538, 16
    %v751 = vrot.slane %v749, 1
    %v752 = vor.u32 %v747, %v751
    %v754 = vshll.u32 %v570, 16
    %v756 = vrot.slane %v754, 1
    %v757 = vsel %vm589, %v752, %v756
    %v759 = vshrl.u32 %v539, 16
    %v761 = vshll.u32 %v539, 16
    %v763 = vrot.slane %v761, 1
    %v764 = vor.u32 %v759, %v763
    %v766 = vshll.u32 %v571, 16
    %v768 = vrot.slane %v766, 1
    %v769 = vsel %vm589, %v764, %v768
    %v771 = vshrl.u32 %v541, 16
    %v773 = vshll.u32 %v541, 16
    %v775 = vrot.slane %v773, 1
    %v776 = vor.u32 %v771, %v775
    %v778 = vshll.u32 %v573, 16
    %v780 = vrot.slane %v778, 1
    %v781 = vsel %vm589, %v776, %v780
    %v783 = vshrl.u32 %v542, 16
    %v785 = vshll.u32 %v542, 16
    %v787 = vrot.slane %v785, 1
    %v788 = vor.u32 %v783, %v787
    %v790 = vshll.u32 %v574, 16
    %v792 = vrot.slane %v790, 1
    %v793 = vsel %vm589, %v788, %v792
    %v795 = vshrl.u32 %v543, 16
    %v797 = vshll.u32 %v543, 16
    %v799 = vrot.slane %v797, 1
    %v800 = vor.u32 %v795, %v799
    %v802 = vshll.u32 %v575, 16
    %v804 = vrot.slane %v802, 1
    %v805 = vsel %vm589, %v800, %v804
    %v807 = vshrl.u32 %v544, 16
    %v809 = vshll.u32 %v544, 16
    %v811 = vrot.slane %v809, 1
    %v812 = vor.u32 %v807, %v811
    %v814 = vshll.u32 %v576, 16
    %v816 = vrot.slane %v814, 1
    %v817 = vsel %vm589, %v812, %v816
    %v819 = vshrl.u32 %v545, 16
    %v821 = vshll.u32 %v545, 16
    %v823 = vrot.slane %v821, 1
    %v824 = vor.u32 %v819, %v823
    %v826 = vshll.u32 %v577, 16
    %v828 = vrot.slane %v826, 1
    %v829 = vsel %vm589, %v824, %v828
    %v831 = vshrl.u32 %v546, 16
    %v833 = vshll.u32 %v546, 16
    %v835 = vrot.slane %v833, 1
    %v836 = vor.u32 %v831, %v835
    %v838 = vshll.u32 %v578, 16
    %v840 = vrot.slane %v838, 1
    %v841 = vsel %vm589, %v836, %v840
    %v843 = vshrl.u32 %v547, 16
    %v845 = vshll.u32 %v547, 16
    %v847 = vrot.slane %v845, 1
    %v848 = vor.u32 %v843, %v847
    %v850 = vshll.u32 %v579, 16
    %v852 = vrot.slane %v850, 1
    %v853 = vsel %vm589, %v848, %v852
    %v855 = vshrl.u32 %v548, 16
    %v857 = vshll.u32 %v548, 16
    %v859 = vrot.slane %v857, 1
    %v860 = vor.u32 %v855, %v859
    %v862 = vshll.u32 %v580, 16
    %v864 = vrot.slane %v862, 1
    %v865 = vsel %vm589, %v860, %v864
    %v867 = vshrl.u32 %v549, 16
    %v869 = vshll.u32 %v549, 16
    %v871 = vrot.slane %v869, 1
    %v872 = vor.u32 %v867, %v871
    %v874 = vshll.u32 %v581, 16
    %v876 = vrot.slane %v874, 1
    %v877 = vsel %vm589, %v872, %v876
    %v879 = vshrl.u32 %v550, 16
    %v881 = vshll.u32 %v550, 16
    %v883 = vrot.slane %v881, 1
    %v884 = vor.u32 %v879, %v883
    %v886 = vshll.u32 %v582, 16
    %v888 = vrot.slane %v886, 1
    %v889 = vsel %vm589, %v884, %v888
    %v891 = vshrl.u32 %v551, 16
    %v893 = vshll.u32 %v551, 16
    %v895 = vrot.slane %v893, 1
    %v896 = vor.u32 %v891, %v895
    %v898 = vshll.u32 %v583, 16
    %v900 = vrot.slane %v898, 1
    %v901 = vsel %vm589, %v896, %v900
    %v903 = vshrl.u32 %v552, 16
    %v905 = vshll.u32 %v552, 16
    %v907 = vrot.slane %v905, 1
    %v908 = vor.u32 %v903, %v907
    %v910 = vshll.u32 %v584, 16
    %v912 = vrot.slane %v910, 1
    %v913 = vsel %vm589, %v908, %v912
    %v915 = vshrl.u32 %v553, 16
    %v917 = vshll.u32 %v553, 16
    %v919 = vrot.slane %v917, 1
    %v920 = vor.u32 %v915, %v919
    %v922 = vshll.u32 %v585, 16
    %v924 = vrot.slane %v922, 1
    %v925 = vsel %vm589, %v920, %v924
    %v927 = vshrl.u32 %v554, 16
    %v929 = vshll.u32 %v554, 16
    %v931 = vrot.slane %v929, 1
    %v932 = vor.u32 %v927, %v931
    %v934 = vshll.u32 %v586, 16
    %v936 = vrot.slane %v934, 1
    %v937 = vsel %vm589, %v932, %v936
    %v939 = vshrl.u32 %v555, 16
    %v941 = vshll.u32 %v555, 16
    %v943 = vrot.slane %v941, 1
    %v944 = vor.u32 %v939, %v943
    %v946 = vshll.u32 %v587, 16
    %v948 = vrot.slane %v946, 1
    %v949 = vsel %vm589, %v944, %v948
    %vm1010 = vcmask 1046528
    %v1011 = vrot.slane %v525, 1
    %v1012 = vrot.slane %v557, 1
    %v1013 = vsel %vm1010, %v1011, %v1012
    %v1014 = vrot.slane %v526, 1
    %v1015 = vrot.slane %v558, 1
    %v1016 = vsel %vm1010, %v1014, %v1015
    %v1017 = vrot.slane %v527, 1
    %v1018 = vrot.slane %v559, 1
    %v1019 = vsel %vm1010, %v1017, %v1018
    %v1020 = vrot.slane %v528, 1
    %v1021 = vrot.slane %v560, 1
    %v1022 = vsel %vm1010, %v1020, %v1021
    %v1023 = vrot.slane %v529, 1
    %v1024 = vrot.slane %v561, 1
    %v1025 = vsel %vm1010, %v1023, %v1024
    %v1026 = vrot.slane %v530, 1
    %v1027 = vrot.slane %v562, 1
    %v1028 = vsel %vm1010, %v1026, %v1027
    %v1029 = vrot.slane %v531, 1
    %v1030 = vrot.slane %v563, 1
    %v1031 = vsel %vm1010, %v1029, %v1030
    %v1032 = vrot.slane %v532, 1
    %v1033 = vrot.slane %v564, 1
    %v1034 = vsel %vm1010, %v1032, %v1033
    %v1035 = vrot.slane %v533, 1
    %v1036 = vrot.slane %v565, 1
    %v1037 = vsel %vm1010, %v1035, %v1036
    %v1038 = vrot.slane %v534, 1
    %v1039 = vrot.slane %v566, 1
    %v1040 = vsel %vm1010, %v1038, %v1039
    %v1041 = vrot.slane %v535, 1
    %v1042 = vrot.slane %v567, 1
    %v1043 = vsel %vm1010, %v1041, %v1042
    %v1044 = vrot.slane %v536, 1
    %v1045 = vrot.slane %v568, 1
    %v1046 = vsel %vm1010, %v1044, %v1045
    %v1047 = vrot.slane %v537, 1
    %v1048 = vrot.slane %v569, 1
    %v1049 = vsel %vm1010, %v1047, %v1048
    %v1050 = vrot.slane %v538, 1
    %v1051 = vrot.slane %v570, 1
    %v1052 = vsel %vm1010, %v1050, %v1051
    %v1053 = vrot.slane %v539, 1
    %v1054 = vrot.slane %v571, 1
    %v1055 = vsel %vm1010, %v1053, %v1054
    %v1056 = vrot.slane %v541, 1
    %v1057 = vrot.slane %v573, 1
    %v1058 = vsel %vm1010, %v1056, %v1057
    %v1059 = vrot.slane %v542, 1
    %v1060 = vrot.slane %v574, 1
    %v1061 = vsel %vm1010, %v1059, %v1060
    %v1062 = vrot.slane %v543, 1
    %v1063 = vrot.slane %v575, 1
    %v1064 = vsel %vm1010, %v1062, %v1063
    %v1065 = vrot.slane %v544, 1
    %v1066 = vrot.slane %v576, 1
    %v1067 = vsel %vm1010, %v1065, %v1066
    %v1068 = vrot.slane %v545, 1
    %v1069 = vrot.slane %v577, 1
    %v1070 = vsel %vm1010, %v1068, %v1069
    %v1071 = vrot.slane %v546, 1
    %v1072 = vrot.slane %v578, 1
    %v1073 = vsel %vm1010, %v1071, %v1072
    %v1074 = vrot.slane %v547, 1
    %v1075 = vrot.slane %v579, 1
    %v1076 = vsel %vm1010, %v1074, %v1075
    %v1077 = vrot.slane %v548, 1
    %v1078 = vrot.slane %v580, 1
    %v1079 = vsel %vm1010, %v1077, %v1078
    %v1080 = vrot.slane %v549, 1
    %v1081 = vrot.slane %v581, 1
    %v1082 = vsel %vm1010, %v1080, %v1081
    %v1083 = vrot.slane %v550, 1
    %v1084 = vrot.slane %v582, 1
    %v1085 = vsel %vm1010, %v1083, %v1084
    %v1086 = vrot.slane %v551, 1
    %v1087 = vrot.slane %v583, 1
    %v1088 = vsel %vm1010, %v1086, %v1087
    %v1089 = vrot.slane %v552, 1
    %v1090 = vrot.slane %v584, 1
    %v1091 = vsel %vm1010, %v1089, %v1090
    %v1092 = vrot.slane %v553, 1
    %v1093 = vrot.slane %v585, 1
    %v1094 = vsel %vm1010, %v1092, %v1093
    %v1095 = vrot.slane %v554, 1
    %v1096 = vrot.slane %v586, 1
    %v1097 = vsel %vm1010, %v1095, %v1096
    %v1098 = vrot.slane %v555, 1
    %v1099 = vrot.slane %v587, 1
    %v1100 = vsel %vm1010, %v1098, %v1099
    %v1102 = vshrl.u32 %v540, 16
    %v1104 = vshll.u32 %v540, 16
    %v1106 = vrot.slane %v1104, 1
    %v1107 = vor.u32 %v1102, %v1106
    %v1109 = vshll.u32 %v572, 16
    %v1111 = vrot.slane %v1109, 1
    %v1112 = vsel %vm589, %v1107, %v1111
    %v1114 = vshrl.u32 %v556, 16
    %v1116 = vshll.u32 %v556, 16
    %v1118 = vrot.slane %v1116, 1
    %v1119 = vor.u32 %v1114, %v1118
    %v1121 = vshll.u32 %v588, 16
    %v1123 = vrot.slane %v1121, 1
    %v1124 = vsel %vm589, %v1119, %v1123
    %v1129 = vrot.slane %v540, 1
    %v1130 = vrot.slane %v572, 1
    %v1131 = vsel %vm1010, %v1129, %v1130
    %v1132 = vrot.slane %v556, 1
    %v1133 = vrot.slane %v588, 1
    %v1134 = vsel %vm1010, %v1132, %v1133
    %1135 = vrot.lane.b32.xlu0 %v601, 4
    %v1136 = vpop.permute.xlu0 %1135
    %1137 = vrot.lane.b32.xlu0 %v613, 4
    %v1138 = vpop.permute.xlu0 %1137
    %1139 = vrot.lane.b32.xlu0 %v625, 4
    %v1140 = vpop.permute.xlu0 %1139
    %1141 = vrot.lane.b32.xlu0 %v637, 4
    %v1142 = vpop.permute.xlu0 %1141
    %1143 = vrot.lane.b32.xlu0 %v649, 4
    %v1144 = vpop.permute.xlu0 %1143
    %1145 = vrot.lane.b32.xlu0 %v661, 4
    %v1146 = vpop.permute.xlu0 %1145
    %1147 = vrot.lane.b32.xlu0 %v673, 4
    %v1148 = vpop.permute.xlu0 %1147
    %1149 = vrot.lane.b32.xlu0 %v685, 4
    %v1150 = vpop.permute.xlu0 %1149
    %1151 = vrot.lane.b32.xlu0 %v697, 4
    %v1152 = vpop.permute.xlu0 %1151
    %1153 = vrot.lane.b32.xlu0 %v709, 4
    %v1154 = vpop.permute.xlu0 %1153
    %1155 = vrot.lane.b32.xlu0 %v721, 4
    %v1156 = vpop.permute.xlu0 %1155
    %1157 = vrot.lane.b32.xlu0 %v733, 4
    %v1158 = vpop.permute.xlu0 %1157
    %1159 = vrot.lane.b32.xlu0 %v745, 4
    %v1160 = vpop.permute.xlu0 %1159
    %1161 = vrot.lane.b32.xlu0 %v757, 4
    %v1162 = vpop.permute.xlu0 %1161
    %1163 = vrot.lane.b32.xlu0 %v769, 4
    %v1164 = vpop.permute.xlu0 %1163
    %1165 = vrot.lane.b32.xlu0 %v781, 4
    %v1166 = vpop.permute.xlu0 %1165
    %1167 = vrot.lane.b32.xlu0 %v793, 4
    %v1168 = vpop.permute.xlu0 %1167
    %1169 = vrot.lane.b32.xlu0 %v805, 4
    %v1170 = vpop.permute.xlu0 %1169
    %1171 = vrot.lane.b32.xlu0 %v817, 4
    %v1172 = vpop.permute.xlu0 %1171
    %1173 = vrot.lane.b32.xlu0 %v829, 4
    %v1174 = vpop.permute.xlu0 %1173
    %1175 = vrot.lane.b32.xlu0 %v841, 4
    %v1176 = vpop.permute.xlu0 %1175
    %1177 = vrot.lane.b32.xlu0 %v853, 4
    %v1178 = vpop.permute.xlu0 %1177
    %1179 = vrot.lane.b32.xlu0 %v865, 4
    %v1180 = vpop.permute.xlu0 %1179
    %1181 = vrot.lane.b32.xlu0 %v877, 4
    %v1182 = vpop.permute.xlu0 %1181
    %1183 = vrot.lane.b32.xlu0 %v889, 4
    %v1184 = vpop.permute.xlu0 %1183
    %1185 = vrot.lane.b32.xlu0 %v901, 4
    %v1186 = vpop.permute.xlu0 %1185
    %1187 = vrot.lane.b32.xlu0 %v913, 4
    %v1188 = vpop.permute.xlu0 %1187
    %1189 = vrot.lane.b32.xlu0 %v925, 4
    %v1190 = vpop.permute.xlu0 %1189
    %1191 = vrot.lane.b32.xlu0 %v937, 4
    %v1192 = vpop.permute.xlu0 %1191
    %1193 = vrot.lane.b32.xlu0 %v949, 4
    %v1194 = vpop.permute.xlu0 %1193
    %1195 = vrot.lane.b32.xlu0 %v1013, 8
    %v1196 = vpop.permute.xlu0 %1195
    %1197 = vrot.lane.b32.xlu0 %v1016, 8
    %v1198 = vpop.permute.xlu0 %1197
    %1199 = vrot.lane.b32.xlu0 %v1019, 8
    %v1200 = vpop.permute.xlu0 %1199
    %1201 = vrot.lane.b32.xlu0 %v1022, 8
    %v1202 = vpop.permute.xlu0 %1201
    %1203 = vrot.lane.b32.xlu0 %v1025, 8
    %v1204 = vpop.permute.xlu0 %1203
    %1205 = vrot.lane.b32.xlu0 %v1028, 8
    %v1206 = vpop.permute.xlu0 %1205
    %1207 = vrot.lane.b32.xlu0 %v1031, 8
    %v1208 = vpop.permute.xlu0 %1207
    %1209 = vrot.lane.b32.xlu0 %v1034, 8
    %v1210 = vpop.permute.xlu0 %1209
    %1211 = vrot.lane.b32.xlu0 %v1037, 8
    %v1212 = vpop.permute.xlu0 %1211
    %1213 = vrot.lane.b32.xlu0 %v1040, 8
    %v1214 = vpop.permute.xlu0 %1213
    %1215 = vrot.lane.b32.xlu0 %v1043, 8
    %v1216 = vpop.permute.xlu0 %1215
    %1217 = vrot.lane.b32.xlu0 %v1046, 8
    %v1218 = vpop.permute.xlu0 %1217
    %1219 = vrot.lane.b32.xlu0 %v1049, 8
    %v1220 = vpop.permute.xlu0 %1219
    %1221 = vrot.lane.b32.xlu0 %v1052, 8
    %v1222 = vpop.permute.xlu0 %1221
    %1223 = vrot.lane.b32.xlu0 %v1055, 8
    %v1224 = vpop.permute.xlu0 %1223
    %1225 = vrot.lane.b32.xlu0 %v1058, 8
    %v1226 = vpop.permute.xlu0 %1225
    %1227 = vrot.lane.b32.xlu0 %v1061, 8
    %v1228 = vpop.permute.xlu0 %1227
    %1229 = vrot.lane.b32.xlu0 %v1064, 8
    %v1230 = vpop.permute.xlu0 %1229
    %1231 = vrot.lane.b32.xlu0 %v1067, 8
    %v1232 = vpop.permute.xlu0 %1231
    %1233 = vrot.lane.b32.xlu0 %v1070, 8
    %v1234 = vpop.permute.xlu0 %1233
    %1235 = vrot.lane.b32.xlu0 %v1073, 8
    %v1236 = vpop.permute.xlu0 %1235
    %1237 = vrot.lane.b32.xlu0 %v1076, 8
    %v1238 = vpop.permute.xlu0 %1237
    %1239 = vrot.lane.b32.xlu0 %v1079, 8
    %v1240 = vpop.permute.xlu0 %1239
    %1241 = vrot.lane.b32.xlu0 %v1082, 8
    %v1242 = vpop.permute.xlu0 %1241
    %1243 = vrot.lane.b32.xlu0 %v1085, 8
    %v1244 = vpop.permute.xlu0 %1243
    %1245 = vrot.lane.b32.xlu0 %v1088, 8
    %v1246 = vpop.permute.xlu0 %1245
    %1247 = vrot.lane.b32.xlu0 %v1091, 8
    %v1248 = vpop.permute.xlu0 %1247
    %1249 = vrot.lane.b32.xlu0 %v1094, 8
    %v1250 = vpop.permute.xlu0 %1249
    %1251 = vrot.lane.b32.xlu0 %v1097, 8
    %v1252 = vpop.permute.xlu0 %1251
    %1253 = vrot.lane.b32.xlu0 %v1100, 8
    %v1254 = vpop.permute.xlu0 %1253
    %1255 = vrot.lane.b32.xlu0 %v525, 12
    %v1256 = vpop.permute.xlu0 %1255
    %1257 = vrot.lane.b32.xlu0 %v526, 12
    %v1258 = vpop.permute.xlu0 %1257
    %1259 = vrot.lane.b32.xlu0 %v527, 12
    %v1260 = vpop.permute.xlu0 %1259
    %1261 = vrot.lane.b32.xlu0 %v528, 12
    %v1262 = vpop.permute.xlu0 %1261
    %1263 = vrot.lane.b32.xlu0 %v529, 12
    %v1264 = vpop.permute.xlu0 %1263
    %1265 = vrot.lane.b32.xlu0 %v530, 12
    %v1266 = vpop.permute.xlu0 %1265
    %1267 = vrot.lane.b32.xlu0 %v531, 12
    %v1268 = vpop.permute.xlu0 %1267
    %1269 = vrot.lane.b32.xlu0 %v532, 12
    %v1270 = vpop.permute.xlu0 %1269
    %1271 = vrot.lane.b32.xlu0 %v533, 12
    %v1272 = vpop.permute.xlu0 %1271
    %1273 = vrot.lane.b32.xlu0 %v534, 12
    %v1274 = vpop.permute.xlu0 %1273
    %1275 = vrot.lane.b32.xlu0 %v535, 12
    %v1276 = vpop.permute.xlu0 %1275
    %1277 = vrot.lane.b32.xlu0 %v536, 12
    %v1278 = vpop.permute.xlu0 %1277
    %1279 = vrot.lane.b32.xlu0 %v537, 12
    %v1280 = vpop.permute.xlu0 %1279
    %1281 = vrot.lane.b32.xlu0 %v538, 12
    %v1282 = vpop.permute.xlu0 %1281
    %1283 = vrot.lane.b32.xlu0 %v539, 12
    %v1284 = vpop.permute.xlu0 %1283
    %1285 = vrot.lane.b32.xlu0 %v540, 12
    %v1286 = vpop.permute.xlu0 %1285
    %1287 = vrot.lane.b32.xlu0 %v541, 12
    %v1288 = vpop.permute.xlu0 %1287
    %1289 = vrot.lane.b32.xlu0 %v542, 12
    %v1290 = vpop.permute.xlu0 %1289
    %1291 = vrot.lane.b32.xlu0 %v543, 12
    %v1292 = vpop.permute.xlu0 %1291
    %1293 = vrot.lane.b32.xlu0 %v544, 12
    %v1294 = vpop.permute.xlu0 %1293
    %1295 = vrot.lane.b32.xlu0 %v545, 12
    %v1296 = vpop.permute.xlu0 %1295
    %1297 = vrot.lane.b32.xlu0 %v546, 12
    %v1298 = vpop.permute.xlu0 %1297
    %1299 = vrot.lane.b32.xlu0 %v547, 12
    %v1300 = vpop.permute.xlu0 %1299
    %1301 = vrot.lane.b32.xlu0 %v548, 12
    %v1302 = vpop.permute.xlu0 %1301
    %1303 = vrot.lane.b32.xlu0 %v549, 12
    %v1304 = vpop.permute.xlu0 %1303
    %1305 = vrot.lane.b32.xlu0 %v550, 12
    %v1306 = vpop.permute.xlu0 %1305
    %1307 = vrot.lane.b32.xlu0 %v551, 12
    %v1308 = vpop.permute.xlu0 %1307
    %1309 = vrot.lane.b32.xlu0 %v552, 12
    %v1310 = vpop.permute.xlu0 %1309
    %1311 = vrot.lane.b32.xlu0 %v553, 12
    %v1312 = vpop.permute.xlu0 %1311
    %1313 = vrot.lane.b32.xlu0 %v554, 12
    %v1314 = vpop.permute.xlu0 %1313
    %1315 = vrot.lane.b32.xlu0 %v555, 12
    %v1316 = vpop.permute.xlu0 %1315
    %1317 = vrot.lane.b32.xlu0 %v556, 12
    %v1318 = vpop.permute.xlu0 %1317
    %1319 = vrot.lane.b32.xlu0 %v601, 16
    %v1320 = vpop.permute.xlu0 %1319
    %1321 = vrot.lane.b32.xlu0 %v613, 16
    %v1322 = vpop.permute.xlu0 %1321
    %1323 = vrot.lane.b32.xlu0 %v625, 16
    %v1324 = vpop.permute.xlu0 %1323
    %1325 = vrot.lane.b32.xlu0 %v637, 16
    %v1326 = vpop.permute.xlu0 %1325
    %1327 = vrot.lane.b32.xlu0 %v649, 16
    %v1328 = vpop.permute.xlu0 %1327
    %1329 = vrot.lane.b32.xlu0 %v661, 16
    %v1330 = vpop.permute.xlu0 %1329
    %1331 = vrot.lane.b32.xlu0 %v673, 16
    %v1332 = vpop.permute.xlu0 %1331
    %1333 = vrot.lane.b32.xlu0 %v685, 16
    %v1334 = vpop.permute.xlu0 %1333
    %1335 = vrot.lane.b32.xlu0 %v697, 16
    %v1336 = vpop.permute.xlu0 %1335
    %1337 = vrot.lane.b32.xlu0 %v709, 16
    %v1338 = vpop.permute.xlu0 %1337
    %1339 = vrot.lane.b32.xlu0 %v721, 16
    %v1340 = vpop.permute.xlu0 %1339
    %1341 = vrot.lane.b32.xlu0 %v733, 16
    %v1342 = vpop.permute.xlu0 %1341
    %1343 = vrot.lane.b32.xlu0 %v745, 16
    %v1344 = vpop.permute.xlu0 %1343
    %1345 = vrot.lane.b32.xlu0 %v757, 16
    %v1346 = vpop.permute.xlu0 %1345
    %1347 = vrot.lane.b32.xlu0 %v769, 16
    %v1348 = vpop.permute.xlu0 %1347
    %1349 = vrot.lane.b32.xlu0 %v1112, 16
    %v1350 = vpop.permute.xlu0 %1349
    %1351 = vrot.lane.b32.xlu0 %v781, 16
    %v1352 = vpop.permute.xlu0 %1351
    %1353 = vrot.lane.b32.xlu0 %v793, 16
    %v1354 = vpop.permute.xlu0 %1353
    %1355 = vrot.lane.b32.xlu0 %v805, 16
    %v1356 = vpop.permute.xlu0 %1355
    %1357 = vrot.lane.b32.xlu0 %v817, 16
    %v1358 = vpop.permute.xlu0 %1357
    %1359 = vrot.lane.b32.xlu0 %v829, 16
    %v1360 = vpop.permute.xlu0 %1359
    %1361 = vrot.lane.b32.xlu0 %v841, 16
    %v1362 = vpop.permute.xlu0 %1361
    %1363 = vrot.lane.b32.xlu0 %v853, 16
    %v1364 = vpop.permute.xlu0 %1363
    %1365 = vrot.lane.b32.xlu0 %v865, 16
    %v1366 = vpop.permute.xlu0 %1365
    %1367 = vrot.lane.b32.xlu0 %v877, 16
    %v1368 = vpop.permute.xlu0 %1367
    %1369 = vrot.lane.b32.xlu0 %v889, 16
    %v1370 = vpop.permute.xlu0 %1369
    %1371 = vrot.lane.b32.xlu0 %v901, 16
    %v1372 = vpop.permute.xlu0 %1371
    %1373 = vrot.lane.b32.xlu0 %v913, 16
    %v1374 = vpop.permute.xlu0 %1373
    %1375 = vrot.lane.b32.xlu0 %v925, 16
    %v1376 = vpop.permute.xlu0 %1375
    %1377 = vrot.lane.b32.xlu0 %v937, 16
    %v1378 = vpop.permute.xlu0 %1377
    %1379 = vrot.lane.b32.xlu0 %v949, 16
    %v1380 = vpop.permute.xlu0 %1379
    %1381 = vrot.lane.b32.xlu0 %v1124, 16
    %v1382 = vpop.permute.xlu0 %1381
    %1383 = vrot.lane.b32.xlu0 %v1013, 20
    %v1384 = vpop.permute.xlu0 %1383
    %1385 = vrot.lane.b32.xlu0 %v1016, 20
    %v1386 = vpop.permute.xlu0 %1385
    %1387 = vrot.lane.b32.xlu0 %v1019, 20
    %v1388 = vpop.permute.xlu0 %1387
    %1389 = vrot.lane.b32.xlu0 %v1022, 20
    %v1390 = vpop.permute.xlu0 %1389
    %1391 = vrot.lane.b32.xlu0 %v1025, 20
    %v1392 = vpop.permute.xlu0 %1391
    %1393 = vrot.lane.b32.xlu0 %v1028, 20
    %v1394 = vpop.permute.xlu0 %1393
    %1395 = vrot.lane.b32.xlu0 %v1031, 20
    %v1396 = vpop.permute.xlu0 %1395
    %1397 = vrot.lane.b32.xlu0 %v1034, 20
    %v1398 = vpop.permute.xlu0 %1397
    %1399 = vrot.lane.b32.xlu0 %v1037, 20
    %v1400 = vpop.permute.xlu0 %1399
    %1401 = vrot.lane.b32.xlu0 %v1040, 20
    %v1402 = vpop.permute.xlu0 %1401
    %1403 = vrot.lane.b32.xlu0 %v1043, 20
    %v1404 = vpop.permute.xlu0 %1403
    %1405 = vrot.lane.b32.xlu0 %v1046, 20
    %v1406 = vpop.permute.xlu0 %1405
    %1407 = vrot.lane.b32.xlu0 %v1049, 20
    %v1408 = vpop.permute.xlu0 %1407
    %1409 = vrot.lane.b32.xlu0 %v1052, 20
    %v1410 = vpop.permute.xlu0 %1409
    %1411 = vrot.lane.b32.xlu0 %v1055, 20
    %v1412 = vpop.permute.xlu0 %1411
    %1413 = vrot.lane.b32.xlu0 %v1131, 20
    %v1414 = vpop.permute.xlu0 %1413
    %1415 = vrot.lane.b32.xlu0 %v1058, 20
    %v1416 = vpop.permute.xlu0 %1415
    %1417 = vrot.lane.b32.xlu0 %v1061, 20
    %v1418 = vpop.permute.xlu0 %1417
    %1419 = vrot.lane.b32.xlu0 %v1064, 20
    %v1420 = vpop.permute.xlu0 %1419
    %1421 = vrot.lane.b32.xlu0 %v1067, 20
    %v1422 = vpop.permute.xlu0 %1421
    %1423 = vrot.lane.b32.xlu0 %v1070, 20
    %v1424 = vpop.permute.xlu0 %1423
    %1425 = vrot.lane.b32.xlu0 %v1073, 20
    %v1426 = vpop.permute.xlu0 %1425
    %1427 = vrot.lane.b32.xlu0 %v1076, 20
    %v1428 = vpop.permute.xlu0 %1427
    %1429 = vrot.lane.b32.xlu0 %v1079, 20
    %v1430 = vpop.permute.xlu0 %1429
    %1431 = vrot.lane.b32.xlu0 %v1082, 20
    %v1432 = vpop.permute.xlu0 %1431
    %1433 = vrot.lane.b32.xlu0 %v1085, 20
    %v1434 = vpop.permute.xlu0 %1433
    %1435 = vrot.lane.b32.xlu0 %v1088, 20
    %v1436 = vpop.permute.xlu0 %1435
    %1437 = vrot.lane.b32.xlu0 %v1091, 20
    %v1438 = vpop.permute.xlu0 %1437
    %1439 = vrot.lane.b32.xlu0 %v1094, 20
    %v1440 = vpop.permute.xlu0 %1439
    %1441 = vrot.lane.b32.xlu0 %v1097, 20
    %v1442 = vpop.permute.xlu0 %1441
    %1443 = vrot.lane.b32.xlu0 %v1100, 20
    %v1444 = vpop.permute.xlu0 %1443
    %1445 = vrot.lane.b32.xlu0 %v1134, 20
    %v1446 = vpop.permute.xlu0 %1445
    %1447 = vrot.lane.b32.xlu0 %v526, 24
    %v1448 = vpop.permute.xlu0 %1447
    %1449 = vrot.lane.b32.xlu0 %v527, 24
    %v1450 = vpop.permute.xlu0 %1449
    %1451 = vrot.lane.b32.xlu0 %v528, 24
    %v1452 = vpop.permute.xlu0 %1451
    %1453 = vrot.lane.b32.xlu0 %v529, 24
    %v1454 = vpop.permute.xlu0 %1453
    %1455 = vrot.lane.b32.xlu0 %v530, 24
    %v1456 = vpop.permute.xlu0 %1455
    %1457 = vrot.lane.b32.xlu0 %v531, 24
    %v1458 = vpop.permute.xlu0 %1457
    %1459 = vrot.lane.b32.xlu0 %v532, 24
    %v1460 = vpop.permute.xlu0 %1459
    %1461 = vrot.lane.b32.xlu0 %v533, 24
    %v1462 = vpop.permute.xlu0 %1461
    %1463 = vrot.lane.b32.xlu0 %v534, 24
    %v1464 = vpop.permute.xlu0 %1463
    %1465 = vrot.lane.b32.xlu0 %v535, 24
    %v1466 = vpop.permute.xlu0 %1465
    %1467 = vrot.lane.b32.xlu0 %v536, 24
    %v1468 = vpop.permute.xlu0 %1467
    %1469 = vrot.lane.b32.xlu0 %v537, 24
    %v1470 = vpop.permute.xlu0 %1469
    %1471 = vrot.lane.b32.xlu0 %v538, 24
    %v1472 = vpop.permute.xlu0 %1471
    %1473 = vrot.lane.b32.xlu0 %v539, 24
    %v1474 = vpop.permute.xlu0 %1473
    %1475 = vrot.lane.b32.xlu0 %v540, 24
    %v1476 = vpop.permute.xlu0 %1475
    %1477 = vrot.lane.b32.xlu0 %v542, 24
    %v1478 = vpop.permute.xlu0 %1477
    %1479 = vrot.lane.b32.xlu0 %v543, 24
    %v1480 = vpop.permute.xlu0 %1479
    %1481 = vrot.lane.b32.xlu0 %v544, 24
    %v1482 = vpop.permute.xlu0 %1481
    %1483 = vrot.lane.b32.xlu0 %v545, 24
    %v1484 = vpop.permute.xlu0 %1483
    %1485 = vrot.lane.b32.xlu0 %v546, 24
    %v1486 = vpop.permute.xlu0 %1485
    %1487 = vrot.lane.b32.xlu0 %v547, 24
    %v1488 = vpop.permute.xlu0 %1487
    %1489 = vrot.lane.b32.xlu0 %v548, 24
    %v1490 = vpop.permute.xlu0 %1489
    %1491 = vrot.lane.b32.xlu0 %v549, 24
    %v1492 = vpop.permute.xlu0 %1491
    %1493 = vrot.lane.b32.xlu0 %v550, 24
    %v1494 = vpop.permute.xlu0 %1493
    %1495 = vrot.lane.b32.xlu0 %v551, 24
    %v1496 = vpop.permute.xlu0 %1495
    %1497 = vrot.lane.b32.xlu0 %v552, 24
    %v1498 = vpop.permute.xlu0 %1497
    %1499 = vrot.lane.b32.xlu0 %v553, 24
    %v1500 = vpop.permute.xlu0 %1499
    %1501 = vrot.lane.b32.xlu0 %v554, 24
    %v1502 = vpop.permute.xlu0 %1501
    %1503 = vrot.lane.b32.xlu0 %v555, 24
    %v1504 = vpop.permute.xlu0 %1503
    %1505 = vrot.lane.b32.xlu0 %v556, 24
    %v1506 = vpop.permute.xlu0 %1505
    %1507 = vrot.lane.b32.xlu0 %v613, 28
    %v1508 = vpop.permute.xlu0 %1507
    %1509 = vrot.lane.b32.xlu0 %v625, 28
    %v1510 = vpop.permute.xlu0 %1509
    %1511 = vrot.lane.b32.xlu0 %v637, 28
    %v1512 = vpop.permute.xlu0 %1511
    %1513 = vrot.lane.b32.xlu0 %v649, 28
    %v1514 = vpop.permute.xlu0 %1513
    %1515 = vrot.lane.b32.xlu0 %v661, 28
    %v1516 = vpop.permute.xlu0 %1515
    %1517 = vrot.lane.b32.xlu0 %v673, 28
    %v1518 = vpop.permute.xlu0 %1517
    %1519 = vrot.lane.b32.xlu0 %v685, 28
    %v1520 = vpop.permute.xlu0 %1519
    %1521 = vrot.lane.b32.xlu0 %v697, 28
    %v1522 = vpop.permute.xlu0 %1521
    %1523 = vrot.lane.b32.xlu0 %v709, 28
    %v1524 = vpop.permute.xlu0 %1523
    %1525 = vrot.lane.b32.xlu0 %v721, 28
    %v1526 = vpop.permute.xlu0 %1525
    %1527 = vrot.lane.b32.xlu0 %v733, 28
    %v1528 = vpop.permute.xlu0 %1527
    %1529 = vrot.lane.b32.xlu0 %v745, 28
    %v1530 = vpop.permute.xlu0 %1529
    %1531 = vrot.lane.b32.xlu0 %v757, 28
    %v1532 = vpop.permute.xlu0 %1531
    %1533 = vrot.lane.b32.xlu0 %v769, 28
    %v1534 = vpop.permute.xlu0 %1533
    %1535 = vrot.lane.b32.xlu0 %v1112, 28
    %v1536 = vpop.permute.xlu0 %1535
    %1537 = vrot.lane.b32.xlu0 %v793, 28
    %v1538 = vpop.permute.xlu0 %1537
    %1539 = vrot.lane.b32.xlu0 %v805, 28
    %v1540 = vpop.permute.xlu0 %1539
    %1541 = vrot.lane.b32.xlu0 %v817, 28
    %v1542 = vpop.permute.xlu0 %1541
    %1543 = vrot.lane.b32.xlu0 %v829, 28
    %v1544 = vpop.permute.xlu0 %1543
    %1545 = vrot.lane.b32.xlu0 %v841, 28
    %v1546 = vpop.permute.xlu0 %1545
    %1547 = vrot.lane.b32.xlu0 %v853, 28
    %v1548 = vpop.permute.xlu0 %1547
    %1549 = vrot.lane.b32.xlu0 %v865, 28
    %v1550 = vpop.permute.xlu0 %1549
    %1551 = vrot.lane.b32.xlu0 %v877, 28
    %v1552 = vpop.permute.xlu0 %1551
    %1553 = vrot.lane.b32.xlu0 %v889, 28
    %v1554 = vpop.permute.xlu0 %1553
    %1555 = vrot.lane.b32.xlu0 %v901, 28
    %v1556 = vpop.permute.xlu0 %1555
    %1557 = vrot.lane.b32.xlu0 %v913, 28
    %v1558 = vpop.permute.xlu0 %1557
    %1559 = vrot.lane.b32.xlu0 %v925, 28
    %v1560 = vpop.permute.xlu0 %1559
    %1561 = vrot.lane.b32.xlu0 %v937, 28
    %v1562 = vpop.permute.xlu0 %1561
    %1563 = vrot.lane.b32.xlu0 %v949, 28
    %v1564 = vpop.permute.xlu0 %1563
    %1565 = vrot.lane.b32.xlu0 %v1124, 28
    %v1566 = vpop.permute.xlu0 %1565
    %1567 = vrot.lane.b32.xlu0 %v1016, 32
    %v1568 = vpop.permute.xlu0 %1567
    %1569 = vrot.lane.b32.xlu0 %v1019, 32
    %v1570 = vpop.permute.xlu0 %1569
    %1571 = vrot.lane.b32.xlu0 %v1022, 32
    %v1572 = vpop.permute.xlu0 %1571
    %1573 = vrot.lane.b32.xlu0 %v1025, 32
    %v1574 = vpop.permute.xlu0 %1573
    %1575 = vrot.lane.b32.xlu0 %v1028, 32
    %v1576 = vpop.permute.xlu0 %1575
    %1577 = vrot.lane.b32.xlu0 %v1031, 32
    %v1578 = vpop.permute.xlu0 %1577
    %1579 = vrot.lane.b32.xlu0 %v1034, 32
    %v1580 = vpop.permute.xlu0 %1579
    %1581 = vrot.lane.b32.xlu0 %v1037, 32
    %v1582 = vpop.permute.xlu0 %1581
    %1583 = vrot.lane.b32.xlu0 %v1040, 32
    %v1584 = vpop.permute.xlu0 %1583
    %1585 = vrot.lane.b32.xlu0 %v1043, 32
    %v1586 = vpop.permute.xlu0 %1585
    %1587 = vrot.lane.b32.xlu0 %v1046, 32
    %v1588 = vpop.permute.xlu0 %1587
    %1589 = vrot.lane.b32.xlu0 %v1049, 32
    %v1590 = vpop.permute.xlu0 %1589
    %1591 = vrot.lane.b32.xlu0 %v1052, 32
    %v1592 = vpop.permute.xlu0 %1591
    %1593 = vrot.lane.b32.xlu0 %v1055, 32
    %v1594 = vpop.permute.xlu0 %1593
    %1595 = vrot.lane.b32.xlu0 %v1131, 32
    %v1596 = vpop.permute.xlu0 %1595
    %1597 = vrot.lane.b32.xlu0 %v1061, 32
    %v1598 = vpop.permute.xlu0 %1597
    %1599 = vrot.lane.b32.xlu0 %v1064, 32
    %v1600 = vpop.permute.xlu0 %1599
    %1601 = vrot.lane.b32.xlu0 %v1067, 32
    %v1602 = vpop.permute.xlu0 %1601
    %1603 = vrot.lane.b32.xlu0 %v1070, 32
    %v1604 = vpop.permute.xlu0 %1603
    %1605 = vrot.lane.b32.xlu0 %v1073, 32
    %v1606 = vpop.permute.xlu0 %1605
    %1607 = vrot.lane.b32.xlu0 %v1076, 32
    %v1608 = vpop.permute.xlu0 %1607
    %1609 = vrot.lane.b32.xlu0 %v1079, 32
    %v1610 = vpop.permute.xlu0 %1609
    %1611 = vrot.lane.b32.xlu0 %v1082, 32
    %v1612 = vpop.permute.xlu0 %1611
    %1613 = vrot.lane.b32.xlu0 %v1085, 32
    %v1614 = vpop.permute.xlu0 %1613
    %1615 = vrot.lane.b32.xlu0 %v1088, 32
    %v1616 = vpop.permute.xlu0 %1615
    %1617 = vrot.lane.b32.xlu0 %v1091, 32
    %v1618 = vpop.permute.xlu0 %1617
    %1619 = vrot.lane.b32.xlu0 %v1094, 32
    %v1620 = vpop.permute.xlu0 %1619
    %1621 = vrot.lane.b32.xlu0 %v1097, 32
    %v1622 = vpop.permute.xlu0 %1621
    %1623 = vrot.lane.b32.xlu0 %v1100, 32
    %v1624 = vpop.permute.xlu0 %1623
    %1625 = vrot.lane.b32.xlu0 %v1134, 32
    %v1626 = vpop.permute.xlu0 %1625
    %vm1627 = vcmask 31744
    %v1629 = vsel %vm1627, %v525, %v1136
    %v1631 = vsel %vm1627, %v526, %v1138
    %v1633 = vsel %vm1627, %v527, %v1140
    %v1635 = vsel %vm1627, %v528, %v1142
    %v1637 = vsel %vm1627, %v529, %v1144
    %v1639 = vsel %vm1627, %v530, %v1146
    %v1641 = vsel %vm1627, %v531, %v1148
    %v1643 = vsel %vm1627, %v532, %v1150
    %v1645 = vsel %vm1627, %v533, %v1152
    %v1647 = vsel %vm1627, %v534, %v1154
    %v1649 = vsel %vm1627, %v535, %v1156
    %v1651 = vsel %vm1627, %v536, %v1158
    %v1653 = vsel %vm1627, %v537, %v1160
    %v1655 = vsel %vm1627, %v538, %v1162
    %v1657 = vsel %vm1627, %v539, %v1164
    %v1659 = vsel %vm1627, %v541, %v1166
    %v1661 = vsel %vm1627, %v542, %v1168
    %v1663 = vsel %vm1627, %v543, %v1170
    %v1665 = vsel %vm1627, %v544, %v1172
    %v1667 = vsel %vm1627, %v545, %v1174
    %v1669 = vsel %vm1627, %v546, %v1176
    %v1671 = vsel %vm1627, %v547, %v1178
    %v1673 = vsel %vm1627, %v548, %v1180
    %v1675 = vsel %vm1627, %v549, %v1182
    %v1677 = vsel %vm1627, %v550, %v1184
    %v1679 = vsel %vm1627, %v551, %v1186
    %v1681 = vsel %vm1627, %v552, %v1188
    %v1683 = vsel %vm1627, %v553, %v1190
    %v1685 = vsel %vm1627, %v554, %v1192
    %v1687 = vsel %vm1627, %v555, %v1194
    %vm1688 = vcmask 64512
    %v1690 = vsel %vm1688, %v1629, %v1196
    %v1692 = vsel %vm1688, %v1631, %v1198
    %v1694 = vsel %vm1688, %v1633, %v1200
    %v1696 = vsel %vm1688, %v1635, %v1202
    %v1698 = vsel %vm1688, %v1637, %v1204
    %v1700 = vsel %vm1688, %v1639, %v1206
    %v1702 = vsel %vm1688, %v1641, %v1208
    %v1704 = vsel %vm1688, %v1643, %v1210
    %v1706 = vsel %vm1688, %v1645, %v1212
    %v1708 = vsel %vm1688, %v1647, %v1214
    %v1710 = vsel %vm1688, %v1649, %v1216
    %v1712 = vsel %vm1688, %v1651, %v1218
    %v1714 = vsel %vm1688, %v1653, %v1220
    %v1716 = vsel %vm1688, %v1655, %v1222
    %v1718 = vsel %vm1688, %v1657, %v1224
    %v1720 = vsel %vm1688, %v1659, %v1226
    %v1722 = vsel %vm1688, %v1661, %v1228
    %v1724 = vsel %vm1688, %v1663, %v1230
    %v1726 = vsel %vm1688, %v1665, %v1232
    %v1728 = vsel %vm1688, %v1667, %v1234
    %v1730 = vsel %vm1688, %v1669, %v1236
    %v1732 = vsel %vm1688, %v1671, %v1238
    %v1734 = vsel %vm1688, %v1673, %v1240
    %v1736 = vsel %vm1688, %v1675, %v1242
    %v1738 = vsel %vm1688, %v1677, %v1244
    %v1740 = vsel %vm1688, %v1679, %v1246
    %v1742 = vsel %vm1688, %v1681, %v1248
    %v1744 = vsel %vm1688, %v1683, %v1250
    %v1746 = vsel %vm1688, %v1685, %v1252
    %v1748 = vsel %vm1688, %v1687, %v1254
    %vm1749 = vcmask 97280
    %v1751 = vsel %vm1749, %v1690, %v1256
    %v1753 = vsel %vm1749, %v1690, %v1258
    %v1755 = vsel %vm1749, %v1692, %v1260
    %v1757 = vsel %vm1749, %v1694, %v1262
    %v1759 = vsel %vm1749, %v1696, %v1264
    %v1761 = vsel %vm1749, %v1698, %v1266
    %v1763 = vsel %vm1749, %v1700, %v1268
    %v1765 = vsel %vm1749, %v1702, %v1270
    %v1767 = vsel %vm1749, %v1704, %v1272
    %v1769 = vsel %vm1749, %v1706, %v1274
    %v1771 = vsel %vm1749, %v1708, %v1276
    %v1773 = vsel %vm1749, %v1710, %v1278
    %v1775 = vsel %vm1749, %v1712, %v1280
    %v1777 = vsel %vm1749, %v1714, %v1282
    %v1779 = vsel %vm1749, %v1716, %v1284
    %v1781 = vsel %vm1749, %v1718, %v1286
    %v1783 = vsel %vm1749, %v1720, %v1288
    %v1785 = vsel %vm1749, %v1720, %v1290
    %v1787 = vsel %vm1749, %v1722, %v1292
    %v1789 = vsel %vm1749, %v1724, %v1294
    %v1791 = vsel %vm1749, %v1726, %v1296
    %v1793 = vsel %vm1749, %v1728, %v1298
    %v1795 = vsel %vm1749, %v1730, %v1300
    %v1797 = vsel %vm1749, %v1732, %v1302
    %v1799 = vsel %vm1749, %v1734, %v1304
    %v1801 = vsel %vm1749, %v1736, %v1306
    %v1803 = vsel %vm1749, %v1738, %v1308
    %v1805 = vsel %vm1749, %v1740, %v1310
    %v1807 = vsel %vm1749, %v1742, %v1312
    %v1809 = vsel %vm1749, %v1744, %v1314
    %v1811 = vsel %vm1749, %v1746, %v1316
    %v1813 = vsel %vm1749, %v1748, %v1318
    %vm1814 = vcmask 130048
    %v1816 = vsel %vm1814, %v1751, %v1320
    %v1818 = vsel %vm1814, %v1753, %v1322
    %v1820 = vsel %vm1814, %v1755, %v1324
    %v1822 = vsel %vm1814, %v1757, %v1326
    %v1824 = vsel %vm1814, %v1759, %v1328
    %v1826 = vsel %vm1814, %v1761, %v1330
    %v1828 = vsel %vm1814, %v1763, %v1332
    %v1830 = vsel %vm1814, %v1765, %v1334
    %v1832 = vsel %vm1814, %v1767, %v1336
    %v1834 = vsel %vm1814, %v1769, %v1338
    %v1836 = vsel %vm1814, %v1771, %v1340
    %v1838 = vsel %vm1814, %v1773, %v1342
    %v1840 = vsel %vm1814, %v1775, %v1344
    %v1842 = vsel %vm1814, %v1777, %v1346
    %v1844 = vsel %vm1814, %v1779, %v1348
    %v1846 = vsel %vm1814, %v1781, %v1350
    %v1848 = vsel %vm1814, %v1783, %v1352
    %v1850 = vsel %vm1814, %v1785, %v1354
    %v1852 = vsel %vm1814, %v1787, %v1356
    %v1854 = vsel %vm1814, %v1789, %v1358
    %v1856 = vsel %vm1814, %v1791, %v1360
    %v1858 = vsel %vm1814, %v1793, %v1362
    %v1860 = vsel %vm1814, %v1795, %v1364
    %v1862 = vsel %vm1814, %v1797, %v1366
    %v1864 = vsel %vm1814, %v1799, %v1368
    %v1866 = vsel %vm1814, %v1801, %v1370
    %v1868 = vsel %vm1814, %v1803, %v1372
    %v1870 = vsel %vm1814, %v1805, %v1374
    %v1872 = vsel %vm1814, %v1807, %v1376
    %v1874 = vsel %vm1814, %v1809, %v1378
    %v1876 = vsel %vm1814, %v1811, %v1380
    %v1878 = vsel %vm1814, %v1813, %v1382
    %vm1879 = vcmask 162816
    %v1881 = vsel %vm1879, %v1816, %v1384
    %v1883 = vsel %vm1879, %v1818, %v1386
    %v1885 = vsel %vm1879, %v1820, %v1388
    %v1887 = vsel %vm1879, %v1822, %v1390
    %v1889 = vsel %vm1879, %v1824, %v1392
    %v1891 = vsel %vm1879, %v1826, %v1394
    %v1893 = vsel %vm1879, %v1828, %v1396
    %v1895 = vsel %vm1879, %v1830, %v1398
    %v1897 = vsel %vm1879, %v1832, %v1400
    %v1899 = vsel %vm1879, %v1834, %v1402
    %v1901 = vsel %vm1879, %v1836, %v1404
    %v1903 = vsel %vm1879, %v1838, %v1406
    %v1905 = vsel %vm1879, %v1840, %v1408
    %v1907 = vsel %vm1879, %v1842, %v1410
    %v1909 = vsel %vm1879, %v1844, %v1412
    %v1911 = vsel %vm1879, %v1846, %v1414
    %v1913 = vsel %vm1879, %v1848, %v1416
    %v1915 = vsel %vm1879, %v1850, %v1418
    %v1917 = vsel %vm1879, %v1852, %v1420
    %v1919 = vsel %vm1879, %v1854, %v1422
    %v1921 = vsel %vm1879, %v1856, %v1424
    %v1923 = vsel %vm1879, %v1858, %v1426
    %v1925 = vsel %vm1879, %v1860, %v1428
    %v1927 = vsel %vm1879, %v1862, %v1430
    %v1929 = vsel %vm1879, %v1864, %v1432
    %v1931 = vsel %vm1879, %v1866, %v1434
    %v1933 = vsel %vm1879, %v1868, %v1436
    %v1935 = vsel %vm1879, %v1870, %v1438
    %v1937 = vsel %vm1879, %v1872, %v1440
    %v1939 = vsel %vm1879, %v1874, %v1442
    %v1941 = vsel %vm1879, %v1876, %v1444
    %v1943 = vsel %vm1879, %v1878, %v1446
    %vm1944 = vcmask 195584
    %v1946 = vsel %vm1944, %v1881, %v1448
    %v1948 = vsel %vm1944, %v1883, %v1450
    %v1950 = vsel %vm1944, %v1885, %v1452
    %v1952 = vsel %vm1944, %v1887, %v1454
    %v1954 = vsel %vm1944, %v1889, %v1456
    %v1956 = vsel %vm1944, %v1891, %v1458
    %v1958 = vsel %vm1944, %v1893, %v1460
    %v1960 = vsel %vm1944, %v1895, %v1462
    %v1962 = vsel %vm1944, %v1897, %v1464
    %v1964 = vsel %vm1944, %v1899, %v1466
    %v1966 = vsel %vm1944, %v1901, %v1468
    %v1968 = vsel %vm1944, %v1903, %v1470
    %v1970 = vsel %vm1944, %v1905, %v1472
    %v1972 = vsel %vm1944, %v1907, %v1474
    %v1974 = vsel %vm1944, %v1909, %v1476
    %v1975 = vsel %vm1944, %v1911, %v1476
    %v1977 = vsel %vm1944, %v1913, %v1478
    %v1979 = vsel %vm1944, %v1915, %v1480
    %v1981 = vsel %vm1944, %v1917, %v1482
    %v1983 = vsel %vm1944, %v1919, %v1484
    %v1985 = vsel %vm1944, %v1921, %v1486
    %v1987 = vsel %vm1944, %v1923, %v1488
    %v1989 = vsel %vm1944, %v1925, %v1490
    %v1991 = vsel %vm1944, %v1927, %v1492
    %v1993 = vsel %vm1944, %v1929, %v1494
    %v1995 = vsel %vm1944, %v1931, %v1496
    %v1997 = vsel %vm1944, %v1933, %v1498
    %v1999 = vsel %vm1944, %v1935, %v1500
    %v2001 = vsel %vm1944, %v1937, %v1502
    %v2003 = vsel %vm1944, %v1939, %v1504
    %v2005 = vsel %vm1944, %v1941, %v1506
    %v2006 = vsel %vm1944, %v1943, %v1506
    %vm2007 = vcmask 228352
    %v2009 = vsel %vm2007, %v1946, %v1508
    %v2011 = vsel %vm2007, %v1948, %v1510
    %v2013 = vsel %vm2007, %v1950, %v1512
    %v2015 = vsel %vm2007, %v1952, %v1514
    %v2017 = vsel %vm2007, %v1954, %v1516
    %v2019 = vsel %vm2007, %v1956, %v1518
    %v2021 = vsel %vm2007, %v1958, %v1520
    %v2023 = vsel %vm2007, %v1960, %v1522
    %v2025 = vsel %vm2007, %v1962, %v1524
    %v2027 = vsel %vm2007, %v1964, %v1526
    %v2029 = vsel %vm2007, %v1966, %v1528
    %v2031 = vsel %vm2007, %v1968, %v1530
    %v2033 = vsel %vm2007, %v1970, %v1532
    %v2035 = vsel %vm2007, %v1972, %v1534
    %v2037 = vsel %vm2007, %v1974, %v1536
    %v2038 = vsel %vm2007, %v1975, %v1536
    %v2040 = vsel %vm2007, %v1977, %v1538
    %v2042 = vsel %vm2007, %v1979, %v1540
    %v2044 = vsel %vm2007, %v1981, %v1542
    %v2046 = vsel %vm2007, %v1983, %v1544
    %v2048 = vsel %vm2007, %v1985, %v1546
    %v2050 = vsel %vm2007, %v1987, %v1548
    %v2052 = vsel %vm2007, %v1989, %v1550
    %v2054 = vsel %vm2007, %v1991, %v1552
    %v2056 = vsel %vm2007, %v1993, %v1554
    %v2058 = vsel %vm2007, %v1995, %v1556
    %v2060 = vsel %vm2007, %v1997, %v1558
    %v2062 = vsel %vm2007, %v1999, %v1560
    %v2064 = vsel %vm2007, %v2001, %v1562
    %v2066 = vsel %vm2007, %v2003, %v1564
    %v2068 = vsel %vm2007, %v2005, %v1566
    %v2069 = vsel %vm2007, %v2006, %v1566
    %vm2070 = vcmask 261120
    %v2072 = vsel %vm2070, %v2009, %v1568
    %v2074 = vsel %vm2070, %v2011, %v1570
    %v2076 = vsel %vm2070, %v2013, %v1572
    %v2078 = vsel %vm2070, %v2015, %v1574
    %v2080 = vsel %vm2070, %v2017, %v1576
    %v2082 = vsel %vm2070, %v2019, %v1578
    %v2084 = vsel %vm2070, %v2021, %v1580
    %v2086 = vsel %vm2070, %v2023, %v1582
    %v2088 = vsel %vm2070, %v2025, %v1584
    %v2090 = vsel %vm2070, %v2027, %v1586
    %v2092 = vsel %vm2070, %v2029, %v1588
    %v2094 = vsel %vm2070, %v2031, %v1590
    %v2096 = vsel %vm2070, %v2033, %v1592
    %v2098 = vsel %vm2070, %v2035, %v1594
    %v2100 = vsel %vm2070, %v2037, %v1596
    %v2101 = vsel %vm2070, %v2038, %v1596
    %v2103 = vsel %vm2070, %v2040, %v1598
    %v2105 = vsel %vm2070, %v2042, %v1600
    %v2107 = vsel %vm2070, %v2044, %v1602
    %v2109 = vsel %vm2070, %v2046, %v1604
    %v2111 = vsel %vm2070, %v2048, %v1606
    %v2113 = vsel %vm2070, %v2050, %v1608
    %v2115 = vsel %vm2070, %v2052, %v1610
    %v2117 = vsel %vm2070, %v2054, %v1612
    %v2119 = vsel %vm2070, %v2056, %v1614
    %v2121 = vsel %vm2070, %v2058, %v1616
    %v2123 = vsel %vm2070, %v2060, %v1618
    %v2125 = vsel %vm2070, %v2062, %v1620
    %v2127 = vsel %vm2070, %v2064, %v1622
    %v2129 = vsel %vm2070, %v2066, %v1624
    %v2131 = vsel %vm2070, %v2068, %v1626
    %v2132 = vsel %vm2070, %v2069, %v1626
    %v2134 = vlaneseq
    %v2135 = vshrl.u32 %v2134, 7
    %v2136 = vsub.s32 0, %v2135
    %v2137 = vrot.slane %v137, %v2136
    %v2144 = vunpack.c.l.b16 %v132
    %v2145 = vunpack.c.l.b16 %v133
    %v2146 = vunpack.c.l.b16 %v134
    %v2147 = vunpack.c.l.b16 %v135
    %v2148 = vunpack.c.l.b16 %v136
    %v2149 = vpack.c.b16 %v2145, %v2144
    %v2150 = vpack.c.b16 %v2147, %v2146
    %v2151 = vpack.c.b16 %v2148, %v2148
    %vm2154 = vcmask 293888
    %v2155 = vsel %vm2154, %v2072, 0
    %v2157 = vsel %vm2154, %v2074, 0
    %v2159 = vsel %vm2154, %v2076, 0
    %v2161 = vsel %vm2154, %v2078, 0
    %v2163 = vsel %vm2154, %v2080, 0
    %v2165 = vsel %vm2154, %v2082, 0
    %v2167 = vsel %vm2154, %v2084, 0
    %v2169 = vsel %vm2154, %v2086, 0
    %v2171 = vsel %vm2154, %v2088, 0
    %v2173 = vsel %vm2154, %v2090, 0
    %v2175 = vsel %vm2154, %v2092, 0
    %v2177 = vsel %vm2154, %v2094, 0
    %v2179 = vsel %vm2154, %v2096, 0
    %v2181 = vsel %vm2154, %v2098, 0
    %v2183 = vsel %vm2154, %v2100, 0
    %v2185 = vsel %vm2154, %v2101, 0
    %v2187 = vsel %vm2154, %v2103, 0
    %v2189 = vsel %vm2154, %v2105, 0
    %v2191 = vsel %vm2154, %v2107, 0
    %v2193 = vsel %vm2154, %v2109, 0
    %v2195 = vsel %vm2154, %v2111, 0
    %v2197 = vsel %vm2154, %v2113, 0
    %v2199 = vsel %vm2154, %v2115, 0
    %v2201 = vsel %vm2154, %v2117, 0
    %v2203 = vsel %vm2154, %v2119, 0
    %v2205 = vsel %vm2154, %v2121, 0
    %v2207 = vsel %vm2154, %v2123, 0
    %v2209 = vsel %vm2154, %v2125, 0
    %v2211 = vsel %vm2154, %v2127, 0
    %v2213 = vsel %vm2154, %v2129, 0
    %v2215 = vsel %vm2154, %v2131, 0
    %v2217 = vsel %vm2154, %v2132, 0
    %vm2219 = vcmask 1041408
    %v2221 = vsel %vm2219, %v2151, 0
    %2223 = vmatprep.subr.bf16.mxu0 0
    %2224 = vmatpush1.bf16.msra.mxu0 %v2149
    %2225 = vmatprep.subr.bf16.mxu0 0
    %2226 = vmatpush1.bf16.msra.mxu0 %v2150
    %2227 = vmatprep.subr.bf16.mxu0 0
    %2228 = vmatpush1.bf16.msra.mxu0 %v2221
    %2229 = vmatprep.subr.bf16.mxu0 0
    %2230 = vmatpush1.bf16.msra.mxu0 0
    %2231 = vmatprep.subr.bf16.mxu0 0
    %2232 = vmatpush1.bf16.msra.mxu0 0
    %2233 = vmatprep.subr.bf16.mxu0 0
    %2234 = vmatpush1.bf16.msra.mxu0 0
    %2235 = vmatprep.subr.bf16.mxu0 0
    %2236 = vmatpush1.bf16.msra.mxu0 0
    %2237 = vmatprep.subr.bf16.mxu0 0
    %2238 = vmatpush1.bf16.msra.mxu0 0
    %2239 = vmatprep.subr.bf16.mxu0 0
    %2240 = vmatpush1.bf16.msra.mxu0 0
    %2241 = vmatprep.subr.bf16.mxu0 0
    %2242 = vmatpush1.bf16.msra.mxu0 0
    %2243 = vmatprep.subr.bf16.mxu0 0
    %2244 = vmatpush1.bf16.msra.mxu0 0
    %2245 = vmatprep.subr.bf16.mxu0 0
    %2246 = vmatpush1.bf16.msra.mxu0 0
    %2247 = vmatprep.subr.bf16.mxu0 0
    %2248 = vmatpush1.bf16.msra.mxu0 0
    %2249 = vmatprep.subr.bf16.mxu0 0
    %2250 = vmatpush1.bf16.msra.mxu0 0
    %2251 = vmatprep.subr.bf16.mxu0 0
    %2252 = vmatpush1.bf16.msra.mxu0 0
    %2253 = vmatprep.subr.bf16.mxu0 0
    %2254 = vmatpush1.bf16.msra.mxu0 0
    %2255 = vmatprep.mubr.bf16.mxu0 0
    %2256 = vmatmul.mubr.bf16.gmra.mrb[0].mxu0 %v2155
    %v2257 = vpop.f32.mrb[0].mxu0
    %v2258 = vadd.f32 %v2137, %v2257
    %v2259 = vpop.f32.mrb[0].mxu0
    %v2260 = vpop.f32.mrb[0].mxu0
    %v2261 = vadd.f32 %v2137, %v2260
    %v2262 = vpop.f32.mrb[0].mxu0
    %2263 = vmatprep.mubr.bf16.mxu0 0
    %2264 = vmatmul.mubr.bf16.gmra.mrb[0].mxu0 %v2157
    %v2265 = vpop.f32.mrb[0].mxu0
    %v2266 = vadd.f32 %v2137, %v2265
    %v2267 = vpop.f32.mrb[0].mxu0
    %v2268 = vpop.f32.mrb[0].mxu0
    %v2269 = vadd.f32 %v2137, %v2268
    %v2270 = vpop.f32.mrb[0].mxu0
    %2271 = vmatprep.mubr.bf16.mxu0 0
    %2272 = vmatmul.mubr.bf16.gmra.mrb[0].mxu0 %v2159
    %v2273 = vpop.f32.mrb[0].mxu0
    %v2274 = vadd.f32 %v2137, %v2273
    %v2275 = vpop.f32.mrb[0].mxu0
    %v2276 = vpop.f32.mrb[0].mxu0
    %v2277 = vadd.f32 %v2137, %v2276
    %v2278 = vpop.f32.mrb[0].mxu0
    %2279 = vmatprep.mubr.bf16.mxu0 0
    %2280 = vmatmul.mubr.bf16.gmra.mrb[0].mxu0 %v2161
    %v2281 = vpop.f32.mrb[0].mxu0
    %v2282 = vadd.f32 %v2137, %v2281
    %v2283 = vpop.f32.mrb[0].mxu0
    %v2284 = vpop.f32.mrb[0].mxu0
    %v2285 = vadd.f32 %v2137, %v2284
    %v2286 = vpop.f32.mrb[0].mxu0
    %2287 = vmatprep.mubr.bf16.mxu0 0
    %2288 = vmatmul.mubr.bf16.gmra.mrb[0].mxu0 %v2163
    %v2289 = vpop.f32.mrb[0].mxu0
    %v2290 = vadd.f32 %v2137, %v2289
    %v2291 = vpop.f32.mrb[0].mxu0
    %v2292 = vpop.f32.mrb[0].mxu0
    %v2293 = vadd.f32 %v2137, %v2292
    %v2294 = vpop.f32.mrb[0].mxu0
    %2295 = vmatprep.mubr.bf16.mxu0 0
    %2296 = vmatmul.mubr.bf16.gmra.mrb[0].mxu0 %v2165
    %v2297 = vpop.f32.mrb[0].mxu0
    %v2298 = vadd.f32 %v2137, %v2297
    %v2299 = vpop.f32.mrb[0].mxu0
    %v2300 = vpop.f32.mrb[0].mxu0
    %v2301 = vadd.f32 %v2137, %v2300
    %v2302 = vpop.f32.mrb[0].mxu0
    %2303 = vmatprep.mubr.bf16.mxu0 0
    %2304 = vmatmul.mubr.bf16.gmra.mrb[0].mxu0 %v2167
    %v2305 = vpop.f32.mrb[0].mxu0
    %v2306 = vadd.f32 %v2137, %v2305
    %v2307 = vpop.f32.mrb[0].mxu0
    %v2308 = vpop.f32.mrb[0].mxu0
    %v2309 = vadd.f32 %v2137, %v2308
    %v2310 = vpop.f32.mrb[0].mxu0
    %2311 = vmatprep.mubr.bf16.mxu0 0
    %2312 = vmatmul.mubr.bf16.gmra.mrb[0].mxu0 %v2169
    %v2313 = vpop.f32.mrb[0].mxu0
    %v2314 = vadd.f32 %v2137, %v2313
    %v2315 = vpop.f32.mrb[0].mxu0
    %v2316 = vpop.f32.mrb[0].mxu0
    %v2317 = vadd.f32 %v2137, %v2316
    %v2318 = vpop.f32.mrb[0].mxu0
    %2319 = vmatprep.mubr.bf16.mxu0 0
    %2320 = vmatmul.mubr.bf16.gmra.mrb[0].mxu0 %v2171
    %v2321 = vpop.f32.mrb[0].mxu0
    %v2322 = vadd.f32 %v2137, %v2321
    %v2323 = vpop.f32.mrb[0].mxu0
    %v2324 = vpop.f32.mrb[0].mxu0
    %v2325 = vadd.f32 %v2137, %v2324
    %v2326 = vpop.f32.mrb[0].mxu0
    %2327 = vmatprep.mubr.bf16.mxu0 0
    %2328 = vmatmul.mubr.bf16.gmra.mrb[0].mxu0 %v2173
    %v2329 = vpop.f32.mrb[0].mxu0
    %v2330 = vadd.f32 %v2137, %v2329
    %v2331 = vpop.f32.mrb[0].mxu0
    %v2332 = vpop.f32.mrb[0].mxu0
    %v2333 = vadd.f32 %v2137, %v2332
    %v2334 = vpop.f32.mrb[0].mxu0
    %2335 = vmatprep.mubr.bf16.mxu0 0
    %2336 = vmatmul.mubr.bf16.gmra.mrb[0].mxu0 %v2175
    %v2337 = vpop.f32.mrb[0].mxu0
    %v2338 = vadd.f32 %v2137, %v2337
    %v2339 = vpop.f32.mrb[0].mxu0
    %v2340 = vpop.f32.mrb[0].mxu0
    %v2341 = vadd.f32 %v2137, %v2340
    %v2342 = vpop.f32.mrb[0].mxu0
    %2343 = vmatprep.mubr.bf16.mxu0 0
    %2344 = vmatmul.mubr.bf16.gmra.mrb[0].mxu0 %v2177
    %v2345 = vpop.f32.mrb[0].mxu0
    %v2346 = vadd.f32 %v2137, %v2345
    %v2347 = vpop.f32.mrb[0].mxu0
    %v2348 = vpop.f32.mrb[0].mxu0
    %v2349 = vadd.f32 %v2137, %v2348
    %v2350 = vpop.f32.mrb[0].mxu0
    %2351 = vmatprep.mubr.bf16.mxu0 0
    %2352 = vmatmul.mubr.bf16.gmra.mrb[0].mxu0 %v2179
    %v2353 = vpop.f32.mrb[0].mxu0
    %v2354 = vadd.f32 %v2137, %v2353
    %v2355 = vpop.f32.mrb[0].mxu0
    %v2356 = vpop.f32.mrb[0].mxu0
    %v2357 = vadd.f32 %v2137, %v2356
    %v2358 = vpop.f32.mrb[0].mxu0
    %2359 = vmatprep.mubr.bf16.mxu0 0
    %2360 = vmatmul.mubr.bf16.gmra.mrb[0].mxu0 %v2181
    %v2361 = vpop.f32.mrb[0].mxu0
    %v2362 = vadd.f32 %v2137, %v2361
    %v2363 = vpop.f32.mrb[0].mxu0
    %v2364 = vpop.f32.mrb[0].mxu0
    %v2365 = vadd.f32 %v2137, %v2364
    %v2366 = vpop.f32.mrb[0].mxu0
    %2367 = vmatprep.mubr.bf16.mxu0 0
    %2368 = vmatmul.mubr.bf16.gmra.mrb[0].mxu0 %v2183
    %v2369 = vpop.f32.mrb[0].mxu0
    %v2370 = vadd.f32 %v2137, %v2369
    %v2371 = vpop.f32.mrb[0].mxu0
    %v2372 = vpop.f32.mrb[0].mxu0
    %v2373 = vadd.f32 %v2137, %v2372
    %v2374 = vpop.f32.mrb[0].mxu0
    %2375 = vmatprep.mubr.bf16.mxu0 0
    %2376 = vmatmul.mubr.bf16.gmra.mrb[0].mxu0 %v2185
    %v2377 = vpop.f32.mrb[0].mxu0
    %v2378 = vadd.f32 %v2137, %v2377
    %v2379 = vpop.f32.mrb[0].mxu0
    %v2380 = vpop.f32.mrb[0].mxu0
    %v2381 = vadd.f32 %v2137, %v2380
    %v2382 = vpop.f32.mrb[0].mxu0
    %2383 = vmatprep.mubr.bf16.mxu0 0
    %2384 = vmatmul.mubr.bf16.gmra.mrb[0].mxu0 %v2187
    %v2385 = vpop.f32.mrb[0].mxu0
    %v2386 = vadd.f32 %v2137, %v2385
    %v2387 = vpop.f32.mrb[0].mxu0
    %v2388 = vpop.f32.mrb[0].mxu0
    %v2389 = vadd.f32 %v2137, %v2388
    %v2390 = vpop.f32.mrb[0].mxu0
    %2391 = vmatprep.mubr.bf16.mxu0 0
    %2392 = vmatmul.mubr.bf16.gmra.mrb[0].mxu0 %v2189
    %v2393 = vpop.f32.mrb[0].mxu0
    %v2394 = vadd.f32 %v2137, %v2393
    %v2395 = vpop.f32.mrb[0].mxu0
    %v2396 = vpop.f32.mrb[0].mxu0
    %v2397 = vadd.f32 %v2137, %v2396
    %v2398 = vpop.f32.mrb[0].mxu0
    %2399 = vmatprep.mubr.bf16.mxu0 0
    %2400 = vmatmul.mubr.bf16.gmra.mrb[0].mxu0 %v2191
    %v2401 = vpop.f32.mrb[0].mxu0
    %v2402 = vadd.f32 %v2137, %v2401
    %v2403 = vpop.f32.mrb[0].mxu0
    %v2404 = vpop.f32.mrb[0].mxu0
    %v2405 = vadd.f32 %v2137, %v2404
    %v2406 = vpop.f32.mrb[0].mxu0
    %2407 = vmatprep.mubr.bf16.mxu0 0
    %2408 = vmatmul.mubr.bf16.gmra.mrb[0].mxu0 %v2193
    %v2409 = vpop.f32.mrb[0].mxu0
    %v2410 = vadd.f32 %v2137, %v2409
    %v2411 = vpop.f32.mrb[0].mxu0
    %v2412 = vpop.f32.mrb[0].mxu0
    %v2413 = vadd.f32 %v2137, %v2412
    %v2414 = vpop.f32.mrb[0].mxu0
    %2415 = vmatprep.mubr.bf16.mxu0 0
    %2416 = vmatmul.mubr.bf16.gmra.mrb[0].mxu0 %v2195
    %v2417 = vpop.f32.mrb[0].mxu0
    %v2418 = vadd.f32 %v2137, %v2417
    %v2419 = vpop.f32.mrb[0].mxu0
    %v2420 = vpop.f32.mrb[0].mxu0
    %v2421 = vadd.f32 %v2137, %v2420
    %v2422 = vpop.f32.mrb[0].mxu0
    %2423 = vmatprep.mubr.bf16.mxu0 0
    %2424 = vmatmul.mubr.bf16.gmra.mrb[0].mxu0 %v2197
    %v2425 = vpop.f32.mrb[0].mxu0
    %v2426 = vadd.f32 %v2137, %v2425
    %v2427 = vpop.f32.mrb[0].mxu0
    %v2428 = vpop.f32.mrb[0].mxu0
    %v2429 = vadd.f32 %v2137, %v2428
    %v2430 = vpop.f32.mrb[0].mxu0
    %2431 = vmatprep.mubr.bf16.mxu0 0
    %2432 = vmatmul.mubr.bf16.gmra.mrb[0].mxu0 %v2199
    %v2433 = vpop.f32.mrb[0].mxu0
    %v2434 = vadd.f32 %v2137, %v2433
    %v2435 = vpop.f32.mrb[0].mxu0
    %v2436 = vpop.f32.mrb[0].mxu0
    %v2437 = vadd.f32 %v2137, %v2436
    %v2438 = vpop.f32.mrb[0].mxu0
    %2439 = vmatprep.mubr.bf16.mxu0 0
    %2440 = vmatmul.mubr.bf16.gmra.mrb[0].mxu0 %v2201
    %v2441 = vpop.f32.mrb[0].mxu0
    %v2442 = vadd.f32 %v2137, %v2441
    %v2443 = vpop.f32.mrb[0].mxu0
    %v2444 = vpop.f32.mrb[0].mxu0
    %v2445 = vadd.f32 %v2137, %v2444
    %v2446 = vpop.f32.mrb[0].mxu0
    %2447 = vmatprep.mubr.bf16.mxu0 0
    %2448 = vmatmul.mubr.bf16.gmra.mrb[0].mxu0 %v2203
    %v2449 = vpop.f32.mrb[0].mxu0
    %v2450 = vadd.f32 %v2137, %v2449
    %v2451 = vpop.f32.mrb[0].mxu0
    %v2452 = vpop.f32.mrb[0].mxu0
    %v2453 = vadd.f32 %v2137, %v2452
    %v2454 = vpop.f32.mrb[0].mxu0
    %2455 = vmatprep.mubr.bf16.mxu0 0
    %2456 = vmatmul.mubr.bf16.gmra.mrb[0].mxu0 %v2205
    %v2457 = vpop.f32.mrb[0].mxu0
    %v2458 = vadd.f32 %v2137, %v2457
    %v2459 = vpop.f32.mrb[0].mxu0
    %v2460 = vpop.f32.mrb[0].mxu0
    %v2461 = vadd.f32 %v2137, %v2460
    %v2462 = vpop.f32.mrb[0].mxu0
    %2463 = vmatprep.mubr.bf16.mxu0 0
    %2464 = vmatmul.mubr.bf16.gmra.mrb[0].mxu0 %v2207
    %v2465 = vpop.f32.mrb[0].mxu0
    %v2466 = vadd.f32 %v2137, %v2465
    %v2467 = vpop.f32.mrb[0].mxu0
    %v2468 = vpop.f32.mrb[0].mxu0
    %v2469 = vadd.f32 %v2137, %v2468
    %v2470 = vpop.f32.mrb[0].mxu0
    %2471 = vmatprep.mubr.bf16.mxu0 0
    %2472 = vmatmul.mubr.bf16.gmra.mrb[0].mxu0 %v2209
    %v2473 = vpop.f32.mrb[0].mxu0
    %v2474 = vadd.f32 %v2137, %v2473
    %v2475 = vpop.f32.mrb[0].mxu0
    %v2476 = vpop.f32.mrb[0].mxu0
    %v2477 = vadd.f32 %v2137, %v2476
    %v2478 = vpop.f32.mrb[0].mxu0
    %2479 = vmatprep.mubr.bf16.mxu0 0
    %2480 = vmatmul.mubr.bf16.gmra.mrb[0].mxu0 %v2211
    %v2481 = vpop.f32.mrb[0].mxu0
    %v2482 = vadd.f32 %v2137, %v2481
    %v2483 = vpop.f32.mrb[0].mxu0
    %v2484 = vpop.f32.mrb[0].mxu0
    %v2485 = vadd.f32 %v2137, %v2484
    %v2486 = vpop.f32.mrb[0].mxu0
    %2487 = vmatprep.mubr.bf16.mxu0 0
    %2488 = vmatmul.mubr.bf16.gmra.mrb[0].mxu0 %v2213
    %v2489 = vpop.f32.mrb[0].mxu0
    %v2490 = vadd.f32 %v2137, %v2489
    %v2491 = vpop.f32.mrb[0].mxu0
    %v2492 = vpop.f32.mrb[0].mxu0
    %v2493 = vadd.f32 %v2137, %v2492
    %v2494 = vpop.f32.mrb[0].mxu0
    %2495 = vmatprep.mubr.bf16.mxu0 0
    %2496 = vmatmul.mubr.bf16.gmra.mrb[0].mxu0 %v2215
    %v2497 = vpop.f32.mrb[0].mxu0
    %v2498 = vadd.f32 %v2137, %v2497
    %v2499 = vpop.f32.mrb[0].mxu0
    %v2500 = vpop.f32.mrb[0].mxu0
    %v2501 = vadd.f32 %v2137, %v2500
    %v2502 = vpop.f32.mrb[0].mxu0
    %2503 = vmatprep.mubr.bf16.mxu0 0
    %2504 = vmatmul.mubr.bf16.gmra.mrb[0].mxu0 %v2217
    %v2505 = vpop.f32.mrb[0].mxu0
    %v2506 = vadd.f32 %v2137, %v2505
    %v2507 = vpop.f32.mrb[0].mxu0
    %v2508 = vpop.f32.mrb[0].mxu0
    %v2509 = vadd.f32 %v2137, %v2508
    %v2510 = vpop.f32.mrb[0].mxu0
    %2511 = vdwg.mxu0
    %v2512 = vmax.f32 %v2258, 0.0
    %v2513 = vmax.f32 %v2261, 0.0
    %v2514 = vmax.f32 %v2266, 0.0
    %v2515 = vmax.f32 %v2269, 0.0
    %v2516 = vmax.f32 %v2274, 0.0
    %v2517 = vmax.f32 %v2277, 0.0
    %v2518 = vmax.f32 %v2282, 0.0
    %v2519 = vmax.f32 %v2285, 0.0
    %v2520 = vmax.f32 %v2290, 0.0
    %v2521 = vmax.f32 %v2293, 0.0
    %v2522 = vmax.f32 %v2298, 0.0
    %v2523 = vmax.f32 %v2301, 0.0
    %v2524 = vmax.f32 %v2306, 0.0
    %v2525 = vmax.f32 %v2309, 0.0
    %v2526 = vmax.f32 %v2314, 0.0
    %v2527 = vmax.f32 %v2317, 0.0
    %v2528 = vmax.f32 %v2322, 0.0
    %v2529 = vmax.f32 %v2325, 0.0
    %v2530 = vmax.f32 %v2330, 0.0
    %v2531 = vmax.f32 %v2333, 0.0
    %v2532 = vmax.f32 %v2338, 0.0
    %v2533 = vmax.f32 %v2341, 0.0
    %v2534 = vmax.f32 %v2346, 0.0
    %v2535 = vmax.f32 %v2349, 0.0
    %v2536 = vmax.f32 %v2354, 0.0
    %v2537 = vmax.f32 %v2357, 0.0
    %v2538 = vmax.f32 %v2362, 0.0
    %v2539 = vmax.f32 %v2365, 0.0
    %v2540 = vmax.f32 %v2370, 0.0
    %v2541 = vmax.f32 %v2373, 0.0
    %v2542 = vmax.f32 %v2378, 0.0
    %v2543 = vmax.f32 %v2381, 0.0
    %v2544 = vmax.f32 %v2386, 0.0
    %v2545 = vmax.f32 %v2389, 0.0
    %v2546 = vmax.f32 %v2394, 0.0
    %v2547 = vmax.f32 %v2397, 0.0
    %v2548 = vmax.f32 %v2402, 0.0
    %v2549 = vmax.f32 %v2405, 0.0
    %v2550 = vmax.f32 %v2410, 0.0
    %v2551 = vmax.f32 %v2413, 0.0
    %v2552 = vmax.f32 %v2418, 0.0
    %v2553 = vmax.f32 %v2421, 0.0
    %v2554 = vmax.f32 %v2426, 0.0
    %v2555 = vmax.f32 %v2429, 0.0
    %v2556 = vmax.f32 %v2434, 0.0
    %v2557 = vmax.f32 %v2437, 0.0
    %v2558 = vmax.f32 %v2442, 0.0
    %v2559 = vmax.f32 %v2445, 0.0
    %v2560 = vmax.f32 %v2450, 0.0
    %v2561 = vmax.f32 %v2453, 0.0
    %v2562 = vmax.f32 %v2458, 0.0
    %v2563 = vmax.f32 %v2461, 0.0
    %v2564 = vmax.f32 %v2466, 0.0
    %v2565 = vmax.f32 %v2469, 0.0
    %v2566 = vmax.f32 %v2474, 0.0
    %v2567 = vmax.f32 %v2477, 0.0
    %v2568 = vmax.f32 %v2482, 0.0
    %v2569 = vmax.f32 %v2485, 0.0
    %v2570 = vmax.f32 %v2490, 0.0
    %v2571 = vmax.f32 %v2493, 0.0
    %v2572 = vmax.f32 %v2498, 0.0
    %v2573 = vmax.f32 %v2501, 0.0
    %v2574 = vmax.f32 %v2506, 0.0
    %v2575 = vmax.f32 %v2509, 0.0
    %v2576 = vpack.c.bf16 %v2513, %v2512
    %v2577 = vpack.c.bf16 %v2515, %v2514
    %v2578 = vpack.c.bf16 %v2517, %v2516
    %v2579 = vpack.c.bf16 %v2519, %v2518
    %v2580 = vpack.c.bf16 %v2521, %v2520
    %v2581 = vpack.c.bf16 %v2523, %v2522
    %v2582 = vpack.c.bf16 %v2525, %v2524
    %v2583 = vpack.c.bf16 %v2527, %v2526
    %v2584 = vpack.c.bf16 %v2529, %v2528
    %v2585 = vpack.c.bf16 %v2531, %v2530
    %v2586 = vpack.c.bf16 %v2533, %v2532
    %v2587 = vpack.c.bf16 %v2535, %v2534
    %v2588 = vpack.c.bf16 %v2537, %v2536
    %v2589 = vpack.c.bf16 %v2539, %v2538
    %v2590 = vpack.c.bf16 %v2541, %v2540
    %v2591 = vpack.c.bf16 %v2543, %v2542
    %v2592 = vpack.c.bf16 %v2545, %v2544
    %v2593 = vpack.c.bf16 %v2547, %v2546
    %v2594 = vpack.c.bf16 %v2549, %v2548
    %v2595 = vpack.c.bf16 %v2551, %v2550
    %v2596 = vpack.c.bf16 %v2553, %v2552
    %v2597 = vpack.c.bf16 %v2555, %v2554
    %v2598 = vpack.c.bf16 %v2557, %v2556
    %v2599 = vpack.c.bf16 %v2559, %v2558
    %v2600 = vpack.c.bf16 %v2561, %v2560
    %v2601 = vpack.c.bf16 %v2563, %v2562
    %v2602 = vpack.c.bf16 %v2565, %v2564
    %v2603 = vpack.c.bf16 %v2567, %v2566
    %v2604 = vpack.c.bf16 %v2569, %v2568
    %v2605 = vpack.c.bf16 %v2571, %v2570
    %v2606 = vpack.c.bf16 %v2573, %v2572
    %v2607 = vpack.c.bf16 %v2575, %v2574
    %v2608 = vld [vmem:[%s3] sm:$0xf]
    %v2609 = vld [vmem:[%s3 + $0x4] sm:$0xf]
    %v2610 = vld [vmem:[%s3 + $0x8] sm:$0xf]
    %v2611 = vld [vmem:[%s3 + $0xc] sm:$0xf]
    %v2612 = vld [vmem:[%s3 + $0x10] sm:$0xf]
    %v2613 = vld [vmem:[%s3 + $0x14] sm:$0xf]
    %v2614 = vld [vmem:[%s3 + $0x18] sm:$0xf]
    %v2615 = vld [vmem:[%s3 + $0x1c] sm:$0xf]
    %v2616 = vld [vmem:[%s3 + $0x20] sm:$0xf]
    %v2617 = vld [vmem:[%s3 + $0x24] sm:$0xf]
    %v2618 = vld [vmem:[%s3 + $0x28] sm:$0xf]
    %v2619 = vld [vmem:[%s3 + $0x2c] sm:$0xf]
    %v2620 = vld [vmem:[%s3 + $0x30] sm:$0xf]
    %v2621 = vld [vmem:[%s3 + $0x34] sm:$0xf]
    %v2622 = vld [vmem:[%s3 + $0x38] sm:$0xf]
    %v2623 = vld [vmem:[%s3 + $0x3c] sm:$0xf]
    %v2624 = vld [vmem:[%s3 + $0x40] sm:$0xf]
    %v2625 = vld [vmem:[%s3 + $0x44] sm:$0xf]
    %v2626 = vld [vmem:[%s3 + $0x48] sm:$0xf]
    %v2627 = vld [vmem:[%s3 + $0x4c] sm:$0xf]
    %v2628 = vld [vmem:[%s3 + $0x50] sm:$0xf]
    %v2629 = vld [vmem:[%s3 + $0x54] sm:$0xf]
    %v2630 = vld [vmem:[%s3 + $0x58] sm:$0xf]
    %v2631 = vld [vmem:[%s3 + $0x5c] sm:$0xf]
    %v2632 = vld [vmem:[%s3 + $0x60] sm:$0xf]
    %v2633 = vld [vmem:[%s3 + $0x64] sm:$0xf]
    %v2634 = vld [vmem:[%s3 + $0x68] sm:$0xf]
    %v2635 = vld [vmem:[%s3 + $0x6c] sm:$0xf]
    %v2636 = vld [vmem:[%s3 + $0x70] sm:$0xf]
    %v2637 = vld [vmem:[%s3 + $0x74] sm:$0xf]
    %v2638 = vld [vmem:[%s3 + $0x78] sm:$0xf]
    %v2639 = vld [vmem:[%s3 + $0x7c] sm:$0xf]
    %v2640 = vld [vmem:[%s3 + $0x80] sm:$0xf]
    %v2641 = vld [vmem:[%s3 + $0x84] sm:$0xf]
    %v2642 = vld [vmem:[%s3 + $0x88] sm:$0xf]
    %v2643 = vld [vmem:[%s3 + $0x8c] sm:$0xf]
    %v2644 = vld [vmem:[%s3 + $0x90] sm:$0xf]
    %v2645 = vld [vmem:[%s3 + $0x94] sm:$0xf]
    %v2646 = vld [vmem:[%s3 + $0x98] sm:$0xf]
    %v2647 = vld [vmem:[%s3 + $0x9c] sm:$0xf]
    %v2648 = vld [vmem:[%s3 + $0xa0] sm:$0xf]
    %v2649 = vld [vmem:[%s3 + $0xa4] sm:$0xf]
    %v2650 = vld [vmem:[%s3 + $0xa8] sm:$0xf]
    %v2651 = vld [vmem:[%s3 + $0xac] sm:$0xf]
    %v2652 = vld [vmem:[%s3 + $0xb0] sm:$0xf]
    %v2653 = vld [vmem:[%s3 + $0xb4] sm:$0xf]
    %v2654 = vld [vmem:[%s3 + $0xb8] sm:$0xf]
    %v2655 = vld [vmem:[%s3 + $0xbc] sm:$0xf]
    %v2656 = vld [vmem:[%s3 + $0xc0] sm:$0xf]
    %v2657 = vld [vmem:[%s3 + $0xc4] sm:$0xf]
    %v2658 = vld [vmem:[%s3 + $0xc8] sm:$0xf]
    %v2659 = vld [vmem:[%s3 + $0xcc] sm:$0xf]
    %v2660 = vld [vmem:[%s3 + $0xd0] sm:$0xf]
    %v2661 = vld [vmem:[%s3 + $0xd4] sm:$0xf]
    %v2662 = vld [vmem:[%s3 + $0xd8] sm:$0xf]
    %v2663 = vld [vmem:[%s3 + $0xdc] sm:$0xf]
    %v2664 = vld [vmem:[%s3 + $0xe0] sm:$0xf]
    %v2665 = vld [vmem:[%s3 + $0xe4] sm:$0xf]
    %v2666 = vld [vmem:[%s3 + $0xe8] sm:$0xf]
    %v2667 = vld [vmem:[%s3 + $0xec] sm:$0xf]
    %v2668 = vld [vmem:[%s3 + $0xf0] sm:$0xf]
    %v2669 = vld [vmem:[%s3 + $0xf4] sm:$0xf]
    %v2670 = vld [vmem:[%s3 + $0xf8] sm:$0xf]
    %v2671 = vld [vmem:[%s3 + $0xfc] sm:$0xf]
    %v2672 = vld [vmem:[%s3 + $0x100] sm:$0xf]
    %v2673 = vld [vmem:[%s3 + $0x104] sm:$0xf]
    %v2674 = vld [vmem:[%s3 + $0x108] sm:$0xf]
    %v2675 = vld [vmem:[%s3 + $0x10c] sm:$0xf]
    %v2676 = vld [vmem:[%s3 + $0x110] sm:$0xf]
    %v2677 = vld [vmem:[%s3 + $0x114] sm:$0xf]
    %v2678 = vld [vmem:[%s3 + $0x118] sm:$0xf]
    %v2679 = vld [vmem:[%s3 + $0x11c] sm:$0xf]
    %v2680 = vld [vmem:[%s4] sm:$0x1]
    %v2682 = vshrl.u32 %v2576, 16
    %v2684 = vrot.slane %v2682, 7
    %v2685 = vshll.u32 %v2576, 16
    %v2687 = vor.u32 %v2684, %v2685
    %v2689 = vshrl.u32 %v2577, 16
    %v2691 = vrot.slane %v2689, 7
    %v2692 = vshll.u32 %v2577, 16
    %v2694 = vor.u32 %v2691, %v2692
    %v2696 = vshrl.u32 %v2578, 16
    %v2698 = vrot.slane %v2696, 7
    %v2699 = vshll.u32 %v2578, 16
    %v2701 = vor.u32 %v2698, %v2699
    %v2703 = vshrl.u32 %v2579, 16
    %v2705 = vrot.slane %v2703, 7
    %v2706 = vshll.u32 %v2579, 16
    %v2708 = vor.u32 %v2705, %v2706
    %v2710 = vshrl.u32 %v2580, 16
    %v2712 = vrot.slane %v2710, 7
    %v2713 = vshll.u32 %v2580, 16
    %v2715 = vor.u32 %v2712, %v2713
    %v2717 = vshrl.u32 %v2581, 16
    %v2719 = vrot.slane %v2717, 7
    %v2720 = vshll.u32 %v2581, 16
    %v2722 = vor.u32 %v2719, %v2720
    %v2724 = vshrl.u32 %v2582, 16
    %v2726 = vrot.slane %v2724, 7
    %v2727 = vshll.u32 %v2582, 16
    %v2729 = vor.u32 %v2726, %v2727
    %v2731 = vshrl.u32 %v2583, 16
    %v2733 = vrot.slane %v2731, 7
    %v2734 = vshll.u32 %v2583, 16
    %v2736 = vor.u32 %v2733, %v2734
    %v2738 = vshrl.u32 %v2584, 16
    %v2740 = vrot.slane %v2738, 7
    %v2741 = vshll.u32 %v2584, 16
    %v2743 = vor.u32 %v2740, %v2741
    %v2745 = vshrl.u32 %v2585, 16
    %v2747 = vrot.slane %v2745, 7
    %v2748 = vshll.u32 %v2585, 16
    %v2750 = vor.u32 %v2747, %v2748
    %v2752 = vshrl.u32 %v2586, 16
    %v2754 = vrot.slane %v2752, 7
    %v2755 = vshll.u32 %v2586, 16
    %v2757 = vor.u32 %v2754, %v2755
    %v2759 = vshrl.u32 %v2587, 16
    %v2761 = vrot.slane %v2759, 7
    %v2762 = vshll.u32 %v2587, 16
    %v2764 = vor.u32 %v2761, %v2762
    %v2766 = vshrl.u32 %v2588, 16
    %v2768 = vrot.slane %v2766, 7
    %v2769 = vshll.u32 %v2588, 16
    %v2771 = vor.u32 %v2768, %v2769
    %v2773 = vshrl.u32 %v2589, 16
    %v2775 = vrot.slane %v2773, 7
    %v2776 = vshll.u32 %v2589, 16
    %v2778 = vor.u32 %v2775, %v2776
    %v2780 = vshrl.u32 %v2590, 16
    %v2782 = vrot.slane %v2780, 7
    %v2783 = vshll.u32 %v2590, 16
    %v2785 = vor.u32 %v2782, %v2783
    %v2787 = vshrl.u32 %v2591, 16
    %v2789 = vrot.slane %v2787, 7
    %v2790 = vshll.u32 %v2591, 16
    %v2792 = vor.u32 %v2789, %v2790
    %v2794 = vshrl.u32 %v2592, 16
    %v2796 = vrot.slane %v2794, 7
    %v2797 = vshll.u32 %v2592, 16
    %v2799 = vor.u32 %v2796, %v2797
    %v2801 = vshrl.u32 %v2593, 16
    %v2803 = vrot.slane %v2801, 7
    %v2804 = vshll.u32 %v2593, 16
    %v2806 = vor.u32 %v2803, %v2804
    %v2808 = vshrl.u32 %v2594, 16
    %v2810 = vrot.slane %v2808, 7
    %v2811 = vshll.u32 %v2594, 16
    %v2813 = vor.u32 %v2810, %v2811
    %v2815 = vshrl.u32 %v2595, 16
    %v2817 = vrot.slane %v2815, 7
    %v2818 = vshll.u32 %v2595, 16
    %v2820 = vor.u32 %v2817, %v2818
    %v2822 = vshrl.u32 %v2596, 16
    %v2824 = vrot.slane %v2822, 7
    %v2825 = vshll.u32 %v2596, 16
    %v2827 = vor.u32 %v2824, %v2825
    %v2829 = vshrl.u32 %v2597, 16
    %v2831 = vrot.slane %v2829, 7
    %v2832 = vshll.u32 %v2597, 16
    %v2834 = vor.u32 %v2831, %v2832
    %v2836 = vshrl.u32 %v2598, 16
    %v2838 = vrot.slane %v2836, 7
    %v2839 = vshll.u32 %v2598, 16
    %v2841 = vor.u32 %v2838, %v2839
    %v2843 = vshrl.u32 %v2599, 16
    %v2845 = vrot.slane %v2843, 7
    %v2846 = vshll.u32 %v2599, 16
    %v2848 = vor.u32 %v2845, %v2846
    %v2850 = vshrl.u32 %v2600, 16
    %v2852 = vrot.slane %v2850, 7
    %v2853 = vshll.u32 %v2600, 16
    %v2855 = vor.u32 %v2852, %v2853
    %v2857 = vshrl.u32 %v2601, 16
    %v2859 = vrot.slane %v2857, 7
    %v2860 = vshll.u32 %v2601, 16
    %v2862 = vor.u32 %v2859, %v2860
    %v2864 = vshrl.u32 %v2602, 16
    %v2866 = vrot.slane %v2864, 7
    %v2867 = vshll.u32 %v2602, 16
    %v2869 = vor.u32 %v2866, %v2867
    %v2871 = vshrl.u32 %v2603, 16
    %v2873 = vrot.slane %v2871, 7
    %v2874 = vshll.u32 %v2603, 16
    %v2876 = vor.u32 %v2873, %v2874
    %v2878 = vshrl.u32 %v2604, 16
    %v2880 = vrot.slane %v2878, 7
    %v2881 = vshll.u32 %v2604, 16
    %v2883 = vor.u32 %v2880, %v2881
    %v2885 = vshrl.u32 %v2605, 16
    %v2887 = vrot.slane %v2885, 7
    %v2888 = vshll.u32 %v2605, 16
    %v2890 = vor.u32 %v2887, %v2888
    %v2892 = vshrl.u32 %v2606, 16
    %v2894 = vrot.slane %v2892, 7
    %v2895 = vshll.u32 %v2606, 16
    %v2897 = vor.u32 %v2894, %v2895
    %v2899 = vshrl.u32 %v2607, 16
    %v2901 = vrot.slane %v2899, 7
    %v2902 = vshll.u32 %v2607, 16
    %v2904 = vor.u32 %v2901, %v2902
    %v3001 = vrot.slane %v2576, 7
    %v3002 = vrot.slane %v2577, 7
    %v3003 = vrot.slane %v2578, 7
    %v3004 = vrot.slane %v2579, 7
    %v3005 = vrot.slane %v2580, 7
    %v3006 = vrot.slane %v2581, 7
    %v3007 = vrot.slane %v2582, 7
    %v3008 = vrot.slane %v2583, 7
    %v3009 = vrot.slane %v2584, 7
    %v3010 = vrot.slane %v2585, 7
    %v3011 = vrot.slane %v2586, 7
    %v3012 = vrot.slane %v2587, 7
    %v3013 = vrot.slane %v2588, 7
    %v3014 = vrot.slane %v2589, 7
    %v3015 = vrot.slane %v2590, 7
    %v3016 = vrot.slane %v2591, 7
    %v3017 = vrot.slane %v2592, 7
    %v3018 = vrot.slane %v2593, 7
    %v3019 = vrot.slane %v2594, 7
    %v3020 = vrot.slane %v2595, 7
    %v3021 = vrot.slane %v2596, 7
    %v3022 = vrot.slane %v2597, 7
    %v3023 = vrot.slane %v2598, 7
    %v3024 = vrot.slane %v2599, 7
    %v3025 = vrot.slane %v2600, 7
    %v3026 = vrot.slane %v2601, 7
    %v3027 = vrot.slane %v2602, 7
    %v3028 = vrot.slane %v2603, 7
    %v3029 = vrot.slane %v2604, 7
    %v3030 = vrot.slane %v2605, 7
    %v3031 = vrot.slane %v2606, 7
    %v3032 = vrot.slane %v2607, 7
    %v3065 = vsel %vm524, %v2576, %v2687
    %v3066 = vsel %vm524, %v2577, %v2694
    %v3067 = vsel %vm524, %v2578, %v2701
    %v3068 = vsel %vm524, %v2579, %v2708
    %v3069 = vsel %vm524, %v2580, %v2715
    %v3070 = vsel %vm524, %v2581, %v2722
    %v3071 = vsel %vm524, %v2582, %v2729
    %v3072 = vsel %vm524, %v2583, %v2736
    %v3073 = vsel %vm524, %v2584, %v2743
    %v3074 = vsel %vm524, %v2585, %v2750
    %v3075 = vsel %vm524, %v2586, %v2757
    %v3076 = vsel %vm524, %v2587, %v2764
    %v3077 = vsel %vm524, %v2588, %v2771
    %v3078 = vsel %vm524, %v2589, %v2778
    %v3079 = vsel %vm524, %v2590, %v2785
    %v3080 = vsel %vm524, %v2591, %v2792
    %v3081 = vsel %vm524, %v2592, %v2799
    %v3082 = vsel %vm524, %v2593, %v2806
    %v3083 = vsel %vm524, %v2594, %v2813
    %v3084 = vsel %vm524, %v2595, %v2820
    %v3085 = vsel %vm524, %v2596, %v2827
    %v3086 = vsel %vm524, %v2597, %v2834
    %v3087 = vsel %vm524, %v2598, %v2841
    %v3088 = vsel %vm524, %v2599, %v2848
    %v3089 = vsel %vm524, %v2600, %v2855
    %v3090 = vsel %vm524, %v2601, %v2862
    %v3091 = vsel %vm524, %v2602, %v2869
    %v3092 = vsel %vm524, %v2603, %v2876
    %v3093 = vsel %vm524, %v2604, %v2883
    %v3094 = vsel %vm524, %v2605, %v2890
    %v3095 = vsel %vm524, %v2606, %v2897
    %v3096 = vsel %vm524, %v2607, %v2904
    %v3097 = vsel %vm524, %v2684, %v3001
    %v3098 = vsel %vm524, %v2691, %v3002
    %v3099 = vsel %vm524, %v2698, %v3003
    %v3100 = vsel %vm524, %v2705, %v3004
    %v3101 = vsel %vm524, %v2712, %v3005
    %v3102 = vsel %vm524, %v2719, %v3006
    %v3103 = vsel %vm524, %v2726, %v3007
    %v3104 = vsel %vm524, %v2733, %v3008
    %v3105 = vsel %vm524, %v2740, %v3009
    %v3106 = vsel %vm524, %v2747, %v3010
    %v3107 = vsel %vm524, %v2754, %v3011
    %v3108 = vsel %vm524, %v2761, %v3012
    %v3109 = vsel %vm524, %v2768, %v3013
    %v3110 = vsel %vm524, %v2775, %v3014
    %v3111 = vsel %vm524, %v2782, %v3015
    %v3112 = vsel %vm524, %v2789, %v3016
    %v3113 = vsel %vm524, %v2796, %v3017
    %v3114 = vsel %vm524, %v2803, %v3018
    %v3115 = vsel %vm524, %v2810, %v3019
    %v3116 = vsel %vm524, %v2817, %v3020
    %v3117 = vsel %vm524, %v2824, %v3021
    %v3118 = vsel %vm524, %v2831, %v3022
    %v3119 = vsel %vm524, %v2838, %v3023
    %v3120 = vsel %vm524, %v2845, %v3024
    %v3121 = vsel %vm524, %v2852, %v3025
    %v3122 = vsel %vm524, %v2859, %v3026
    %v3123 = vsel %vm524, %v2866, %v3027
    %v3124 = vsel %vm524, %v2873, %v3028
    %v3125 = vsel %vm524, %v2880, %v3029
    %v3126 = vsel %vm524, %v2887, %v3030
    %v3127 = vsel %vm524, %v2894, %v3031
    %v3128 = vsel %vm524, %v2901, %v3032
    %v3130 = vshrl.u32 %v3065, 16
    %v3132 = vshll.u32 %v3065, 16
    %v3134 = vrot.slane %v3132, 1
    %v3135 = vor.u32 %v3130, %v3134
    %v3137 = vshll.u32 %v3097, 16
    %v3139 = vrot.slane %v3137, 1
    %v3140 = vsel %vm589, %v3135, %v3139
    %v3142 = vshrl.u32 %v3066, 16
    %v3144 = vshll.u32 %v3066, 16
    %v3146 = vrot.slane %v3144, 1
    %v3147 = vor.u32 %v3142, %v3146
    %v3149 = vshll.u32 %v3098, 16
    %v3151 = vrot.slane %v3149, 1
    %v3152 = vsel %vm589, %v3147, %v3151
    %v3154 = vshrl.u32 %v3067, 16
    %v3156 = vshll.u32 %v3067, 16
    %v3158 = vrot.slane %v3156, 1
    %v3159 = vor.u32 %v3154, %v3158
    %v3161 = vshll.u32 %v3099, 16
    %v3163 = vrot.slane %v3161, 1
    %v3164 = vsel %vm589, %v3159, %v3163
    %v3166 = vshrl.u32 %v3068, 16
    %v3168 = vshll.u32 %v3068, 16
    %v3170 = vrot.slane %v3168, 1
    %v3171 = vor.u32 %v3166, %v3170
    %v3173 = vshll.u32 %v3100, 16
    %v3175 = vrot.slane %v3173, 1
    %v3176 = vsel %vm589, %v3171, %v3175
    %v3178 = vshrl.u32 %v3069, 16
    %v3180 = vshll.u32 %v3069, 16
    %v3182 = vrot.slane %v3180, 1
    %v3183 = vor.u32 %v3178, %v3182
    %v3185 = vshll.u32 %v3101, 16
    %v3187 = vrot.slane %v3185, 1
    %v3188 = vsel %vm589, %v3183, %v3187
    %v3190 = vshrl.u32 %v3070, 16
    %v3192 = vshll.u32 %v3070, 16
    %v3194 = vrot.slane %v3192, 1
    %v3195 = vor.u32 %v3190, %v3194
    %v3197 = vshll.u32 %v3102, 16
    %v3199 = vrot.slane %v3197, 1
    %v3200 = vsel %vm589, %v3195, %v3199
    %v3202 = vshrl.u32 %v3071, 16
    %v3204 = vshll.u32 %v3071, 16
    %v3206 = vrot.slane %v3204, 1
    %v3207 = vor.u32 %v3202, %v3206
    %v3209 = vshll.u32 %v3103, 16
    %v3211 = vrot.slane %v3209, 1
    %v3212 = vsel %vm589, %v3207, %v3211
    %v3214 = vshrl.u32 %v3072, 16
    %v3216 = vshll.u32 %v3072, 16
    %v3218 = vrot.slane %v3216, 1
    %v3219 = vor.u32 %v3214, %v3218
    %v3221 = vshll.u32 %v3104, 16
    %v3223 = vrot.slane %v3221, 1
    %v3224 = vsel %vm589, %v3219, %v3223
    %v3226 = vshrl.u32 %v3073, 16
    %v3228 = vshll.u32 %v3073, 16
    %v3230 = vrot.slane %v3228, 1
    %v3231 = vor.u32 %v3226, %v3230
    %v3233 = vshll.u32 %v3105, 16
    %v3235 = vrot.slane %v3233, 1
    %v3236 = vsel %vm589, %v3231, %v3235
    %v3238 = vshrl.u32 %v3074, 16
    %v3240 = vshll.u32 %v3074, 16
    %v3242 = vrot.slane %v3240, 1
    %v3243 = vor.u32 %v3238, %v3242
    %v3245 = vshll.u32 %v3106, 16
    %v3247 = vrot.slane %v3245, 1
    %v3248 = vsel %vm589, %v3243, %v3247
    %v3250 = vshrl.u32 %v3075, 16
    %v3252 = vshll.u32 %v3075, 16
    %v3254 = vrot.slane %v3252, 1
    %v3255 = vor.u32 %v3250, %v3254
    %v3257 = vshll.u32 %v3107, 16
    %v3259 = vrot.slane %v3257, 1
    %v3260 = vsel %vm589, %v3255, %v3259
    %v3262 = vshrl.u32 %v3076, 16
    %v3264 = vshll.u32 %v3076, 16
    %v3266 = vrot.slane %v3264, 1
    %v3267 = vor.u32 %v3262, %v3266
    %v3269 = vshll.u32 %v3108, 16
    %v3271 = vrot.slane %v3269, 1
    %v3272 = vsel %vm589, %v3267, %v3271
    %v3274 = vshrl.u32 %v3077, 16
    %v3276 = vshll.u32 %v3077, 16
    %v3278 = vrot.slane %v3276, 1
    %v3279 = vor.u32 %v3274, %v3278
    %v3281 = vshll.u32 %v3109, 16
    %v3283 = vrot.slane %v3281, 1
    %v3284 = vsel %vm589, %v3279, %v3283
    %v3286 = vshrl.u32 %v3078, 16
    %v3288 = vshll.u32 %v3078, 16
    %v3290 = vrot.slane %v3288, 1
    %v3291 = vor.u32 %v3286, %v3290
    %v3293 = vshll.u32 %v3110, 16
    %v3295 = vrot.slane %v3293, 1
    %v3296 = vsel %vm589, %v3291, %v3295
    %v3298 = vshrl.u32 %v3079, 16
    %v3300 = vshll.u32 %v3079, 16
    %v3302 = vrot.slane %v3300, 1
    %v3303 = vor.u32 %v3298, %v3302
    %v3305 = vshll.u32 %v3111, 16
    %v3307 = vrot.slane %v3305, 1
    %v3308 = vsel %vm589, %v3303, %v3307
    %v3310 = vshrl.u32 %v3081, 16
    %v3312 = vshll.u32 %v3081, 16
    %v3314 = vrot.slane %v3312, 1
    %v3315 = vor.u32 %v3310, %v3314
    %v3317 = vshll.u32 %v3113, 16
    %v3319 = vrot.slane %v3317, 1
    %v3320 = vsel %vm589, %v3315, %v3319
    %v3322 = vshrl.u32 %v3082, 16
    %v3324 = vshll.u32 %v3082, 16
    %v3326 = vrot.slane %v3324, 1
    %v3327 = vor.u32 %v3322, %v3326
    %v3329 = vshll.u32 %v3114, 16
    %v3331 = vrot.slane %v3329, 1
    %v3332 = vsel %vm589, %v3327, %v3331
    %v3334 = vshrl.u32 %v3083, 16
    %v3336 = vshll.u32 %v3083, 16
    %v3338 = vrot.slane %v3336, 1
    %v3339 = vor.u32 %v3334, %v3338
    %v3341 = vshll.u32 %v3115, 16
    %v3343 = vrot.slane %v3341, 1
    %v3344 = vsel %vm589, %v3339, %v3343
    %v3346 = vshrl.u32 %v3084, 16
    %v3348 = vshll.u32 %v3084, 16
    %v3350 = vrot.slane %v3348, 1
    %v3351 = vor.u32 %v3346, %v3350
    %v3353 = vshll.u32 %v3116, 16
    %v3355 = vrot.slane %v3353, 1
    %v3356 = vsel %vm589, %v3351, %v3355
    %v3358 = vshrl.u32 %v3085, 16
    %v3360 = vshll.u32 %v3085, 16
    %v3362 = vrot.slane %v3360, 1
    %v3363 = vor.u32 %v3358, %v3362
    %v3365 = vshll.u32 %v3117, 16
    %v3367 = vrot.slane %v3365, 1
    %v3368 = vsel %vm589, %v3363, %v3367
    %v3370 = vshrl.u32 %v3086, 16
    %v3372 = vshll.u32 %v3086, 16
    %v3374 = vrot.slane %v3372, 1
    %v3375 = vor.u32 %v3370, %v3374
    %v3377 = vshll.u32 %v3118, 16
    %v3379 = vrot.slane %v3377, 1
    %v3380 = vsel %vm589, %v3375, %v3379
    %v3382 = vshrl.u32 %v3087, 16
    %v3384 = vshll.u32 %v3087, 16
    %v3386 = vrot.slane %v3384, 1
    %v3387 = vor.u32 %v3382, %v3386
    %v3389 = vshll.u32 %v3119, 16
    %v3391 = vrot.slane %v3389, 1
    %v3392 = vsel %vm589, %v3387, %v3391
    %v3394 = vshrl.u32 %v3088, 16
    %v3396 = vshll.u32 %v3088, 16
    %v3398 = vrot.slane %v3396, 1
    %v3399 = vor.u32 %v3394, %v3398
    %v3401 = vshll.u32 %v3120, 16
    %v3403 = vrot.slane %v3401, 1
    %v3404 = vsel %vm589, %v3399, %v3403
    %v3406 = vshrl.u32 %v3089, 16
    %v3408 = vshll.u32 %v3089, 16
    %v3410 = vrot.slane %v3408, 1
    %v3411 = vor.u32 %v3406, %v3410
    %v3413 = vshll.u32 %v3121, 16
    %v3415 = vrot.slane %v3413, 1
    %v3416 = vsel %vm589, %v3411, %v3415
    %v3418 = vshrl.u32 %v3090, 16
    %v3420 = vshll.u32 %v3090, 16
    %v3422 = vrot.slane %v3420, 1
    %v3423 = vor.u32 %v3418, %v3422
    %v3425 = vshll.u32 %v3122, 16
    %v3427 = vrot.slane %v3425, 1
    %v3428 = vsel %vm589, %v3423, %v3427
    %v3430 = vshrl.u32 %v3091, 16
    %v3432 = vshll.u32 %v3091, 16
    %v3434 = vrot.slane %v3432, 1
    %v3435 = vor.u32 %v3430, %v3434
    %v3437 = vshll.u32 %v3123, 16
    %v3439 = vrot.slane %v3437, 1
    %v3440 = vsel %vm589, %v3435, %v3439
    %v3442 = vshrl.u32 %v3092, 16
    %v3444 = vshll.u32 %v3092, 16
    %v3446 = vrot.slane %v3444, 1
    %v3447 = vor.u32 %v3442, %v3446
    %v3449 = vshll.u32 %v3124, 16
    %v3451 = vrot.slane %v3449, 1
    %v3452 = vsel %vm589, %v3447, %v3451
    %v3454 = vshrl.u32 %v3093, 16
    %v3456 = vshll.u32 %v3093, 16
    %v3458 = vrot.slane %v3456, 1
    %v3459 = vor.u32 %v3454, %v3458
    %v3461 = vshll.u32 %v3125, 16
    %v3463 = vrot.slane %v3461, 1
    %v3464 = vsel %vm589, %v3459, %v3463
    %v3466 = vshrl.u32 %v3094, 16
    %v3468 = vshll.u32 %v3094, 16
    %v3470 = vrot.slane %v3468, 1
    %v3471 = vor.u32 %v3466, %v3470
    %v3473 = vshll.u32 %v3126, 16
    %v3475 = vrot.slane %v3473, 1
    %v3476 = vsel %vm589, %v3471, %v3475
    %v3478 = vshrl.u32 %v3095, 16
    %v3480 = vshll.u32 %v3095, 16
    %v3482 = vrot.slane %v3480, 1
    %v3483 = vor.u32 %v3478, %v3482
    %v3485 = vshll.u32 %v3127, 16
    %v3487 = vrot.slane %v3485, 1
    %v3488 = vsel %vm589, %v3483, %v3487
    %v3549 = vrot.slane %v3065, 1
    %v3550 = vrot.slane %v3097, 1
    %v3551 = vsel %vm1010, %v3549, %v3550
    %v3552 = vrot.slane %v3066, 1
    %v3553 = vrot.slane %v3098, 1
    %v3554 = vsel %vm1010, %v3552, %v3553
    %v3555 = vrot.slane %v3067, 1
    %v3556 = vrot.slane %v3099, 1
    %v3557 = vsel %vm1010, %v3555, %v3556
    %v3558 = vrot.slane %v3068, 1
    %v3559 = vrot.slane %v3100, 1
    %v3560 = vsel %vm1010, %v3558, %v3559
    %v3561 = vrot.slane %v3069, 1
    %v3562 = vrot.slane %v3101, 1
    %v3563 = vsel %vm1010, %v3561, %v3562
    %v3564 = vrot.slane %v3070, 1
    %v3565 = vrot.slane %v3102, 1
    %v3566 = vsel %vm1010, %v3564, %v3565
    %v3567 = vrot.slane %v3071, 1
    %v3568 = vrot.slane %v3103, 1
    %v3569 = vsel %vm1010, %v3567, %v3568
    %v3570 = vrot.slane %v3072, 1
    %v3571 = vrot.slane %v3104, 1
    %v3572 = vsel %vm1010, %v3570, %v3571
    %v3573 = vrot.slane %v3073, 1
    %v3574 = vrot.slane %v3105, 1
    %v3575 = vsel %vm1010, %v3573, %v3574
    %v3576 = vrot.slane %v3074, 1
    %v3577 = vrot.slane %v3106, 1
    %v3578 = vsel %vm1010, %v3576, %v3577
    %v3579 = vrot.slane %v3075, 1
    %v3580 = vrot.slane %v3107, 1
    %v3581 = vsel %vm1010, %v3579, %v3580
    %v3582 = vrot.slane %v3076, 1
    %v3583 = vrot.slane %v3108, 1
    %v3584 = vsel %vm1010, %v3582, %v3583
    %v3585 = vrot.slane %v3077, 1
    %v3586 = vrot.slane %v3109, 1
    %v3587 = vsel %vm1010, %v3585, %v3586
    %v3588 = vrot.slane %v3078, 1
    %v3589 = vrot.slane %v3110, 1
    %v3590 = vsel %vm1010, %v3588, %v3589
    %v3591 = vrot.slane %v3079, 1
    %v3592 = vrot.slane %v3111, 1
    %v3593 = vsel %vm1010, %v3591, %v3592
    %v3594 = vrot.slane %v3081, 1
    %v3595 = vrot.slane %v3113, 1
    %v3596 = vsel %vm1010, %v3594, %v3595
    %v3597 = vrot.slane %v3082, 1
    %v3598 = vrot.slane %v3114, 1
    %v3599 = vsel %vm1010, %v3597, %v3598
    %v3600 = vrot.slane %v3083, 1
    %v3601 = vrot.slane %v3115, 1
    %v3602 = vsel %vm1010, %v3600, %v3601
    %v3603 = vrot.slane %v3084, 1
    %v3604 = vrot.slane %v3116, 1
    %v3605 = vsel %vm1010, %v3603, %v3604
    %v3606 = vrot.slane %v3085, 1
    %v3607 = vrot.slane %v3117, 1
    %v3608 = vsel %vm1010, %v3606, %v3607
    %v3609 = vrot.slane %v3086, 1
    %v3610 = vrot.slane %v3118, 1
    %v3611 = vsel %vm1010, %v3609, %v3610
    %v3612 = vrot.slane %v3087, 1
    %v3613 = vrot.slane %v3119, 1
    %v3614 = vsel %vm1010, %v3612, %v3613
    %v3615 = vrot.slane %v3088, 1
    %v3616 = vrot.slane %v3120, 1
    %v3617 = vsel %vm1010, %v3615, %v3616
    %v3618 = vrot.slane %v3089, 1
    %v3619 = vrot.slane %v3121, 1
    %v3620 = vsel %vm1010, %v3618, %v3619
    %v3621 = vrot.slane %v3090, 1
    %v3622 = vrot.slane %v3122, 1
    %v3623 = vsel %vm1010, %v3621, %v3622
    %v3624 = vrot.slane %v3091, 1
    %v3625 = vrot.slane %v3123, 1
    %v3626 = vsel %vm1010, %v3624, %v3625
    %v3627 = vrot.slane %v3092, 1
    %v3628 = vrot.slane %v3124, 1
    %v3629 = vsel %vm1010, %v3627, %v3628
    %v3630 = vrot.slane %v3093, 1
    %v3631 = vrot.slane %v3125, 1
    %v3632 = vsel %vm1010, %v3630, %v3631
    %v3633 = vrot.slane %v3094, 1
    %v3634 = vrot.slane %v3126, 1
    %v3635 = vsel %vm1010, %v3633, %v3634
    %v3636 = vrot.slane %v3095, 1
    %v3637 = vrot.slane %v3127, 1
    %v3638 = vsel %vm1010, %v3636, %v3637
    %3639 = vrot.lane.b32.xlu0 %v3140, 64
    %v3640 = vpop.permute.xlu0 %3639
    %3641 = vrot.lane.b32.xlu0 %v3152, 64
    %v3642 = vpop.permute.xlu0 %3641
    %3643 = vrot.lane.b32.xlu0 %v3164, 64
    %v3644 = vpop.permute.xlu0 %3643
    %3645 = vrot.lane.b32.xlu0 %v3176, 64
    %v3646 = vpop.permute.xlu0 %3645
    %3647 = vrot.lane.b32.xlu0 %v3188, 64
    %v3648 = vpop.permute.xlu0 %3647
    %3649 = vrot.lane.b32.xlu0 %v3200, 64
    %v3650 = vpop.permute.xlu0 %3649
    %3651 = vrot.lane.b32.xlu0 %v3212, 64
    %v3652 = vpop.permute.xlu0 %3651
    %3653 = vrot.lane.b32.xlu0 %v3224, 64
    %v3654 = vpop.permute.xlu0 %3653
    %3655 = vrot.lane.b32.xlu0 %v3236, 64
    %v3656 = vpop.permute.xlu0 %3655
    %3657 = vrot.lane.b32.xlu0 %v3248, 64
    %v3658 = vpop.permute.xlu0 %3657
    %3659 = vrot.lane.b32.xlu0 %v3260, 64
    %v3660 = vpop.permute.xlu0 %3659
    %3661 = vrot.lane.b32.xlu0 %v3272, 64
    %v3662 = vpop.permute.xlu0 %3661
    %3663 = vrot.lane.b32.xlu0 %v3284, 64
    %v3664 = vpop.permute.xlu0 %3663
    %3665 = vrot.lane.b32.xlu0 %v3296, 64
    %v3666 = vpop.permute.xlu0 %3665
    %3667 = vrot.lane.b32.xlu0 %v3308, 64
    %v3668 = vpop.permute.xlu0 %3667
    %3669 = vrot.lane.b32.xlu0 %v3320, 64
    %v3670 = vpop.permute.xlu0 %3669
    %3671 = vrot.lane.b32.xlu0 %v3332, 64
    %v3672 = vpop.permute.xlu0 %3671
    %3673 = vrot.lane.b32.xlu0 %v3344, 64
    %v3674 = vpop.permute.xlu0 %3673
    %3675 = vrot.lane.b32.xlu0 %v3356, 64
    %v3676 = vpop.permute.xlu0 %3675
    %3677 = vrot.lane.b32.xlu0 %v3368, 64
    %v3678 = vpop.permute.xlu0 %3677
    %3679 = vrot.lane.b32.xlu0 %v3380, 64
    %v3680 = vpop.permute.xlu0 %3679
    %3681 = vrot.lane.b32.xlu0 %v3392, 64
    %v3682 = vpop.permute.xlu0 %3681
    %3683 = vrot.lane.b32.xlu0 %v3404, 64
    %v3684 = vpop.permute.xlu0 %3683
    %3685 = vrot.lane.b32.xlu0 %v3416, 64
    %v3686 = vpop.permute.xlu0 %3685
    %3687 = vrot.lane.b32.xlu0 %v3428, 64
    %v3688 = vpop.permute.xlu0 %3687
    %3689 = vrot.lane.b32.xlu0 %v3440, 64
    %v3690 = vpop.permute.xlu0 %3689
    %3691 = vrot.lane.b32.xlu0 %v3452, 64
    %v3692 = vpop.permute.xlu0 %3691
    %3693 = vrot.lane.b32.xlu0 %v3464, 64
    %v3694 = vpop.permute.xlu0 %3693
    %3695 = vrot.lane.b32.xlu0 %v3476, 64
    %v3696 = vpop.permute.xlu0 %3695
    %3697 = vrot.lane.b32.xlu0 %v3488, 64
    %v3698 = vpop.permute.xlu0 %3697
    %vm3699 = vcmask 523264
    %v3701 = vsel %vm3699, %v3065, %v3640
    %v3704 = vsel %vm3699, %v3066, %v3642
    %v3707 = vsel %vm3699, %v3067, %v3644
    %v3710 = vsel %vm3699, %v3068, %v3646
    %v3713 = vsel %vm3699, %v3069, %v3648
    %v3716 = vsel %vm3699, %v3070, %v3650
    %v3719 = vsel %vm3699, %v3071, %v3652
    %v3722 = vsel %vm3699, %v3072, %v3654
    %v3725 = vsel %vm3699, %v3073, %v3656
    %v3728 = vsel %vm3699, %v3074, %v3658
    %v3731 = vsel %vm3699, %v3075, %v3660
    %v3734 = vsel %vm3699, %v3076, %v3662
    %v3737 = vsel %vm3699, %v3077, %v3664
    %v3740 = vsel %vm3699, %v3078, %v3666
    %v3743 = vsel %vm3699, %v3079, %v3668
    %v3746 = vsel %vm3699, %v3081, %v3670
    %v3749 = vsel %vm3699, %v3082, %v3672
    %v3752 = vsel %vm3699, %v3083, %v3674
    %v3755 = vsel %vm3699, %v3084, %v3676
    %v3758 = vsel %vm3699, %v3085, %v3678
    %v3761 = vsel %vm3699, %v3086, %v3680
    %v3764 = vsel %vm3699, %v3087, %v3682
    %v3767 = vsel %vm3699, %v3088, %v3684
    %v3770 = vsel %vm3699, %v3089, %v3686
    %v3773 = vsel %vm3699, %v3090, %v3688
    %v3776 = vsel %vm3699, %v3091, %v3690
    %v3779 = vsel %vm3699, %v3092, %v3692
    %v3782 = vsel %vm3699, %v3093, %v3694
    %v3785 = vsel %vm3699, %v3094, %v3696
    %v3788 = vsel %vm3699, %v3095, %v3698
    %v3791 = vshrl.u32 %v3080, 16
    %v3793 = vshll.u32 %v3080, 16
    %v3795 = vrot.slane %v3793, 1
    %v3796 = vor.u32 %v3791, %v3795
    %v3798 = vshll.u32 %v3112, 16
    %v3800 = vrot.slane %v3798, 1
    %v3801 = vsel %vm589, %v3796, %v3800
    %v3803 = vshrl.u32 %v3096, 16
    %v3805 = vshll.u32 %v3096, 16
    %v3807 = vrot.slane %v3805, 1
    %v3808 = vor.u32 %v3803, %v3807
    %v3810 = vshll.u32 %v3128, 16
    %v3812 = vrot.slane %v3810, 1
    %v3813 = vsel %vm589, %v3808, %v3812
    %v3818 = vrot.slane %v3080, 1
    %v3819 = vrot.slane %v3112, 1
    %v3820 = vsel %vm1010, %v3818, %v3819
    %v3821 = vrot.slane %v3096, 1
    %v3822 = vrot.slane %v3128, 1
    %v3823 = vsel %vm1010, %v3821, %v3822
    %3824 = vrot.lane.b32.xlu0 %v3801, 64
    %v3825 = vpop.permute.xlu0 %3824
    %3826 = vrot.lane.b32.xlu0 %v3813, 64
    %v3827 = vpop.permute.xlu0 %3826
    %v3829 = vsel %vm3699, %v3080, %v3825
    %v3832 = vsel %vm3699, %v3096, %v3827
    %v3858 = vunpack.c.l.b16 %v2632
    %v3859 = vunpack.c.l.b16 %v2633
    %v3860 = vunpack.c.l.b16 %v2634
    %v3861 = vunpack.c.l.b16 %v2635
    %v3862 = vunpack.c.l.b16 %v2636
    %v3863 = vunpack.c.l.b16 %v2637
    %v3864 = vunpack.c.l.b16 %v2638
    %v3865 = vunpack.c.l.b16 %v2639
    %v3866 = vunpack.c.l.b16 %v2640
    %v3867 = vunpack.c.l.b16 %v2641
    %v3868 = vunpack.c.l.b16 %v2642
    %v3869 = vunpack.c.l.b16 %v2643
    %v3870 = vunpack.c.l.b16 %v2644
    %v3871 = vunpack.c.l.b16 %v2645
    %v3872 = vunpack.c.l.b16 %v2646
    %v3873 = vunpack.c.l.b16 %v2647
    %v3874 = vunpack.c.l.b16 %v2648
    %v3875 = vunpack.c.l.b16 %v2649
    %v3876 = vunpack.c.l.b16 %v2650
    %v3877 = vunpack.c.l.b16 %v2651
    %v3878 = vunpack.c.l.b16 %v2652
    %v3879 = vunpack.c.l.b16 %v2653
    %v3880 = vunpack.c.l.b16 %v2654
    %v3881 = vunpack.c.l.b16 %v2655
    %v3882 = vpack.c.b16 %v3859, %v3858
    %v3883 = vpack.c.b16 %v3861, %v3860
    %v3884 = vpack.c.b16 %v3863, %v3862
    %v3885 = vpack.c.b16 %v3865, %v3864
    %v3886 = vpack.c.b16 %v3867, %v3866
    %v3887 = vpack.c.b16 %v3869, %v3868
    %v3888 = vpack.c.b16 %v3871, %v3870
    %v3889 = vpack.c.b16 %v3873, %v3872
    %v3890 = vpack.c.b16 %v3875, %v3874
    %v3891 = vpack.c.b16 %v3877, %v3876
    %v3892 = vpack.c.b16 %v3879, %v3878
    %v3893 = vpack.c.b16 %v3881, %v3880
    %v3907 = vsel %vm3699, %v3551, 0
    %v3910 = vsel %vm3699, %v3554, 0
    %v3913 = vsel %vm3699, %v3557, 0
    %v3916 = vsel %vm3699, %v3560, 0
    %v3919 = vsel %vm3699, %v3563, 0
    %v3922 = vsel %vm3699, %v3566, 0
    %v3925 = vsel %vm3699, %v3569, 0
    %v3928 = vsel %vm3699, %v3572, 0
    %v3931 = vsel %vm3699, %v3575, 0
    %v3934 = vsel %vm3699, %v3578, 0
    %v3937 = vsel %vm3699, %v3581, 0
    %v3940 = vsel %vm3699, %v3584, 0
    %v3943 = vsel %vm3699, %v3587, 0
    %v3946 = vsel %vm3699, %v3590, 0
    %v3949 = vsel %vm3699, %v3593, 0
    %v3952 = vsel %vm3699, %v3820, 0
    %v3955 = vsel %vm3699, %v3596, 0
    %v3958 = vsel %vm3699, %v3599, 0
    %v3961 = vsel %vm3699, %v3602, 0
    %v3964 = vsel %vm3699, %v3605, 0
    %v3967 = vsel %vm3699, %v3608, 0
    %v3970 = vsel %vm3699, %v3611, 0
    %v3973 = vsel %vm3699, %v3614, 0
    %v3976 = vsel %vm3699, %v3617, 0
    %v3979 = vsel %vm3699, %v3620, 0
    %v3982 = vsel %vm3699, %v3623, 0
    %v3985 = vsel %vm3699, %v3626, 0
    %v3988 = vsel %vm3699, %v3629, 0
    %v3991 = vsel %vm3699, %v3632, 0
    %v3994 = vsel %vm3699, %v3635, 0
    %v3997 = vsel %vm3699, %v3638, 0
    %v4000 = vsel %vm3699, %v3823, 0
    %4002 = vmatprep.subr.bf16.mxu0 0
    %4003 = vmatpush1.bf16.msra.mxu0 %v3882
    %4004 = vmatprep.subr.bf16.mxu0 0
    %4005 = vmatpush1.bf16.msra.mxu0 %v3883
    %4006 = vmatprep.subr.bf16.mxu0 0
    %4007 = vmatpush1.bf16.msra.mxu0 %v3884
    %4008 = vmatprep.subr.bf16.mxu0 0
    %4009 = vmatpush1.bf16.msra.mxu0 %v3885
    %4010 = vmatprep.subr.bf16.mxu0 0
    %4011 = vmatpush1.bf16.msra.mxu0 %v3886
    %4012 = vmatprep.subr.bf16.mxu0 0
    %4013 = vmatpush1.bf16.msra.mxu0 %v3887
    %4014 = vmatprep.subr.bf16.mxu0 0
    %4015 = vmatpush1.bf16.msra.mxu0 %v3888
    %4016 = vmatprep.subr.bf16.mxu0 0
    %4017 = vmatpush1.bf16.msra.mxu0 %v3889
    %4018 = vmatprep.subr.bf16.mxu0 0
    %4019 = vmatpush1.bf16.msra.mxu0 %v3890
    %4020 = vmatprep.subr.bf16.mxu0 0
    %4021 = vmatpush1.bf16.msra.mxu0 %v3891
    %4022 = vmatprep.subr.bf16.mxu0 0
    %4023 = vmatpush1.bf16.msra.mxu0 %v3892
    %4024 = vmatprep.subr.bf16.mxu0 0
    %4025 = vmatpush1.bf16.msra.mxu0 %v3893
    %4026 = vmatprep.subr.bf16.mxu0 0
    %4027 = vmatpush1.bf16.msra.mxu0 0
    %4028 = vmatprep.subr.bf16.mxu0 0
    %4029 = vmatpush1.bf16.msra.mxu0 0
    %4030 = vmatprep.subr.bf16.mxu0 0
    %4031 = vmatpush1.bf16.msra.mxu0 0
    %4032 = vmatprep.subr.bf16.mxu0 0
    %4033 = vmatpush1.bf16.msra.mxu0 0
    %4034 = vmatprep.mubr.bf16.mxu0 %v3907
    %4035 = vmatmul.mubr.bf16.gmra.mrb[0].mxu0 %v3701
    %v4036 = vpop.f32.mrb[0].mxu0
    %v4037 = vadd.f32 0.0, %v4036
    %v4038 = vpop.f32.mrb[0].mxu0
    %v4039 = vpop.f32.mrb[0].mxu0
    %v4040 = vadd.f32 0.0, %v4039
    %v4041 = vpop.f32.mrb[0].mxu0
    %4042 = vmatprep.mubr.bf16.mxu0 %v3910
    %4043 = vmatmul.mubr.bf16.gmra.mrb[0].mxu0 %v3704
    %v4044 = vpop.f32.mrb[0].mxu0
    %v4045 = vadd.f32 0.0, %v4044
    %v4046 = vpop.f32.mrb[0].mxu0
    %v4047 = vpop.f32.mrb[0].mxu0
    %v4048 = vadd.f32 0.0, %v4047
    %v4049 = vpop.f32.mrb[0].mxu0
    %4050 = vmatprep.mubr.bf16.mxu0 %v3913
    %4051 = vmatmul.mubr.bf16.gmra.mrb[0].mxu0 %v3707
    %v4052 = vpop.f32.mrb[0].mxu0
    %v4053 = vadd.f32 0.0, %v4052
    %v4054 = vpop.f32.mrb[0].mxu0
    %v4055 = vpop.f32.mrb[0].mxu0
    %v4056 = vadd.f32 0.0, %v4055
    %v4057 = vpop.f32.mrb[0].mxu0
    %4058 = vmatprep.mubr.bf16.mxu0 %v3916
    %4059 = vmatmul.mubr.bf16.gmra.mrb[0].mxu0 %v3710
    %v4060 = vpop.f32.mrb[0].mxu0
    %v4061 = vadd.f32 0.0, %v4060
    %v4062 = vpop.f32.mrb[0].mxu0
    %v4063 = vpop.f32.mrb[0].mxu0
    %v4064 = vadd.f32 0.0, %v4063
    %v4065 = vpop.f32.mrb[0].mxu0
    %4066 = vmatprep.mubr.bf16.mxu0 %v3919
    %4067 = vmatmul.mubr.bf16.gmra.mrb[0].mxu0 %v3713
    %v4068 = vpop.f32.mrb[0].mxu0
    %v4069 = vadd.f32 0.0, %v4068
    %v4070 = vpop.f32.mrb[0].mxu0
    %v4071 = vpop.f32.mrb[0].mxu0
    %v4072 = vadd.f32 0.0, %v4071
    %v4073 = vpop.f32.mrb[0].mxu0
    %4074 = vmatprep.mubr.bf16.mxu0 %v3922
    %4075 = vmatmul.mubr.bf16.gmra.mrb[0].mxu0 %v3716
    %v4076 = vpop.f32.mrb[0].mxu0
    %v4077 = vadd.f32 0.0, %v4076
    %v4078 = vpop.f32.mrb[0].mxu0
    %v4079 = vpop.f32.mrb[0].mxu0
    %v4080 = vadd.f32 0.0, %v4079
    %v4081 = vpop.f32.mrb[0].mxu0
    %4082 = vmatprep.mubr.bf16.mxu0 %v3925
    %4083 = vmatmul.mubr.bf16.gmra.mrb[0].mxu0 %v3719
    %v4084 = vpop.f32.mrb[0].mxu0
    %v4085 = vadd.f32 0.0, %v4084
    %v4086 = vpop.f32.mrb[0].mxu0
    %v4087 = vpop.f32.mrb[0].mxu0
    %v4088 = vadd.f32 0.0, %v4087
    %v4089 = vpop.f32.mrb[0].mxu0
    %4090 = vmatprep.mubr.bf16.mxu0 %v3928
    %4091 = vmatmul.mubr.bf16.gmra.mrb[0].mxu0 %v3722
    %v4092 = vpop.f32.mrb[0].mxu0
    %v4093 = vadd.f32 0.0, %v4092
    %v4094 = vpop.f32.mrb[0].mxu0
    %v4095 = vpop.f32.mrb[0].mxu0
    %v4096 = vadd.f32 0.0, %v4095
    %v4097 = vpop.f32.mrb[0].mxu0
    %4098 = vmatprep.mubr.bf16.mxu0 %v3931
    %4099 = vmatmul.mubr.bf16.gmra.mrb[0].mxu0 %v3725
    %v4100 = vpop.f32.mrb[0].mxu0
    %v4101 = vadd.f32 0.0, %v4100
    %v4102 = vpop.f32.mrb[0].mxu0
    %v4103 = vpop.f32.mrb[0].mxu0
    %v4104 = vadd.f32 0.0, %v4103
    %v4105 = vpop.f32.mrb[0].mxu0
    %4106 = vmatprep.mubr.bf16.mxu0 %v3934
    %4107 = vmatmul.mubr.bf16.gmra.mrb[0].mxu0 %v3728
    %v4108 = vpop.f32.mrb[0].mxu0
    %v4109 = vadd.f32 0.0, %v4108
    %v4110 = vpop.f32.mrb[0].mxu0
    %v4111 = vpop.f32.mrb[0].mxu0
    %v4112 = vadd.f32 0.0, %v4111
    %v4113 = vpop.f32.mrb[0].mxu0
    %4114 = vmatprep.mubr.bf16.mxu0 %v3937
    %4115 = vmatmul.mubr.bf16.gmra.mrb[0].mxu0 %v3731
    %v4116 = vpop.f32.mrb[0].mxu0
    %v4117 = vadd.f32 0.0, %v4116
    %v4118 = vpop.f32.mrb[0].mxu0
    %v4119 = vpop.f32.mrb[0].mxu0
    %v4120 = vadd.f32 0.0, %v4119
    %v4121 = vpop.f32.mrb[0].mxu0
    %4122 = vmatprep.mubr.bf16.mxu0 %v3940
    %4123 = vmatmul.mubr.bf16.gmra.mrb[0].mxu0 %v3734
    %v4124 = vpop.f32.mrb[0].mxu0
    %v4125 = vadd.f32 0.0, %v4124
    %v4126 = vpop.f32.mrb[0].mxu0
    %v4127 = vpop.f32.mrb[0].mxu0
    %v4128 = vadd.f32 0.0, %v4127
    %v4129 = vpop.f32.mrb[0].mxu0
    %4130 = vmatprep.mubr.bf16.mxu0 %v3943
    %4131 = vmatmul.mubr.bf16.gmra.mrb[0].mxu0 %v3737
    %v4132 = vpop.f32.mrb[0].mxu0
    %v4133 = vadd.f32 0.0, %v4132
    %v4134 = vpop.f32.mrb[0].mxu0
    %v4135 = vpop.f32.mrb[0].mxu0
    %v4136 = vadd.f32 0.0, %v4135
    %v4137 = vpop.f32.mrb[0].mxu0
    %4138 = vmatprep.mubr.bf16.mxu0 %v3946
    %4139 = vmatmul.mubr.bf16.gmra.mrb[0].mxu0 %v3740
    %v4140 = vpop.f32.mrb[0].mxu0
    %v4141 = vadd.f32 0.0, %v4140
    %v4142 = vpop.f32.mrb[0].mxu0
    %v4143 = vpop.f32.mrb[0].mxu0
    %v4144 = vadd.f32 0.0, %v4143
    %v4145 = vpop.f32.mrb[0].mxu0
    %4146 = vmatprep.mubr.bf16.mxu0 %v3949
    %4147 = vmatmul.mubr.bf16.gmra.mrb[0].mxu0 %v3743
    %v4148 = vpop.f32.mrb[0].mxu0
    %v4149 = vadd.f32 0.0, %v4148
    %v4150 = vpop.f32.mrb[0].mxu0
    %v4151 = vpop.f32.mrb[0].mxu0
    %v4152 = vadd.f32 0.0, %v4151
    %v4153 = vpop.f32.mrb[0].mxu0
    %4154 = vmatprep.mubr.bf16.mxu0 %v3952
    %4155 = vmatmul.mubr.bf16.gmra.mrb[0].mxu0 %v3829
    %v4156 = vpop.f32.mrb[0].mxu0
    %v4157 = vadd.f32 0.0, %v4156
    %v4158 = vpop.f32.mrb[0].mxu0
    %v4159 = vpop.f32.mrb[0].mxu0
    %v4160 = vadd.f32 0.0, %v4159
    %v4161 = vpop.f32.mrb[0].mxu0
    %4162 = vmatprep.mubr.bf16.mxu0 %v3955
    %4163 = vmatmul.mubr.bf16.gmra.mrb[0].mxu0 %v3746
    %v4164 = vpop.f32.mrb[0].mxu0
    %v4165 = vadd.f32 0.0, %v4164
    %v4166 = vpop.f32.mrb[0].mxu0
    %v4167 = vpop.f32.mrb[0].mxu0
    %v4168 = vadd.f32 0.0, %v4167
    %v4169 = vpop.f32.mrb[0].mxu0
    %4170 = vmatprep.mubr.bf16.mxu0 %v3958
    %4171 = vmatmul.mubr.bf16.gmra.mrb[0].mxu0 %v3749
    %v4172 = vpop.f32.mrb[0].mxu0
    %v4173 = vadd.f32 0.0, %v4172
    %v4174 = vpop.f32.mrb[0].mxu0
    %v4175 = vpop.f32.mrb[0].mxu0
    %v4176 = vadd.f32 0.0, %v4175
    %v4177 = vpop.f32.mrb[0].mxu0
    %4178 = vmatprep.mubr.bf16.mxu0 %v3961
    %4179 = vmatmul.mubr.bf16.gmra.mrb[0].mxu0 %v3752
    %v4180 = vpop.f32.mrb[0].mxu0
    %v4181 = vadd.f32 0.0, %v4180
    %v4182 = vpop.f32.mrb[0].mxu0
    %v4183 = vpop.f32.mrb[0].mxu0
    %v4184 = vadd.f32 0.0, %v4183
    %v4185 = vpop.f32.mrb[0].mxu0
    %4186 = vmatprep.mubr.bf16.mxu0 %v3964
    %4187 = vmatmul.mubr.bf16.gmra.mrb[0].mxu0 %v3755
    %v4188 = vpop.f32.mrb[0].mxu0
    %v4189 = vadd.f32 0.0, %v4188
    %v4190 = vpop.f32.mrb[0].mxu0
    %v4191 = vpop.f32.mrb[0].mxu0
    %v4192 = vadd.f32 0.0, %v4191
    %v4193 = vpop.f32.mrb[0].mxu0
    %4194 = vmatprep.mubr.bf16.mxu0 %v3967
    %4195 = vmatmul.mubr.bf16.gmra.mrb[0].mxu0 %v3758
    %v4196 = vpop.f32.mrb[0].mxu0
    %v4197 = vadd.f32 0.0, %v4196
    %v4198 = vpop.f32.mrb[0].mxu0
    %v4199 = vpop.f32.mrb[0].mxu0
    %v4200 = vadd.f32 0.0, %v4199
    %v4201 = vpop.f32.mrb[0].mxu0
    %4202 = vmatprep.mubr.bf16.mxu0 %v3970
    %4203 = vmatmul.mubr.bf16.gmra.mrb[0].mxu0 %v3761
    %v4204 = vpop.f32.mrb[0].mxu0
    %v4205 = vadd.f32 0.0, %v4204
    %v4206 = vpop.f32.mrb[0].mxu0
    %v4207 = vpop.f32.mrb[0].mxu0
    %v4208 = vadd.f32 0.0, %v4207
    %v4209 = vpop.f32.mrb[0].mxu0
    %4210 = vmatprep.mubr.bf16.mxu0 %v3973
    %4211 = vmatmul.mubr.bf16.gmra.mrb[0].mxu0 %v3764
    %v4212 = vpop.f32.mrb[0].mxu0
    %v4213 = vadd.f32 0.0, %v4212
    %v4214 = vpop.f32.mrb[0].mxu0
    %v4215 = vpop.f32.mrb[0].mxu0
    %v4216 = vadd.f32 0.0, %v4215
    %v4217 = vpop.f32.mrb[0].mxu0
    %4218 = vmatprep.mubr.bf16.mxu0 %v3976
    %4219 = vmatmul.mubr.bf16.gmra.mrb[0].mxu0 %v3767
    %v4220 = vpop.f32.mrb[0].mxu0
    %v4221 = vadd.f32 0.0, %v4220
    %v4222 = vpop.f32.mrb[0].mxu0
    %v4223 = vpop.f32.mrb[0].mxu0
    %v4224 = vadd.f32 0.0, %v4223
    %v4225 = vpop.f32.mrb[0].mxu0
    %4226 = vmatprep.mubr.bf16.mxu0 %v3979
    %4227 = vmatmul.mubr.bf16.gmra.mrb[0].mxu0 %v3770
    %v4228 = vpop.f32.mrb[0].mxu0
    %v4229 = vadd.f32 0.0, %v4228
    %v4230 = vpop.f32.mrb[0].mxu0
    %v4231 = vpop.f32.mrb[0].mxu0
    %v4232 = vadd.f32 0.0, %v4231
    %v4233 = vpop.f32.mrb[0].mxu0
    %4234 = vmatprep.mubr.bf16.mxu0 %v3982
    %4235 = vmatmul.mubr.bf16.gmra.mrb[0].mxu0 %v3773
    %v4236 = vpop.f32.mrb[0].mxu0
    %v4237 = vadd.f32 0.0, %v4236
    %v4238 = vpop.f32.mrb[0].mxu0
    %v4239 = vpop.f32.mrb[0].mxu0
    %v4240 = vadd.f32 0.0, %v4239
    %v4241 = vpop.f32.mrb[0].mxu0
    %4242 = vmatprep.mubr.bf16.mxu0 %v3985
    %4243 = vmatmul.mubr.bf16.gmra.mrb[0].mxu0 %v3776
    %v4244 = vpop.f32.mrb[0].mxu0
    %v4245 = vadd.f32 0.0, %v4244
    %v4246 = vpop.f32.mrb[0].mxu0
    %v4247 = vpop.f32.mrb[0].mxu0
    %v4248 = vadd.f32 0.0, %v4247
    %v4249 = vpop.f32.mrb[0].mxu0
    %4250 = vmatprep.mubr.bf16.mxu0 %v3988
    %4251 = vmatmul.mubr.bf16.gmra.mrb[0].mxu0 %v3779
    %v4252 = vpop.f32.mrb[0].mxu0
    %v4253 = vadd.f32 0.0, %v4252
    %v4254 = vpop.f32.mrb[0].mxu0
    %v4255 = vpop.f32.mrb[0].mxu0
    %v4256 = vadd.f32 0.0, %v4255
    %v4257 = vpop.f32.mrb[0].mxu0
    %4258 = vmatprep.mubr.bf16.mxu0 %v3991
    %4259 = vmatmul.mubr.bf16.gmra.mrb[0].mxu0 %v3782
    %v4260 = vpop.f32.mrb[0].mxu0
    %v4261 = vadd.f32 0.0, %v4260
    %v4262 = vpop.f32.mrb[0].mxu0
    %v4263 = vpop.f32.mrb[0].mxu0
    %v4264 = vadd.f32 0.0, %v4263
    %v4265 = vpop.f32.mrb[0].mxu0
    %4266 = vmatprep.mubr.bf16.mxu0 %v3994
    %4267 = vmatmul.mubr.bf16.gmra.mrb[0].mxu0 %v3785
    %v4268 = vpop.f32.mrb[0].mxu0
    %v4269 = vadd.f32 0.0, %v4268
    %v4270 = vpop.f32.mrb[0].mxu0
    %v4271 = vpop.f32.mrb[0].mxu0
    %v4272 = vadd.f32 0.0, %v4271
    %v4273 = vpop.f32.mrb[0].mxu0
    %4274 = vmatprep.mubr.bf16.mxu0 %v3997
    %4275 = vmatmul.mubr.bf16.gmra.mrb[0].mxu0 %v3788
    %v4276 = vpop.f32.mrb[0].mxu0
    %v4277 = vadd.f32 0.0, %v4276
    %v4278 = vpop.f32.mrb[0].mxu0
    %v4279 = vpop.f32.mrb[0].mxu0
    %v4280 = vadd.f32 0.0, %v4279
    %v4281 = vpop.f32.mrb[0].mxu0
    %4282 = vmatprep.mubr.bf16.mxu0 %v4000
    %4283 = vmatmul.mubr.bf16.gmra.mrb[0].mxu0 %v3832
    %v4284 = vpop.f32.mrb[0].mxu0
    %v4285 = vadd.f32 0.0, %v4284
    %v4286 = vpop.f32.mrb[0].mxu0
    %v4287 = vpop.f32.mrb[0].mxu0
    %v4288 = vadd.f32 0.0, %v4287
    %v4289 = vpop.f32.mrb[0].mxu0
    %4290 = vdwg.mxu0
    %v4315 = vunpack.c.l.b16 %v2608
    %v4316 = vunpack.c.l.b16 %v2609
    %v4317 = vunpack.c.l.b16 %v2610
    %v4318 = vunpack.c.l.b16 %v2611
    %v4319 = vunpack.c.l.b16 %v2612
    %v4320 = vunpack.c.l.b16 %v2613
    %v4321 = vunpack.c.l.b16 %v2614
    %v4322 = vunpack.c.l.b16 %v2615
    %v4323 = vunpack.c.l.b16 %v2616
    %v4324 = vunpack.c.l.b16 %v2617
    %v4325 = vunpack.c.l.b16 %v2618
    %v4326 = vunpack.c.l.b16 %v2619
    %v4327 = vunpack.c.l.b16 %v2620
    %v4328 = vunpack.c.l.b16 %v2621
    %v4329 = vunpack.c.l.b16 %v2622
    %v4330 = vunpack.c.l.b16 %v2623
    %v4331 = vunpack.c.l.b16 %v2624
    %v4332 = vunpack.c.l.b16 %v2625
    %v4333 = vunpack.c.l.b16 %v2626
    %v4334 = vunpack.c.l.b16 %v2627
    %v4335 = vunpack.c.l.b16 %v2628
    %v4336 = vunpack.c.l.b16 %v2629
    %v4337 = vunpack.c.l.b16 %v2630
    %v4338 = vunpack.c.l.b16 %v2631
    %v4339 = vpack.c.b16 %v4316, %v4315
    %v4340 = vpack.c.b16 %v4318, %v4317
    %v4341 = vpack.c.b16 %v4320, %v4319
    %v4342 = vpack.c.b16 %v4322, %v4321
    %v4343 = vpack.c.b16 %v4324, %v4323
    %v4344 = vpack.c.b16 %v4326, %v4325
    %v4345 = vpack.c.b16 %v4328, %v4327
    %v4346 = vpack.c.b16 %v4330, %v4329
    %v4347 = vpack.c.b16 %v4332, %v4331
    %v4348 = vpack.c.b16 %v4334, %v4333
    %v4349 = vpack.c.b16 %v4336, %v4335
    %v4350 = vpack.c.b16 %v4338, %v4337
    %4363 = vmatprep.subr.bf16.mxu0 0
    %4364 = vmatpush1.bf16.msra.mxu0 %v4339
    %4365 = vmatprep.subr.bf16.mxu0 0
    %4366 = vmatpush1.bf16.msra.mxu0 %v4340
    %4367 = vmatprep.subr.bf16.mxu0 0
    %4368 = vmatpush1.bf16.msra.mxu0 %v4341
    %4369 = vmatprep.subr.bf16.mxu0 0
    %4370 = vmatpush1.bf16.msra.mxu0 %v4342
    %4371 = vmatprep.subr.bf16.mxu0 0
    %4372 = vmatpush1.bf16.msra.mxu0 %v4343
    %4373 = vmatprep.subr.bf16.mxu0 0
    %4374 = vmatpush1.bf16.msra.mxu0 %v4344
    %4375 = vmatprep.subr.bf16.mxu0 0
    %4376 = vmatpush1.bf16.msra.mxu0 %v4345
    %4377 = vmatprep.subr.bf16.mxu0 0
    %4378 = vmatpush1.bf16.msra.mxu0 %v4346
    %4379 = vmatprep.subr.bf16.mxu0 0
    %4380 = vmatpush1.bf16.msra.mxu0 %v4347
    %4381 = vmatprep.subr.bf16.mxu0 0
    %4382 = vmatpush1.bf16.msra.mxu0 %v4348
    %4383 = vmatprep.subr.bf16.mxu0 0
    %4384 = vmatpush1.bf16.msra.mxu0 %v4349
    %4385 = vmatprep.subr.bf16.mxu0 0
    %4386 = vmatpush1.bf16.msra.mxu0 %v4350
    %4387 = vmatprep.subr.bf16.mxu0 0
    %4388 = vmatpush1.bf16.msra.mxu0 0
    %4389 = vmatprep.subr.bf16.mxu0 0
    %4390 = vmatpush1.bf16.msra.mxu0 0
    %4391 = vmatprep.subr.bf16.mxu0 0
    %4392 = vmatpush1.bf16.msra.mxu0 0
    %4393 = vmatprep.subr.bf16.mxu0 0
    %4394 = vmatpush1.bf16.msra.mxu0 0
    %4395 = vmatprep.mubr.bf16.mxu0 %v3907
    %4396 = vmatmul.mubr.bf16.gmra.mrb[0].mxu0 %v3701
    %v4397 = vpop.f32.mrb[0].mxu0
    %v4398 = vadd.f32 %v4037, %v4397
    %v4399 = vpop.f32.mrb[0].mxu0
    %v4400 = vpop.f32.mrb[0].mxu0
    %v4401 = vadd.f32 %v4040, %v4400
    %v4402 = vpop.f32.mrb[0].mxu0
    %4403 = vmatprep.mubr.bf16.mxu0 %v3907
    %4404 = vmatmul.mubr.bf16.gmra.mrb[0].mxu0 %v3701
    %v4405 = vpop.f32.mrb[0].mxu0
    %v4406 = vadd.f32 %v4045, %v4405
    %v4407 = vpop.f32.mrb[0].mxu0
    %v4408 = vpop.f32.mrb[0].mxu0
    %v4409 = vadd.f32 %v4048, %v4408
    %v4410 = vpop.f32.mrb[0].mxu0
    %4411 = vmatprep.mubr.bf16.mxu0 %v3910
    %4412 = vmatmul.mubr.bf16.gmra.mrb[0].mxu0 %v3704
    %v4413 = vpop.f32.mrb[0].mxu0
    %v4414 = vadd.f32 %v4053, %v4413
    %v4415 = vpop.f32.mrb[0].mxu0
    %v4416 = vpop.f32.mrb[0].mxu0
    %v4417 = vadd.f32 %v4056, %v4416
    %v4418 = vpop.f32.mrb[0].mxu0
    %4419 = vmatprep.mubr.bf16.mxu0 %v3913
    %4420 = vmatmul.mubr.bf16.gmra.mrb[0].mxu0 %v3707
    %v4421 = vpop.f32.mrb[0].mxu0
    %v4422 = vadd.f32 %v4061, %v4421
    %v4423 = vpop.f32.mrb[0].mxu0
    %v4424 = vpop.f32.mrb[0].mxu0
    %v4425 = vadd.f32 %v4064, %v4424
    %v4426 = vpop.f32.mrb[0].mxu0
    %4427 = vmatprep.mubr.bf16.mxu0 %v3916
    %4428 = vmatmul.mubr.bf16.gmra.mrb[0].mxu0 %v3710
    %v4429 = vpop.f32.mrb[0].mxu0
    %v4430 = vadd.f32 %v4069, %v4429
    %v4431 = vpop.f32.mrb[0].mxu0
    %v4432 = vpop.f32.mrb[0].mxu0
    %v4433 = vadd.f32 %v4072, %v4432
    %v4434 = vpop.f32.mrb[0].mxu0
    %4435 = vmatprep.mubr.bf16.mxu0 %v3919
    %4436 = vmatmul.mubr.bf16.gmra.mrb[0].mxu0 %v3713
    %v4437 = vpop.f32.mrb[0].mxu0
    %v4438 = vadd.f32 %v4077, %v4437
    %v4439 = vpop.f32.mrb[0].mxu0
    %v4440 = vpop.f32.mrb[0].mxu0
    %v4441 = vadd.f32 %v4080, %v4440
    %v4442 = vpop.f32.mrb[0].mxu0
    %4443 = vmatprep.mubr.bf16.mxu0 %v3922
    %4444 = vmatmul.mubr.bf16.gmra.mrb[0].mxu0 %v3716
    %v4445 = vpop.f32.mrb[0].mxu0
    %v4446 = vadd.f32 %v4085, %v4445
    %v4447 = vpop.f32.mrb[0].mxu0
    %v4448 = vpop.f32.mrb[0].mxu0
    %v4449 = vadd.f32 %v4088, %v4448
    %v4450 = vpop.f32.mrb[0].mxu0
    %4451 = vmatprep.mubr.bf16.mxu0 %v3925
    %4452 = vmatmul.mubr.bf16.gmra.mrb[0].mxu0 %v3719
    %v4453 = vpop.f32.mrb[0].mxu0
    %v4454 = vadd.f32 %v4093, %v4453
    %v4455 = vpop.f32.mrb[0].mxu0
    %v4456 = vpop.f32.mrb[0].mxu0
    %v4457 = vadd.f32 %v4096, %v4456
    %v4458 = vpop.f32.mrb[0].mxu0
    %4459 = vmatprep.mubr.bf16.mxu0 %v3928
    %4460 = vmatmul.mubr.bf16.gmra.mrb[0].mxu0 %v3722
    %v4461 = vpop.f32.mrb[0].mxu0
    %v4462 = vadd.f32 %v4101, %v4461
    %v4463 = vpop.f32.mrb[0].mxu0
    %v4464 = vpop.f32.mrb[0].mxu0
    %v4465 = vadd.f32 %v4104, %v4464
    %v4466 = vpop.f32.mrb[0].mxu0
    %4467 = vmatprep.mubr.bf16.mxu0 %v3931
    %4468 = vmatmul.mubr.bf16.gmra.mrb[0].mxu0 %v3725
    %v4469 = vpop.f32.mrb[0].mxu0
    %v4470 = vadd.f32 %v4109, %v4469
    %v4471 = vpop.f32.mrb[0].mxu0
    %v4472 = vpop.f32.mrb[0].mxu0
    %v4473 = vadd.f32 %v4112, %v4472
    %v4474 = vpop.f32.mrb[0].mxu0
    %4475 = vmatprep.mubr.bf16.mxu0 %v3934
    %4476 = vmatmul.mubr.bf16.gmra.mrb[0].mxu0 %v3728
    %v4477 = vpop.f32.mrb[0].mxu0
    %v4478 = vadd.f32 %v4117, %v4477
    %v4479 = vpop.f32.mrb[0].mxu0
    %v4480 = vpop.f32.mrb[0].mxu0
    %v4481 = vadd.f32 %v4120, %v4480
    %v4482 = vpop.f32.mrb[0].mxu0
    %4483 = vmatprep.mubr.bf16.mxu0 %v3937
    %4484 = vmatmul.mubr.bf16.gmra.mrb[0].mxu0 %v3731
    %v4485 = vpop.f32.mrb[0].mxu0
    %v4486 = vadd.f32 %v4125, %v4485
    %v4487 = vpop.f32.mrb[0].mxu0
    %v4488 = vpop.f32.mrb[0].mxu0
    %v4489 = vadd.f32 %v4128, %v4488
    %v4490 = vpop.f32.mrb[0].mxu0
    %4491 = vmatprep.mubr.bf16.mxu0 %v3940
    %4492 = vmatmul.mubr.bf16.gmra.mrb[0].mxu0 %v3734
    %v4493 = vpop.f32.mrb[0].mxu0
    %v4494 = vadd.f32 %v4133, %v4493
    %v4495 = vpop.f32.mrb[0].mxu0
    %v4496 = vpop.f32.mrb[0].mxu0
    %v4497 = vadd.f32 %v4136, %v4496
    %v4498 = vpop.f32.mrb[0].mxu0
    %4499 = vmatprep.mubr.bf16.mxu0 %v3943
    %4500 = vmatmul.mubr.bf16.gmra.mrb[0].mxu0 %v3737
    %v4501 = vpop.f32.mrb[0].mxu0
    %v4502 = vadd.f32 %v4141, %v4501
    %v4503 = vpop.f32.mrb[0].mxu0
    %v4504 = vpop.f32.mrb[0].mxu0
    %v4505 = vadd.f32 %v4144, %v4504
    %v4506 = vpop.f32.mrb[0].mxu0
    %4507 = vmatprep.mubr.bf16.mxu0 %v3946
    %4508 = vmatmul.mubr.bf16.gmra.mrb[0].mxu0 %v3740
    %v4509 = vpop.f32.mrb[0].mxu0
    %v4510 = vadd.f32 %v4149, %v4509
    %v4511 = vpop.f32.mrb[0].mxu0
    %v4512 = vpop.f32.mrb[0].mxu0
    %v4513 = vadd.f32 %v4152, %v4512
    %v4514 = vpop.f32.mrb[0].mxu0
    %4515 = vmatprep.mubr.bf16.mxu0 %v3949
    %4516 = vmatmul.mubr.bf16.gmra.mrb[0].mxu0 %v3743
    %v4517 = vpop.f32.mrb[0].mxu0
    %v4518 = vadd.f32 %v4157, %v4517
    %v4519 = vpop.f32.mrb[0].mxu0
    %v4520 = vpop.f32.mrb[0].mxu0
    %v4521 = vadd.f32 %v4160, %v4520
    %v4522 = vpop.f32.mrb[0].mxu0
    %4523 = vmatprep.mubr.bf16.mxu0 %v3955
    %4524 = vmatmul.mubr.bf16.gmra.mrb[0].mxu0 %v3746
    %v4525 = vpop.f32.mrb[0].mxu0
    %v4526 = vadd.f32 %v4165, %v4525
    %v4527 = vpop.f32.mrb[0].mxu0
    %v4528 = vpop.f32.mrb[0].mxu0
    %v4529 = vadd.f32 %v4168, %v4528
    %v4530 = vpop.f32.mrb[0].mxu0
    %4531 = vmatprep.mubr.bf16.mxu0 %v3955
    %4532 = vmatmul.mubr.bf16.gmra.mrb[0].mxu0 %v3746
    %v4533 = vpop.f32.mrb[0].mxu0
    %v4534 = vadd.f32 %v4173, %v4533
    %v4535 = vpop.f32.mrb[0].mxu0
    %v4536 = vpop.f32.mrb[0].mxu0
    %v4537 = vadd.f32 %v4176, %v4536
    %v4538 = vpop.f32.mrb[0].mxu0
    %4539 = vmatprep.mubr.bf16.mxu0 %v3958
    %4540 = vmatmul.mubr.bf16.gmra.mrb[0].mxu0 %v3749
    %v4541 = vpop.f32.mrb[0].mxu0
    %v4542 = vadd.f32 %v4181, %v4541
    %v4543 = vpop.f32.mrb[0].mxu0
    %v4544 = vpop.f32.mrb[0].mxu0
    %v4545 = vadd.f32 %v4184, %v4544
    %v4546 = vpop.f32.mrb[0].mxu0
    %4547 = vmatprep.mubr.bf16.mxu0 %v3961
    %4548 = vmatmul.mubr.bf16.gmra.mrb[0].mxu0 %v3752
    %v4549 = vpop.f32.mrb[0].mxu0
    %v4550 = vadd.f32 %v4189, %v4549
    %v4551 = vpop.f32.mrb[0].mxu0
    %v4552 = vpop.f32.mrb[0].mxu0
    %v4553 = vadd.f32 %v4192, %v4552
    %v4554 = vpop.f32.mrb[0].mxu0
    %4555 = vmatprep.mubr.bf16.mxu0 %v3964
    %4556 = vmatmul.mubr.bf16.gmra.mrb[0].mxu0 %v3755
    %v4557 = vpop.f32.mrb[0].mxu0
    %v4558 = vadd.f32 %v4197, %v4557
    %v4559 = vpop.f32.mrb[0].mxu0
    %v4560 = vpop.f32.mrb[0].mxu0
    %v4561 = vadd.f32 %v4200, %v4560
    %v4562 = vpop.f32.mrb[0].mxu0
    %4563 = vmatprep.mubr.bf16.mxu0 %v3967
    %4564 = vmatmul.mubr.bf16.gmra.mrb[0].mxu0 %v3758
    %v4565 = vpop.f32.mrb[0].mxu0
    %v4566 = vadd.f32 %v4205, %v4565
    %v4567 = vpop.f32.mrb[0].mxu0
    %v4568 = vpop.f32.mrb[0].mxu0
    %v4569 = vadd.f32 %v4208, %v4568
    %v4570 = vpop.f32.mrb[0].mxu0
    %4571 = vmatprep.mubr.bf16.mxu0 %v3970
    %4572 = vmatmul.mubr.bf16.gmra.mrb[0].mxu0 %v3761
    %v4573 = vpop.f32.mrb[0].mxu0
    %v4574 = vadd.f32 %v4213, %v4573
    %v4575 = vpop.f32.mrb[0].mxu0
    %v4576 = vpop.f32.mrb[0].mxu0
    %v4577 = vadd.f32 %v4216, %v4576
    %v4578 = vpop.f32.mrb[0].mxu0
    %4579 = vmatprep.mubr.bf16.mxu0 %v3973
    %4580 = vmatmul.mubr.bf16.gmra.mrb[0].mxu0 %v3764
    %v4581 = vpop.f32.mrb[0].mxu0
    %v4582 = vadd.f32 %v4221, %v4581
    %v4583 = vpop.f32.mrb[0].mxu0
    %v4584 = vpop.f32.mrb[0].mxu0
    %v4585 = vadd.f32 %v4224, %v4584
    %v4586 = vpop.f32.mrb[0].mxu0
    %4587 = vmatprep.mubr.bf16.mxu0 %v3976
    %4588 = vmatmul.mubr.bf16.gmra.mrb[0].mxu0 %v3767
    %v4589 = vpop.f32.mrb[0].mxu0
    %v4590 = vadd.f32 %v4229, %v4589
    %v4591 = vpop.f32.mrb[0].mxu0
    %v4592 = vpop.f32.mrb[0].mxu0
    %v4593 = vadd.f32 %v4232, %v4592
    %v4594 = vpop.f32.mrb[0].mxu0
    %4595 = vmatprep.mubr.bf16.mxu0 %v3979
    %4596 = vmatmul.mubr.bf16.gmra.mrb[0].mxu0 %v3770
    %v4597 = vpop.f32.mrb[0].mxu0
    %v4598 = vadd.f32 %v4237, %v4597
    %v4599 = vpop.f32.mrb[0].mxu0
    %v4600 = vpop.f32.mrb[0].mxu0
    %v4601 = vadd.f32 %v4240, %v4600
    %v4602 = vpop.f32.mrb[0].mxu0
    %4603 = vmatprep.mubr.bf16.mxu0 %v3982
    %4604 = vmatmul.mubr.bf16.gmra.mrb[0].mxu0 %v3773
    %v4605 = vpop.f32.mrb[0].mxu0
    %v4606 = vadd.f32 %v4245, %v4605
    %v4607 = vpop.f32.mrb[0].mxu0
    %v4608 = vpop.f32.mrb[0].mxu0
    %v4609 = vadd.f32 %v4248, %v4608
    %v4610 = vpop.f32.mrb[0].mxu0
    %4611 = vmatprep.mubr.bf16.mxu0 %v3985
    %4612 = vmatmul.mubr.bf16.gmra.mrb[0].mxu0 %v3776
    %v4613 = vpop.f32.mrb[0].mxu0
    %v4614 = vadd.f32 %v4253, %v4613
    %v4615 = vpop.f32.mrb[0].mxu0
    %v4616 = vpop.f32.mrb[0].mxu0
    %v4617 = vadd.f32 %v4256, %v4616
    %v4618 = vpop.f32.mrb[0].mxu0
    %4619 = vmatprep.mubr.bf16.mxu0 %v3988
    %4620 = vmatmul.mubr.bf16.gmra.mrb[0].mxu0 %v3779
    %v4621 = vpop.f32.mrb[0].mxu0
    %v4622 = vadd.f32 %v4261, %v4621
    %v4623 = vpop.f32.mrb[0].mxu0
    %v4624 = vpop.f32.mrb[0].mxu0
    %v4625 = vadd.f32 %v4264, %v4624
    %v4626 = vpop.f32.mrb[0].mxu0
    %4627 = vmatprep.mubr.bf16.mxu0 %v3991
    %4628 = vmatmul.mubr.bf16.gmra.mrb[0].mxu0 %v3782
    %v4629 = vpop.f32.mrb[0].mxu0
    %v4630 = vadd.f32 %v4269, %v4629
    %v4631 = vpop.f32.mrb[0].mxu0
    %v4632 = vpop.f32.mrb[0].mxu0
    %v4633 = vadd.f32 %v4272, %v4632
    %v4634 = vpop.f32.mrb[0].mxu0
    %4635 = vmatprep.mubr.bf16.mxu0 %v3994
    %4636 = vmatmul.mubr.bf16.gmra.mrb[0].mxu0 %v3785
    %v4637 = vpop.f32.mrb[0].mxu0
    %v4638 = vadd.f32 %v4277, %v4637
    %v4639 = vpop.f32.mrb[0].mxu0
    %v4640 = vpop.f32.mrb[0].mxu0
    %v4641 = vadd.f32 %v4280, %v4640
    %v4642 = vpop.f32.mrb[0].mxu0
    %4643 = vmatprep.mubr.bf16.mxu0 %v3997
    %4644 = vmatmul.mubr.bf16.gmra.mrb[0].mxu0 %v3788
    %v4645 = vpop.f32.mrb[0].mxu0
    %v4646 = vadd.f32 %v4285, %v4645
    %v4647 = vpop.f32.mrb[0].mxu0
    %v4648 = vpop.f32.mrb[0].mxu0
    %v4649 = vadd.f32 %v4288, %v4648
    %v4650 = vpop.f32.mrb[0].mxu0
    %4651 = vdwg.mxu0
    %v4676 = vunpack.c.l.b16 %v2656
    %v4677 = vunpack.c.l.b16 %v2657
    %v4678 = vunpack.c.l.b16 %v2658
    %v4679 = vunpack.c.l.b16 %v2659
    %v4680 = vunpack.c.l.b16 %v2660
    %v4681 = vunpack.c.l.b16 %v2661
    %v4682 = vunpack.c.l.b16 %v2662
    %v4683 = vunpack.c.l.b16 %v2663
    %v4684 = vunpack.c.l.b16 %v2664
    %v4685 = vunpack.c.l.b16 %v2665
    %v4686 = vunpack.c.l.b16 %v2666
    %v4687 = vunpack.c.l.b16 %v2667
    %v4688 = vunpack.c.l.b16 %v2668
    %v4689 = vunpack.c.l.b16 %v2669
    %v4690 = vunpack.c.l.b16 %v2670
    %v4691 = vunpack.c.l.b16 %v2671
    %v4692 = vunpack.c.l.b16 %v2672
    %v4693 = vunpack.c.l.b16 %v2673
    %v4694 = vunpack.c.l.b16 %v2674
    %v4695 = vunpack.c.l.b16 %v2675
    %v4696 = vunpack.c.l.b16 %v2676
    %v4697 = vunpack.c.l.b16 %v2677
    %v4698 = vunpack.c.l.b16 %v2678
    %v4699 = vunpack.c.l.b16 %v2679
    %v4700 = vpack.c.b16 %v4677, %v4676
    %v4701 = vpack.c.b16 %v4679, %v4678
    %v4702 = vpack.c.b16 %v4681, %v4680
    %v4703 = vpack.c.b16 %v4683, %v4682
    %v4704 = vpack.c.b16 %v4685, %v4684
    %v4705 = vpack.c.b16 %v4687, %v4686
    %v4706 = vpack.c.b16 %v4689, %v4688
    %v4707 = vpack.c.b16 %v4691, %v4690
    %v4708 = vpack.c.b16 %v4693, %v4692
    %v4709 = vpack.c.b16 %v4695, %v4694
    %v4710 = vpack.c.b16 %v4697, %v4696
    %v4711 = vpack.c.b16 %v4699, %v4698
    %4724 = vmatprep.subr.bf16.mxu0 0
    %4725 = vmatpush1.bf16.msra.mxu0 %v4700
    %4726 = vmatprep.subr.bf16.mxu0 0
    %4727 = vmatpush1.bf16.msra.mxu0 %v4701
    %4728 = vmatprep.subr.bf16.mxu0 0
    %4729 = vmatpush1.bf16.msra.mxu0 %v4702
    %4730 = vmatprep.subr.bf16.mxu0 0
    %4731 = vmatpush1.bf16.msra.mxu0 %v4703
    %4732 = vmatprep.subr.bf16.mxu0 0
    %4733 = vmatpush1.bf16.msra.mxu0 %v4704
    %4734 = vmatprep.subr.bf16.mxu0 0
    %4735 = vmatpush1.bf16.msra.mxu0 %v4705
    %4736 = vmatprep.subr.bf16.mxu0 0
    %4737 = vmatpush1.bf16.msra.mxu0 %v4706
    %4738 = vmatprep.subr.bf16.mxu0 0
    %4739 = vmatpush1.bf16.msra.mxu0 %v4707
    %4740 = vmatprep.subr.bf16.mxu0 0
    %4741 = vmatpush1.bf16.msra.mxu0 %v4708
    %4742 = vmatprep.subr.bf16.mxu0 0
    %4743 = vmatpush1.bf16.msra.mxu0 %v4709
    %4744 = vmatprep.subr.bf16.mxu0 0
    %4745 = vmatpush1.bf16.msra.mxu0 %v4710
    %4746 = vmatprep.subr.bf16.mxu0 0
    %4747 = vmatpush1.bf16.msra.mxu0 %v4711
    %4748 = vmatprep.subr.bf16.mxu0 0
    %4749 = vmatpush1.bf16.msra.mxu0 0
    %4750 = vmatprep.subr.bf16.mxu0 0
    %4751 = vmatpush1.bf16.msra.mxu0 0
    %4752 = vmatprep.subr.bf16.mxu0 0
    %4753 = vmatpush1.bf16.msra.mxu0 0
    %4754 = vmatprep.subr.bf16.mxu0 0
    %4755 = vmatpush1.bf16.msra.mxu0 0
    %4756 = vmatprep.mubr.bf16.mxu0 %v3910
    %4757 = vmatmul.mubr.bf16.gmra.mrb[0].mxu0 %v3704
    %v4758 = vpop.f32.mrb[0].mxu0
    %v4759 = vadd.f32 0.0, %v4758
    %v4760 = vpop.f32.mrb[0].mxu0
    %v4761 = vpop.f32.mrb[0].mxu0
    %v4762 = vadd.f32 0.0, %v4761
    %v4763 = vpop.f32.mrb[0].mxu0
    %4764 = vmatprep.mubr.bf16.mxu0 %v3913
    %4765 = vmatmul.mubr.bf16.gmra.mrb[0].mxu0 %v3707
    %v4766 = vpop.f32.mrb[0].mxu0
    %v4767 = vadd.f32 0.0, %v4766
    %v4768 = vpop.f32.mrb[0].mxu0
    %v4769 = vpop.f32.mrb[0].mxu0
    %v4770 = vadd.f32 0.0, %v4769
    %v4771 = vpop.f32.mrb[0].mxu0
    %4772 = vmatprep.mubr.bf16.mxu0 %v3916
    %4773 = vmatmul.mubr.bf16.gmra.mrb[0].mxu0 %v3710
    %v4774 = vpop.f32.mrb[0].mxu0
    %v4775 = vadd.f32 0.0, %v4774
    %v4776 = vpop.f32.mrb[0].mxu0
    %v4777 = vpop.f32.mrb[0].mxu0
    %v4778 = vadd.f32 0.0, %v4777
    %v4779 = vpop.f32.mrb[0].mxu0
    %4780 = vmatprep.mubr.bf16.mxu0 %v3919
    %4781 = vmatmul.mubr.bf16.gmra.mrb[0].mxu0 %v3713
    %v4782 = vpop.f32.mrb[0].mxu0
    %v4783 = vadd.f32 0.0, %v4782
    %v4784 = vpop.f32.mrb[0].mxu0
    %v4785 = vpop.f32.mrb[0].mxu0
    %v4786 = vadd.f32 0.0, %v4785
    %v4787 = vpop.f32.mrb[0].mxu0
    %4788 = vmatprep.mubr.bf16.mxu0 %v3922
    %4789 = vmatmul.mubr.bf16.gmra.mrb[0].mxu0 %v3716
    %v4790 = vpop.f32.mrb[0].mxu0
    %v4791 = vadd.f32 0.0, %v4790
    %v4792 = vpop.f32.mrb[0].mxu0
    %v4793 = vpop.f32.mrb[0].mxu0
    %v4794 = vadd.f32 0.0, %v4793
    %v4795 = vpop.f32.mrb[0].mxu0
    %4796 = vmatprep.mubr.bf16.mxu0 %v3925
    %4797 = vmatmul.mubr.bf16.gmra.mrb[0].mxu0 %v3719
    %v4798 = vpop.f32.mrb[0].mxu0
    %v4799 = vadd.f32 0.0, %v4798
    %v4800 = vpop.f32.mrb[0].mxu0
    %v4801 = vpop.f32.mrb[0].mxu0
    %v4802 = vadd.f32 0.0, %v4801
    %v4803 = vpop.f32.mrb[0].mxu0
    %4804 = vmatprep.mubr.bf16.mxu0 %v3928
    %4805 = vmatmul.mubr.bf16.gmra.mrb[0].mxu0 %v3722
    %v4806 = vpop.f32.mrb[0].mxu0
    %v4807 = vadd.f32 0.0, %v4806
    %v4808 = vpop.f32.mrb[0].mxu0
    %v4809 = vpop.f32.mrb[0].mxu0
    %v4810 = vadd.f32 0.0, %v4809
    %v4811 = vpop.f32.mrb[0].mxu0
    %4812 = vmatprep.mubr.bf16.mxu0 %v3931
    %4813 = vmatmul.mubr.bf16.gmra.mrb[0].mxu0 %v3725
    %v4814 = vpop.f32.mrb[0].mxu0
    %v4815 = vadd.f32 0.0, %v4814
    %v4816 = vpop.f32.mrb[0].mxu0
    %v4817 = vpop.f32.mrb[0].mxu0
    %v4818 = vadd.f32 0.0, %v4817
    %v4819 = vpop.f32.mrb[0].mxu0
    %4820 = vmatprep.mubr.bf16.mxu0 %v3934
    %4821 = vmatmul.mubr.bf16.gmra.mrb[0].mxu0 %v3728
    %v4822 = vpop.f32.mrb[0].mxu0
    %v4823 = vadd.f32 0.0, %v4822
    %v4824 = vpop.f32.mrb[0].mxu0
    %v4825 = vpop.f32.mrb[0].mxu0
    %v4826 = vadd.f32 0.0, %v4825
    %v4827 = vpop.f32.mrb[0].mxu0
    %4828 = vmatprep.mubr.bf16.mxu0 %v3937
    %4829 = vmatmul.mubr.bf16.gmra.mrb[0].mxu0 %v3731
    %v4830 = vpop.f32.mrb[0].mxu0
    %v4831 = vadd.f32 0.0, %v4830
    %v4832 = vpop.f32.mrb[0].mxu0
    %v4833 = vpop.f32.mrb[0].mxu0
    %v4834 = vadd.f32 0.0, %v4833
    %v4835 = vpop.f32.mrb[0].mxu0
    %4836 = vmatprep.mubr.bf16.mxu0 %v3940
    %4837 = vmatmul.mubr.bf16.gmra.mrb[0].mxu0 %v3734
    %v4838 = vpop.f32.mrb[0].mxu0
    %v4839 = vadd.f32 0.0, %v4838
    %v4840 = vpop.f32.mrb[0].mxu0
    %v4841 = vpop.f32.mrb[0].mxu0
    %v4842 = vadd.f32 0.0, %v4841
    %v4843 = vpop.f32.mrb[0].mxu0
    %4844 = vmatprep.mubr.bf16.mxu0 %v3943
    %4845 = vmatmul.mubr.bf16.gmra.mrb[0].mxu0 %v3737
    %v4846 = vpop.f32.mrb[0].mxu0
    %v4847 = vadd.f32 0.0, %v4846
    %v4848 = vpop.f32.mrb[0].mxu0
    %v4849 = vpop.f32.mrb[0].mxu0
    %v4850 = vadd.f32 0.0, %v4849
    %v4851 = vpop.f32.mrb[0].mxu0
    %4852 = vmatprep.mubr.bf16.mxu0 %v3946
    %4853 = vmatmul.mubr.bf16.gmra.mrb[0].mxu0 %v3740
    %v4854 = vpop.f32.mrb[0].mxu0
    %v4855 = vadd.f32 0.0, %v4854
    %v4856 = vpop.f32.mrb[0].mxu0
    %v4857 = vpop.f32.mrb[0].mxu0
    %v4858 = vadd.f32 0.0, %v4857
    %v4859 = vpop.f32.mrb[0].mxu0
    %4860 = vmatprep.mubr.bf16.mxu0 %v3949
    %4861 = vmatmul.mubr.bf16.gmra.mrb[0].mxu0 %v3743
    %v4862 = vpop.f32.mrb[0].mxu0
    %v4863 = vadd.f32 0.0, %v4862
    %v4864 = vpop.f32.mrb[0].mxu0
    %v4865 = vpop.f32.mrb[0].mxu0
    %v4866 = vadd.f32 0.0, %v4865
    %v4867 = vpop.f32.mrb[0].mxu0
    %4868 = vmatprep.mubr.bf16.mxu0 %v3952
    %4869 = vmatmul.mubr.bf16.gmra.mrb[0].mxu0 %v3829
    %v4870 = vpop.f32.mrb[0].mxu0
    %v4871 = vadd.f32 0.0, %v4870
    %v4872 = vpop.f32.mrb[0].mxu0
    %v4873 = vpop.f32.mrb[0].mxu0
    %v4874 = vadd.f32 0.0, %v4873
    %v4875 = vpop.f32.mrb[0].mxu0
    %4876 = vmatprep.mubr.bf16.mxu0 %v3952
    %4877 = vmatmul.mubr.bf16.gmra.mrb[0].mxu0 %v3829
    %v4878 = vpop.f32.mrb[0].mxu0
    %v4879 = vadd.f32 0.0, %v4878
    %v4880 = vpop.f32.mrb[0].mxu0
    %v4881 = vpop.f32.mrb[0].mxu0
    %v4882 = vadd.f32 0.0, %v4881
    %v4883 = vpop.f32.mrb[0].mxu0
    %4884 = vmatprep.mubr.bf16.mxu0 %v3958
    %4885 = vmatmul.mubr.bf16.gmra.mrb[0].mxu0 %v3749
    %v4886 = vpop.f32.mrb[0].mxu0
    %v4887 = vadd.f32 0.0, %v4886
    %v4888 = vpop.f32.mrb[0].mxu0
    %v4889 = vpop.f32.mrb[0].mxu0
    %v4890 = vadd.f32 0.0, %v4889
    %v4891 = vpop.f32.mrb[0].mxu0
    %4892 = vmatprep.mubr.bf16.mxu0 %v3961
    %4893 = vmatmul.mubr.bf16.gmra.mrb[0].mxu0 %v3752
    %v4894 = vpop.f32.mrb[0].mxu0
    %v4895 = vadd.f32 0.0, %v4894
    %v4896 = vpop.f32.mrb[0].mxu0
    %v4897 = vpop.f32.mrb[0].mxu0
    %v4898 = vadd.f32 0.0, %v4897
    %v4899 = vpop.f32.mrb[0].mxu0
    %4900 = vmatprep.mubr.bf16.mxu0 %v3964
    %4901 = vmatmul.mubr.bf16.gmra.mrb[0].mxu0 %v3755
    %v4902 = vpop.f32.mrb[0].mxu0
    %v4903 = vadd.f32 0.0, %v4902
    %v4904 = vpop.f32.mrb[0].mxu0
    %v4905 = vpop.f32.mrb[0].mxu0
    %v4906 = vadd.f32 0.0, %v4905
    %v4907 = vpop.f32.mrb[0].mxu0
    %4908 = vmatprep.mubr.bf16.mxu0 %v3967
    %4909 = vmatmul.mubr.bf16.gmra.mrb[0].mxu0 %v3758
    %v4910 = vpop.f32.mrb[0].mxu0
    %v4911 = vadd.f32 0.0, %v4910
    %v4912 = vpop.f32.mrb[0].mxu0
    %v4913 = vpop.f32.mrb[0].mxu0
    %v4914 = vadd.f32 0.0, %v4913
    %v4915 = vpop.f32.mrb[0].mxu0
    %4916 = vmatprep.mubr.bf16.mxu0 %v3970
    %4917 = vmatmul.mubr.bf16.gmra.mrb[0].mxu0 %v3761
    %v4918 = vpop.f32.mrb[0].mxu0
    %v4919 = vadd.f32 0.0, %v4918
    %v4920 = vpop.f32.mrb[0].mxu0
    %v4921 = vpop.f32.mrb[0].mxu0
    %v4922 = vadd.f32 0.0, %v4921
    %v4923 = vpop.f32.mrb[0].mxu0
    %4924 = vmatprep.mubr.bf16.mxu0 %v3973
    %4925 = vmatmul.mubr.bf16.gmra.mrb[0].mxu0 %v3764
    %v4926 = vpop.f32.mrb[0].mxu0
    %v4927 = vadd.f32 0.0, %v4926
    %v4928 = vpop.f32.mrb[0].mxu0
    %v4929 = vpop.f32.mrb[0].mxu0
    %v4930 = vadd.f32 0.0, %v4929
    %v4931 = vpop.f32.mrb[0].mxu0
    %4932 = vmatprep.mubr.bf16.mxu0 %v3976
    %4933 = vmatmul.mubr.bf16.gmra.mrb[0].mxu0 %v3767
    %v4934 = vpop.f32.mrb[0].mxu0
    %v4935 = vadd.f32 0.0, %v4934
    %v4936 = vpop.f32.mrb[0].mxu0
    %v4937 = vpop.f32.mrb[0].mxu0
    %v4938 = vadd.f32 0.0, %v4937
    %v4939 = vpop.f32.mrb[0].mxu0
    %4940 = vmatprep.mubr.bf16.mxu0 %v3979
    %4941 = vmatmul.mubr.bf16.gmra.mrb[0].mxu0 %v3770
    %v4942 = vpop.f32.mrb[0].mxu0
    %v4943 = vadd.f32 0.0, %v4942
    %v4944 = vpop.f32.mrb[0].mxu0
    %v4945 = vpop.f32.mrb[0].mxu0
    %v4946 = vadd.f32 0.0, %v4945
    %v4947 = vpop.f32.mrb[0].mxu0
    %4948 = vmatprep.mubr.bf16.mxu0 %v3982
    %4949 = vmatmul.mubr.bf16.gmra.mrb[0].mxu0 %v3773
    %v4950 = vpop.f32.mrb[0].mxu0
    %v4951 = vadd.f32 0.0, %v4950
    %v4952 = vpop.f32.mrb[0].mxu0
    %v4953 = vpop.f32.mrb[0].mxu0
    %v4954 = vadd.f32 0.0, %v4953
    %v4955 = vpop.f32.mrb[0].mxu0
    %4956 = vmatprep.mubr.bf16.mxu0 %v3985
    %4957 = vmatmul.mubr.bf16.gmra.mrb[0].mxu0 %v3776
    %v4958 = vpop.f32.mrb[0].mxu0
    %v4959 = vadd.f32 0.0, %v4958
    %v4960 = vpop.f32.mrb[0].mxu0
    %v4961 = vpop.f32.mrb[0].mxu0
    %v4962 = vadd.f32 0.0, %v4961
    %v4963 = vpop.f32.mrb[0].mxu0
    %4964 = vmatprep.mubr.bf16.mxu0 %v3988
    %4965 = vmatmul.mubr.bf16.gmra.mrb[0].mxu0 %v3779
    %v4966 = vpop.f32.mrb[0].mxu0
    %v4967 = vadd.f32 0.0, %v4966
    %v4968 = vpop.f32.mrb[0].mxu0
    %v4969 = vpop.f32.mrb[0].mxu0
    %v4970 = vadd.f32 0.0, %v4969
    %v4971 = vpop.f32.mrb[0].mxu0
    %4972 = vmatprep.mubr.bf16.mxu0 %v3991
    %4973 = vmatmul.mubr.bf16.gmra.mrb[0].mxu0 %v3782
    %v4974 = vpop.f32.mrb[0].mxu0
    %v4975 = vadd.f32 0.0, %v4974
    %v4976 = vpop.f32.mrb[0].mxu0
    %v4977 = vpop.f32.mrb[0].mxu0
    %v4978 = vadd.f32 0.0, %v4977
    %v4979 = vpop.f32.mrb[0].mxu0
    %4980 = vmatprep.mubr.bf16.mxu0 %v3994
    %4981 = vmatmul.mubr.bf16.gmra.mrb[0].mxu0 %v3785
    %v4982 = vpop.f32.mrb[0].mxu0
    %v4983 = vadd.f32 0.0, %v4982
    %v4984 = vpop.f32.mrb[0].mxu0
    %v4985 = vpop.f32.mrb[0].mxu0
    %v4986 = vadd.f32 0.0, %v4985
    %v4987 = vpop.f32.mrb[0].mxu0
    %4988 = vmatprep.mubr.bf16.mxu0 %v3997
    %4989 = vmatmul.mubr.bf16.gmra.mrb[0].mxu0 %v3788
    %v4990 = vpop.f32.mrb[0].mxu0
    %v4991 = vadd.f32 0.0, %v4990
    %v4992 = vpop.f32.mrb[0].mxu0
    %v4993 = vpop.f32.mrb[0].mxu0
    %v4994 = vadd.f32 0.0, %v4993
    %v4995 = vpop.f32.mrb[0].mxu0
    %4996 = vmatprep.mubr.bf16.mxu0 %v4000
    %4997 = vmatmul.mubr.bf16.gmra.mrb[0].mxu0 %v3832
    %v4998 = vpop.f32.mrb[0].mxu0
    %v4999 = vadd.f32 0.0, %v4998
    %v5000 = vpop.f32.mrb[0].mxu0
    %v5001 = vpop.f32.mrb[0].mxu0
    %v5002 = vadd.f32 0.0, %v5001
    %v5003 = vpop.f32.mrb[0].mxu0
    %5004 = vmatprep.mubr.bf16.mxu0 %v4000
    %5005 = vmatmul.mubr.bf16.gmra.mrb[0].mxu0 %v3832
    %v5006 = vpop.f32.mrb[0].mxu0
    %v5007 = vadd.f32 0.0, %v5006
    %v5008 = vpop.f32.mrb[0].mxu0
    %v5009 = vpop.f32.mrb[0].mxu0
    %v5010 = vadd.f32 0.0, %v5009
    %v5011 = vpop.f32.mrb[0].mxu0
    %5012 = vdwg.mxu0
    %v5013 = vadd.f32 %v4398, %v4759
    %v5014 = vadd.f32 %v4401, %v4762
    %v5015 = vadd.f32 %v4406, %v4767
    %v5016 = vadd.f32 %v4409, %v4770
    %v5017 = vadd.f32 %v4414, %v4775
    %v5018 = vadd.f32 %v4417, %v4778
    %v5019 = vadd.f32 %v4422, %v4783
    %v5020 = vadd.f32 %v4425, %v4786
    %v5021 = vadd.f32 %v4430, %v4791
    %v5022 = vadd.f32 %v4433, %v4794
    %v5023 = vadd.f32 %v4438, %v4799
    %v5024 = vadd.f32 %v4441, %v4802
    %v5025 = vadd.f32 %v4446, %v4807
    %v5026 = vadd.f32 %v4449, %v4810
    %v5027 = vadd.f32 %v4454, %v4815
    %v5028 = vadd.f32 %v4457, %v4818
    %v5029 = vadd.f32 %v4462, %v4823
    %v5030 = vadd.f32 %v4465, %v4826
    %v5031 = vadd.f32 %v4470, %v4831
    %v5032 = vadd.f32 %v4473, %v4834
    %v5033 = vadd.f32 %v4478, %v4839
    %v5034 = vadd.f32 %v4481, %v4842
    %v5035 = vadd.f32 %v4486, %v4847
    %v5036 = vadd.f32 %v4489, %v4850
    %v5037 = vadd.f32 %v4494, %v4855
    %v5038 = vadd.f32 %v4497, %v4858
    %v5039 = vadd.f32 %v4502, %v4863
    %v5040 = vadd.f32 %v4505, %v4866
    %v5041 = vadd.f32 %v4510, %v4871
    %v5042 = vadd.f32 %v4513, %v4874
    %v5043 = vadd.f32 %v4518, %v4879
    %v5044 = vadd.f32 %v4521, %v4882
    %v5045 = vadd.f32 %v4526, %v4887
    %v5046 = vadd.f32 %v4529, %v4890
    %v5047 = vadd.f32 %v4534, %v4895
    %v5048 = vadd.f32 %v4537, %v4898
    %v5049 = vadd.f32 %v4542, %v4903
    %v5050 = vadd.f32 %v4545, %v4906
    %v5051 = vadd.f32 %v4550, %v4911
    %v5052 = vadd.f32 %v4553, %v4914
    %v5053 = vadd.f32 %v4558, %v4919
    %v5054 = vadd.f32 %v4561, %v4922
    %v5055 = vadd.f32 %v4566, %v4927
    %v5056 = vadd.f32 %v4569, %v4930
    %v5057 = vadd.f32 %v4574, %v4935
    %v5058 = vadd.f32 %v4577, %v4938
    %v5059 = vadd.f32 %v4582, %v4943
    %v5060 = vadd.f32 %v4585, %v4946
    %v5061 = vadd.f32 %v4590, %v4951
    %v5062 = vadd.f32 %v4593, %v4954
    %v5063 = vadd.f32 %v4598, %v4959
    %v5064 = vadd.f32 %v4601, %v4962
    %v5065 = vadd.f32 %v4606, %v4967
    %v5066 = vadd.f32 %v4609, %v4970
    %v5067 = vadd.f32 %v4614, %v4975
    %v5068 = vadd.f32 %v4617, %v4978
    %v5069 = vadd.f32 %v4622, %v4983
    %v5070 = vadd.f32 %v4625, %v4986
    %v5071 = vadd.f32 %v4630, %v4991
    %v5072 = vadd.f32 %v4633, %v4994
    %v5073 = vadd.f32 %v4638, %v4999
    %v5074 = vadd.f32 %v4641, %v5002
    %v5075 = vadd.f32 %v4646, %v5007
    %v5076 = vadd.f32 %v4649, %v5010
    %v5078 = vlaneseq
    %v5079 = vshrl.u32 %v5078, 7
    %v5080 = vsub.s32 0, %v5079
    %v5081 = vrot.slane %v2680, %v5080
    %v5083 = vadd.f32 %v5013, %v5081
    %v5084 = vadd.f32 %v5014, %v5081
    %v5085 = vadd.f32 %v5015, %v5081
    %v5086 = vadd.f32 %v5016, %v5081
    %v5087 = vadd.f32 %v5017, %v5081
    %v5088 = vadd.f32 %v5018, %v5081
    %v5089 = vadd.f32 %v5019, %v5081
    %v5090 = vadd.f32 %v5020, %v5081
    %v5091 = vadd.f32 %v5021, %v5081
    %v5092 = vadd.f32 %v5022, %v5081
    %v5093 = vadd.f32 %v5023, %v5081
    %v5094 = vadd.f32 %v5024, %v5081
    %v5095 = vadd.f32 %v5025, %v5081
    %v5096 = vadd.f32 %v5026, %v5081
    %v5097 = vadd.f32 %v5027, %v5081
    %v5098 = vadd.f32 %v5028, %v5081
    %v5099 = vadd.f32 %v5029, %v5081
    %v5100 = vadd.f32 %v5030, %v5081
    %v5101 = vadd.f32 %v5031, %v5081
    %v5102 = vadd.f32 %v5032, %v5081
    %v5103 = vadd.f32 %v5033, %v5081
    %v5104 = vadd.f32 %v5034, %v5081
    %v5105 = vadd.f32 %v5035, %v5081
    %v5106 = vadd.f32 %v5036, %v5081
    %v5107 = vadd.f32 %v5037, %v5081
    %v5108 = vadd.f32 %v5038, %v5081
    %v5109 = vadd.f32 %v5039, %v5081
    %v5110 = vadd.f32 %v5040, %v5081
    %v5111 = vadd.f32 %v5041, %v5081
    %v5112 = vadd.f32 %v5042, %v5081
    %v5113 = vadd.f32 %v5043, %v5081
    %v5114 = vadd.f32 %v5044, %v5081
    %v5115 = vadd.f32 %v5045, %v5081
    %v5116 = vadd.f32 %v5046, %v5081
    %v5117 = vadd.f32 %v5047, %v5081
    %v5118 = vadd.f32 %v5048, %v5081
    %v5119 = vadd.f32 %v5049, %v5081
    %v5120 = vadd.f32 %v5050, %v5081
    %v5121 = vadd.f32 %v5051, %v5081
    %v5122 = vadd.f32 %v5052, %v5081
    %v5123 = vadd.f32 %v5053, %v5081
    %v5124 = vadd.f32 %v5054, %v5081
    %v5125 = vadd.f32 %v5055, %v5081
    %v5126 = vadd.f32 %v5056, %v5081
    %v5127 = vadd.f32 %v5057, %v5081
    %v5128 = vadd.f32 %v5058, %v5081
    %v5129 = vadd.f32 %v5059, %v5081
    %v5130 = vadd.f32 %v5060, %v5081
    %v5131 = vadd.f32 %v5061, %v5081
    %v5132 = vadd.f32 %v5062, %v5081
    %v5133 = vadd.f32 %v5063, %v5081
    %v5134 = vadd.f32 %v5064, %v5081
    %v5135 = vadd.f32 %v5065, %v5081
    %v5136 = vadd.f32 %v5066, %v5081
    %v5137 = vadd.f32 %v5067, %v5081
    %v5138 = vadd.f32 %v5068, %v5081
    %v5139 = vadd.f32 %v5069, %v5081
    %v5140 = vadd.f32 %v5070, %v5081
    %v5141 = vadd.f32 %v5071, %v5081
    %v5142 = vadd.f32 %v5072, %v5081
    %v5143 = vadd.f32 %v5073, %v5081
    %v5144 = vadd.f32 %v5074, %v5081
    %v5145 = vadd.f32 %v5075, %v5081
    %v5146 = vadd.f32 %v5076, %v5081
    %v5147 = vmax.f32 %v5083, 0.0
    %v5148 = vmax.f32 %v5084, 0.0
    %v5149 = vmax.f32 %v5085, 0.0
    %v5150 = vmax.f32 %v5086, 0.0
    %v5151 = vmax.f32 %v5087, 0.0
    %v5152 = vmax.f32 %v5088, 0.0
    %v5153 = vmax.f32 %v5089, 0.0
    %v5154 = vmax.f32 %v5090, 0.0
    %v5155 = vmax.f32 %v5091, 0.0
    %v5156 = vmax.f32 %v5092, 0.0
    %v5157 = vmax.f32 %v5093, 0.0
    %v5158 = vmax.f32 %v5094, 0.0
    %v5159 = vmax.f32 %v5095, 0.0
    %v5160 = vmax.f32 %v5096, 0.0
    %v5161 = vmax.f32 %v5097, 0.0
    %v5162 = vmax.f32 %v5098, 0.0
    %v5163 = vmax.f32 %v5099, 0.0
    %v5164 = vmax.f32 %v5100, 0.0
    %v5165 = vmax.f32 %v5101, 0.0
    %v5166 = vmax.f32 %v5102, 0.0
    %v5167 = vmax.f32 %v5103, 0.0
    %v5168 = vmax.f32 %v5104, 0.0
    %v5169 = vmax.f32 %v5105, 0.0
    %v5170 = vmax.f32 %v5106, 0.0
    %v5171 = vmax.f32 %v5107, 0.0
    %v5172 = vmax.f32 %v5108, 0.0
    %v5173 = vmax.f32 %v5109, 0.0
    %v5174 = vmax.f32 %v5110, 0.0
    %v5175 = vmax.f32 %v5111, 0.0
    %v5176 = vmax.f32 %v5112, 0.0
    %v5177 = vmax.f32 %v5113, 0.0
    %v5178 = vmax.f32 %v5114, 0.0
    %v5179 = vmax.f32 %v5115, 0.0
    %v5180 = vmax.f32 %v5116, 0.0
    %v5181 = vmax.f32 %v5117, 0.0
    %v5182 = vmax.f32 %v5118, 0.0
    %v5183 = vmax.f32 %v5119, 0.0
    %v5184 = vmax.f32 %v5120, 0.0
    %v5185 = vmax.f32 %v5121, 0.0
    %v5186 = vmax.f32 %v5122, 0.0
    %v5187 = vmax.f32 %v5123, 0.0
    %v5188 = vmax.f32 %v5124, 0.0
    %v5189 = vmax.f32 %v5125, 0.0
    %v5190 = vmax.f32 %v5126, 0.0
    %v5191 = vmax.f32 %v5127, 0.0
    %v5192 = vmax.f32 %v5128, 0.0
    %v5193 = vmax.f32 %v5129, 0.0
    %v5194 = vmax.f32 %v5130, 0.0
    %v5195 = vmax.f32 %v5131, 0.0
    %v5196 = vmax.f32 %v5132, 0.0
    %v5197 = vmax.f32 %v5133, 0.0
    %v5198 = vmax.f32 %v5134, 0.0
    %v5199 = vmax.f32 %v5135, 0.0
    %v5200 = vmax.f32 %v5136, 0.0
    %v5201 = vmax.f32 %v5137, 0.0
    %v5202 = vmax.f32 %v5138, 0.0
    %v5203 = vmax.f32 %v5139, 0.0
    %v5204 = vmax.f32 %v5140, 0.0
    %v5205 = vmax.f32 %v5141, 0.0
    %v5206 = vmax.f32 %v5142, 0.0
    %v5207 = vmax.f32 %v5143, 0.0
    %v5208 = vmax.f32 %v5144, 0.0
    %v5209 = vmax.f32 %v5145, 0.0
    %v5210 = vmax.f32 %v5146, 0.0
    %5211 = vxpose.xlu0.b32.start [1/16] %v5147, 128
    %5212 = vxpose.xlu0.b32.cont [2/16] %v5148, 128
    %5213 = vxpose.xlu0.b32.cont [3/16] %v5149, 128
    %5214 = vxpose.xlu0.b32.cont [4/16] %v5150, 128
    %5215 = vxpose.xlu0.b32.cont [5/16] %v5151, 128
    %5216 = vxpose.xlu0.b32.cont [6/16] %v5152, 128
    %5217 = vxpose.xlu0.b32.cont [7/16] %v5153, 128
    %5218 = vxpose.xlu0.b32.cont [8/16] %v5154, 128
    %5219 = vxpose.xlu0.b32.cont [9/16] %v5155, 128
    %5220 = vxpose.xlu0.b32.cont [10/16] %v5156, 128
    %5221 = vxpose.xlu0.b32.cont [11/16] %v5157, 128
    %5222 = vxpose.xlu0.b32.cont [12/16] %v5158, 128
    %5223 = vxpose.xlu0.b32.cont [13/16] %v5159, 128
    %5224 = vxpose.xlu0.b32.cont [14/16] %v5160, 128
    %5225 = vxpose.xlu0.b32.cont [15/16] %v5161, 128
    %5226 = vxpose.xlu0.b32.end [16/16] %v5162, 128
    %v5227 = vpop.trf.xlu0
    %v5228 = vpop.trf.xlu0
    %v5229 = vpop.trf.xlu0
    %v5230 = vpop.trf.xlu0
    %v5231 = vpop.trf.xlu0
    %v5232 = vpop.trf.xlu0
    %v5233 = vpop.trf.xlu0
    %v5234 = vpop.trf.xlu0
    %v5235 = vpop.trf.xlu0
    %v5236 = vpop.trf.xlu0
    %v5237 = vpop.trf.xlu0
    %v5238 = vpop.trf.xlu0
    %v5239 = vpop.trf.xlu0
    %v5240 = vpop.trf.xlu0
    %v5241 = vpop.trf.xlu0
    %v5242 = vpop.trf.xlu0
    %5243 = vxpose.xlu0.b32.start [1/16] %v5163, 128
    %5244 = vxpose.xlu0.b32.cont [2/16] %v5164, 128
    %5245 = vxpose.xlu0.b32.cont [3/16] %v5165, 128
    %5246 = vxpose.xlu0.b32.cont [4/16] %v5166, 128
    %5247 = vxpose.xlu0.b32.cont [5/16] %v5167, 128
    %5248 = vxpose.xlu0.b32.cont [6/16] %v5168, 128
    %5249 = vxpose.xlu0.b32.cont [7/16] %v5169, 128
    %5250 = vxpose.xlu0.b32.cont [8/16] %v5170, 128
    %5251 = vxpose.xlu0.b32.cont [9/16] %v5171, 128
    %5252 = vxpose.xlu0.b32.cont [10/16] %v5172, 128
    %5253 = vxpose.xlu0.b32.cont [11/16] %v5173, 128
    %5254 = vxpose.xlu0.b32.cont [12/16] %v5174, 128
    %5255 = vxpose.xlu0.b32.cont [13/16] %v5175, 128
    %5256 = vxpose.xlu0.b32.cont [14/16] %v5176, 128
    %5257 = vxpose.xlu0.b32.cont [15/16] %v5177, 128
    %5258 = vxpose.xlu0.b32.end [16/16] %v5178, 128
    %v5259 = vpop.trf.xlu0
    %v5260 = vpop.trf.xlu0
    %v5261 = vpop.trf.xlu0
    %v5262 = vpop.trf.xlu0
    %v5263 = vpop.trf.xlu0
    %v5264 = vpop.trf.xlu0
    %v5265 = vpop.trf.xlu0
    %v5266 = vpop.trf.xlu0
    %v5267 = vpop.trf.xlu0
    %v5268 = vpop.trf.xlu0
    %v5269 = vpop.trf.xlu0
    %v5270 = vpop.trf.xlu0
    %v5271 = vpop.trf.xlu0
    %v5272 = vpop.trf.xlu0
    %v5273 = vpop.trf.xlu0
    %v5274 = vpop.trf.xlu0
    %5275 = vst [vmem:[#allocation2] sm:$0xff] %v5227
    %5276 = vst [vmem:[#allocation2 + $0x8] sm:$0xff] %v5259
    %5277 = vst [vmem:[#allocation2 + $0x10] sm:$0xff] %v5228
    %5278 = vst [vmem:[#allocation2 + $0x18] sm:$0xff] %v5260
    %5279 = vst [vmem:[#allocation2 + $0x20] sm:$0xff] %v5229
    %5280 = vst [vmem:[#allocation2 + $0x28] sm:$0xff] %v5261
    %5281 = vst [vmem:[#allocation2 + $0x30] sm:$0xff] %v5230
    %5282 = vst [vmem:[#allocation2 + $0x38] sm:$0xff] %v5262
    %5283 = vst [vmem:[#allocation2 + $0x40] sm:$0xff] %v5231
    %5284 = vst [vmem:[#allocation2 + $0x48] sm:$0xff] %v5263
    %5285 = vst [vmem:[#allocation2 + $0x50] sm:$0xff] %v5232
    %5286 = vst [vmem:[#allocation2 + $0x58] sm:$0xff] %v5264
    %5287 = vst [vmem:[#allocation2 + $0x60] sm:$0xff] %v5233
    %5288 = vst [vmem:[#allocation2 + $0x68] sm:$0xff] %v5265
    %5289 = vst [vmem:[#allocation2 + $0x70] sm:$0xff] %v5234
    %5290 = vst [vmem:[#allocation2 + $0x78] sm:$0xff] %v5266
    %5291 = vxpose.xlu0.b32.start [1/16] %v5179, 128
    %5292 = vxpose.xlu0.b32.cont [2/16] %v5180, 128
    %5293 = vxpose.xlu0.b32.cont [3/16] %v5181, 128
    %5294 = vxpose.xlu0.b32.cont [4/16] %v5182, 128
    %5295 = vxpose.xlu0.b32.cont [5/16] %v5183, 128
    %5296 = vxpose.xlu0.b32.cont [6/16] %v5184, 128
    %5297 = vxpose.xlu0.b32.cont [7/16] %v5185, 128
    %5298 = vxpose.xlu0.b32.cont [8/16] %v5186, 128
    %5299 = vxpose.xlu0.b32.cont [9/16] %v5187, 128
    %5300 = vxpose.xlu0.b32.cont [10/16] %v5188, 128
    %5301 = vxpose.xlu0.b32.cont [11/16] %v5189, 128
    %5302 = vxpose.xlu0.b32.cont [12/16] %v5190, 128
    %5303 = vxpose.xlu0.b32.cont [13/16] %v5191, 128
    %5304 = vxpose.xlu0.b32.cont [14/16] %v5192, 128
    %5305 = vxpose.xlu0.b32.cont [15/16] %v5193, 128
    %5306 = vxpose.xlu0.b32.end [16/16] %v5194, 128
    %v5307 = vpop.trf.xlu0
    %v5308 = vpop.trf.xlu0
    %v5309 = vpop.trf.xlu0
    %v5310 = vpop.trf.xlu0
    %v5311 = vpop.trf.xlu0
    %v5312 = vpop.trf.xlu0
    %v5313 = vpop.trf.xlu0
    %v5314 = vpop.trf.xlu0
    %v5315 = vpop.trf.xlu0
    %v5316 = vpop.trf.xlu0
    %v5317 = vpop.trf.xlu0
    %v5318 = vpop.trf.xlu0
    %v5319 = vpop.trf.xlu0
    %v5320 = vpop.trf.xlu0
    %v5321 = vpop.trf.xlu0
    %v5322 = vpop.trf.xlu0
    %5323 = vxpose.xlu0.b32.start [1/16] %v5195, 128
    %5324 = vxpose.xlu0.b32.cont [2/16] %v5196, 128
    %5325 = vxpose.xlu0.b32.cont [3/16] %v5197, 128
    %5326 = vxpose.xlu0.b32.cont [4/16] %v5198, 128
    %5327 = vxpose.xlu0.b32.cont [5/16] %v5199, 128
    %5328 = vxpose.xlu0.b32.cont [6/16] %v5200, 128
    %5329 = vxpose.xlu0.b32.cont [7/16] %v5201, 128
    %5330 = vxpose.xlu0.b32.cont [8/16] %v5202, 128
    %5331 = vxpose.xlu0.b32.cont [9/16] %v5203, 128
    %5332 = vxpose.xlu0.b32.cont [10/16] %v5204, 128
    %5333 = vxpose.xlu0.b32.cont [11/16] %v5205, 128
    %5334 = vxpose.xlu0.b32.cont [12/16] %v5206, 128
    %5335 = vxpose.xlu0.b32.cont [13/16] %v5207, 128
    %5336 = vxpose.xlu0.b32.cont [14/16] %v5208, 128
    %5337 = vxpose.xlu0.b32.cont [15/16] %v5209, 128
    %5338 = vxpose.xlu0.b32.end [16/16] %v5210, 128
    %v5339 = vpop.trf.xlu0
    %v5340 = vpop.trf.xlu0
    %v5341 = vpop.trf.xlu0
    %v5342 = vpop.trf.xlu0
    %v5343 = vpop.trf.xlu0
    %v5344 = vpop.trf.xlu0
    %v5345 = vpop.trf.xlu0
    %v5346 = vpop.trf.xlu0
    %v5347 = vpop.trf.xlu0
    %v5348 = vpop.trf.xlu0
    %v5349 = vpop.trf.xlu0
    %v5350 = vpop.trf.xlu0
    %v5351 = vpop.trf.xlu0
    %v5352 = vpop.trf.xlu0
    %v5353 = vpop.trf.xlu0
    %v5354 = vpop.trf.xlu0
    %s5355 = scalar_lea.vmem [#allocation2], 128
    %5356 = vst [vmem:[%s5355] sm:$0xff] %v5307
    %5357 = vst [vmem:[%s5355 + $0x8] sm:$0xff] %v5339
    %5358 = vst [vmem:[%s5355 + $0x10] sm:$0xff] %v5308
    %5359 = vst [vmem:[%s5355 + $0x18] sm:$0xff] %v5340
    %5360 = vst [vmem:[%s5355 + $0x20] sm:$0xff] %v5309
    %5361 = vst [vmem:[%s5355 + $0x28] sm:$0xff] %v5341
    %5362 = vst [vmem:[%s5355 + $0x30] sm:$0xff] %v5310
    %5363 = vst [vmem:[%s5355 + $0x38] sm:$0xff] %v5342
    %5364 = vst [vmem:[%s5355 + $0x40] sm:$0xff] %v5311
    %5365 = vst [vmem:[%s5355 + $0x48] sm:$0xff] %v5343
    %5366 = vst [vmem:[%s5355 + $0x50] sm:$0xff] %v5312
    %5367 = vst [vmem:[%s5355 + $0x58] sm:$0xff] %v5344
    %5368 = vst [vmem:[%s5355 + $0x60] sm:$0xff] %v5313
    %5369 = vst [vmem:[%s5355 + $0x68] sm:$0xff] %v5345
    %5370 = vst [vmem:[%s5355 + $0x70] sm:$0xff] %v5314
    %5371 = vst [vmem:[%s5355 + $0x78] sm:$0xff] %v5346
    %v5372 = vsel %vm3699, %v5147, -inf
    %v5373 = vsel %vm3699, %v5149, -inf
    %v5374 = vmax.f32 %v5372, %v5373
    %v5375 = vsel %vm3699, %v5148, -inf
    %v5376 = vsel %vm3699, %v5150, -inf
    %v5377 = vmax.f32 %v5375, %v5376
    %v5378 = vsel %vm3699, %v5151, -inf
    %v5379 = vsel %vm3699, %v5153, -inf
    %v5380 = vmax.f32 %v5378, %v5379
    %v5381 = vsel %vm3699, %v5152, -inf
    %v5382 = vsel %vm3699, %v5154, -inf
    %v5383 = vmax.f32 %v5381, %v5382
    %v5384 = vsel %vm3699, %v5155, -inf
    %v5385 = vsel %vm3699, %v5157, -inf
    %v5386 = vmax.f32 %v5384, %v5385
    %v5387 = vsel %vm3699, %v5156, -inf
    %v5388 = vsel %vm3699, %v5158, -inf
    %v5389 = vmax.f32 %v5387, %v5388
    %v5390 = vsel %vm3699, %v5159, -inf
    %v5391 = vsel %vm3699, %v5161, -inf
    %v5392 = vmax.f32 %v5390, %v5391
    %v5393 = vsel %vm3699, %v5160, -inf
    %v5394 = vsel %vm3699, %v5162, -inf
    %v5395 = vmax.f32 %v5393, %v5394
    %v5396 = vsel %vm3699, %v5163, -inf
    %v5397 = vsel %vm3699, %v5165, -inf
    %v5398 = vmax.f32 %v5396, %v5397
    %v5399 = vsel %vm3699, %v5164, -inf
    %v5400 = vsel %vm3699, %v5166, -inf
    %v5401 = vmax.f32 %v5399, %v5400
    %v5402 = vsel %vm3699, %v5167, -inf
    %v5403 = vsel %vm3699, %v5169, -inf
    %v5404 = vmax.f32 %v5402, %v5403
    %v5405 = vsel %vm3699, %v5168, -inf
    %v5406 = vsel %vm3699, %v5170, -inf
    %v5407 = vmax.f32 %v5405, %v5406
    %v5408 = vsel %vm3699, %v5171, -inf
    %v5409 = vsel %vm3699, %v5173, -inf
    %v5410 = vmax.f32 %v5408, %v5409
    %v5411 = vsel %vm3699, %v5172, -inf
    %v5412 = vsel %vm3699, %v5174, -inf
    %v5413 = vmax.f32 %v5411, %v5412
    %v5414 = vsel %vm3699, %v5175, -inf
    %v5415 = vsel %vm3699, %v5177, -inf
    %v5416 = vmax.f32 %v5414, %v5415
    %v5417 = vsel %vm3699, %v5176, -inf
    %v5418 = vsel %vm3699, %v5178, -inf
    %v5419 = vmax.f32 %v5417, %v5418
    %v5420 = vsel %vm3699, %v5179, -inf
    %v5421 = vsel %vm3699, %v5181, -inf
    %v5422 = vmax.f32 %v5420, %v5421
    %v5423 = vsel %vm3699, %v5180, -inf
    %v5424 = vsel %vm3699, %v5182, -inf
    %v5425 = vmax.f32 %v5423, %v5424
    %v5426 = vsel %vm3699, %v5183, -inf
    %v5427 = vsel %vm3699, %v5185, -inf
    %v5428 = vmax.f32 %v5426, %v5427
    %v5429 = vsel %vm3699, %v5184, -inf
    %v5430 = vsel %vm3699, %v5186, -inf
    %v5431 = vmax.f32 %v5429, %v5430
    %v5432 = vsel %vm3699, %v5187, -inf
    %v5433 = vsel %vm3699, %v5189, -inf
    %v5434 = vmax.f32 %v5432, %v5433
    %v5435 = vsel %vm3699, %v5188, -inf
    %v5436 = vsel %vm3699, %v5190, -inf
    %v5437 = vmax.f32 %v5435, %v5436
    %v5438 = vsel %vm3699, %v5191, -inf
    %v5439 = vsel %vm3699, %v5193, -inf
    %v5440 = vmax.f32 %v5438, %v5439
    %v5441 = vsel %vm3699, %v5192, -inf
    %v5442 = vsel %vm3699, %v5194, -inf
    %v5443 = vmax.f32 %v5441, %v5442
    %v5444 = vsel %vm3699, %v5195, -inf
    %v5445 = vsel %vm3699, %v5197, -inf
    %v5446 = vmax.f32 %v5444, %v5445
    %v5447 = vsel %vm3699, %v5196, -inf
    %v5448 = vsel %vm3699, %v5198, -inf
    %v5449 = vmax.f32 %v5447, %v5448
    %v5450 = vsel %vm3699, %v5199, -inf
    %v5451 = vsel %vm3699, %v5201, -inf
    %v5452 = vmax.f32 %v5450, %v5451
    %v5453 = vsel %vm3699, %v5200, -inf
    %v5454 = vsel %vm3699, %v5202, -inf
    %v5455 = vmax.f32 %v5453, %v5454
    %v5456 = vsel %vm3699, %v5203, -inf
    %v5457 = vsel %vm3699, %v5205, -inf
    %v5458 = vmax.f32 %v5456, %v5457
    %v5459 = vsel %vm3699, %v5204, -inf
    %v5460 = vsel %vm3699, %v5206, -inf
    %v5461 = vmax.f32 %v5459, %v5460
    %v5462 = vsel %vm3699, %v5207, -inf
    %v5463 = vsel %vm3699, %v5209, -inf
    %v5464 = vmax.f32 %v5462, %v5463
    %v5465 = vsel %vm3699, %v5208, -inf
    %v5466 = vsel %vm3699, %v5210, -inf
    %v5467 = vmax.f32 %v5465, %v5466
    %v5500 = vcombine.high %v5374, %v5374
    %v5502 = vunpack.c.l.s4 1983009808
    %v5503 = vunpack.c.0.s8 %v5502
    %v5504 = vlaneseq
    %v5505 = vshrl.u32 %v5504, 7
    %v5506 = vsub.s32 %v5503, %v5505
    %v5507 = vrot.slane %v5374, %v5506
    %v5509 = vunpack.c.l.s4 1983009808
    %v5510 = vunpack.c.0.s8 %v5509
    %v5511 = vlaneseq
    %v5512 = vshrl.u32 %v5511, 7
    %v5513 = vsub.s32 %v5510, %v5512
    %v5514 = vrot.slane %v5500, %v5513
    %v5515 = vcombine.high %v5507, %v5507
    %v5516 = vcombine.high %v5514, %v5514
    %v5517 = vcombine.high %v5377, %v5377
    %v5519 = vunpack.c.l.s4 1983009808
    %v5520 = vunpack.c.0.s8 %v5519
    %v5521 = vlaneseq
    %v5522 = vshrl.u32 %v5521, 7
    %v5523 = vsub.s32 %v5520, %v5522
    %v5524 = vrot.slane %v5377, %v5523
    %v5526 = vunpack.c.l.s4 1983009808
    %v5527 = vunpack.c.0.s8 %v5526
    %v5528 = vlaneseq
    %v5529 = vshrl.u32 %v5528, 7
    %v5530 = vsub.s32 %v5527, %v5529
    %v5531 = vrot.slane %v5517, %v5530
    %v5532 = vcombine.high %v5524, %v5524
    %v5533 = vcombine.high %v5531, %v5531
    %v5534 = vcombine.high %v5380, %v5380
    %v5536 = vunpack.c.l.s4 1983009808
    %v5537 = vunpack.c.0.s8 %v5536
    %v5538 = vlaneseq
    %v5539 = vshrl.u32 %v5538, 7
    %v5540 = vsub.s32 %v5537, %v5539
    %v5541 = vrot.slane %v5380, %v5540
    %v5543 = vunpack.c.l.s4 1983009808
    %v5544 = vunpack.c.0.s8 %v5543
    %v5545 = vlaneseq
    %v5546 = vshrl.u32 %v5545, 7
    %v5547 = vsub.s32 %v5544, %v5546
    %v5548 = vrot.slane %v5534, %v5547
    %v5549 = vcombine.high %v5541, %v5541
    %v5550 = vcombine.high %v5548, %v5548
    %v5551 = vcombine.high %v5383, %v5383
    %v5553 = vunpack.c.l.s4 1983009808
    %v5554 = vunpack.c.0.s8 %v5553
    %v5555 = vlaneseq
    %v5556 = vshrl.u32 %v5555, 7
    %v5557 = vsub.s32 %v5554, %v5556
    %v5558 = vrot.slane %v5383, %v5557
    %v5560 = vunpack.c.l.s4 1983009808
    %v5561 = vunpack.c.0.s8 %v5560
    %v5562 = vlaneseq
    %v5563 = vshrl.u32 %v5562, 7
    %v5564 = vsub.s32 %v5561, %v5563
    %v5565 = vrot.slane %v5551, %v5564
    %v5566 = vcombine.high %v5558, %v5558
    %v5567 = vcombine.high %v5565, %v5565
    %v5568 = vcombine.high %v5386, %v5386
    %v5570 = vunpack.c.l.s4 1983009808
    %v5571 = vunpack.c.0.s8 %v5570
    %v5572 = vlaneseq
    %v5573 = vshrl.u32 %v5572, 7
    %v5574 = vsub.s32 %v5571, %v5573
    %v5575 = vrot.slane %v5386, %v5574
    %v5577 = vunpack.c.l.s4 1983009808
    %v5578 = vunpack.c.0.s8 %v5577
    %v5579 = vlaneseq
    %v5580 = vshrl.u32 %v5579, 7
    %v5581 = vsub.s32 %v5578, %v5580
    %v5582 = vrot.slane %v5568, %v5581
    %v5583 = vcombine.high %v5575, %v5575
    %v5584 = vcombine.high %v5582, %v5582
    %v5585 = vcombine.high %v5389, %v5389
    %v5587 = vunpack.c.l.s4 1983009808
    %v5588 = vunpack.c.0.s8 %v5587
    %v5589 = vlaneseq
    %v5590 = vshrl.u32 %v5589, 7
    %v5591 = vsub.s32 %v5588, %v5590
    %v5592 = vrot.slane %v5389, %v5591
    %v5594 = vunpack.c.l.s4 1983009808
    %v5595 = vunpack.c.0.s8 %v5594
    %v5596 = vlaneseq
    %v5597 = vshrl.u32 %v5596, 7
    %v5598 = vsub.s32 %v5595, %v5597
    %v5599 = vrot.slane %v5585, %v5598
    %v5600 = vcombine.high %v5592, %v5592
    %v5601 = vcombine.high %v5599, %v5599
    %v5602 = vcombine.high %v5392, %v5392
    %v5604 = vunpack.c.l.s4 1983009808
    %v5605 = vunpack.c.0.s8 %v5604
    %v5606 = vlaneseq
    %v5607 = vshrl.u32 %v5606, 7
    %v5608 = vsub.s32 %v5605, %v5607
    %v5609 = vrot.slane %v5392, %v5608
    %v5611 = vunpack.c.l.s4 1983009808
    %v5612 = vunpack.c.0.s8 %v5611
    %v5613 = vlaneseq
    %v5614 = vshrl.u32 %v5613, 7
    %v5615 = vsub.s32 %v5612, %v5614
    %v5616 = vrot.slane %v5602, %v5615
    %v5617 = vcombine.high %v5609, %v5609
    %v5618 = vcombine.high %v5616, %v5616
    %v5619 = vcombine.high %v5395, %v5395
    %v5621 = vunpack.c.l.s4 1983009808
    %v5622 = vunpack.c.0.s8 %v5621
    %v5623 = vlaneseq
    %v5624 = vshrl.u32 %v5623, 7
    %v5625 = vsub.s32 %v5622, %v5624
    %v5626 = vrot.slane %v5395, %v5625
    %v5628 = vunpack.c.l.s4 1983009808
    %v5629 = vunpack.c.0.s8 %v5628
    %v5630 = vlaneseq
    %v5631 = vshrl.u32 %v5630, 7
    %v5632 = vsub.s32 %v5629, %v5631
    %v5633 = vrot.slane %v5619, %v5632
    %v5634 = vcombine.high %v5626, %v5626
    %v5635 = vcombine.high %v5633, %v5633
    %v5636 = vcombine.high %v5398, %v5398
    %v5638 = vunpack.c.l.s4 1983009808
    %v5639 = vunpack.c.0.s8 %v5638
    %v5640 = vlaneseq
    %v5641 = vshrl.u32 %v5640, 7
    %v5642 = vsub.s32 %v5639, %v5641
    %v5643 = vrot.slane %v5398, %v5642
    %v5645 = vunpack.c.l.s4 1983009808
    %v5646 = vunpack.c.0.s8 %v5645
    %v5647 = vlaneseq
    %v5648 = vshrl.u32 %v5647, 7
    %v5649 = vsub.s32 %v5646, %v5648
    %v5650 = vrot.slane %v5636, %v5649
    %v5651 = vcombine.high %v5643, %v5643
    %v5652 = vcombine.high %v5650, %v5650
    %v5653 = vcombine.high %v5401, %v5401
    %v5655 = vunpack.c.l.s4 1983009808
    %v5656 = vunpack.c.0.s8 %v5655
    %v5657 = vlaneseq
    %v5658 = vshrl.u32 %v5657, 7
    %v5659 = vsub.s32 %v5656, %v5658
    %v5660 = vrot.slane %v5401, %v5659
    %v5662 = vunpack.c.l.s4 1983009808
    %v5663 = vunpack.c.0.s8 %v5662
    %v5664 = vlaneseq
    %v5665 = vshrl.u32 %v5664, 7
    %v5666 = vsub.s32 %v5663, %v5665
    %v5667 = vrot.slane %v5653, %v5666
    %v5668 = vcombine.high %v5660, %v5660
    %v5669 = vcombine.high %v5667, %v5667
    %v5670 = vcombine.high %v5404, %v5404
    %v5672 = vunpack.c.l.s4 1983009808
    %v5673 = vunpack.c.0.s8 %v5672
    %v5674 = vlaneseq
    %v5675 = vshrl.u32 %v5674, 7
    %v5676 = vsub.s32 %v5673, %v5675
    %v5677 = vrot.slane %v5404, %v5676
    %v5679 = vunpack.c.l.s4 1983009808
    %v5680 = vunpack.c.0.s8 %v5679
    %v5681 = vlaneseq
    %v5682 = vshrl.u32 %v5681, 7
    %v5683 = vsub.s32 %v5680, %v5682
    %v5684 = vrot.slane %v5670, %v5683
    %v5685 = vcombine.high %v5677, %v5677
    %v5686 = vcombine.high %v5684, %v5684
    %v5687 = vcombine.high %v5407, %v5407
    %v5689 = vunpack.c.l.s4 1983009808
    %v5690 = vunpack.c.0.s8 %v5689
    %v5691 = vlaneseq
    %v5692 = vshrl.u32 %v5691, 7
    %v5693 = vsub.s32 %v5690, %v5692
    %v5694 = vrot.slane %v5407, %v5693
    %v5696 = vunpack.c.l.s4 1983009808
    %v5697 = vunpack.c.0.s8 %v5696
    %v5698 = vlaneseq
    %v5699 = vshrl.u32 %v5698, 7
    %v5700 = vsub.s32 %v5697, %v5699
    %v5701 = vrot.slane %v5687, %v5700
    %v5702 = vcombine.high %v5694, %v5694
    %v5703 = vcombine.high %v5701, %v5701
    %v5704 = vcombine.high %v5410, %v5410
    %v5706 = vunpack.c.l.s4 1983009808
    %v5707 = vunpack.c.0.s8 %v5706
    %v5708 = vlaneseq
    %v5709 = vshrl.u32 %v5708, 7
    %v5710 = vsub.s32 %v5707, %v5709
    %v5711 = vrot.slane %v5410, %v5710
    %v5713 = vunpack.c.l.s4 1983009808
    %v5714 = vunpack.c.0.s8 %v5713
    %v5715 = vlaneseq
    %v5716 = vshrl.u32 %v5715, 7
    %v5717 = vsub.s32 %v5714, %v5716
    %v5718 = vrot.slane %v5704, %v5717
    %v5719 = vcombine.high %v5711, %v5711
    %v5720 = vcombine.high %v5718, %v5718
    %v5721 = vcombine.high %v5413, %v5413
    %v5723 = vunpack.c.l.s4 1983009808
    %v5724 = vunpack.c.0.s8 %v5723
    %v5725 = vlaneseq
    %v5726 = vshrl.u32 %v5725, 7
    %v5727 = vsub.s32 %v5724, %v5726
    %v5728 = vrot.slane %v5413, %v5727
    %v5730 = vunpack.c.l.s4 1983009808
    %v5731 = vunpack.c.0.s8 %v5730
    %v5732 = vlaneseq
    %v5733 = vshrl.u32 %v5732, 7
    %v5734 = vsub.s32 %v5731, %v5733
    %v5735 = vrot.slane %v5721, %v5734
    %v5736 = vcombine.high %v5728, %v5728
    %v5737 = vcombine.high %v5735, %v5735
    %v5738 = vcombine.high %v5416, %v5416
    %v5740 = vunpack.c.l.s4 1983009808
    %v5741 = vunpack.c.0.s8 %v5740
    %v5742 = vlaneseq
    %v5743 = vshrl.u32 %v5742, 7
    %v5744 = vsub.s32 %v5741, %v5743
    %v5745 = vrot.slane %v5416, %v5744
    %v5747 = vunpack.c.l.s4 1983009808
    %v5748 = vunpack.c.0.s8 %v5747
    %v5749 = vlaneseq
    %v5750 = vshrl.u32 %v5749, 7
    %v5751 = vsub.s32 %v5748, %v5750
    %v5752 = vrot.slane %v5738, %v5751
    %v5753 = vcombine.high %v5745, %v5745
    %v5754 = vcombine.high %v5752, %v5752
    %v5755 = vcombine.high %v5419, %v5419
    %v5757 = vunpack.c.l.s4 1983009808
    %v5758 = vunpack.c.0.s8 %v5757
    %v5759 = vlaneseq
    %v5760 = vshrl.u32 %v5759, 7
    %v5761 = vsub.s32 %v5758, %v5760
    %v5762 = vrot.slane %v5419, %v5761
    %v5764 = vunpack.c.l.s4 1983009808
    %v5765 = vunpack.c.0.s8 %v5764
    %v5766 = vlaneseq
    %v5767 = vshrl.u32 %v5766, 7
    %v5768 = vsub.s32 %v5765, %v5767
    %v5769 = vrot.slane %v5755, %v5768
    %v5770 = vcombine.high %v5762, %v5762
    %v5771 = vcombine.high %v5769, %v5769
    %v5772 = vcombine.high %v5422, %v5422
    %v5774 = vunpack.c.l.s4 1983009808
    %v5775 = vunpack.c.0.s8 %v5774
    %v5776 = vlaneseq
    %v5777 = vshrl.u32 %v5776, 7
    %v5778 = vsub.s32 %v5775, %v5777
    %v5779 = vrot.slane %v5422, %v5778
    %v5781 = vunpack.c.l.s4 1983009808
    %v5782 = vunpack.c.0.s8 %v5781
    %v5783 = vlaneseq
    %v5784 = vshrl.u32 %v5783, 7
    %v5785 = vsub.s32 %v5782, %v5784
    %v5786 = vrot.slane %v5772, %v5785
    %v5787 = vcombine.high %v5779, %v5779
    %v5788 = vcombine.high %v5786, %v5786
    %v5789 = vcombine.high %v5425, %v5425
    %v5791 = vunpack.c.l.s4 1983009808
    %v5792 = vunpack.c.0.s8 %v5791
    %v5793 = vlaneseq
    %v5794 = vshrl.u32 %v5793, 7
    %v5795 = vsub.s32 %v5792, %v5794
    %v5796 = vrot.slane %v5425, %v5795
    %v5798 = vunpack.c.l.s4 1983009808
    %v5799 = vunpack.c.0.s8 %v5798
    %v5800 = vlaneseq
    %v5801 = vshrl.u32 %v5800, 7
    %v5802 = vsub.s32 %v5799, %v5801
    %v5803 = vrot.slane %v5789, %v5802
    %v5804 = vcombine.high %v5796, %v5796
    %v5805 = vcombine.high %v5803, %v5803
    %v5806 = vcombine.high %v5428, %v5428
    %v5808 = vunpack.c.l.s4 1983009808
    %v5809 = vunpack.c.0.s8 %v5808
    %v5810 = vlaneseq
    %v5811 = vshrl.u32 %v5810, 7
    %v5812 = vsub.s32 %v5809, %v5811
    %v5813 = vrot.slane %v5428, %v5812
    %v5815 = vunpack.c.l.s4 1983009808
    %v5816 = vunpack.c.0.s8 %v5815
    %v5817 = vlaneseq
    %v5818 = vshrl.u32 %v5817, 7
    %v5819 = vsub.s32 %v5816, %v5818
    %v5820 = vrot.slane %v5806, %v5819
    %v5821 = vcombine.high %v5813, %v5813
    %v5822 = vcombine.high %v5820, %v5820
    %v5823 = vcombine.high %v5431, %v5431
    %v5825 = vunpack.c.l.s4 1983009808
    %v5826 = vunpack.c.0.s8 %v5825
    %v5827 = vlaneseq
    %v5828 = vshrl.u32 %v5827, 7
    %v5829 = vsub.s32 %v5826, %v5828
    %v5830 = vrot.slane %v5431, %v5829
    %v5832 = vunpack.c.l.s4 1983009808
    %v5833 = vunpack.c.0.s8 %v5832
    %v5834 = vlaneseq
    %v5835 = vshrl.u32 %v5834, 7
    %v5836 = vsub.s32 %v5833, %v5835
    %v5837 = vrot.slane %v5823, %v5836
    %v5838 = vcombine.high %v5830, %v5830
    %v5839 = vcombine.high %v5837, %v5837
    %v5840 = vcombine.high %v5434, %v5434
    %v5842 = vunpack.c.l.s4 1983009808
    %v5843 = vunpack.c.0.s8 %v5842
    %v5844 = vlaneseq
    %v5845 = vshrl.u32 %v5844, 7
    %v5846 = vsub.s32 %v5843, %v5845
    %v5847 = vrot.slane %v5434, %v5846
    %v5849 = vunpack.c.l.s4 1983009808
    %v5850 = vunpack.c.0.s8 %v5849
    %v5851 = vlaneseq
    %v5852 = vshrl.u32 %v5851, 7
    %v5853 = vsub.s32 %v5850, %v5852
    %v5854 = vrot.slane %v5840, %v5853
    %v5855 = vcombine.high %v5847, %v5847
    %v5856 = vcombine.high %v5854, %v5854
    %v5857 = vcombine.high %v5437, %v5437
    %v5859 = vunpack.c.l.s4 1983009808
    %v5860 = vunpack.c.0.s8 %v5859
    %v5861 = vlaneseq
    %v5862 = vshrl.u32 %v5861, 7
    %v5863 = vsub.s32 %v5860, %v5862
    %v5864 = vrot.slane %v5437, %v5863
    %v5866 = vunpack.c.l.s4 1983009808
    %v5867 = vunpack.c.0.s8 %v5866
    %v5868 = vlaneseq
    %v5869 = vshrl.u32 %v5868, 7
    %v5870 = vsub.s32 %v5867, %v5869
    %v5871 = vrot.slane %v5857, %v5870
    %v5872 = vcombine.high %v5864, %v5864
    %v5873 = vcombine.high %v5871, %v5871
    %v5874 = vcombine.high %v5440, %v5440
    %v5876 = vunpack.c.l.s4 1983009808
    %v5877 = vunpack.c.0.s8 %v5876
    %v5878 = vlaneseq
    %v5879 = vshrl.u32 %v5878, 7
    %v5880 = vsub.s32 %v5877, %v5879
    %v5881 = vrot.slane %v5440, %v5880
    %v5883 = vunpack.c.l.s4 1983009808
    %v5884 = vunpack.c.0.s8 %v5883
    %v5885 = vlaneseq
    %v5886 = vshrl.u32 %v5885, 7
    %v5887 = vsub.s32 %v5884, %v5886
    %v5888 = vrot.slane %v5874, %v5887
    %v5889 = vcombine.high %v5881, %v5881
    %v5890 = vcombine.high %v5888, %v5888
    %v5891 = vcombine.high %v5443, %v5443
    %v5893 = vunpack.c.l.s4 1983009808
    %v5894 = vunpack.c.0.s8 %v5893
    %v5895 = vlaneseq
    %v5896 = vshrl.u32 %v5895, 7
    %v5897 = vsub.s32 %v5894, %v5896
    %v5898 = vrot.slane %v5443, %v5897
    %v5900 = vunpack.c.l.s4 1983009808
    %v5901 = vunpack.c.0.s8 %v5900
    %v5902 = vlaneseq
    %v5903 = vshrl.u32 %v5902, 7
    %v5904 = vsub.s32 %v5901, %v5903
    %v5905 = vrot.slane %v5891, %v5904
    %v5906 = vcombine.high %v5898, %v5898
    %v5907 = vcombine.high %v5905, %v5905
    %v5908 = vcombine.high %v5446, %v5446
    %v5910 = vunpack.c.l.s4 1983009808
    %v5911 = vunpack.c.0.s8 %v5910
    %v5912 = vlaneseq
    %v5913 = vshrl.u32 %v5912, 7
    %v5914 = vsub.s32 %v5911, %v5913
    %v5915 = vrot.slane %v5446, %v5914
    %v5917 = vunpack.c.l.s4 1983009808
    %v5918 = vunpack.c.0.s8 %v5917
    %v5919 = vlaneseq
    %v5920 = vshrl.u32 %v5919, 7
    %v5921 = vsub.s32 %v5918, %v5920
    %v5922 = vrot.slane %v5908, %v5921
    %v5923 = vcombine.high %v5915, %v5915
    %v5924 = vcombine.high %v5922, %v5922
    %v5925 = vcombine.high %v5449, %v5449
    %v5927 = vunpack.c.l.s4 1983009808
    %v5928 = vunpack.c.0.s8 %v5927
    %v5929 = vlaneseq
    %v5930 = vshrl.u32 %v5929, 7
    %v5931 = vsub.s32 %v5928, %v5930
    %v5932 = vrot.slane %v5449, %v5931
    %v5934 = vunpack.c.l.s4 1983009808
    %v5935 = vunpack.c.0.s8 %v5934
    %v5936 = vlaneseq
    %v5937 = vshrl.u32 %v5936, 7
    %v5938 = vsub.s32 %v5935, %v5937
    %v5939 = vrot.slane %v5925, %v5938
    %v5940 = vcombine.high %v5932, %v5932
    %v5941 = vcombine.high %v5939, %v5939
    %v5942 = vcombine.high %v5452, %v5452
    %v5944 = vunpack.c.l.s4 1983009808
    %v5945 = vunpack.c.0.s8 %v5944
    %v5946 = vlaneseq
    %v5947 = vshrl.u32 %v5946, 7
    %v5948 = vsub.s32 %v5945, %v5947
    %v5949 = vrot.slane %v5452, %v5948
    %v5951 = vunpack.c.l.s4 1983009808
    %v5952 = vunpack.c.0.s8 %v5951
    %v5953 = vlaneseq
    %v5954 = vshrl.u32 %v5953, 7
    %v5955 = vsub.s32 %v5952, %v5954
    %v5956 = vrot.slane %v5942, %v5955
    %v5957 = vcombine.high %v5949, %v5949
    %v5958 = vcombine.high %v5956, %v5956
    %v5959 = vcombine.high %v5455, %v5455
    %v5961 = vunpack.c.l.s4 1983009808
    %v5962 = vunpack.c.0.s8 %v5961
    %v5963 = vlaneseq
    %v5964 = vshrl.u32 %v5963, 7
    %v5965 = vsub.s32 %v5962, %v5964
    %v5966 = vrot.slane %v5455, %v5965
    %v5968 = vunpack.c.l.s4 1983009808
    %v5969 = vunpack.c.0.s8 %v5968
    %v5970 = vlaneseq
    %v5971 = vshrl.u32 %v5970, 7
    %v5972 = vsub.s32 %v5969, %v5971
    %v5973 = vrot.slane %v5959, %v5972
    %v5974 = vcombine.high %v5966, %v5966
    %v5975 = vcombine.high %v5973, %v5973
    %v5976 = vcombine.high %v5458, %v5458
    %v5978 = vunpack.c.l.s4 1983009808
    %v5979 = vunpack.c.0.s8 %v5978
    %v5980 = vlaneseq
    %v5981 = vshrl.u32 %v5980, 7
    %v5982 = vsub.s32 %v5979, %v5981
    %v5983 = vrot.slane %v5458, %v5982
    %v5985 = vunpack.c.l.s4 1983009808
    %v5986 = vunpack.c.0.s8 %v5985
    %v5987 = vlaneseq
    %v5988 = vshrl.u32 %v5987, 7
    %v5989 = vsub.s32 %v5986, %v5988
    %v5990 = vrot.slane %v5976, %v5989
    %v5991 = vcombine.high %v5983, %v5983
    %v5992 = vcombine.high %v5990, %v5990
    %v5993 = vcombine.high %v5461, %v5461
    %v5995 = vunpack.c.l.s4 1983009808
    %v5996 = vunpack.c.0.s8 %v5995
    %v5997 = vlaneseq
    %v5998 = vshrl.u32 %v5997, 7
    %v5999 = vsub.s32 %v5996, %v5998
    %v6000 = vrot.slane %v5461, %v5999
    %v6002 = vunpack.c.l.s4 1983009808
    %v6003 = vunpack.c.0.s8 %v6002
    %v6004 = vlaneseq
    %v6005 = vshrl.u32 %v6004, 7
    %v6006 = vsub.s32 %v6003, %v6005
    %v6007 = vrot.slane %v5993, %v6006
    %v6008 = vcombine.high %v6000, %v6000
    %v6009 = vcombine.high %v6007, %v6007
    %v6010 = vcombine.high %v5464, %v5464
    %v6012 = vunpack.c.l.s4 1983009808
    %v6013 = vunpack.c.0.s8 %v6012
    %v6014 = vlaneseq
    %v6015 = vshrl.u32 %v6014, 7
    %v6016 = vsub.s32 %v6013, %v6015
    %v6017 = vrot.slane %v5464, %v6016
    %v6019 = vunpack.c.l.s4 1983009808
    %v6020 = vunpack.c.0.s8 %v6019
    %v6021 = vlaneseq
    %v6022 = vshrl.u32 %v6021, 7
    %v6023 = vsub.s32 %v6020, %v6022
    %v6024 = vrot.slane %v6010, %v6023
    %v6025 = vcombine.high %v6017, %v6017
    %v6026 = vcombine.high %v6024, %v6024
    %v6027 = vcombine.high %v5467, %v5467
    %v6029 = vunpack.c.l.s4 1983009808
    %v6030 = vunpack.c.0.s8 %v6029
    %v6031 = vlaneseq
    %v6032 = vshrl.u32 %v6031, 7
    %v6033 = vsub.s32 %v6030, %v6032
    %v6034 = vrot.slane %v5467, %v6033
    %v6036 = vunpack.c.l.s4 1983009808
    %v6037 = vunpack.c.0.s8 %v6036
    %v6038 = vlaneseq
    %v6039 = vshrl.u32 %v6038, 7
    %v6040 = vsub.s32 %v6037, %v6039
    %v6041 = vrot.slane %v6027, %v6040
    %v6042 = vcombine.high %v6034, %v6034
    %v6043 = vcombine.high %v6041, %v6041
    %vm6172 = vcmask 517120
    %v6173 = vsel %vm6172, %v5507, -inf
    %v6174 = vrot.slane %v6173, 4
    %v6175 = vmax.f32 %v6173, %v6174
    %v6176 = vrot.slane %v6175, 2
    %v6177 = vmax.f32 %v6175, %v6176
    %v6178 = vrot.slane %v6177, 1
    %v6179 = vmax.f32 %v6177, %v6178
    %v6180 = vsel %vm6172, %v5515, -inf
    %v6181 = vrot.slane %v6180, 4
    %v6182 = vmax.f32 %v6180, %v6181
    %v6183 = vrot.slane %v6182, 2
    %v6184 = vmax.f32 %v6182, %v6183
    %v6185 = vrot.slane %v6184, 1
    %v6186 = vmax.f32 %v6184, %v6185
    %v6187 = vsel %vm6172, %v5514, -inf
    %v6188 = vrot.slane %v6187, 4
    %v6189 = vmax.f32 %v6187, %v6188
    %v6190 = vrot.slane %v6189, 2
    %v6191 = vmax.f32 %v6189, %v6190
    %v6192 = vrot.slane %v6191, 1
    %v6193 = vmax.f32 %v6191, %v6192
    %v6194 = vsel %vm6172, %v5516, -inf
    %v6195 = vrot.slane %v6194, 4
    %v6196 = vmax.f32 %v6194, %v6195
    %v6197 = vrot.slane %v6196, 2
    %v6198 = vmax.f32 %v6196, %v6197
    %v6199 = vrot.slane %v6198, 1
    %v6200 = vmax.f32 %v6198, %v6199
    %v6201 = vsel %vm6172, %v5524, -inf
    %v6202 = vrot.slane %v6201, 4
    %v6203 = vmax.f32 %v6201, %v6202
    %v6204 = vrot.slane %v6203, 2
    %v6205 = vmax.f32 %v6203, %v6204
    %v6206 = vrot.slane %v6205, 1
    %v6207 = vmax.f32 %v6205, %v6206
    %v6208 = vsel %vm6172, %v5532, -inf
    %v6209 = vrot.slane %v6208, 4
    %v6210 = vmax.f32 %v6208, %v6209
    %v6211 = vrot.slane %v6210, 2
    %v6212 = vmax.f32 %v6210, %v6211
    %v6213 = vrot.slane %v6212, 1
    %v6214 = vmax.f32 %v6212, %v6213
    %v6215 = vsel %vm6172, %v5531, -inf
    %v6216 = vrot.slane %v6215, 4
    %v6217 = vmax.f32 %v6215, %v6216
    %v6218 = vrot.slane %v6217, 2
    %v6219 = vmax.f32 %v6217, %v6218
    %v6220 = vrot.slane %v6219, 1
    %v6221 = vmax.f32 %v6219, %v6220
    %v6222 = vsel %vm6172, %v5533, -inf
    %v6223 = vrot.slane %v6222, 4
    %v6224 = vmax.f32 %v6222, %v6223
    %v6225 = vrot.slane %v6224, 2
    %v6226 = vmax.f32 %v6224, %v6225
    %v6227 = vrot.slane %v6226, 1
    %v6228 = vmax.f32 %v6226, %v6227
    %v6229 = vsel %vm6172, %v5541, -inf
    %v6230 = vrot.slane %v6229, 4
    %v6231 = vmax.f32 %v6229, %v6230
    %v6232 = vrot.slane %v6231, 2
    %v6233 = vmax.f32 %v6231, %v6232
    %v6234 = vrot.slane %v6233, 1
    %v6235 = vmax.f32 %v6233, %v6234
    %v6236 = vsel %vm6172, %v5549, -inf
    %v6237 = vrot.slane %v6236, 4
    %v6238 = vmax.f32 %v6236, %v6237
    %v6239 = vrot.slane %v6238, 2
    %v6240 = vmax.f32 %v6238, %v6239
    %v6241 = vrot.slane %v6240, 1
    %v6242 = vmax.f32 %v6240, %v6241
    %v6243 = vsel %vm6172, %v5548, -inf
    %v6244 = vrot.slane %v6243, 4
    %v6245 = vmax.f32 %v6243, %v6244
    %v6246 = vrot.slane %v6245, 2
    %v6247 = vmax.f32 %v6245, %v6246
    %v6248 = vrot.slane %v6247, 1
    %v6249 = vmax.f32 %v6247, %v6248
    %v6250 = vsel %vm6172, %v5550, -inf
    %v6251 = vrot.slane %v6250, 4
    %v6252 = vmax.f32 %v6250, %v6251
    %v6253 = vrot.slane %v6252, 2
    %v6254 = vmax.f32 %v6252, %v6253
    %v6255 = vrot.slane %v6254, 1
    %v6256 = vmax.f32 %v6254, %v6255
    %v6257 = vsel %vm6172, %v5558, -inf
    %v6258 = vrot.slane %v6257, 4
    %v6259 = vmax.f32 %v6257, %v6258
    %v6260 = vrot.slane %v6259, 2
    %v6261 = vmax.f32 %v6259, %v6260
    %v6262 = vrot.slane %v6261, 1
    %v6263 = vmax.f32 %v6261, %v6262
    %v6264 = vsel %vm6172, %v5566, -inf
    %v6265 = vrot.slane %v6264, 4
    %v6266 = vmax.f32 %v6264, %v6265
    %v6267 = vrot.slane %v6266, 2
    %v6268 = vmax.f32 %v6266, %v6267
    %v6269 = vrot.slane %v6268, 1
    %v6270 = vmax.f32 %v6268, %v6269
    %v6271 = vsel %vm6172, %v5565, -inf
    %v6272 = vrot.slane %v6271, 4
    %v6273 = vmax.f32 %v6271, %v6272
    %v6274 = vrot.slane %v6273, 2
    %v6275 = vmax.f32 %v6273, %v6274
    %v6276 = vrot.slane %v6275, 1
    %v6277 = vmax.f32 %v6275, %v6276
    %v6278 = vsel %vm6172, %v5567, -inf
    %v6279 = vrot.slane %v6278, 4
    %v6280 = vmax.f32 %v6278, %v6279
    %v6281 = vrot.slane %v6280, 2
    %v6282 = vmax.f32 %v6280, %v6281
    %v6283 = vrot.slane %v6282, 1
    %v6284 = vmax.f32 %v6282, %v6283
    %v6285 = vsel %vm6172, %v5575, -inf
    %v6286 = vrot.slane %v6285, 4
    %v6287 = vmax.f32 %v6285, %v6286
    %v6288 = vrot.slane %v6287, 2
    %v6289 = vmax.f32 %v6287, %v6288
    %v6290 = vrot.slane %v6289, 1
    %v6291 = vmax.f32 %v6289, %v6290
    %v6292 = vsel %vm6172, %v5583, -inf
    %v6293 = vrot.slane %v6292, 4
    %v6294 = vmax.f32 %v6292, %v6293
    %v6295 = vrot.slane %v6294, 2
    %v6296 = vmax.f32 %v6294, %v6295
    %v6297 = vrot.slane %v6296, 1
    %v6298 = vmax.f32 %v6296, %v6297
    %v6299 = vsel %vm6172, %v5582, -inf
    %v6300 = vrot.slane %v6299, 4
    %v6301 = vmax.f32 %v6299, %v6300
    %v6302 = vrot.slane %v6301, 2
    %v6303 = vmax.f32 %v6301, %v6302
    %v6304 = vrot.slane %v6303, 1
    %v6305 = vmax.f32 %v6303, %v6304
    %v6306 = vsel %vm6172, %v5584, -inf
    %v6307 = vrot.slane %v6306, 4
    %v6308 = vmax.f32 %v6306, %v6307
    %v6309 = vrot.slane %v6308, 2
    %v6310 = vmax.f32 %v6308, %v6309
    %v6311 = vrot.slane %v6310, 1
    %v6312 = vmax.f32 %v6310, %v6311
    %v6313 = vsel %vm6172, %v5592, -inf
    %v6314 = vrot.slane %v6313, 4
    %v6315 = vmax.f32 %v6313, %v6314
    %v6316 = vrot.slane %v6315, 2
    %v6317 = vmax.f32 %v6315, %v6316
    %v6318 = vrot.slane %v6317, 1
    %v6319 = vmax.f32 %v6317, %v6318
    %v6320 = vsel %vm6172, %v5600, -inf
    %v6321 = vrot.slane %v6320, 4
    %v6322 = vmax.f32 %v6320, %v6321
    %v6323 = vrot.slane %v6322, 2
    %v6324 = vmax.f32 %v6322, %v6323
    %v6325 = vrot.slane %v6324, 1
    %v6326 = vmax.f32 %v6324, %v6325
    %v6327 = vsel %vm6172, %v5599, -inf
    %v6328 = vrot.slane %v6327, 4
    %v6329 = vmax.f32 %v6327, %v6328
    %v6330 = vrot.slane %v6329, 2
    %v6331 = vmax.f32 %v6329, %v6330
    %v6332 = vrot.slane %v6331, 1
    %v6333 = vmax.f32 %v6331, %v6332
    %v6334 = vsel %vm6172, %v5601, -inf
    %v6335 = vrot.slane %v6334, 4
    %v6336 = vmax.f32 %v6334, %v6335
    %v6337 = vrot.slane %v6336, 2
    %v6338 = vmax.f32 %v6336, %v6337
    %v6339 = vrot.slane %v6338, 1
    %v6340 = vmax.f32 %v6338, %v6339
    %v6341 = vsel %vm6172, %v5609, -inf
    %v6342 = vrot.slane %v6341, 4
    %v6343 = vmax.f32 %v6341, %v6342
    %v6344 = vrot.slane %v6343, 2
    %v6345 = vmax.f32 %v6343, %v6344
    %v6346 = vrot.slane %v6345, 1
    %v6347 = vmax.f32 %v6345, %v6346
    %v6348 = vsel %vm6172, %v5617, -inf
    %v6349 = vrot.slane %v6348, 4
    %v6350 = vmax.f32 %v6348, %v6349
    %v6351 = vrot.slane %v6350, 2
    %v6352 = vmax.f32 %v6350, %v6351
    %v6353 = vrot.slane %v6352, 1
    %v6354 = vmax.f32 %v6352, %v6353
    %v6355 = vsel %vm6172, %v5616, -inf
    %v6356 = vrot.slane %v6355, 4
    %v6357 = vmax.f32 %v6355, %v6356
    %v6358 = vrot.slane %v6357, 2
    %v6359 = vmax.f32 %v6357, %v6358
    %v6360 = vrot.slane %v6359, 1
    %v6361 = vmax.f32 %v6359, %v6360
    %v6362 = vsel %vm6172, %v5618, -inf
    %v6363 = vrot.slane %v6362, 4
    %v6364 = vmax.f32 %v6362, %v6363
    %v6365 = vrot.slane %v6364, 2
    %v6366 = vmax.f32 %v6364, %v6365
    %v6367 = vrot.slane %v6366, 1
    %v6368 = vmax.f32 %v6366, %v6367
    %v6369 = vsel %vm6172, %v5626, -inf
    %v6370 = vrot.slane %v6369, 4
    %v6371 = vmax.f32 %v6369, %v6370
    %v6372 = vrot.slane %v6371, 2
    %v6373 = vmax.f32 %v6371, %v6372
    %v6374 = vrot.slane %v6373, 1
    %v6375 = vmax.f32 %v6373, %v6374
    %v6376 = vsel %vm6172, %v5634, -inf
    %v6377 = vrot.slane %v6376, 4
    %v6378 = vmax.f32 %v6376, %v6377
    %v6379 = vrot.slane %v6378, 2
    %v6380 = vmax.f32 %v6378, %v6379
    %v6381 = vrot.slane %v6380, 1
    %v6382 = vmax.f32 %v6380, %v6381
    %v6383 = vsel %vm6172, %v5633, -inf
    %v6384 = vrot.slane %v6383, 4
    %v6385 = vmax.f32 %v6383, %v6384
    %v6386 = vrot.slane %v6385, 2
    %v6387 = vmax.f32 %v6385, %v6386
    %v6388 = vrot.slane %v6387, 1
    %v6389 = vmax.f32 %v6387, %v6388
    %v6390 = vsel %vm6172, %v5635, -inf
    %v6391 = vrot.slane %v6390, 4
    %v6392 = vmax.f32 %v6390, %v6391
    %v6393 = vrot.slane %v6392, 2
    %v6394 = vmax.f32 %v6392, %v6393
    %v6395 = vrot.slane %v6394, 1
    %v6396 = vmax.f32 %v6394, %v6395
    %v6397 = vsel %vm6172, %v5643, -inf
    %v6398 = vrot.slane %v6397, 4
    %v6399 = vmax.f32 %v6397, %v6398
    %v6400 = vrot.slane %v6399, 2
    %v6401 = vmax.f32 %v6399, %v6400
    %v6402 = vrot.slane %v6401, 1
    %v6403 = vmax.f32 %v6401, %v6402
    %v6404 = vsel %vm6172, %v5651, -inf
    %v6405 = vrot.slane %v6404, 4
    %v6406 = vmax.f32 %v6404, %v6405
    %v6407 = vrot.slane %v6406, 2
    %v6408 = vmax.f32 %v6406, %v6407
    %v6409 = vrot.slane %v6408, 1
    %v6410 = vmax.f32 %v6408, %v6409
    %v6411 = vsel %vm6172, %v5650, -inf
    %v6412 = vrot.slane %v6411, 4
    %v6413 = vmax.f32 %v6411, %v6412
    %v6414 = vrot.slane %v6413, 2
    %v6415 = vmax.f32 %v6413, %v6414
    %v6416 = vrot.slane %v6415, 1
    %v6417 = vmax.f32 %v6415, %v6416
    %v6418 = vsel %vm6172, %v5652, -inf
    %v6419 = vrot.slane %v6418, 4
    %v6420 = vmax.f32 %v6418, %v6419
    %v6421 = vrot.slane %v6420, 2
    %v6422 = vmax.f32 %v6420, %v6421
    %v6423 = vrot.slane %v6422, 1
    %v6424 = vmax.f32 %v6422, %v6423
    %v6425 = vsel %vm6172, %v5660, -inf
    %v6426 = vrot.slane %v6425, 4
    %v6427 = vmax.f32 %v6425, %v6426
    %v6428 = vrot.slane %v6427, 2
    %v6429 = vmax.f32 %v6427, %v6428
    %v6430 = vrot.slane %v6429, 1
    %v6431 = vmax.f32 %v6429, %v6430
    %v6432 = vsel %vm6172, %v5668, -inf
    %v6433 = vrot.slane %v6432, 4
    %v6434 = vmax.f32 %v6432, %v6433
    %v6435 = vrot.slane %v6434, 2
    %v6436 = vmax.f32 %v6434, %v6435
    %v6437 = vrot.slane %v6436, 1
    %v6438 = vmax.f32 %v6436, %v6437
    %v6439 = vsel %vm6172, %v5667, -inf
    %v6440 = vrot.slane %v6439, 4
    %v6441 = vmax.f32 %v6439, %v6440
    %v6442 = vrot.slane %v6441, 2
    %v6443 = vmax.f32 %v6441, %v6442
    %v6444 = vrot.slane %v6443, 1
    %v6445 = vmax.f32 %v6443, %v6444
    %v6446 = vsel %vm6172, %v5669, -inf
    %v6447 = vrot.slane %v6446, 4
    %v6448 = vmax.f32 %v6446, %v6447
    %v6449 = vrot.slane %v6448, 2
    %v6450 = vmax.f32 %v6448, %v6449
    %v6451 = vrot.slane %v6450, 1
    %v6452 = vmax.f32 %v6450, %v6451
    %v6453 = vsel %vm6172, %v5677, -inf
    %v6454 = vrot.slane %v6453, 4
    %v6455 = vmax.f32 %v6453, %v6454
    %v6456 = vrot.slane %v6455, 2
    %v6457 = vmax.f32 %v6455, %v6456
    %v6458 = vrot.slane %v6457, 1
    %v6459 = vmax.f32 %v6457, %v6458
    %v6460 = vsel %vm6172, %v5685, -inf
    %v6461 = vrot.slane %v6460, 4
    %v6462 = vmax.f32 %v6460, %v6461
    %v6463 = vrot.slane %v6462, 2
    %v6464 = vmax.f32 %v6462, %v6463
    %v6465 = vrot.slane %v6464, 1
    %v6466 = vmax.f32 %v6464, %v6465
    %v6467 = vsel %vm6172, %v5684, -inf
    %v6468 = vrot.slane %v6467, 4
    %v6469 = vmax.f32 %v6467, %v6468
    %v6470 = vrot.slane %v6469, 2
    %v6471 = vmax.f32 %v6469, %v6470
    %v6472 = vrot.slane %v6471, 1
    %v6473 = vmax.f32 %v6471, %v6472
    %v6474 = vsel %vm6172, %v5686, -inf
    %v6475 = vrot.slane %v6474, 4
    %v6476 = vmax.f32 %v6474, %v6475
    %v6477 = vrot.slane %v6476, 2
    %v6478 = vmax.f32 %v6476, %v6477
    %v6479 = vrot.slane %v6478, 1
    %v6480 = vmax.f32 %v6478, %v6479
    %v6481 = vsel %vm6172, %v5694, -inf
    %v6482 = vrot.slane %v6481, 4
    %v6483 = vmax.f32 %v6481, %v6482
    %v6484 = vrot.slane %v6483, 2
    %v6485 = vmax.f32 %v6483, %v6484
    %v6486 = vrot.slane %v6485, 1
    %v6487 = vmax.f32 %v6485, %v6486
    %v6488 = vsel %vm6172, %v5702, -inf
    %v6489 = vrot.slane %v6488, 4
    %v6490 = vmax.f32 %v6488, %v6489
    %v6491 = vrot.slane %v6490, 2
    %v6492 = vmax.f32 %v6490, %v6491
    %v6493 = vrot.slane %v6492, 1
    %v6494 = vmax.f32 %v6492, %v6493
    %v6495 = vsel %vm6172, %v5701, -inf
    %v6496 = vrot.slane %v6495, 4
    %v6497 = vmax.f32 %v6495, %v6496
    %v6498 = vrot.slane %v6497, 2
    %v6499 = vmax.f32 %v6497, %v6498
    %v6500 = vrot.slane %v6499, 1
    %v6501 = vmax.f32 %v6499, %v6500
    %v6502 = vsel %vm6172, %v5703, -inf
    %v6503 = vrot.slane %v6502, 4
    %v6504 = vmax.f32 %v6502, %v6503
    %v6505 = vrot.slane %v6504, 2
    %v6506 = vmax.f32 %v6504, %v6505
    %v6507 = vrot.slane %v6506, 1
    %v6508 = vmax.f32 %v6506, %v6507
    %v6509 = vsel %vm6172, %v5711, -inf
    %v6510 = vrot.slane %v6509, 4
    %v6511 = vmax.f32 %v6509, %v6510
    %v6512 = vrot.slane %v6511, 2
    %v6513 = vmax.f32 %v6511, %v6512
    %v6514 = vrot.slane %v6513, 1
    %v6515 = vmax.f32 %v6513, %v6514
    %v6516 = vsel %vm6172, %v5719, -inf
    %v6517 = vrot.slane %v6516, 4
    %v6518 = vmax.f32 %v6516, %v6517
    %v6519 = vrot.slane %v6518, 2
    %v6520 = vmax.f32 %v6518, %v6519
    %v6521 = vrot.slane %v6520, 1
    %v6522 = vmax.f32 %v6520, %v6521
    %v6523 = vsel %vm6172, %v5718, -inf
    %v6524 = vrot.slane %v6523, 4
    %v6525 = vmax.f32 %v6523, %v6524
    %v6526 = vrot.slane %v6525, 2
    %v6527 = vmax.f32 %v6525, %v6526
    %v6528 = vrot.slane %v6527, 1
    %v6529 = vmax.f32 %v6527, %v6528
    %v6530 = vsel %vm6172, %v5720, -inf
    %v6531 = vrot.slane %v6530, 4
    %v6532 = vmax.f32 %v6530, %v6531
    %v6533 = vrot.slane %v6532, 2
    %v6534 = vmax.f32 %v6532, %v6533
    %v6535 = vrot.slane %v6534, 1
    %v6536 = vmax.f32 %v6534, %v6535
    %v6537 = vsel %vm6172, %v5728, -inf
    %v6538 = vrot.slane %v6537, 4
    %v6539 = vmax.f32 %v6537, %v6538
    %v6540 = vrot.slane %v6539, 2
    %v6541 = vmax.f32 %v6539, %v6540
    %v6542 = vrot.slane %v6541, 1
    %v6543 = vmax.f32 %v6541, %v6542
    %v6544 = vsel %vm6172, %v5736, -inf
    %v6545 = vrot.slane %v6544, 4
    %v6546 = vmax.f32 %v6544, %v6545
    %v6547 = vrot.slane %v6546, 2
    %v6548 = vmax.f32 %v6546, %v6547
    %v6549 = vrot.slane %v6548, 1
    %v6550 = vmax.f32 %v6548, %v6549
    %v6551 = vsel %vm6172, %v5735, -inf
    %v6552 = vrot.slane %v6551, 4
    %v6553 = vmax.f32 %v6551, %v6552
    %v6554 = vrot.slane %v6553, 2
    %v6555 = vmax.f32 %v6553, %v6554
    %v6556 = vrot.slane %v6555, 1
    %v6557 = vmax.f32 %v6555, %v6556
    %v6558 = vsel %vm6172, %v5737, -inf
    %v6559 = vrot.slane %v6558, 4
    %v6560 = vmax.f32 %v6558, %v6559
    %v6561 = vrot.slane %v6560, 2
    %v6562 = vmax.f32 %v6560, %v6561
    %v6563 = vrot.slane %v6562, 1
    %v6564 = vmax.f32 %v6562, %v6563
    %v6565 = vsel %vm6172, %v5745, -inf
    %v6566 = vrot.slane %v6565, 4
    %v6567 = vmax.f32 %v6565, %v6566
    %v6568 = vrot.slane %v6567, 2
    %v6569 = vmax.f32 %v6567, %v6568
    %v6570 = vrot.slane %v6569, 1
    %v6571 = vmax.f32 %v6569, %v6570
    %v6572 = vsel %vm6172, %v5753, -inf
    %v6573 = vrot.slane %v6572, 4
    %v6574 = vmax.f32 %v6572, %v6573
    %v6575 = vrot.slane %v6574, 2
    %v6576 = vmax.f32 %v6574, %v6575
    %v6577 = vrot.slane %v6576, 1
    %v6578 = vmax.f32 %v6576, %v6577
    %v6579 = vsel %vm6172, %v5752, -inf
    %v6580 = vrot.slane %v6579, 4
    %v6581 = vmax.f32 %v6579, %v6580
    %v6582 = vrot.slane %v6581, 2
    %v6583 = vmax.f32 %v6581, %v6582
    %v6584 = vrot.slane %v6583, 1
    %v6585 = vmax.f32 %v6583, %v6584
    %v6586 = vsel %vm6172, %v5754, -inf
    %v6587 = vrot.slane %v6586, 4
    %v6588 = vmax.f32 %v6586, %v6587
    %v6589 = vrot.slane %v6588, 2
    %v6590 = vmax.f32 %v6588, %v6589
    %v6591 = vrot.slane %v6590, 1
    %v6592 = vmax.f32 %v6590, %v6591
    %v6593 = vsel %vm6172, %v5762, -inf
    %v6594 = vrot.slane %v6593, 4
    %v6595 = vmax.f32 %v6593, %v6594
    %v6596 = vrot.slane %v6595, 2
    %v6597 = vmax.f32 %v6595, %v6596
    %v6598 = vrot.slane %v6597, 1
    %v6599 = vmax.f32 %v6597, %v6598
    %v6600 = vsel %vm6172, %v5770, -inf
    %v6601 = vrot.slane %v6600, 4
    %v6602 = vmax.f32 %v6600, %v6601
    %v6603 = vrot.slane %v6602, 2
    %v6604 = vmax.f32 %v6602, %v6603
    %v6605 = vrot.slane %v6604, 1
    %v6606 = vmax.f32 %v6604, %v6605
    %v6607 = vsel %vm6172, %v5769, -inf
    %v6608 = vrot.slane %v6607, 4
    %v6609 = vmax.f32 %v6607, %v6608
    %v6610 = vrot.slane %v6609, 2
    %v6611 = vmax.f32 %v6609, %v6610
    %v6612 = vrot.slane %v6611, 1
    %v6613 = vmax.f32 %v6611, %v6612
    %v6614 = vsel %vm6172, %v5771, -inf
    %v6615 = vrot.slane %v6614, 4
    %v6616 = vmax.f32 %v6614, %v6615
    %v6617 = vrot.slane %v6616, 2
    %v6618 = vmax.f32 %v6616, %v6617
    %v6619 = vrot.slane %v6618, 1
    %v6620 = vmax.f32 %v6618, %v6619
    %v6621 = vsel %vm6172, %v5779, -inf
    %v6622 = vrot.slane %v6621, 4
    %v6623 = vmax.f32 %v6621, %v6622
    %v6624 = vrot.slane %v6623, 2
    %v6625 = vmax.f32 %v6623, %v6624
    %v6626 = vrot.slane %v6625, 1
    %v6627 = vmax.f32 %v6625, %v6626
    %v6628 = vsel %vm6172, %v5787, -inf
    %v6629 = vrot.slane %v6628, 4
    %v6630 = vmax.f32 %v6628, %v6629
    %v6631 = vrot.slane %v6630, 2
    %v6632 = vmax.f32 %v6630, %v6631
    %v6633 = vrot.slane %v6632, 1
    %v6634 = vmax.f32 %v6632, %v6633
    %v6635 = vsel %vm6172, %v5786, -inf
    %v6636 = vrot.slane %v6635, 4
    %v6637 = vmax.f32 %v6635, %v6636
    %v6638 = vrot.slane %v6637, 2
    %v6639 = vmax.f32 %v6637, %v6638
    %v6640 = vrot.slane %v6639, 1
    %v6641 = vmax.f32 %v6639, %v6640
    %v6642 = vsel %vm6172, %v5788, -inf
    %v6643 = vrot.slane %v6642, 4
    %v6644 = vmax.f32 %v6642, %v6643
    %v6645 = vrot.slane %v6644, 2
    %v6646 = vmax.f32 %v6644, %v6645
    %v6647 = vrot.slane %v6646, 1
    %v6648 = vmax.f32 %v6646, %v6647
    %v6649 = vsel %vm6172, %v5796, -inf
    %v6650 = vrot.slane %v6649, 4
    %v6651 = vmax.f32 %v6649, %v6650
    %v6652 = vrot.slane %v6651, 2
    %v6653 = vmax.f32 %v6651, %v6652
    %v6654 = vrot.slane %v6653, 1
    %v6655 = vmax.f32 %v6653, %v6654
    %v6656 = vsel %vm6172, %v5804, -inf
    %v6657 = vrot.slane %v6656, 4
    %v6658 = vmax.f32 %v6656, %v6657
    %v6659 = vrot.slane %v6658, 2
    %v6660 = vmax.f32 %v6658, %v6659
    %v6661 = vrot.slane %v6660, 1
    %v6662 = vmax.f32 %v6660, %v6661
    %v6663 = vsel %vm6172, %v5803, -inf
    %v6664 = vrot.slane %v6663, 4
    %v6665 = vmax.f32 %v6663, %v6664
    %v6666 = vrot.slane %v6665, 2
    %v6667 = vmax.f32 %v6665, %v6666
    %v6668 = vrot.slane %v6667, 1
    %v6669 = vmax.f32 %v6667, %v6668
    %v6670 = vsel %vm6172, %v5805, -inf
    %v6671 = vrot.slane %v6670, 4
    %v6672 = vmax.f32 %v6670, %v6671
    %v6673 = vrot.slane %v6672, 2
    %v6674 = vmax.f32 %v6672, %v6673
    %v6675 = vrot.slane %v6674, 1
    %v6676 = vmax.f32 %v6674, %v6675
    %v6677 = vsel %vm6172, %v5813, -inf
    %v6678 = vrot.slane %v6677, 4
    %v6679 = vmax.f32 %v6677, %v6678
    %v6680 = vrot.slane %v6679, 2
    %v6681 = vmax.f32 %v6679, %v6680
    %v6682 = vrot.slane %v6681, 1
    %v6683 = vmax.f32 %v6681, %v6682
    %v6684 = vsel %vm6172, %v5821, -inf
    %v6685 = vrot.slane %v6684, 4
    %v6686 = vmax.f32 %v6684, %v6685
    %v6687 = vrot.slane %v6686, 2
    %v6688 = vmax.f32 %v6686, %v6687
    %v6689 = vrot.slane %v6688, 1
    %v6690 = vmax.f32 %v6688, %v6689
    %v6691 = vsel %vm6172, %v5820, -inf
    %v6692 = vrot.slane %v6691, 4
    %v6693 = vmax.f32 %v6691, %v6692
    %v6694 = vrot.slane %v6693, 2
    %v6695 = vmax.f32 %v6693, %v6694
    %v6696 = vrot.slane %v6695, 1
    %v6697 = vmax.f32 %v6695, %v6696
    %v6698 = vsel %vm6172, %v5822, -inf
    %v6699 = vrot.slane %v6698, 4
    %v6700 = vmax.f32 %v6698, %v6699
    %v6701 = vrot.slane %v6700, 2
    %v6702 = vmax.f32 %v6700, %v6701
    %v6703 = vrot.slane %v6702, 1
    %v6704 = vmax.f32 %v6702, %v6703
    %v6705 = vsel %vm6172, %v5830, -inf
    %v6706 = vrot.slane %v6705, 4
    %v6707 = vmax.f32 %v6705, %v6706
    %v6708 = vrot.slane %v6707, 2
    %v6709 = vmax.f32 %v6707, %v6708
    %v6710 = vrot.slane %v6709, 1
    %v6711 = vmax.f32 %v6709, %v6710
    %v6712 = vsel %vm6172, %v5838, -inf
    %v6713 = vrot.slane %v6712, 4
    %v6714 = vmax.f32 %v6712, %v6713
    %v6715 = vrot.slane %v6714, 2
    %v6716 = vmax.f32 %v6714, %v6715
    %v6717 = vrot.slane %v6716, 1
    %v6718 = vmax.f32 %v6716, %v6717
    %v6719 = vsel %vm6172, %v5837, -inf
    %v6720 = vrot.slane %v6719, 4
    %v6721 = vmax.f32 %v6719, %v6720
    %v6722 = vrot.slane %v6721, 2
    %v6723 = vmax.f32 %v6721, %v6722
    %v6724 = vrot.slane %v6723, 1
    %v6725 = vmax.f32 %v6723, %v6724
    %v6726 = vsel %vm6172, %v5839, -inf
    %v6727 = vrot.slane %v6726, 4
    %v6728 = vmax.f32 %v6726, %v6727
    %v6729 = vrot.slane %v6728, 2
    %v6730 = vmax.f32 %v6728, %v6729
    %v6731 = vrot.slane %v6730, 1
    %v6732 = vmax.f32 %v6730, %v6731
    %v6733 = vsel %vm6172, %v5847, -inf
    %v6734 = vrot.slane %v6733, 4
    %v6735 = vmax.f32 %v6733, %v6734
    %v6736 = vrot.slane %v6735, 2
    %v6737 = vmax.f32 %v6735, %v6736
    %v6738 = vrot.slane %v6737, 1
    %v6739 = vmax.f32 %v6737, %v6738
    %v6740 = vsel %vm6172, %v5855, -inf
    %v6741 = vrot.slane %v6740, 4
    %v6742 = vmax.f32 %v6740, %v6741
    %v6743 = vrot.slane %v6742, 2
    %v6744 = vmax.f32 %v6742, %v6743
    %v6745 = vrot.slane %v6744, 1
    %v6746 = vmax.f32 %v6744, %v6745
    %v6747 = vsel %vm6172, %v5854, -inf
    %v6748 = vrot.slane %v6747, 4
    %v6749 = vmax.f32 %v6747, %v6748
    %v6750 = vrot.slane %v6749, 2
    %v6751 = vmax.f32 %v6749, %v6750
    %v6752 = vrot.slane %v6751, 1
    %v6753 = vmax.f32 %v6751, %v6752
    %v6754 = vsel %vm6172, %v5856, -inf
    %v6755 = vrot.slane %v6754, 4
    %v6756 = vmax.f32 %v6754, %v6755
    %v6757 = vrot.slane %v6756, 2
    %v6758 = vmax.f32 %v6756, %v6757
    %v6759 = vrot.slane %v6758, 1
    %v6760 = vmax.f32 %v6758, %v6759
    %v6761 = vsel %vm6172, %v5864, -inf
    %v6762 = vrot.slane %v6761, 4
    %v6763 = vmax.f32 %v6761, %v6762
    %v6764 = vrot.slane %v6763, 2
    %v6765 = vmax.f32 %v6763, %v6764
    %v6766 = vrot.slane %v6765, 1
    %v6767 = vmax.f32 %v6765, %v6766
    %v6768 = vsel %vm6172, %v5872, -inf
    %v6769 = vrot.slane %v6768, 4
    %v6770 = vmax.f32 %v6768, %v6769
    %v6771 = vrot.slane %v6770, 2
    %v6772 = vmax.f32 %v6770, %v6771
    %v6773 = vrot.slane %v6772, 1
    %v6774 = vmax.f32 %v6772, %v6773
    %v6775 = vsel %vm6172, %v5871, -inf
    %v6776 = vrot.slane %v6775, 4
    %v6777 = vmax.f32 %v6775, %v6776
    %v6778 = vrot.slane %v6777, 2
    %v6779 = vmax.f32 %v6777, %v6778
    %v6780 = vrot.slane %v6779, 1
    %v6781 = vmax.f32 %v6779, %v6780
    %v6782 = vsel %vm6172, %v5873, -inf
    %v6783 = vrot.slane %v6782, 4
    %v6784 = vmax.f32 %v6782, %v6783
    %v6785 = vrot.slane %v6784, 2
    %v6786 = vmax.f32 %v6784, %v6785
    %v6787 = vrot.slane %v6786, 1
    %v6788 = vmax.f32 %v6786, %v6787
    %v6789 = vsel %vm6172, %v5881, -inf
    %v6790 = vrot.slane %v6789, 4
    %v6791 = vmax.f32 %v6789, %v6790
    %v6792 = vrot.slane %v6791, 2
    %v6793 = vmax.f32 %v6791, %v6792
    %v6794 = vrot.slane %v6793, 1
    %v6795 = vmax.f32 %v6793, %v6794
    %v6796 = vsel %vm6172, %v5889, -inf
    %v6797 = vrot.slane %v6796, 4
    %v6798 = vmax.f32 %v6796, %v6797
    %v6799 = vrot.slane %v6798, 2
    %v6800 = vmax.f32 %v6798, %v6799
    %v6801 = vrot.slane %v6800, 1
    %v6802 = vmax.f32 %v6800, %v6801
    %v6803 = vsel %vm6172, %v5888, -inf
    %v6804 = vrot.slane %v6803, 4
    %v6805 = vmax.f32 %v6803, %v6804
    %v6806 = vrot.slane %v6805, 2
    %v6807 = vmax.f32 %v6805, %v6806
    %v6808 = vrot.slane %v6807, 1
    %v6809 = vmax.f32 %v6807, %v6808
    %v6810 = vsel %vm6172, %v5890, -inf
    %v6811 = vrot.slane %v6810, 4
    %v6812 = vmax.f32 %v6810, %v6811
    %v6813 = vrot.slane %v6812, 2
    %v6814 = vmax.f32 %v6812, %v6813
    %v6815 = vrot.slane %v6814, 1
    %v6816 = vmax.f32 %v6814, %v6815
    %v6817 = vsel %vm6172, %v5898, -inf
    %v6818 = vrot.slane %v6817, 4
    %v6819 = vmax.f32 %v6817, %v6818
    %v6820 = vrot.slane %v6819, 2
    %v6821 = vmax.f32 %v6819, %v6820
    %v6822 = vrot.slane %v6821, 1
    %v6823 = vmax.f32 %v6821, %v6822
    %v6824 = vsel %vm6172, %v5906, -inf
    %v6825 = vrot.slane %v6824, 4
    %v6826 = vmax.f32 %v6824, %v6825
    %v6827 = vrot.slane %v6826, 2
    %v6828 = vmax.f32 %v6826, %v6827
    %v6829 = vrot.slane %v6828, 1
    %v6830 = vmax.f32 %v6828, %v6829
    %v6831 = vsel %vm6172, %v5905, -inf
    %v6832 = vrot.slane %v6831, 4
    %v6833 = vmax.f32 %v6831, %v6832
    %v6834 = vrot.slane %v6833, 2
    %v6835 = vmax.f32 %v6833, %v6834
    %v6836 = vrot.slane %v6835, 1
    %v6837 = vmax.f32 %v6835, %v6836
    %v6838 = vsel %vm6172, %v5907, -inf
    %v6839 = vrot.slane %v6838, 4
    %v6840 = vmax.f32 %v6838, %v6839
    %v6841 = vrot.slane %v6840, 2
    %v6842 = vmax.f32 %v6840, %v6841
    %v6843 = vrot.slane %v6842, 1
    %v6844 = vmax.f32 %v6842, %v6843
    %v6845 = vsel %vm6172, %v5915, -inf
    %v6846 = vrot.slane %v6845, 4
    %v6847 = vmax.f32 %v6845, %v6846
    %v6848 = vrot.slane %v6847, 2
    %v6849 = vmax.f32 %v6847, %v6848
    %v6850 = vrot.slane %v6849, 1
    %v6851 = vmax.f32 %v6849, %v6850
    %v6852 = vsel %vm6172, %v5923, -inf
    %v6853 = vrot.slane %v6852, 4
    %v6854 = vmax.f32 %v6852, %v6853
    %v6855 = vrot.slane %v6854, 2
    %v6856 = vmax.f32 %v6854, %v6855
    %v6857 = vrot.slane %v6856, 1
    %v6858 = vmax.f32 %v6856, %v6857
    %v6859 = vsel %vm6172, %v5922, -inf
    %v6860 = vrot.slane %v6859, 4
    %v6861 = vmax.f32 %v6859, %v6860
    %v6862 = vrot.slane %v6861, 2
    %v6863 = vmax.f32 %v6861, %v6862
    %v6864 = vrot.slane %v6863, 1
    %v6865 = vmax.f32 %v6863, %v6864
    %v6866 = vsel %vm6172, %v5924, -inf
    %v6867 = vrot.slane %v6866, 4
    %v6868 = vmax.f32 %v6866, %v6867
    %v6869 = vrot.slane %v6868, 2
    %v6870 = vmax.f32 %v6868, %v6869
    %v6871 = vrot.slane %v6870, 1
    %v6872 = vmax.f32 %v6870, %v6871
    %v6873 = vsel %vm6172, %v5932, -inf
    %v6874 = vrot.slane %v6873, 4
    %v6875 = vmax.f32 %v6873, %v6874
    %v6876 = vrot.slane %v6875, 2
    %v6877 = vmax.f32 %v6875, %v6876
    %v6878 = vrot.slane %v6877, 1
    %v6879 = vmax.f32 %v6877, %v6878
    %v6880 = vsel %vm6172, %v5940, -inf
    %v6881 = vrot.slane %v6880, 4
    %v6882 = vmax.f32 %v6880, %v6881
    %v6883 = vrot.slane %v6882, 2
    %v6884 = vmax.f32 %v6882, %v6883
    %v6885 = vrot.slane %v6884, 1
    %v6886 = vmax.f32 %v6884, %v6885
    %v6887 = vsel %vm6172, %v5939, -inf
    %v6888 = vrot.slane %v6887, 4
    %v6889 = vmax.f32 %v6887, %v6888
    %v6890 = vrot.slane %v6889, 2
    %v6891 = vmax.f32 %v6889, %v6890
    %v6892 = vrot.slane %v6891, 1
    %v6893 = vmax.f32 %v6891, %v6892
    %v6894 = vsel %vm6172, %v5941, -inf
    %v6895 = vrot.slane %v6894, 4
    %v6896 = vmax.f32 %v6894, %v6895
    %v6897 = vrot.slane %v6896, 2
    %v6898 = vmax.f32 %v6896, %v6897
    %v6899 = vrot.slane %v6898, 1
    %v6900 = vmax.f32 %v6898, %v6899
    %v6901 = vsel %vm6172, %v5949, -inf
    %v6902 = vrot.slane %v6901, 4
    %v6903 = vmax.f32 %v6901, %v6902
    %v6904 = vrot.slane %v6903, 2
    %v6905 = vmax.f32 %v6903, %v6904
    %v6906 = vrot.slane %v6905, 1
    %v6907 = vmax.f32 %v6905, %v6906
    %v6908 = vsel %vm6172, %v5957, -inf
    %v6909 = vrot.slane %v6908, 4
    %v6910 = vmax.f32 %v6908, %v6909
    %v6911 = vrot.slane %v6910, 2
    %v6912 = vmax.f32 %v6910, %v6911
    %v6913 = vrot.slane %v6912, 1
    %v6914 = vmax.f32 %v6912, %v6913
    %v6915 = vsel %vm6172, %v5956, -inf
    %v6916 = vrot.slane %v6915, 4
    %v6917 = vmax.f32 %v6915, %v6916
    %v6918 = vrot.slane %v6917, 2
    %v6919 = vmax.f32 %v6917, %v6918
    %v6920 = vrot.slane %v6919, 1
    %v6921 = vmax.f32 %v6919, %v6920
    %v6922 = vsel %vm6172, %v5958, -inf
    %v6923 = vrot.slane %v6922, 4
    %v6924 = vmax.f32 %v6922, %v6923
    %v6925 = vrot.slane %v6924, 2
    %v6926 = vmax.f32 %v6924, %v6925
    %v6927 = vrot.slane %v6926, 1
    %v6928 = vmax.f32 %v6926, %v6927
    %v6929 = vsel %vm6172, %v5966, -inf
    %v6930 = vrot.slane %v6929, 4
    %v6931 = vmax.f32 %v6929, %v6930
    %v6932 = vrot.slane %v6931, 2
    %v6933 = vmax.f32 %v6931, %v6932
    %v6934 = vrot.slane %v6933, 1
    %v6935 = vmax.f32 %v6933, %v6934
    %v6936 = vsel %vm6172, %v5974, -inf
    %v6937 = vrot.slane %v6936, 4
    %v6938 = vmax.f32 %v6936, %v6937
    %v6939 = vrot.slane %v6938, 2
    %v6940 = vmax.f32 %v6938, %v6939
    %v6941 = vrot.slane %v6940, 1
    %v6942 = vmax.f32 %v6940, %v6941
    %v6943 = vsel %vm6172, %v5973, -inf
    %v6944 = vrot.slane %v6943, 4
    %v6945 = vmax.f32 %v6943, %v6944
    %v6946 = vrot.slane %v6945, 2
    %v6947 = vmax.f32 %v6945, %v6946
    %v6948 = vrot.slane %v6947, 1
    %v6949 = vmax.f32 %v6947, %v6948
    %v6950 = vsel %vm6172, %v5975, -inf
    %v6951 = vrot.slane %v6950, 4
    %v6952 = vmax.f32 %v6950, %v6951
    %v6953 = vrot.slane %v6952, 2
    %v6954 = vmax.f32 %v6952, %v6953
    %v6955 = vrot.slane %v6954, 1
    %v6956 = vmax.f32 %v6954, %v6955
    %v6957 = vsel %vm6172, %v5983, -inf
    %v6958 = vrot.slane %v6957, 4
    %v6959 = vmax.f32 %v6957, %v6958
    %v6960 = vrot.slane %v6959, 2
    %v6961 = vmax.f32 %v6959, %v6960
    %v6962 = vrot.slane %v6961, 1
    %v6963 = vmax.f32 %v6961, %v6962
    %v6964 = vsel %vm6172, %v5991, -inf
    %v6965 = vrot.slane %v6964, 4
    %v6966 = vmax.f32 %v6964, %v6965
    %v6967 = vrot.slane %v6966, 2
    %v6968 = vmax.f32 %v6966, %v6967
    %v6969 = vrot.slane %v6968, 1
    %v6970 = vmax.f32 %v6968, %v6969
    %v6971 = vsel %vm6172, %v5990, -inf
    %v6972 = vrot.slane %v6971, 4
    %v6973 = vmax.f32 %v6971, %v6972
    %v6974 = vrot.slane %v6973, 2
    %v6975 = vmax.f32 %v6973, %v6974
    %v6976 = vrot.slane %v6975, 1
    %v6977 = vmax.f32 %v6975, %v6976
    %v6978 = vsel %vm6172, %v5992, -inf
    %v6979 = vrot.slane %v6978, 4
    %v6980 = vmax.f32 %v6978, %v6979
    %v6981 = vrot.slane %v6980, 2
    %v6982 = vmax.f32 %v6980, %v6981
    %v6983 = vrot.slane %v6982, 1
    %v6984 = vmax.f32 %v6982, %v6983
    %v6985 = vsel %vm6172, %v6000, -inf
    %v6986 = vrot.slane %v6985, 4
    %v6987 = vmax.f32 %v6985, %v6986
    %v6988 = vrot.slane %v6987, 2
    %v6989 = vmax.f32 %v6987, %v6988
    %v6990 = vrot.slane %v6989, 1
    %v6991 = vmax.f32 %v6989, %v6990
    %v6992 = vsel %vm6172, %v6008, -inf
    %v6993 = vrot.slane %v6992, 4
    %v6994 = vmax.f32 %v6992, %v6993
    %v6995 = vrot.slane %v6994, 2
    %v6996 = vmax.f32 %v6994, %v6995
    %v6997 = vrot.slane %v6996, 1
    %v6998 = vmax.f32 %v6996, %v6997
    %v6999 = vsel %vm6172, %v6007, -inf
    %v7000 = vrot.slane %v6999, 4
    %v7001 = vmax.f32 %v6999, %v7000
    %v7002 = vrot.slane %v7001, 2
    %v7003 = vmax.f32 %v7001, %v7002
    %v7004 = vrot.slane %v7003, 1
    %v7005 = vmax.f32 %v7003, %v7004
    %v7006 = vsel %vm6172, %v6009, -inf
    %v7007 = vrot.slane %v7006, 4
    %v7008 = vmax.f32 %v7006, %v7007
    %v7009 = vrot.slane %v7008, 2
    %v7010 = vmax.f32 %v7008, %v7009
    %v7011 = vrot.slane %v7010, 1
    %v7012 = vmax.f32 %v7010, %v7011
    %v7013 = vsel %vm6172, %v6017, -inf
    %v7014 = vrot.slane %v7013, 4
    %v7015 = vmax.f32 %v7013, %v7014
    %v7016 = vrot.slane %v7015, 2
    %v7017 = vmax.f32 %v7015, %v7016
    %v7018 = vrot.slane %v7017, 1
    %v7019 = vmax.f32 %v7017, %v7018
    %v7020 = vsel %vm6172, %v6025, -inf
    %v7021 = vrot.slane %v7020, 4
    %v7022 = vmax.f32 %v7020, %v7021
    %v7023 = vrot.slane %v7022, 2
    %v7024 = vmax.f32 %v7022, %v7023
    %v7025 = vrot.slane %v7024, 1
    %v7026 = vmax.f32 %v7024, %v7025
    %v7027 = vsel %vm6172, %v6024, -inf
    %v7028 = vrot.slane %v7027, 4
    %v7029 = vmax.f32 %v7027, %v7028
    %v7030 = vrot.slane %v7029, 2
    %v7031 = vmax.f32 %v7029, %v7030
    %v7032 = vrot.slane %v7031, 1
    %v7033 = vmax.f32 %v7031, %v7032
    %v7034 = vsel %vm6172, %v6026, -inf
    %v7035 = vrot.slane %v7034, 4
    %v7036 = vmax.f32 %v7034, %v7035
    %v7037 = vrot.slane %v7036, 2
    %v7038 = vmax.f32 %v7036, %v7037
    %v7039 = vrot.slane %v7038, 1
    %v7040 = vmax.f32 %v7038, %v7039
    %v7041 = vsel %vm6172, %v6034, -inf
    %v7042 = vrot.slane %v7041, 4
    %v7043 = vmax.f32 %v7041, %v7042
    %v7044 = vrot.slane %v7043, 2
    %v7045 = vmax.f32 %v7043, %v7044
    %v7046 = vrot.slane %v7045, 1
    %v7047 = vmax.f32 %v7045, %v7046
    %v7048 = vsel %vm6172, %v6042, -inf
    %v7049 = vrot.slane %v7048, 4
    %v7050 = vmax.f32 %v7048, %v7049
    %v7051 = vrot.slane %v7050, 2
    %v7052 = vmax.f32 %v7050, %v7051
    %v7053 = vrot.slane %v7052, 1
    %v7054 = vmax.f32 %v7052, %v7053
    %v7055 = vsel %vm6172, %v6041, -inf
    %v7056 = vrot.slane %v7055, 4
    %v7057 = vmax.f32 %v7055, %v7056
    %v7058 = vrot.slane %v7057, 2
    %v7059 = vmax.f32 %v7057, %v7058
    %v7060 = vrot.slane %v7059, 1
    %v7061 = vmax.f32 %v7059, %v7060
    %v7062 = vsel %vm6172, %v6043, -inf
    %v7063 = vrot.slane %v7062, 4
    %v7064 = vmax.f32 %v7062, %v7063
    %v7065 = vrot.slane %v7064, 2
    %v7066 = vmax.f32 %v7064, %v7065
    %v7067 = vrot.slane %v7066, 1
    %v7068 = vmax.f32 %v7066, %v7067
    %v7069 = vpack.c.bf16 %v6179, %v6179
    %v7070 = vpack.c.bf16 %v6186, %v6186
    %v7071 = vpack.c.bf16 %v6193, %v6193
    %v7072 = vpack.c.bf16 %v6200, %v6200
    %v7073 = vpack.c.bf16 %v6207, %v6207
    %v7074 = vpack.c.bf16 %v6214, %v6214
    %v7075 = vpack.c.bf16 %v6221, %v6221
    %v7076 = vpack.c.bf16 %v6228, %v6228
    %v7077 = vpack.c.bf16 %v6235, %v6235
    %v7078 = vpack.c.bf16 %v6242, %v6242
    %v7079 = vpack.c.bf16 %v6249, %v6249
    %v7080 = vpack.c.bf16 %v6256, %v6256
    %v7081 = vpack.c.bf16 %v6263, %v6263
    %v7082 = vpack.c.bf16 %v6270, %v6270
    %v7083 = vpack.c.bf16 %v6277, %v6277
    %v7084 = vpack.c.bf16 %v6284, %v6284
    %v7085 = vpack.c.bf16 %v6291, %v6291
    %v7086 = vpack.c.bf16 %v6298, %v6298
    %v7087 = vpack.c.bf16 %v6305, %v6305
    %v7088 = vpack.c.bf16 %v6312, %v6312
    %v7089 = vpack.c.bf16 %v6319, %v6319
    %v7090 = vpack.c.bf16 %v6326, %v6326
    %v7091 = vpack.c.bf16 %v6333, %v6333
    %v7092 = vpack.c.bf16 %v6340, %v6340
    %v7093 = vpack.c.bf16 %v6347, %v6347
    %v7094 = vpack.c.bf16 %v6354, %v6354
    %v7095 = vpack.c.bf16 %v6361, %v6361
    %v7096 = vpack.c.bf16 %v6368, %v6368
    %v7097 = vpack.c.bf16 %v6375, %v6375
    %v7098 = vpack.c.bf16 %v6382, %v6382
    %v7099 = vpack.c.bf16 %v6389, %v6389
    %v7100 = vpack.c.bf16 %v6396, %v6396
    %v7101 = vpack.c.bf16 %v6403, %v6403
    %v7102 = vpack.c.bf16 %v6410, %v6410
    %v7103 = vpack.c.bf16 %v6417, %v6417
    %v7104 = vpack.c.bf16 %v6424, %v6424
    %v7105 = vpack.c.bf16 %v6431, %v6431
    %v7106 = vpack.c.bf16 %v6438, %v6438
    %v7107 = vpack.c.bf16 %v6445, %v6445
    %v7108 = vpack.c.bf16 %v6452, %v6452
    %v7109 = vpack.c.bf16 %v6459, %v6459
    %v7110 = vpack.c.bf16 %v6466, %v6466
    %v7111 = vpack.c.bf16 %v6473, %v6473
    %v7112 = vpack.c.bf16 %v6480, %v6480
    %v7113 = vpack.c.bf16 %v6487, %v6487
    %v7114 = vpack.c.bf16 %v6494, %v6494
    %v7115 = vpack.c.bf16 %v6501, %v6501
    %v7116 = vpack.c.bf16 %v6508, %v6508
    %v7117 = vpack.c.bf16 %v6515, %v6515
    %v7118 = vpack.c.bf16 %v6522, %v6522
    %v7119 = vpack.c.bf16 %v6529, %v6529
    %v7120 = vpack.c.bf16 %v6536, %v6536
    %v7121 = vpack.c.bf16 %v6543, %v6543
    %v7122 = vpack.c.bf16 %v6550, %v6550
    %v7123 = vpack.c.bf16 %v6557, %v6557
    %v7124 = vpack.c.bf16 %v6564, %v6564
    %v7125 = vpack.c.bf16 %v6571, %v6571
    %v7126 = vpack.c.bf16 %v6578, %v6578
    %v7127 = vpack.c.bf16 %v6585, %v6585
    %v7128 = vpack.c.bf16 %v6592, %v6592
    %v7129 = vpack.c.bf16 %v6599, %v6599
    %v7130 = vpack.c.bf16 %v6606, %v6606
    %v7131 = vpack.c.bf16 %v6613, %v6613
    %v7132 = vpack.c.bf16 %v6620, %v6620
    %v7133 = vpack.c.bf16 %v6627, %v6627
    %v7134 = vpack.c.bf16 %v6634, %v6634
    %v7135 = vpack.c.bf16 %v6641, %v6641
    %v7136 = vpack.c.bf16 %v6648, %v6648
    %v7137 = vpack.c.bf16 %v6655, %v6655
    %v7138 = vpack.c.bf16 %v6662, %v6662
    %v7139 = vpack.c.bf16 %v6669, %v6669
    %v7140 = vpack.c.bf16 %v6676, %v6676
    %v7141 = vpack.c.bf16 %v6683, %v6683
    %v7142 = vpack.c.bf16 %v6690, %v6690
    %v7143 = vpack.c.bf16 %v6697, %v6697
    %v7144 = vpack.c.bf16 %v6704, %v6704
    %v7145 = vpack.c.bf16 %v6711, %v6711
    %v7146 = vpack.c.bf16 %v6718, %v6718
    %v7147 = vpack.c.bf16 %v6725, %v6725
    %v7148 = vpack.c.bf16 %v6732, %v6732
    %v7149 = vpack.c.bf16 %v6739, %v6739
    %v7150 = vpack.c.bf16 %v6746, %v6746
    %v7151 = vpack.c.bf16 %v6753, %v6753
    %v7152 = vpack.c.bf16 %v6760, %v6760
    %v7153 = vpack.c.bf16 %v6767, %v6767
    %v7154 = vpack.c.bf16 %v6774, %v6774
    %v7155 = vpack.c.bf16 %v6781, %v6781
    %v7156 = vpack.c.bf16 %v6788, %v6788
    %v7157 = vpack.c.bf16 %v6795, %v6795
    %v7158 = vpack.c.bf16 %v6802, %v6802
    %v7159 = vpack.c.bf16 %v6809, %v6809
    %v7160 = vpack.c.bf16 %v6816, %v6816
    %v7161 = vpack.c.bf16 %v6823, %v6823
    %v7162 = vpack.c.bf16 %v6830, %v6830
    %v7163 = vpack.c.bf16 %v6837, %v6837
    %v7164 = vpack.c.bf16 %v6844, %v6844
    %v7165 = vpack.c.bf16 %v6851, %v6851
    %v7166 = vpack.c.bf16 %v6858, %v6858
    %v7167 = vpack.c.bf16 %v6865, %v6865
    %v7168 = vpack.c.bf16 %v6872, %v6872
    %v7169 = vpack.c.bf16 %v6879, %v6879
    %v7170 = vpack.c.bf16 %v6886, %v6886
    %v7171 = vpack.c.bf16 %v6893, %v6893
    %v7172 = vpack.c.bf16 %v6900, %v6900
    %v7173 = vpack.c.bf16 %v6907, %v6907
    %v7174 = vpack.c.bf16 %v6914, %v6914
    %v7175 = vpack.c.bf16 %v6921, %v6921
    %v7176 = vpack.c.bf16 %v6928, %v6928
    %v7177 = vpack.c.bf16 %v6935, %v6935
    %v7178 = vpack.c.bf16 %v6942, %v6942
    %v7179 = vpack.c.bf16 %v6949, %v6949
    %v7180 = vpack.c.bf16 %v6956, %v6956
    %v7181 = vpack.c.bf16 %v6963, %v6963
    %v7182 = vpack.c.bf16 %v6970, %v6970
    %v7183 = vpack.c.bf16 %v6977, %v6977
    %v7184 = vpack.c.bf16 %v6984, %v6984
    %v7185 = vpack.c.bf16 %v6991, %v6991
    %v7186 = vpack.c.bf16 %v6998, %v6998
    %v7187 = vpack.c.bf16 %v7005, %v7005
    %v7188 = vpack.c.bf16 %v7012, %v7012
    %v7189 = vpack.c.bf16 %v7019, %v7019
    %v7190 = vpack.c.bf16 %v7026, %v7026
    %v7191 = vpack.c.bf16 %v7033, %v7033
    %v7192 = vpack.c.bf16 %v7040, %v7040
    %v7193 = vpack.c.bf16 %v7047, %v7047
    %v7194 = vpack.c.bf16 %v7054, %v7054
    %v7195 = vpack.c.bf16 %v7061, %v7061
    %v7196 = vpack.c.bf16 %v7068, %v7068
    %v7197 = vld [vmem:[%s5] sm:$0xf]
    %v7198 = vld [vmem:[%s5 + $0x4] sm:$0xf]
    %v7199 = vld [vmem:[%s5 + $0x8] sm:$0xf]
    %v7200 = vld [vmem:[%s5 + $0xc] sm:$0xf]
    %v7201 = vld [vmem:[%s5 + $0x10] sm:$0xf]
    %v7202 = vld [vmem:[%s5 + $0x14] sm:$0xf]
    %v7203 = vld [vmem:[%s5 + $0x18] sm:$0xf]
    %v7204 = vld [vmem:[%s5 + $0x1c] sm:$0xf]
    %v7205 = vld [vmem:[%s5 + $0x20] sm:$0xf]
    %v7206 = vld [vmem:[%s5 + $0x24] sm:$0xf]
    %v7207 = vld [vmem:[%s5 + $0x28] sm:$0xf]
    %v7208 = vld [vmem:[%s5 + $0x2c] sm:$0xf]
    %v7209 = vld [vmem:[%s5 + $0x30] sm:$0xf]
    %v7210 = vld [vmem:[%s5 + $0x34] sm:$0xf]
    %v7211 = vld [vmem:[%s5 + $0x38] sm:$0xf]
    %v7212 = vld [vmem:[%s5 + $0x3c] sm:$0xf]
    %v7213 = vld [vmem:[%s5 + $0x40] sm:$0xf]
    %v7214 = vld [vmem:[%s5 + $0x44] sm:$0xf]
    %v7215 = vld [vmem:[%s5 + $0x48] sm:$0xf]
    %v7216 = vld [vmem:[%s5 + $0x4c] sm:$0xf]
    %v7217 = vld [vmem:[%s5 + $0x50] sm:$0xf]
    %v7218 = vld [vmem:[%s5 + $0x54] sm:$0xf]
    %v7219 = vld [vmem:[%s5 + $0x58] sm:$0xf]
    %v7220 = vld [vmem:[%s5 + $0x5c] sm:$0xf]
    %v7221 = vld [vmem:[%s5 + $0x60] sm:$0xf]
    %v7222 = vld [vmem:[%s5 + $0x64] sm:$0xf]
    %v7223 = vld [vmem:[%s5 + $0x68] sm:$0xf]
    %v7224 = vld [vmem:[%s5 + $0x6c] sm:$0xf]
    %v7225 = vld [vmem:[%s5 + $0x70] sm:$0xf]
    %v7226 = vld [vmem:[%s5 + $0x74] sm:$0xf]
    %v7227 = vld [vmem:[%s5 + $0x78] sm:$0xf]
    %v7228 = vld [vmem:[%s5 + $0x7c] sm:$0xf]
    %v7229 = vld [vmem:[%s5 + $0x80] sm:$0xf]
    %v7230 = vld [vmem:[%s5 + $0x84] sm:$0xf]
    %v7231 = vld [vmem:[%s5 + $0x88] sm:$0xf]
    %v7232 = vld [vmem:[%s5 + $0x8c] sm:$0xf]
    %v7233 = vld [vmem:[%s5 + $0x90] sm:$0xf]
    %v7234 = vld [vmem:[%s5 + $0x94] sm:$0xf]
    %v7235 = vld [vmem:[%s5 + $0x98] sm:$0xf]
    %v7236 = vld [vmem:[%s5 + $0x9c] sm:$0xf]
    %v7237 = vld [vmem:[%s5 + $0xa0] sm:$0xf]
    %v7238 = vld [vmem:[%s5 + $0xa4] sm:$0xf]
    %v7239 = vld [vmem:[%s5 + $0xa8] sm:$0xf]
    %v7240 = vld [vmem:[%s5 + $0xac] sm:$0xf]
    %v7241 = vld [vmem:[%s5 + $0xb0] sm:$0xf]
    %v7242 = vld [vmem:[%s5 + $0xb4] sm:$0xf]
    %v7243 = vld [vmem:[%s5 + $0xb8] sm:$0xf]
    %v7244 = vld [vmem:[%s5 + $0xbc] sm:$0xf]
    %v7245 = vld [vmem:[%s5 + $0xc0] sm:$0xf]
    %v7246 = vld [vmem:[%s5 + $0xc4] sm:$0xf]
    %v7247 = vld [vmem:[%s5 + $0xc8] sm:$0xf]
    %v7248 = vld [vmem:[%s5 + $0xcc] sm:$0xf]
    %v7249 = vld [vmem:[%s5 + $0xd0] sm:$0xf]
    %v7250 = vld [vmem:[%s5 + $0xd4] sm:$0xf]
    %v7251 = vld [vmem:[%s5 + $0xd8] sm:$0xf]
    %v7252 = vld [vmem:[%s5 + $0xdc] sm:$0xf]
    %v7253 = vld [vmem:[%s5 + $0xe0] sm:$0xf]
    %v7254 = vld [vmem:[%s5 + $0xe4] sm:$0xf]
    %v7255 = vld [vmem:[%s5 + $0xe8] sm:$0xf]
    %v7256 = vld [vmem:[%s5 + $0xec] sm:$0xf]
    %v7257 = vld [vmem:[%s5 + $0xf0] sm:$0xf]
    %v7258 = vld [vmem:[%s5 + $0xf4] sm:$0xf]
    %v7259 = vld [vmem:[%s5 + $0xf8] sm:$0xf]
    %v7260 = vld [vmem:[%s5 + $0xfc] sm:$0xf]
    %v7261 = vld [vmem:[%s5 + $0x100] sm:$0xf]
    %v7262 = vld [vmem:[%s5 + $0x104] sm:$0xf]
    %v7263 = vld [vmem:[%s5 + $0x108] sm:$0xf]
    %v7264 = vld [vmem:[%s5 + $0x10c] sm:$0xf]
    %v7265 = vld [vmem:[%s5 + $0x110] sm:$0xf]
    %v7266 = vld [vmem:[%s5 + $0x114] sm:$0xf]
    %v7267 = vld [vmem:[%s5 + $0x118] sm:$0xf]
    %v7268 = vld [vmem:[%s5 + $0x11c] sm:$0xf]
    %v7269 = vld [vmem:[%s6] sm:$0x1]
    %v7398 = vunpack.c.l.b16 %v7069
    %v7399 = vunpack.c.l.b16 %v7070
    %v7400 = vunpack.c.l.b16 %v7071
    %v7401 = vunpack.c.l.b16 %v7072
    %v7402 = vunpack.c.l.b16 %v7073
    %v7403 = vunpack.c.l.b16 %v7074
    %v7404 = vunpack.c.l.b16 %v7075
    %v7405 = vunpack.c.l.b16 %v7076
    %v7406 = vunpack.c.l.b16 %v7077
    %v7407 = vunpack.c.l.b16 %v7078
    %v7408 = vunpack.c.l.b16 %v7079
    %v7409 = vunpack.c.l.b16 %v7080
    %v7410 = vunpack.c.l.b16 %v7081
    %v7411 = vunpack.c.l.b16 %v7082
    %v7412 = vunpack.c.l.b16 %v7083
    %v7413 = vunpack.c.l.b16 %v7084
    %v7414 = vunpack.c.l.b16 %v7085
    %v7415 = vunpack.c.l.b16 %v7086
    %v7416 = vunpack.c.l.b16 %v7087
    %v7417 = vunpack.c.l.b16 %v7088
    %v7418 = vunpack.c.l.b16 %v7089
    %v7419 = vunpack.c.l.b16 %v7090
    %v7420 = vunpack.c.l.b16 %v7091
    %v7421 = vunpack.c.l.b16 %v7092
    %v7422 = vunpack.c.l.b16 %v7093
    %v7423 = vunpack.c.l.b16 %v7094
    %v7424 = vunpack.c.l.b16 %v7095
    %v7425 = vunpack.c.l.b16 %v7096
    %v7426 = vunpack.c.l.b16 %v7097
    %v7427 = vunpack.c.l.b16 %v7098
    %v7428 = vunpack.c.l.b16 %v7099
    %v7429 = vunpack.c.l.b16 %v7100
    %v7430 = vunpack.c.l.b16 %v7101
    %v7431 = vunpack.c.l.b16 %v7102
    %v7432 = vunpack.c.l.b16 %v7103
    %v7433 = vunpack.c.l.b16 %v7104
    %v7434 = vunpack.c.l.b16 %v7105
    %v7435 = vunpack.c.l.b16 %v7106
    %v7436 = vunpack.c.l.b16 %v7107
    %v7437 = vunpack.c.l.b16 %v7108
    %v7438 = vunpack.c.l.b16 %v7109
    %v7439 = vunpack.c.l.b16 %v7110
    %v7440 = vunpack.c.l.b16 %v7111
    %v7441 = vunpack.c.l.b16 %v7112
    %v7442 = vunpack.c.l.b16 %v7113
    %v7443 = vunpack.c.l.b16 %v7114
    %v7444 = vunpack.c.l.b16 %v7115
    %v7445 = vunpack.c.l.b16 %v7116
    %v7446 = vunpack.c.l.b16 %v7117
    %v7447 = vunpack.c.l.b16 %v7118
    %v7448 = vunpack.c.l.b16 %v7119
    %v7449 = vunpack.c.l.b16 %v7120
    %v7450 = vunpack.c.l.b16 %v7121
    %v7451 = vunpack.c.l.b16 %v7122
    %v7452 = vunpack.c.l.b16 %v7123
    %v7453 = vunpack.c.l.b16 %v7124
    %v7454 = vunpack.c.l.b16 %v7125
    %v7455 = vunpack.c.l.b16 %v7126
    %v7456 = vunpack.c.l.b16 %v7127
    %v7457 = vunpack.c.l.b16 %v7128
    %v7458 = vunpack.c.l.b16 %v7129
    %v7459 = vunpack.c.l.b16 %v7130
    %v7460 = vunpack.c.l.b16 %v7131
    %v7461 = vunpack.c.l.b16 %v7132
    %v7462 = vunpack.c.l.b16 %v7133
    %v7463 = vunpack.c.l.b16 %v7134
    %v7464 = vunpack.c.l.b16 %v7135
    %v7465 = vunpack.c.l.b16 %v7136
    %v7466 = vunpack.c.l.b16 %v7137
    %v7467 = vunpack.c.l.b16 %v7138
    %v7468 = vunpack.c.l.b16 %v7139
    %v7469 = vunpack.c.l.b16 %v7140
    %v7470 = vunpack.c.l.b16 %v7141
    %v7471 = vunpack.c.l.b16 %v7142
    %v7472 = vunpack.c.l.b16 %v7143
    %v7473 = vunpack.c.l.b16 %v7144
    %v7474 = vunpack.c.l.b16 %v7145
    %v7475 = vunpack.c.l.b16 %v7146
    %v7476 = vunpack.c.l.b16 %v7147
    %v7477 = vunpack.c.l.b16 %v7148
    %v7478 = vunpack.c.l.b16 %v7149
    %v7479 = vunpack.c.l.b16 %v7150
    %v7480 = vunpack.c.l.b16 %v7151
    %v7481 = vunpack.c.l.b16 %v7152
    %v7482 = vunpack.c.l.b16 %v7153
    %v7483 = vunpack.c.l.b16 %v7154
    %v7484 = vunpack.c.l.b16 %v7155
    %v7485 = vunpack.c.l.b16 %v7156
    %v7486 = vunpack.c.l.b16 %v7157
    %v7487 = vunpack.c.l.b16 %v7158
    %v7488 = vunpack.c.l.b16 %v7159
    %v7489 = vunpack.c.l.b16 %v7160
    %v7490 = vunpack.c.l.b16 %v7161
    %v7491 = vunpack.c.l.b16 %v7162
    %v7492 = vunpack.c.l.b16 %v7163
    %v7493 = vunpack.c.l.b16 %v7164
    %v7494 = vunpack.c.l.b16 %v7165
    %v7495 = vunpack.c.l.b16 %v7166
    %v7496 = vunpack.c.l.b16 %v7167
    %v7497 = vunpack.c.l.b16 %v7168
    %v7498 = vunpack.c.l.b16 %v7169
    %v7499 = vunpack.c.l.b16 %v7170
    %v7500 = vunpack.c.l.b16 %v7171
    %v7501 = vunpack.c.l.b16 %v7172
    %v7502 = vunpack.c.l.b16 %v7173
    %v7503 = vunpack.c.l.b16 %v7174
    %v7504 = vunpack.c.l.b16 %v7175
    %v7505 = vunpack.c.l.b16 %v7176
    %v7506 = vunpack.c.l.b16 %v7177
    %v7507 = vunpack.c.l.b16 %v7178
    %v7508 = vunpack.c.l.b16 %v7179
    %v7509 = vunpack.c.l.b16 %v7180
    %v7510 = vunpack.c.l.b16 %v7181
    %v7511 = vunpack.c.l.b16 %v7182
    %v7512 = vunpack.c.l.b16 %v7183
    %v7513 = vunpack.c.l.b16 %v7184
    %v7514 = vunpack.c.l.b16 %v7185
    %v7515 = vunpack.c.l.b16 %v7186
    %v7516 = vunpack.c.l.b16 %v7187
    %v7517 = vunpack.c.l.b16 %v7188
    %v7518 = vunpack.c.l.b16 %v7189
    %v7519 = vunpack.c.l.b16 %v7190
    %v7520 = vunpack.c.l.b16 %v7191
    %v7521 = vunpack.c.l.b16 %v7192
    %v7522 = vunpack.c.l.b16 %v7193
    %v7523 = vunpack.c.l.b16 %v7194
    %v7524 = vunpack.c.l.b16 %v7195
    %v7525 = vunpack.c.l.b16 %v7196
    %v7526 = vrot.slane %v7398, 7
    %v7527 = vrot.slane %v7399, 6
    %vm7528 = vcmask 1042434
    %v7529 = vsel %vm7528, %v7527, %v7526
    %v7530 = vrot.slane %v7400, 5
    %vm7531 = vcmask 1043459
    %v7532 = vsel %vm7531, %v7530, %v7529
    %v7533 = vrot.slane %v7401, 4
    %vm7534 = vcmask 1044484
    %v7535 = vsel %vm7534, %v7533, %v7532
    %v7536 = vrot.slane %v7402, 3
    %vm7537 = vcmask 1045509
    %v7538 = vsel %vm7537, %v7536, %v7535
    %v7539 = vrot.slane %v7403, 2
    %vm7540 = vcmask 1046534
    %v7541 = vsel %vm7540, %v7539, %v7538
    %v7542 = vrot.slane %v7404, 1
    %vm7543 = vcmask 1047559
    %v7544 = vsel %vm7543, %v7542, %v7541
    %v7545 = vrot.slane %v7406, 7
    %v7546 = vrot.slane %v7407, 6
    %v7547 = vsel %vm7528, %v7546, %v7545
    %v7548 = vrot.slane %v7408, 5
    %v7549 = vsel %vm7531, %v7548, %v7547
    %v7550 = vrot.slane %v7409, 4
    %v7551 = vsel %vm7534, %v7550, %v7549
    %v7552 = vrot.slane %v7410, 3
    %v7553 = vsel %vm7537, %v7552, %v7551
    %v7554 = vrot.slane %v7411, 2
    %v7555 = vsel %vm7540, %v7554, %v7553
    %v7556 = vrot.slane %v7412, 1
    %v7557 = vsel %vm7543, %v7556, %v7555
    %v7558 = vrot.slane %v7414, 7
    %v7559 = vrot.slane %v7415, 6
    %v7560 = vsel %vm7528, %v7559, %v7558
    %v7561 = vrot.slane %v7416, 5
    %v7562 = vsel %vm7531, %v7561, %v7560
    %v7563 = vrot.slane %v7417, 4
    %v7564 = vsel %vm7534, %v7563, %v7562
    %v7565 = vrot.slane %v7418, 3
    %v7566 = vsel %vm7537, %v7565, %v7564
    %v7567 = vrot.slane %v7419, 2
    %v7568 = vsel %vm7540, %v7567, %v7566
    %v7569 = vrot.slane %v7420, 1
    %v7570 = vsel %vm7543, %v7569, %v7568
    %v7571 = vrot.slane %v7422, 7
    %v7572 = vrot.slane %v7423, 6
    %v7573 = vsel %vm7528, %v7572, %v7571
    %v7574 = vrot.slane %v7424, 5
    %v7575 = vsel %vm7531, %v7574, %v7573
    %v7576 = vrot.slane %v7425, 4
    %v7577 = vsel %vm7534, %v7576, %v7575
    %v7578 = vrot.slane %v7426, 3
    %v7579 = vsel %vm7537, %v7578, %v7577
    %v7580 = vrot.slane %v7427, 2
    %v7581 = vsel %vm7540, %v7580, %v7579
    %v7582 = vrot.slane %v7428, 1
    %v7583 = vsel %vm7543, %v7582, %v7581
    %v7584 = vrot.slane %v7430, 7
    %v7585 = vrot.slane %v7431, 6
    %v7586 = vsel %vm7528, %v7585, %v7584
    %v7587 = vrot.slane %v7432, 5
    %v7588 = vsel %vm7531, %v7587, %v7586
    %v7589 = vrot.slane %v7433, 4
    %v7590 = vsel %vm7534, %v7589, %v7588
    %v7591 = vrot.slane %v7434, 3
    %v7592 = vsel %vm7537, %v7591, %v7590
    %v7593 = vrot.slane %v7435, 2
    %v7594 = vsel %vm7540, %v7593, %v7592
    %v7595 = vrot.slane %v7436, 1
    %v7596 = vsel %vm7543, %v7595, %v7594
    %v7597 = vrot.slane %v7438, 7
    %v7598 = vrot.slane %v7439, 6
    %v7599 = vsel %vm7528, %v7598, %v7597
    %v7600 = vrot.slane %v7440, 5
    %v7601 = vsel %vm7531, %v7600, %v7599
    %v7602 = vrot.slane %v7441, 4
    %v7603 = vsel %vm7534, %v7602, %v7601
    %v7604 = vrot.slane %v7442, 3
    %v7605 = vsel %vm7537, %v7604, %v7603
    %v7606 = vrot.slane %v7443, 2
    %v7607 = vsel %vm7540, %v7606, %v7605
    %v7608 = vrot.slane %v7444, 1
    %v7609 = vsel %vm7543, %v7608, %v7607
    %v7610 = vrot.slane %v7446, 7
    %v7611 = vrot.slane %v7447, 6
    %v7612 = vsel %vm7528, %v7611, %v7610
    %v7613 = vrot.slane %v7448, 5
    %v7614 = vsel %vm7531, %v7613, %v7612
    %v7615 = vrot.slane %v7449, 4
    %v7616 = vsel %vm7534, %v7615, %v7614
    %v7617 = vrot.slane %v7450, 3
    %v7618 = vsel %vm7537, %v7617, %v7616
    %v7619 = vrot.slane %v7451, 2
    %v7620 = vsel %vm7540, %v7619, %v7618
    %v7621 = vrot.slane %v7452, 1
    %v7622 = vsel %vm7543, %v7621, %v7620
    %v7623 = vrot.slane %v7454, 7
    %v7624 = vrot.slane %v7455, 6
    %v7625 = vsel %vm7528, %v7624, %v7623
    %v7626 = vrot.slane %v7456, 5
    %v7627 = vsel %vm7531, %v7626, %v7625
    %v7628 = vrot.slane %v7457, 4
    %v7629 = vsel %vm7534, %v7628, %v7627
    %v7630 = vrot.slane %v7458, 3
    %v7631 = vsel %vm7537, %v7630, %v7629
    %v7632 = vrot.slane %v7459, 2
    %v7633 = vsel %vm7540, %v7632, %v7631
    %v7634 = vrot.slane %v7460, 1
    %v7635 = vsel %vm7543, %v7634, %v7633
    %v7636 = vrot.slane %v7462, 7
    %v7637 = vrot.slane %v7463, 6
    %v7638 = vsel %vm7528, %v7637, %v7636
    %v7639 = vrot.slane %v7464, 5
    %v7640 = vsel %vm7531, %v7639, %v7638
    %v7641 = vrot.slane %v7465, 4
    %v7642 = vsel %vm7534, %v7641, %v7640
    %v7643 = vrot.slane %v7466, 3
    %v7644 = vsel %vm7537, %v7643, %v7642
    %v7645 = vrot.slane %v7467, 2
    %v7646 = vsel %vm7540, %v7645, %v7644
    %v7647 = vrot.slane %v7468, 1
    %v7648 = vsel %vm7543, %v7647, %v7646
    %v7649 = vrot.slane %v7470, 7
    %v7650 = vrot.slane %v7471, 6
    %v7651 = vsel %vm7528, %v7650, %v7649
    %v7652 = vrot.slane %v7472, 5
    %v7653 = vsel %vm7531, %v7652, %v7651
    %v7654 = vrot.slane %v7473, 4
    %v7655 = vsel %vm7534, %v7654, %v7653
    %v7656 = vrot.slane %v7474, 3
    %v7657 = vsel %vm7537, %v7656, %v7655
    %v7658 = vrot.slane %v7475, 2
    %v7659 = vsel %vm7540, %v7658, %v7657
    %v7660 = vrot.slane %v7476, 1
    %v7661 = vsel %vm7543, %v7660, %v7659
    %v7662 = vrot.slane %v7478, 7
    %v7663 = vrot.slane %v7479, 6
    %v7664 = vsel %vm7528, %v7663, %v7662
    %v7665 = vrot.slane %v7480, 5
    %v7666 = vsel %vm7531, %v7665, %v7664
    %v7667 = vrot.slane %v7481, 4
    %v7668 = vsel %vm7534, %v7667, %v7666
    %v7669 = vrot.slane %v7482, 3
    %v7670 = vsel %vm7537, %v7669, %v7668
    %v7671 = vrot.slane %v7483, 2
    %v7672 = vsel %vm7540, %v7671, %v7670
    %v7673 = vrot.slane %v7484, 1
    %v7674 = vsel %vm7543, %v7673, %v7672
    %v7675 = vrot.slane %v7486, 7
    %v7676 = vrot.slane %v7487, 6
    %v7677 = vsel %vm7528, %v7676, %v7675
    %v7678 = vrot.slane %v7488, 5
    %v7679 = vsel %vm7531, %v7678, %v7677
    %v7680 = vrot.slane %v7489, 4
    %v7681 = vsel %vm7534, %v7680, %v7679
    %v7682 = vrot.slane %v7490, 3
    %v7683 = vsel %vm7537, %v7682, %v7681
    %v7684 = vrot.slane %v7491, 2
    %v7685 = vsel %vm7540, %v7684, %v7683
    %v7686 = vrot.slane %v7492, 1
    %v7687 = vsel %vm7543, %v7686, %v7685
    %v7688 = vrot.slane %v7494, 7
    %v7689 = vrot.slane %v7495, 6
    %v7690 = vsel %vm7528, %v7689, %v7688
    %v7691 = vrot.slane %v7496, 5
    %v7692 = vsel %vm7531, %v7691, %v7690
    %v7693 = vrot.slane %v7497, 4
    %v7694 = vsel %vm7534, %v7693, %v7692
    %v7695 = vrot.slane %v7498, 3
    %v7696 = vsel %vm7537, %v7695, %v7694
    %v7697 = vrot.slane %v7499, 2
    %v7698 = vsel %vm7540, %v7697, %v7696
    %v7699 = vrot.slane %v7500, 1
    %v7700 = vsel %vm7543, %v7699, %v7698
    %v7701 = vrot.slane %v7502, 7
    %v7702 = vrot.slane %v7503, 6
    %v7703 = vsel %vm7528, %v7702, %v7701
    %v7704 = vrot.slane %v7504, 5
    %v7705 = vsel %vm7531, %v7704, %v7703
    %v7706 = vrot.slane %v7505, 4
    %v7707 = vsel %vm7534, %v7706, %v7705
    %v7708 = vrot.slane %v7506, 3
    %v7709 = vsel %vm7537, %v7708, %v7707
    %v7710 = vrot.slane %v7507, 2
    %v7711 = vsel %vm7540, %v7710, %v7709
    %v7712 = vrot.slane %v7508, 1
    %v7713 = vsel %vm7543, %v7712, %v7711
    %v7714 = vrot.slane %v7510, 7
    %v7715 = vrot.slane %v7511, 6
    %v7716 = vsel %vm7528, %v7715, %v7714
    %v7717 = vrot.slane %v7512, 5
    %v7718 = vsel %vm7531, %v7717, %v7716
    %v7719 = vrot.slane %v7513, 4
    %v7720 = vsel %vm7534, %v7719, %v7718
    %v7721 = vrot.slane %v7514, 3
    %v7722 = vsel %vm7537, %v7721, %v7720
    %v7723 = vrot.slane %v7515, 2
    %v7724 = vsel %vm7540, %v7723, %v7722
    %v7725 = vrot.slane %v7516, 1
    %v7726 = vsel %vm7543, %v7725, %v7724
    %v7727 = vrot.slane %v7518, 7
    %v7728 = vrot.slane %v7519, 6
    %v7729 = vsel %vm7528, %v7728, %v7727
    %v7730 = vrot.slane %v7520, 5
    %v7731 = vsel %vm7531, %v7730, %v7729
    %v7732 = vrot.slane %v7521, 4
    %v7733 = vsel %vm7534, %v7732, %v7731
    %v7734 = vrot.slane %v7522, 3
    %v7735 = vsel %vm7537, %v7734, %v7733
    %v7736 = vrot.slane %v7523, 2
    %v7737 = vsel %vm7540, %v7736, %v7735
    %v7738 = vrot.slane %v7524, 1
    %v7739 = vsel %vm7543, %v7738, %v7737
    %v7740 = vpack.c.b16 %v7405, %v7544
    %v7741 = vpack.c.b16 %v7413, %v7557
    %v7742 = vpack.c.b16 %v7421, %v7570
    %v7743 = vpack.c.b16 %v7429, %v7583
    %v7744 = vpack.c.b16 %v7437, %v7596
    %v7745 = vpack.c.b16 %v7445, %v7609
    %v7746 = vpack.c.b16 %v7453, %v7622
    %v7747 = vpack.c.b16 %v7461, %v7635
    %v7748 = vpack.c.b16 %v7469, %v7648
    %v7749 = vpack.c.b16 %v7477, %v7661
    %v7750 = vpack.c.b16 %v7485, %v7674
    %v7751 = vpack.c.b16 %v7493, %v7687
    %v7752 = vpack.c.b16 %v7501, %v7700
    %v7753 = vpack.c.b16 %v7509, %v7713
    %v7754 = vpack.c.b16 %v7517, %v7726
    %v7755 = vpack.c.b16 %v7525, %v7739
    %v7773 = vshll.u32 %v7076, 16
    %v7775 = vrot.slane %v7773, 4
    %v7777 = vshll.u32 %v7084, 16
    %v7779 = vrot.slane %v7777, 4
    %v7781 = vshll.u32 %v7092, 16
    %v7783 = vrot.slane %v7781, 4
    %v7785 = vshll.u32 %v7100, 16
    %v7787 = vrot.slane %v7785, 4
    %v7789 = vshll.u32 %v7108, 16
    %v7791 = vrot.slane %v7789, 4
    %v7793 = vshll.u32 %v7116, 16
    %v7795 = vrot.slane %v7793, 4
    %v7797 = vshll.u32 %v7124, 16
    %v7799 = vrot.slane %v7797, 4
    %v7801 = vshll.u32 %v7132, 16
    %v7803 = vrot.slane %v7801, 4
    %v7805 = vshll.u32 %v7140, 16
    %v7807 = vrot.slane %v7805, 4
    %v7809 = vshll.u32 %v7148, 16
    %v7811 = vrot.slane %v7809, 4
    %v7813 = vshll.u32 %v7156, 16
    %v7815 = vrot.slane %v7813, 4
    %v7817 = vshll.u32 %v7164, 16
    %v7819 = vrot.slane %v7817, 4
    %v7821 = vshll.u32 %v7172, 16
    %v7823 = vrot.slane %v7821, 4
    %v7825 = vshll.u32 %v7180, 16
    %v7827 = vrot.slane %v7825, 4
    %v7829 = vshll.u32 %v7188, 16
    %v7831 = vrot.slane %v7829, 4
    %v7833 = vshll.u32 %v7196, 16
    %v7835 = vrot.slane %v7833, 4
    %v7852 = vsel %vm524, %v7069, %v7740
    %v7853 = vsel %vm524, %v7077, %v7741
    %v7854 = vsel %vm524, %v7085, %v7742
    %v7855 = vsel %vm524, %v7093, %v7743
    %v7856 = vsel %vm524, %v7101, %v7744
    %v7857 = vsel %vm524, %v7109, %v7745
    %v7858 = vsel %vm524, %v7117, %v7746
    %v7859 = vsel %vm524, %v7125, %v7747
    %v7860 = vsel %vm524, %v7133, %v7748
    %v7861 = vsel %vm524, %v7141, %v7749
    %v7862 = vsel %vm524, %v7149, %v7750
    %v7863 = vsel %vm524, %v7157, %v7751
    %v7864 = vsel %vm524, %v7165, %v7752
    %v7865 = vsel %vm524, %v7173, %v7753
    %v7866 = vsel %vm524, %v7181, %v7754
    %v7867 = vsel %vm524, %v7189, %v7755
    %vm7868 = vcmask 1044480
    %vm7869 = vsmask.f32 4352
    %vm7870 = vmand %vm7868, %vm7869
    %v7871 = vsel %vm7870, %v7852, %v7775
    %v7872 = vsel %vm7870, %v7853, %v7779
    %v7873 = vsel %vm7870, %v7854, %v7783
    %v7874 = vsel %vm7870, %v7855, %v7787
    %v7875 = vsel %vm7870, %v7856, %v7791
    %v7876 = vsel %vm7870, %v7857, %v7795
    %v7877 = vsel %vm7870, %v7858, %v7799
    %v7878 = vsel %vm7870, %v7859, %v7803
    %v7879 = vsel %vm7870, %v7860, %v7807
    %v7880 = vsel %vm7870, %v7861, %v7811
    %v7881 = vsel %vm7870, %v7862, %v7815
    %v7882 = vsel %vm7870, %v7863, %v7819
    %v7883 = vsel %vm7870, %v7864, %v7823
    %v7884 = vsel %vm7870, %v7865, %v7827
    %v7885 = vsel %vm7870, %v7866, %v7831
    %v7886 = vsel %vm7870, %v7867, %v7835
    %v7901 = vunpack.c.l.b16 %v7871
    %v7902 = vunpack.c.h.b16 %v7871
    %v7903 = vunpack.c.l.b16 %v7872
    %v7904 = vunpack.c.h.b16 %v7872
    %v7905 = vunpack.c.l.b16 %v7873
    %v7906 = vunpack.c.h.b16 %v7873
    %v7907 = vunpack.c.l.b16 %v7874
    %v7908 = vunpack.c.h.b16 %v7874
    %v7909 = vunpack.c.l.b16 %v7875
    %v7910 = vunpack.c.h.b16 %v7875
    %v7911 = vunpack.c.l.b16 %v7876
    %v7912 = vunpack.c.h.b16 %v7876
    %v7913 = vunpack.c.l.b16 %v7877
    %v7914 = vunpack.c.h.b16 %v7877
    %v7915 = vunpack.c.l.b16 %v7879
    %v7916 = vunpack.c.h.b16 %v7879
    %v7917 = vunpack.c.l.b16 %v7880
    %v7918 = vunpack.c.h.b16 %v7880
    %v7919 = vunpack.c.l.b16 %v7881
    %v7920 = vunpack.c.h.b16 %v7881
    %v7921 = vunpack.c.l.b16 %v7882
    %v7922 = vunpack.c.h.b16 %v7882
    %v7923 = vunpack.c.l.b16 %v7883
    %v7924 = vunpack.c.h.b16 %v7883
    %v7925 = vunpack.c.l.b16 %v7884
    %v7926 = vunpack.c.h.b16 %v7884
    %v7927 = vunpack.c.l.b16 %v7885
    %v7928 = vunpack.c.h.b16 %v7885
    %v7929 = vpack.c.b16 %v7901, %v7901
    %v7930 = vpack.c.b16 %v7902, %v7902
    %v7931 = vpack.c.b16 %v7903, %v7903
    %v7932 = vpack.c.b16 %v7904, %v7904
    %v7933 = vpack.c.b16 %v7905, %v7905
    %v7934 = vpack.c.b16 %v7906, %v7906
    %v7935 = vpack.c.b16 %v7907, %v7907
    %v7936 = vpack.c.b16 %v7908, %v7908
    %v7937 = vpack.c.b16 %v7909, %v7909
    %v7938 = vpack.c.b16 %v7910, %v7910
    %v7939 = vpack.c.b16 %v7911, %v7911
    %v7940 = vpack.c.b16 %v7912, %v7912
    %v7941 = vpack.c.b16 %v7913, %v7913
    %v7942 = vpack.c.b16 %v7914, %v7914
    %v7943 = vpack.c.b16 %v7915, %v7915
    %v7944 = vpack.c.b16 %v7916, %v7916
    %v7945 = vpack.c.b16 %v7917, %v7917
    %v7946 = vpack.c.b16 %v7918, %v7918
    %v7947 = vpack.c.b16 %v7919, %v7919
    %v7948 = vpack.c.b16 %v7920, %v7920
    %v7949 = vpack.c.b16 %v7921, %v7921
    %v7950 = vpack.c.b16 %v7922, %v7922
    %v7951 = vpack.c.b16 %v7923, %v7923
    %v7952 = vpack.c.b16 %v7924, %v7924
    %v7953 = vpack.c.b16 %v7925, %v7925
    %v7954 = vpack.c.b16 %v7926, %v7926
    %v7955 = vpack.c.b16 %v7927, %v7927
    %v7956 = vpack.c.b16 %v7928, %v7928
    %vm7957 = vsmask.f32 3328
    %vm7958 = vsmask.f32 7440
    %vm7959 = vmor %vm7957, %vm7958
    %v7961 = vshrl.u32 %v7929, 16
    %v7963 = vrot.slane %v7961, 4
    %v7964 = vshll.u32 %v7929, 16
    %v7966 = vrot.slane %v7964, 5
    %v7967 = vor.u32 %v7963, %v7966
    %v7968 = vrot.slane %v7967, 4
    %v7970 = vshll.u32 %v7930, 16
    %v7972 = vrot.slane %v7970, 5
    %v7973 = vsel %vm7959, %v7968, %v7972
    %v7975 = vshrl.u32 %v7931, 16
    %v7977 = vrot.slane %v7975, 4
    %v7978 = vshll.u32 %v7931, 16
    %v7980 = vrot.slane %v7978, 5
    %v7981 = vor.u32 %v7977, %v7980
    %v7982 = vrot.slane %v7981, 4
    %v7984 = vshll.u32 %v7932, 16
    %v7986 = vrot.slane %v7984, 5
    %v7987 = vsel %vm7959, %v7982, %v7986
    %v7989 = vshrl.u32 %v7933, 16
    %v7991 = vrot.slane %v7989, 4
    %v7992 = vshll.u32 %v7933, 16
    %v7994 = vrot.slane %v7992, 5
    %v7995 = vor.u32 %v7991, %v7994
    %v7996 = vrot.slane %v7995, 4
    %v7998 = vshll.u32 %v7934, 16
    %v8000 = vrot.slane %v7998, 5
    %v8001 = vsel %vm7959, %v7996, %v8000
    %v8003 = vshrl.u32 %v7935, 16
    %v8005 = vrot.slane %v8003, 4
    %v8006 = vshll.u32 %v7935, 16
    %v8008 = vrot.slane %v8006, 5
    %v8009 = vor.u32 %v8005, %v8008
    %v8010 = vrot.slane %v8009, 4
    %v8012 = vshll.u32 %v7936, 16
    %v8014 = vrot.slane %v8012, 5
    %v8015 = vsel %vm7959, %v8010, %v8014
    %v8017 = vshrl.u32 %v7937, 16
    %v8019 = vrot.slane %v8017, 4
    %v8020 = vshll.u32 %v7937, 16
    %v8022 = vrot.slane %v8020, 5
    %v8023 = vor.u32 %v8019, %v8022
    %v8024 = vrot.slane %v8023, 4
    %v8026 = vshll.u32 %v7938, 16
    %v8028 = vrot.slane %v8026, 5
    %v8029 = vsel %vm7959, %v8024, %v8028
    %v8031 = vshrl.u32 %v7939, 16
    %v8033 = vrot.slane %v8031, 4
    %v8034 = vshll.u32 %v7939, 16
    %v8036 = vrot.slane %v8034, 5
    %v8037 = vor.u32 %v8033, %v8036
    %v8038 = vrot.slane %v8037, 4
    %v8040 = vshll.u32 %v7940, 16
    %v8042 = vrot.slane %v8040, 5
    %v8043 = vsel %vm7959, %v8038, %v8042
    %v8045 = vshrl.u32 %v7941, 16
    %v8047 = vrot.slane %v8045, 4
    %v8048 = vshll.u32 %v7941, 16
    %v8050 = vrot.slane %v8048, 5
    %v8051 = vor.u32 %v8047, %v8050
    %v8052 = vrot.slane %v8051, 4
    %v8054 = vshll.u32 %v7942, 16
    %v8056 = vrot.slane %v8054, 5
    %v8057 = vsel %vm7959, %v8052, %v8056
    %v8059 = vshrl.u32 %v7943, 16
    %v8061 = vrot.slane %v8059, 4
    %v8062 = vshll.u32 %v7943, 16
    %v8064 = vrot.slane %v8062, 5
    %v8065 = vor.u32 %v8061, %v8064
    %v8066 = vrot.slane %v8065, 4
    %v8068 = vshll.u32 %v7944, 16
    %v8070 = vrot.slane %v8068, 5
    %v8071 = vsel %vm7959, %v8066, %v8070
    %v8073 = vshrl.u32 %v7945, 16
    %v8075 = vrot.slane %v8073, 4
    %v8076 = vshll.u32 %v7945, 16
    %v8078 = vrot.slane %v8076, 5
    %v8079 = vor.u32 %v8075, %v8078
    %v8080 = vrot.slane %v8079, 4
    %v8082 = vshll.u32 %v7946, 16
    %v8084 = vrot.slane %v8082, 5
    %v8085 = vsel %vm7959, %v8080, %v8084
    %v8087 = vshrl.u32 %v7947, 16
    %v8089 = vrot.slane %v8087, 4
    %v8090 = vshll.u32 %v7947, 16
    %v8092 = vrot.slane %v8090, 5
    %v8093 = vor.u32 %v8089, %v8092
    %v8094 = vrot.slane %v8093, 4
    %v8096 = vshll.u32 %v7948, 16
    %v8098 = vrot.slane %v8096, 5
    %v8099 = vsel %vm7959, %v8094, %v8098
    %v8101 = vshrl.u32 %v7949, 16
    %v8103 = vrot.slane %v8101, 4
    %v8104 = vshll.u32 %v7949, 16
    %v8106 = vrot.slane %v8104, 5
    %v8107 = vor.u32 %v8103, %v8106
    %v8108 = vrot.slane %v8107, 4
    %v8110 = vshll.u32 %v7950, 16
    %v8112 = vrot.slane %v8110, 5
    %v8113 = vsel %vm7959, %v8108, %v8112
    %v8115 = vshrl.u32 %v7951, 16
    %v8117 = vrot.slane %v8115, 4
    %v8118 = vshll.u32 %v7951, 16
    %v8120 = vrot.slane %v8118, 5
    %v8121 = vor.u32 %v8117, %v8120
    %v8122 = vrot.slane %v8121, 4
    %v8124 = vshll.u32 %v7952, 16
    %v8126 = vrot.slane %v8124, 5
    %v8127 = vsel %vm7959, %v8122, %v8126
    %v8129 = vshrl.u32 %v7953, 16
    %v8131 = vrot.slane %v8129, 4
    %v8132 = vshll.u32 %v7953, 16
    %v8134 = vrot.slane %v8132, 5
    %v8135 = vor.u32 %v8131, %v8134
    %v8136 = vrot.slane %v8135, 4
    %v8138 = vshll.u32 %v7954, 16
    %v8140 = vrot.slane %v8138, 5
    %v8141 = vsel %vm7959, %v8136, %v8140
    %v8143 = vshrl.u32 %v7955, 16
    %v8145 = vrot.slane %v8143, 4
    %v8146 = vshll.u32 %v7955, 16
    %v8148 = vrot.slane %v8146, 5
    %v8149 = vor.u32 %v8145, %v8148
    %v8150 = vrot.slane %v8149, 4
    %v8152 = vshll.u32 %v7956, 16
    %v8154 = vrot.slane %v8152, 5
    %v8155 = vsel %vm7959, %v8150, %v8154
    %vm8156 = vcmask 1042432
    %vm8157 = vcmask 1046532
    %vm8158 = vmor %vm8156, %vm8157
    %v8159 = vrot.slane %v7929, 5
    %v8160 = vrot.slane %v8159, 4
    %v8161 = vrot.slane %v7930, 5
    %v8162 = vsel %vm8158, %v8160, %v8161
    %v8163 = vrot.slane %v7931, 5
    %v8164 = vrot.slane %v8163, 4
    %v8165 = vrot.slane %v7932, 5
    %v8166 = vsel %vm8158, %v8164, %v8165
    %v8167 = vrot.slane %v7933, 5
    %v8168 = vrot.slane %v8167, 4
    %v8169 = vrot.slane %v7934, 5
    %v8170 = vsel %vm8158, %v8168, %v8169
    %v8171 = vrot.slane %v7935, 5
    %v8172 = vrot.slane %v8171, 4
    %v8173 = vrot.slane %v7936, 5
    %v8174 = vsel %vm8158, %v8172, %v8173
    %v8175 = vrot.slane %v7937, 5
    %v8176 = vrot.slane %v8175, 4
    %v8177 = vrot.slane %v7938, 5
    %v8178 = vsel %vm8158, %v8176, %v8177
    %v8179 = vrot.slane %v7939, 5
    %v8180 = vrot.slane %v8179, 4
    %v8181 = vrot.slane %v7940, 5
    %v8182 = vsel %vm8158, %v8180, %v8181
    %v8183 = vrot.slane %v7941, 5
    %v8184 = vrot.slane %v8183, 4
    %v8185 = vrot.slane %v7942, 5
    %v8186 = vsel %vm8158, %v8184, %v8185
    %v8187 = vrot.slane %v7943, 5
    %v8188 = vrot.slane %v8187, 4
    %v8189 = vrot.slane %v7944, 5
    %v8190 = vsel %vm8158, %v8188, %v8189
    %v8191 = vrot.slane %v7945, 5
    %v8192 = vrot.slane %v8191, 4
    %v8193 = vrot.slane %v7946, 5
    %v8194 = vsel %vm8158, %v8192, %v8193
    %v8195 = vrot.slane %v7947, 5
    %v8196 = vrot.slane %v8195, 4
    %v8197 = vrot.slane %v7948, 5
    %v8198 = vsel %vm8158, %v8196, %v8197
    %v8199 = vrot.slane %v7949, 5
    %v8200 = vrot.slane %v8199, 4
    %v8201 = vrot.slane %v7950, 5
    %v8202 = vsel %vm8158, %v8200, %v8201
    %v8203 = vrot.slane %v7951, 5
    %v8204 = vrot.slane %v8203, 4
    %v8205 = vrot.slane %v7952, 5
    %v8206 = vsel %vm8158, %v8204, %v8205
    %v8207 = vrot.slane %v7953, 5
    %v8208 = vrot.slane %v8207, 4
    %v8209 = vrot.slane %v7954, 5
    %v8210 = vsel %vm8158, %v8208, %v8209
    %v8211 = vrot.slane %v7955, 5
    %v8212 = vrot.slane %v8211, 4
    %v8213 = vrot.slane %v7956, 5
    %v8214 = vsel %vm8158, %v8212, %v8213
    %v8215 = vpack.c.b16 %v7905, %v7903
    %v8216 = vpack.c.b16 %v7909, %v7907
    %v8217 = vpack.c.b16 %v7913, %v7911
    %v8218 = vpack.c.b16 %v7919, %v7917
    %v8219 = vpack.c.b16 %v7923, %v7921
    %v8220 = vpack.c.b16 %v7927, %v7925
    %v8221 = vunpack.c.l.b16 %v7973
    %v8222 = vunpack.c.l.b16 %v7987
    %v8223 = vunpack.c.l.b16 %v8001
    %v8224 = vunpack.c.l.b16 %v8015
    %v8225 = vunpack.c.l.b16 %v8029
    %v8226 = vunpack.c.l.b16 %v8043
    %v8227 = vunpack.c.l.b16 %v8057
    %v8228 = vunpack.c.l.b16 %v8071
    %v8229 = vunpack.c.l.b16 %v8085
    %v8230 = vunpack.c.l.b16 %v8099
    %v8231 = vunpack.c.l.b16 %v8113
    %v8232 = vunpack.c.l.b16 %v8127
    %v8233 = vunpack.c.l.b16 %v8141
    %v8234 = vunpack.c.l.b16 %v8155
    %v8235 = vpack.c.b16 %v8221, %v8221
    %v8236 = vpack.c.b16 %v8223, %v8222
    %v8237 = vpack.c.b16 %v8225, %v8224
    %v8238 = vpack.c.b16 %v8227, %v8226
    %v8239 = vpack.c.b16 %v8228, %v8228
    %v8240 = vpack.c.b16 %v8230, %v8229
    %v8241 = vpack.c.b16 %v8232, %v8231
    %v8242 = vpack.c.b16 %v8234, %v8233
    %8243 = vrot.lane.b32.xlu0 %v8235, 64
    %v8244 = vpop.permute.xlu0 %8243
    %8245 = vrot.lane.b32.xlu0 %v8236, 64
    %v8246 = vpop.permute.xlu0 %8245
    %8247 = vrot.lane.b32.xlu0 %v8237, 64
    %v8248 = vpop.permute.xlu0 %8247
    %8249 = vrot.lane.b32.xlu0 %v8238, 64
    %v8250 = vpop.permute.xlu0 %8249
    %8251 = vrot.lane.b32.xlu0 %v8239, 64
    %v8252 = vpop.permute.xlu0 %8251
    %8253 = vrot.lane.b32.xlu0 %v8240, 64
    %v8254 = vpop.permute.xlu0 %8253
    %8255 = vrot.lane.b32.xlu0 %v8241, 64
    %v8256 = vpop.permute.xlu0 %8255
    %8257 = vrot.lane.b32.xlu0 %v8242, 64
    %v8258 = vpop.permute.xlu0 %8257
    %v8259 = vunpack.c.l.b16 %v8162
    %v8260 = vunpack.c.l.b16 %v8166
    %v8261 = vunpack.c.l.b16 %v8170
    %v8262 = vunpack.c.l.b16 %v8174
    %v8263 = vunpack.c.l.b16 %v8178
    %v8264 = vunpack.c.l.b16 %v8182
    %v8265 = vunpack.c.l.b16 %v8186
    %v8266 = vunpack.c.l.b16 %v8190
    %v8267 = vunpack.c.l.b16 %v8194
    %v8268 = vunpack.c.l.b16 %v8198
    %v8269 = vunpack.c.l.b16 %v8202
    %v8270 = vunpack.c.l.b16 %v8206
    %v8271 = vunpack.c.l.b16 %v8210
    %v8272 = vunpack.c.l.b16 %v8214
    %v8273 = vpack.c.b16 %v8259, %v8259
    %v8274 = vpack.c.b16 %v8261, %v8260
    %v8275 = vpack.c.b16 %v8263, %v8262
    %v8276 = vpack.c.b16 %v8265, %v8264
    %v8277 = vpack.c.b16 %v8266, %v8266
    %v8278 = vpack.c.b16 %v8268, %v8267
    %v8279 = vpack.c.b16 %v8270, %v8269
    %v8280 = vpack.c.b16 %v8272, %v8271
    %v8282 = vsel %vm3699, %v7929, %v8244
    %v8286 = vsel %vm3699, %v8215, %v8246
    %v8290 = vsel %vm3699, %v8216, %v8248
    %v8294 = vsel %vm3699, %v8217, %v8250
    %v8297 = vsel %vm3699, %v7943, %v8252
    %v8301 = vsel %vm3699, %v8218, %v8254
    %v8305 = vsel %vm3699, %v8219, %v8256
    %v8309 = vsel %vm3699, %v8220, %v8258
    %v8313 = vunpack.c.l.b16 %v7878
    %v8314 = vunpack.c.h.b16 %v7878
    %v8315 = vunpack.c.l.b16 %v7886
    %v8316 = vunpack.c.h.b16 %v7886
    %v8317 = vpack.c.b16 %v8313, %v8313
    %v8318 = vpack.c.b16 %v8314, %v8314
    %v8319 = vpack.c.b16 %v8315, %v8315
    %v8320 = vpack.c.b16 %v8316, %v8316
    %v8322 = vshrl.u32 %v8317, 16
    %v8324 = vrot.slane %v8322, 4
    %v8325 = vshll.u32 %v8317, 16
    %v8327 = vrot.slane %v8325, 5
    %v8328 = vor.u32 %v8324, %v8327
    %v8329 = vrot.slane %v8328, 4
    %v8331 = vshll.u32 %v8318, 16
    %v8333 = vrot.slane %v8331, 5
    %v8334 = vsel %vm7959, %v8329, %v8333
    %v8336 = vshrl.u32 %v8319, 16
    %v8338 = vrot.slane %v8336, 4
    %v8339 = vshll.u32 %v8319, 16
    %v8341 = vrot.slane %v8339, 5
    %v8342 = vor.u32 %v8338, %v8341
    %v8343 = vrot.slane %v8342, 4
    %v8345 = vshll.u32 %v8320, 16
    %v8347 = vrot.slane %v8345, 5
    %v8348 = vsel %vm7959, %v8343, %v8347
    %v8349 = vrot.slane %v8317, 5
    %v8350 = vrot.slane %v8349, 4
    %v8351 = vrot.slane %v8318, 5
    %v8352 = vsel %vm8158, %v8350, %v8351
    %v8353 = vrot.slane %v8319, 5
    %v8354 = vrot.slane %v8353, 4
    %v8355 = vrot.slane %v8320, 5
    %v8356 = vsel %vm8158, %v8354, %v8355
    %v8357 = vpack.c.b16 %v7903, %v7901
    %v8358 = vpack.c.b16 %v7907, %v7905
    %v8359 = vpack.c.b16 %v7911, %v7909
    %v8360 = vpack.c.b16 %v8313, %v7913
    %v8361 = vpack.c.b16 %v7917, %v7915
    %v8362 = vpack.c.b16 %v7921, %v7919
    %v8363 = vpack.c.b16 %v7925, %v7923
    %v8364 = vpack.c.b16 %v8315, %v7927
    %v8365 = vunpack.c.l.b16 %v8334
    %v8366 = vunpack.c.l.b16 %v8348
    %v8367 = vpack.c.b16 %v8222, %v8221
    %v8368 = vpack.c.b16 %v8224, %v8223
    %v8369 = vpack.c.b16 %v8226, %v8225
    %v8370 = vpack.c.b16 %v8365, %v8227
    %v8371 = vpack.c.b16 %v8229, %v8228
    %v8372 = vpack.c.b16 %v8231, %v8230
    %v8373 = vpack.c.b16 %v8233, %v8232
    %v8374 = vpack.c.b16 %v8366, %v8234
    %8375 = vrot.lane.b32.xlu0 %v8367, 64
    %v8376 = vpop.permute.xlu0 %8375
    %8377 = vrot.lane.b32.xlu0 %v8368, 64
    %v8378 = vpop.permute.xlu0 %8377
    %8379 = vrot.lane.b32.xlu0 %v8369, 64
    %v8380 = vpop.permute.xlu0 %8379
    %8381 = vrot.lane.b32.xlu0 %v8370, 64
    %v8382 = vpop.permute.xlu0 %8381
    %8383 = vrot.lane.b32.xlu0 %v8371, 64
    %v8384 = vpop.permute.xlu0 %8383
    %8385 = vrot.lane.b32.xlu0 %v8372, 64
    %v8386 = vpop.permute.xlu0 %8385
    %8387 = vrot.lane.b32.xlu0 %v8373, 64
    %v8388 = vpop.permute.xlu0 %8387
    %8389 = vrot.lane.b32.xlu0 %v8374, 64
    %v8390 = vpop.permute.xlu0 %8389
    %v8391 = vunpack.c.l.b16 %v8352
    %v8392 = vunpack.c.l.b16 %v8356
    %v8393 = vpack.c.b16 %v8260, %v8259
    %v8394 = vpack.c.b16 %v8262, %v8261
    %v8395 = vpack.c.b16 %v8264, %v8263
    %v8396 = vpack.c.b16 %v8391, %v8265
    %v8397 = vpack.c.b16 %v8267, %v8266
    %v8398 = vpack.c.b16 %v8269, %v8268
    %v8399 = vpack.c.b16 %v8271, %v8270
    %v8400 = vpack.c.b16 %v8392, %v8272
    %v8403 = vsel %vm3699, %v8357, %v8376
    %v8407 = vsel %vm3699, %v8358, %v8378
    %v8411 = vsel %vm3699, %v8359, %v8380
    %v8415 = vsel %vm3699, %v8360, %v8382
    %v8419 = vsel %vm3699, %v8361, %v8384
    %v8423 = vsel %vm3699, %v8362, %v8386
    %v8427 = vsel %vm3699, %v8363, %v8388
    %v8431 = vsel %vm3699, %v8364, %v8390
    %v8457 = vunpack.c.l.b16 %v7221
    %v8458 = vunpack.c.l.b16 %v7222
    %v8459 = vunpack.c.l.b16 %v7223
    %v8460 = vunpack.c.l.b16 %v7224
    %v8461 = vunpack.c.l.b16 %v7225
    %v8462 = vunpack.c.l.b16 %v7226
    %v8463 = vunpack.c.l.b16 %v7227
    %v8464 = vunpack.c.l.b16 %v7228
    %v8465 = vunpack.c.l.b16 %v7229
    %v8466 = vunpack.c.l.b16 %v7230
    %v8467 = vunpack.c.l.b16 %v7231
    %v8468 = vunpack.c.l.b16 %v7232
    %v8469 = vunpack.c.l.b16 %v7233
    %v8470 = vunpack.c.l.b16 %v7234
    %v8471 = vunpack.c.l.b16 %v7235
    %v8472 = vunpack.c.l.b16 %v7236
    %v8473 = vunpack.c.l.b16 %v7237
    %v8474 = vunpack.c.l.b16 %v7238
    %v8475 = vunpack.c.l.b16 %v7239
    %v8476 = vunpack.c.l.b16 %v7240
    %v8477 = vunpack.c.l.b16 %v7241
    %v8478 = vunpack.c.l.b16 %v7242
    %v8479 = vunpack.c.l.b16 %v7243
    %v8480 = vunpack.c.l.b16 %v7244
    %v8481 = vpack.c.b16 %v8458, %v8457
    %v8482 = vpack.c.b16 %v8460, %v8459
    %v8483 = vpack.c.b16 %v8462, %v8461
    %v8484 = vpack.c.b16 %v8464, %v8463
    %v8485 = vpack.c.b16 %v8466, %v8465
    %v8486 = vpack.c.b16 %v8468, %v8467
    %v8487 = vpack.c.b16 %v8470, %v8469
    %v8488 = vpack.c.b16 %v8472, %v8471
    %v8489 = vpack.c.b16 %v8474, %v8473
    %v8490 = vpack.c.b16 %v8476, %v8475
    %v8491 = vpack.c.b16 %v8478, %v8477
    %v8492 = vpack.c.b16 %v8480, %v8479
    %v8506 = vsel %vm3699, %v8393, 0
    %v8509 = vsel %vm3699, %v8394, 0
    %v8512 = vsel %vm3699, %v8395, 0
    %v8515 = vsel %vm3699, %v8396, 0
    %v8518 = vsel %vm3699, %v8397, 0
    %v8521 = vsel %vm3699, %v8398, 0
    %v8524 = vsel %vm3699, %v8399, 0
    %v8527 = vsel %vm3699, %v8400, 0
    %8529 = vmatprep.subr.bf16.mxu0 0
    %8530 = vmatpush1.bf16.msra.mxu0 %v8481
    %8531 = vmatprep.subr.bf16.mxu0 0
    %8532 = vmatpush1.bf16.msra.mxu0 %v8482
    %8533 = vmatprep.subr.bf16.mxu0 0
    %8534 = vmatpush1.bf16.msra.mxu0 %v8483
    %8535 = vmatprep.subr.bf16.mxu0 0
    %8536 = vmatpush1.bf16.msra.mxu0 %v8484
    %8537 = vmatprep.subr.bf16.mxu0 0
    %8538 = vmatpush1.bf16.msra.mxu0 %v8485
    %8539 = vmatprep.subr.bf16.mxu0 0
    %8540 = vmatpush1.bf16.msra.mxu0 %v8486
    %8541 = vmatprep.subr.bf16.mxu0 0
    %8542 = vmatpush1.bf16.msra.mxu0 %v8487
    %8543 = vmatprep.subr.bf16.mxu0 0
    %8544 = vmatpush1.bf16.msra.mxu0 %v8488
    %8545 = vmatprep.subr.bf16.mxu0 0
    %8546 = vmatpush1.bf16.msra.mxu0 %v8489
    %8547 = vmatprep.subr.bf16.mxu0 0
    %8548 = vmatpush1.bf16.msra.mxu0 %v8490
    %8549 = vmatprep.subr.bf16.mxu0 0
    %8550 = vmatpush1.bf16.msra.mxu0 %v8491
    %8551 = vmatprep.subr.bf16.mxu0 0
    %8552 = vmatpush1.bf16.msra.mxu0 %v8492
    %8553 = vmatprep.subr.bf16.mxu0 0
    %8554 = vmatpush1.bf16.msra.mxu0 0
    %8555 = vmatprep.subr.bf16.mxu0 0
    %8556 = vmatpush1.bf16.msra.mxu0 0
    %8557 = vmatprep.subr.bf16.mxu0 0
    %8558 = vmatpush1.bf16.msra.mxu0 0
    %8559 = vmatprep.subr.bf16.mxu0 0
    %8560 = vmatpush1.bf16.msra.mxu0 0
    %8561 = vmatprep.mubr.bf16.mxu0 %v8506
    %8562 = vmatmul.mubr.bf16.gmra.mrb[0].mxu0 %v8403
    %v8563 = vpop.f32.mrb[0].mxu0
    %v8564 = vadd.f32 0.0, %v8563
    %v8565 = vpop.f32.mrb[0].mxu0
    %v8566 = vpop.f32.mrb[0].mxu0
    %v8567 = vadd.f32 0.0, %v8566
    %v8568 = vpop.f32.mrb[0].mxu0
    %8569 = vmatprep.mubr.bf16.mxu0 %v8509
    %8570 = vmatmul.mubr.bf16.gmra.mrb[0].mxu0 %v8407
    %v8571 = vpop.f32.mrb[0].mxu0
    %v8572 = vadd.f32 0.0, %v8571
    %v8573 = vpop.f32.mrb[0].mxu0
    %v8574 = vpop.f32.mrb[0].mxu0
    %v8575 = vadd.f32 0.0, %v8574
    %v8576 = vpop.f32.mrb[0].mxu0
    %8577 = vmatprep.mubr.bf16.mxu0 %v8512
    %8578 = vmatmul.mubr.bf16.gmra.mrb[0].mxu0 %v8411
    %v8579 = vpop.f32.mrb[0].mxu0
    %v8580 = vadd.f32 0.0, %v8579
    %v8581 = vpop.f32.mrb[0].mxu0
    %v8582 = vpop.f32.mrb[0].mxu0
    %v8583 = vadd.f32 0.0, %v8582
    %v8584 = vpop.f32.mrb[0].mxu0
    %8585 = vmatprep.mubr.bf16.mxu0 %v8515
    %8586 = vmatmul.mubr.bf16.gmra.mrb[0].mxu0 %v8415
    %v8587 = vpop.f32.mrb[0].mxu0
    %v8588 = vadd.f32 0.0, %v8587
    %v8589 = vpop.f32.mrb[0].mxu0
    %v8590 = vpop.f32.mrb[0].mxu0
    %v8591 = vadd.f32 0.0, %v8590
    %v8592 = vpop.f32.mrb[0].mxu0
    %8593 = vmatprep.mubr.bf16.mxu0 %v8518
    %8594 = vmatmul.mubr.bf16.gmra.mrb[0].mxu0 %v8419
    %v8595 = vpop.f32.mrb[0].mxu0
    %v8596 = vadd.f32 0.0, %v8595
    %v8597 = vpop.f32.mrb[0].mxu0
    %v8598 = vpop.f32.mrb[0].mxu0
    %v8599 = vadd.f32 0.0, %v8598
    %v8600 = vpop.f32.mrb[0].mxu0
    %8601 = vmatprep.mubr.bf16.mxu0 %v8521
    %8602 = vmatmul.mubr.bf16.gmra.mrb[0].mxu0 %v8423
    %v8603 = vpop.f32.mrb[0].mxu0
    %v8604 = vadd.f32 0.0, %v8603
    %v8605 = vpop.f32.mrb[0].mxu0
    %v8606 = vpop.f32.mrb[0].mxu0
    %v8607 = vadd.f32 0.0, %v8606
    %v8608 = vpop.f32.mrb[0].mxu0
    %8609 = vmatprep.mubr.bf16.mxu0 %v8524
    %8610 = vmatmul.mubr.bf16.gmra.mrb[0].mxu0 %v8427
    %v8611 = vpop.f32.mrb[0].mxu0
    %v8612 = vadd.f32 0.0, %v8611
    %v8613 = vpop.f32.mrb[0].mxu0
    %v8614 = vpop.f32.mrb[0].mxu0
    %v8615 = vadd.f32 0.0, %v8614
    %v8616 = vpop.f32.mrb[0].mxu0
    %8617 = vmatprep.mubr.bf16.mxu0 %v8527
    %8618 = vmatmul.mubr.bf16.gmra.mrb[0].mxu0 %v8431
    %v8619 = vpop.f32.mrb[0].mxu0
    %v8620 = vadd.f32 0.0, %v8619
    %v8621 = vpop.f32.mrb[0].mxu0
    %v8622 = vpop.f32.mrb[0].mxu0
    %v8623 = vadd.f32 0.0, %v8622
    %v8624 = vpop.f32.mrb[0].mxu0
    %8625 = vdwg.mxu0
    %v8650 = vunpack.c.l.b16 %v7197
    %v8651 = vunpack.c.l.b16 %v7198
    %v8652 = vunpack.c.l.b16 %v7199
    %v8653 = vunpack.c.l.b16 %v7200
    %v8654 = vunpack.c.l.b16 %v7201
    %v8655 = vunpack.c.l.b16 %v7202
    %v8656 = vunpack.c.l.b16 %v7203
    %v8657 = vunpack.c.l.b16 %v7204
    %v8658 = vunpack.c.l.b16 %v7205
    %v8659 = vunpack.c.l.b16 %v7206
    %v8660 = vunpack.c.l.b16 %v7207
    %v8661 = vunpack.c.l.b16 %v7208
    %v8662 = vunpack.c.l.b16 %v7209
    %v8663 = vunpack.c.l.b16 %v7210
    %v8664 = vunpack.c.l.b16 %v7211
    %v8665 = vunpack.c.l.b16 %v7212
    %v8666 = vunpack.c.l.b16 %v7213
    %v8667 = vunpack.c.l.b16 %v7214
    %v8668 = vunpack.c.l.b16 %v7215
    %v8669 = vunpack.c.l.b16 %v7216
    %v8670 = vunpack.c.l.b16 %v7217
    %v8671 = vunpack.c.l.b16 %v7218
    %v8672 = vunpack.c.l.b16 %v7219
    %v8673 = vunpack.c.l.b16 %v7220
    %v8674 = vpack.c.b16 %v8651, %v8650
    %v8675 = vpack.c.b16 %v8653, %v8652
    %v8676 = vpack.c.b16 %v8655, %v8654
    %v8677 = vpack.c.b16 %v8657, %v8656
    %v8678 = vpack.c.b16 %v8659, %v8658
    %v8679 = vpack.c.b16 %v8661, %v8660
    %v8680 = vpack.c.b16 %v8663, %v8662
    %v8681 = vpack.c.b16 %v8665, %v8664
    %v8682 = vpack.c.b16 %v8667, %v8666
    %v8683 = vpack.c.b16 %v8669, %v8668
    %v8684 = vpack.c.b16 %v8671, %v8670
    %v8685 = vpack.c.b16 %v8673, %v8672
    %v8699 = vsel %vm3699, %v8273, 0
    %v8702 = vsel %vm3699, %v8274, 0
    %v8705 = vsel %vm3699, %v8275, 0
    %v8708 = vsel %vm3699, %v8276, 0
    %v8711 = vsel %vm3699, %v8277, 0
    %v8714 = vsel %vm3699, %v8278, 0
    %v8717 = vsel %vm3699, %v8279, 0
    %v8720 = vsel %vm3699, %v8280, 0
    %8722 = vmatprep.subr.bf16.mxu0 0
    %8723 = vmatpush1.bf16.msra.mxu0 %v8674
    %8724 = vmatprep.subr.bf16.mxu0 0
    %8725 = vmatpush1.bf16.msra.mxu0 %v8675
    %8726 = vmatprep.subr.bf16.mxu0 0
    %8727 = vmatpush1.bf16.msra.mxu0 %v8676
    %8728 = vmatprep.subr.bf16.mxu0 0
    %8729 = vmatpush1.bf16.msra.mxu0 %v8677
    %8730 = vmatprep.subr.bf16.mxu0 0
    %8731 = vmatpush1.bf16.msra.mxu0 %v8678
    %8732 = vmatprep.subr.bf16.mxu0 0
    %8733 = vmatpush1.bf16.msra.mxu0 %v8679
    %8734 = vmatprep.subr.bf16.mxu0 0
    %8735 = vmatpush1.bf16.msra.mxu0 %v8680
    %8736 = vmatprep.subr.bf16.mxu0 0
    %8737 = vmatpush1.bf16.msra.mxu0 %v8681
    %8738 = vmatprep.subr.bf16.mxu0 0
    %8739 = vmatpush1.bf16.msra.mxu0 %v8682
    %8740 = vmatprep.subr.bf16.mxu0 0
    %8741 = vmatpush1.bf16.msra.mxu0 %v8683
    %8742 = vmatprep.subr.bf16.mxu0 0
    %8743 = vmatpush1.bf16.msra.mxu0 %v8684
    %8744 = vmatprep.subr.bf16.mxu0 0
    %8745 = vmatpush1.bf16.msra.mxu0 %v8685
    %8746 = vmatprep.subr.bf16.mxu0 0
    %8747 = vmatpush1.bf16.msra.mxu0 0
    %8748 = vmatprep.subr.bf16.mxu0 0
    %8749 = vmatpush1.bf16.msra.mxu0 0
    %8750 = vmatprep.subr.bf16.mxu0 0
    %8751 = vmatpush1.bf16.msra.mxu0 0
    %8752 = vmatprep.subr.bf16.mxu0 0
    %8753 = vmatpush1.bf16.msra.mxu0 0
    %8754 = vmatprep.mubr.bf16.mxu0 %v8699
    %8755 = vmatmul.mubr.bf16.gmra.mrb[0].mxu0 %v8282
    %v8756 = vpop.f32.mrb[0].mxu0
    %v8757 = vadd.f32 %v8564, %v8756
    %v8758 = vpop.f32.mrb[0].mxu0
    %v8759 = vpop.f32.mrb[0].mxu0
    %v8760 = vadd.f32 %v8567, %v8759
    %v8761 = vpop.f32.mrb[0].mxu0
    %8762 = vmatprep.mubr.bf16.mxu0 %v8702
    %8763 = vmatmul.mubr.bf16.gmra.mrb[0].mxu0 %v8286
    %v8764 = vpop.f32.mrb[0].mxu0
    %v8765 = vadd.f32 %v8572, %v8764
    %v8766 = vpop.f32.mrb[0].mxu0
    %v8767 = vpop.f32.mrb[0].mxu0
    %v8768 = vadd.f32 %v8575, %v8767
    %v8769 = vpop.f32.mrb[0].mxu0
    %8770 = vmatprep.mubr.bf16.mxu0 %v8705
    %8771 = vmatmul.mubr.bf16.gmra.mrb[0].mxu0 %v8290
    %v8772 = vpop.f32.mrb[0].mxu0
    %v8773 = vadd.f32 %v8580, %v8772
    %v8774 = vpop.f32.mrb[0].mxu0
    %v8775 = vpop.f32.mrb[0].mxu0
    %v8776 = vadd.f32 %v8583, %v8775
    %v8777 = vpop.f32.mrb[0].mxu0
    %8778 = vmatprep.mubr.bf16.mxu0 %v8708
    %8779 = vmatmul.mubr.bf16.gmra.mrb[0].mxu0 %v8294
    %v8780 = vpop.f32.mrb[0].mxu0
    %v8781 = vadd.f32 %v8588, %v8780
    %v8782 = vpop.f32.mrb[0].mxu0
    %v8783 = vpop.f32.mrb[0].mxu0
    %v8784 = vadd.f32 %v8591, %v8783
    %v8785 = vpop.f32.mrb[0].mxu0
    %8786 = vmatprep.mubr.bf16.mxu0 %v8711
    %8787 = vmatmul.mubr.bf16.gmra.mrb[0].mxu0 %v8297
    %v8788 = vpop.f32.mrb[0].mxu0
    %v8789 = vadd.f32 %v8596, %v8788
    %v8790 = vpop.f32.mrb[0].mxu0
    %v8791 = vpop.f32.mrb[0].mxu0
    %v8792 = vadd.f32 %v8599, %v8791
    %v8793 = vpop.f32.mrb[0].mxu0
    %8794 = vmatprep.mubr.bf16.mxu0 %v8714
    %8795 = vmatmul.mubr.bf16.gmra.mrb[0].mxu0 %v8301
    %v8796 = vpop.f32.mrb[0].mxu0
    %v8797 = vadd.f32 %v8604, %v8796
    %v8798 = vpop.f32.mrb[0].mxu0
    %v8799 = vpop.f32.mrb[0].mxu0
    %v8800 = vadd.f32 %v8607, %v8799
    %v8801 = vpop.f32.mrb[0].mxu0
    %8802 = vmatprep.mubr.bf16.mxu0 %v8717
    %8803 = vmatmul.mubr.bf16.gmra.mrb[0].mxu0 %v8305
    %v8804 = vpop.f32.mrb[0].mxu0
    %v8805 = vadd.f32 %v8612, %v8804
    %v8806 = vpop.f32.mrb[0].mxu0
    %v8807 = vpop.f32.mrb[0].mxu0
    %v8808 = vadd.f32 %v8615, %v8807
    %v8809 = vpop.f32.mrb[0].mxu0
    %8810 = vmatprep.mubr.bf16.mxu0 %v8720
    %8811 = vmatmul.mubr.bf16.gmra.mrb[0].mxu0 %v8309
    %v8812 = vpop.f32.mrb[0].mxu0
    %v8813 = vadd.f32 %v8620, %v8812
    %v8814 = vpop.f32.mrb[0].mxu0
    %v8815 = vpop.f32.mrb[0].mxu0
    %v8816 = vadd.f32 %v8623, %v8815
    %v8817 = vpop.f32.mrb[0].mxu0
    %8818 = vdwg.mxu0
    %v8819 = vpack.c.b16 %v8365, %v8365
    %v8820 = vpack.c.b16 %v8366, %v8366
    %8821 = vrot.lane.b32.xlu0 %v8819, 64
    %v8822 = vpop.permute.xlu0 %8821
    %8823 = vrot.lane.b32.xlu0 %v8820, 64
    %v8824 = vpop.permute.xlu0 %8823
    %v8825 = vpack.c.b16 %v8391, %v8391
    %v8826 = vpack.c.b16 %v8392, %v8392
    %v8828 = vsel %vm3699, %v8317, %v8822
    %v8831 = vsel %vm3699, %v8319, %v8824
    %v8857 = vunpack.c.l.b16 %v7245
    %v8858 = vunpack.c.l.b16 %v7246
    %v8859 = vunpack.c.l.b16 %v7247
    %v8860 = vunpack.c.l.b16 %v7248
    %v8861 = vunpack.c.l.b16 %v7249
    %v8862 = vunpack.c.l.b16 %v7250
    %v8863 = vunpack.c.l.b16 %v7251
    %v8864 = vunpack.c.l.b16 %v7252
    %v8865 = vunpack.c.l.b16 %v7253
    %v8866 = vunpack.c.l.b16 %v7254
    %v8867 = vunpack.c.l.b16 %v7255
    %v8868 = vunpack.c.l.b16 %v7256
    %v8869 = vunpack.c.l.b16 %v7257
    %v8870 = vunpack.c.l.b16 %v7258
    %v8871 = vunpack.c.l.b16 %v7259
    %v8872 = vunpack.c.l.b16 %v7260
    %v8873 = vunpack.c.l.b16 %v7261
    %v8874 = vunpack.c.l.b16 %v7262
    %v8875 = vunpack.c.l.b16 %v7263
    %v8876 = vunpack.c.l.b16 %v7264
    %v8877 = vunpack.c.l.b16 %v7265
    %v8878 = vunpack.c.l.b16 %v7266
    %v8879 = vunpack.c.l.b16 %v7267
    %v8880 = vunpack.c.l.b16 %v7268
    %v8881 = vpack.c.b16 %v8858, %v8857
    %v8882 = vpack.c.b16 %v8860, %v8859
    %v8883 = vpack.c.b16 %v8862, %v8861
    %v8884 = vpack.c.b16 %v8864, %v8863
    %v8885 = vpack.c.b16 %v8866, %v8865
    %v8886 = vpack.c.b16 %v8868, %v8867
    %v8887 = vpack.c.b16 %v8870, %v8869
    %v8888 = vpack.c.b16 %v8872, %v8871
    %v8889 = vpack.c.b16 %v8874, %v8873
    %v8890 = vpack.c.b16 %v8876, %v8875
    %v8891 = vpack.c.b16 %v8878, %v8877
    %v8892 = vpack.c.b16 %v8880, %v8879
    %v8906 = vsel %vm3699, %v8825, 0
    %v8909 = vsel %vm3699, %v8826, 0
    %8911 = vmatprep.subr.bf16.mxu0 0
    %8912 = vmatpush1.bf16.msra.mxu0 %v8881
    %8913 = vmatprep.subr.bf16.mxu0 0
    %8914 = vmatpush1.bf16.msra.mxu0 %v8882
    %8915 = vmatprep.subr.bf16.mxu0 0
    %8916 = vmatpush1.bf16.msra.mxu0 %v8883
    %8917 = vmatprep.subr.bf16.mxu0 0
    %8918 = vmatpush1.bf16.msra.mxu0 %v8884
    %8919 = vmatprep.subr.bf16.mxu0 0
    %8920 = vmatpush1.bf16.msra.mxu0 %v8885
    %8921 = vmatprep.subr.bf16.mxu0 0
    %8922 = vmatpush1.bf16.msra.mxu0 %v8886
    %8923 = vmatprep.subr.bf16.mxu0 0
    %8924 = vmatpush1.bf16.msra.mxu0 %v8887
    %8925 = vmatprep.subr.bf16.mxu0 0
    %8926 = vmatpush1.bf16.msra.mxu0 %v8888
    %8927 = vmatprep.subr.bf16.mxu0 0
    %8928 = vmatpush1.bf16.msra.mxu0 %v8889
    %8929 = vmatprep.subr.bf16.mxu0 0
    %8930 = vmatpush1.bf16.msra.mxu0 %v8890
    %8931 = vmatprep.subr.bf16.mxu0 0
    %8932 = vmatpush1.bf16.msra.mxu0 %v8891
    %8933 = vmatprep.subr.bf16.mxu0 0
    %8934 = vmatpush1.bf16.msra.mxu0 %v8892
    %8935 = vmatprep.subr.bf16.mxu0 0
    %8936 = vmatpush1.bf16.msra.mxu0 0
    %8937 = vmatprep.subr.bf16.mxu0 0
    %8938 = vmatpush1.bf16.msra.mxu0 0
    %8939 = vmatprep.subr.bf16.mxu0 0
    %8940 = vmatpush1.bf16.msra.mxu0 0
    %8941 = vmatprep.subr.bf16.mxu0 0
    %8942 = vmatpush1.bf16.msra.mxu0 0
    %8943 = vmatprep.mubr.bf16.mxu0 %v8702
    %8944 = vmatmul.mubr.bf16.gmra.mrb[0].mxu0 %v8286
    %v8945 = vpop.f32.mrb[0].mxu0
    %v8946 = vadd.f32 0.0, %v8945
    %v8947 = vpop.f32.mrb[0].mxu0
    %v8948 = vpop.f32.mrb[0].mxu0
    %v8949 = vadd.f32 0.0, %v8948
    %v8950 = vpop.f32.mrb[0].mxu0
    %8951 = vmatprep.mubr.bf16.mxu0 %v8705
    %8952 = vmatmul.mubr.bf16.gmra.mrb[0].mxu0 %v8290
    %v8953 = vpop.f32.mrb[0].mxu0
    %v8954 = vadd.f32 0.0, %v8953
    %v8955 = vpop.f32.mrb[0].mxu0
    %v8956 = vpop.f32.mrb[0].mxu0
    %v8957 = vadd.f32 0.0, %v8956
    %v8958 = vpop.f32.mrb[0].mxu0
    %8959 = vmatprep.mubr.bf16.mxu0 %v8708
    %8960 = vmatmul.mubr.bf16.gmra.mrb[0].mxu0 %v8294
    %v8961 = vpop.f32.mrb[0].mxu0
    %v8962 = vadd.f32 0.0, %v8961
    %v8963 = vpop.f32.mrb[0].mxu0
    %v8964 = vpop.f32.mrb[0].mxu0
    %v8965 = vadd.f32 0.0, %v8964
    %v8966 = vpop.f32.mrb[0].mxu0
    %8967 = vmatprep.mubr.bf16.mxu0 %v8906
    %8968 = vmatmul.mubr.bf16.gmra.mrb[0].mxu0 %v8828
    %v8969 = vpop.f32.mrb[0].mxu0
    %v8970 = vadd.f32 0.0, %v8969
    %v8971 = vpop.f32.mrb[0].mxu0
    %v8972 = vpop.f32.mrb[0].mxu0
    %v8973 = vadd.f32 0.0, %v8972
    %v8974 = vpop.f32.mrb[0].mxu0
    %8975 = vmatprep.mubr.bf16.mxu0 %v8714
    %8976 = vmatmul.mubr.bf16.gmra.mrb[0].mxu0 %v8301
    %v8977 = vpop.f32.mrb[0].mxu0
    %v8978 = vadd.f32 0.0, %v8977
    %v8979 = vpop.f32.mrb[0].mxu0
    %v8980 = vpop.f32.mrb[0].mxu0
    %v8981 = vadd.f32 0.0, %v8980
    %v8982 = vpop.f32.mrb[0].mxu0
    %8983 = vmatprep.mubr.bf16.mxu0 %v8717
    %8984 = vmatmul.mubr.bf16.gmra.mrb[0].mxu0 %v8305
    %v8985 = vpop.f32.mrb[0].mxu0
    %v8986 = vadd.f32 0.0, %v8985
    %v8987 = vpop.f32.mrb[0].mxu0
    %v8988 = vpop.f32.mrb[0].mxu0
    %v8989 = vadd.f32 0.0, %v8988
    %v8990 = vpop.f32.mrb[0].mxu0
    %8991 = vmatprep.mubr.bf16.mxu0 %v8720
    %8992 = vmatmul.mubr.bf16.gmra.mrb[0].mxu0 %v8309
    %v8993 = vpop.f32.mrb[0].mxu0
    %v8994 = vadd.f32 0.0, %v8993
    %v8995 = vpop.f32.mrb[0].mxu0
    %v8996 = vpop.f32.mrb[0].mxu0
    %v8997 = vadd.f32 0.0, %v8996
    %v8998 = vpop.f32.mrb[0].mxu0
    %8999 = vmatprep.mubr.bf16.mxu0 %v8909
    %9000 = vmatmul.mubr.bf16.gmra.mrb[0].mxu0 %v8831
    %v9001 = vpop.f32.mrb[0].mxu0
    %v9002 = vadd.f32 0.0, %v9001
    %v9003 = vpop.f32.mrb[0].mxu0
    %v9004 = vpop.f32.mrb[0].mxu0
    %v9005 = vadd.f32 0.0, %v9004
    %v9006 = vpop.f32.mrb[0].mxu0
    %9007 = vdwg.mxu0
    %v9008 = vadd.f32 %v8757, %v8946
    %v9009 = vadd.f32 %v8760, %v8949
    %v9010 = vadd.f32 %v8765, %v8954
    %v9011 = vadd.f32 %v8768, %v8957
    %v9012 = vadd.f32 %v8773, %v8962
    %v9013 = vadd.f32 %v8776, %v8965
    %v9014 = vadd.f32 %v8781, %v8970
    %v9015 = vadd.f32 %v8784, %v8973
    %v9016 = vadd.f32 %v8789, %v8978
    %v9017 = vadd.f32 %v8792, %v8981
    %v9018 = vadd.f32 %v8797, %v8986
    %v9019 = vadd.f32 %v8800, %v8989
    %v9020 = vadd.f32 %v8805, %v8994
    %v9021 = vadd.f32 %v8808, %v8997
    %v9022 = vadd.f32 %v8813, %v9002
    %v9023 = vadd.f32 %v8816, %v9005
    %v9025 = vlaneseq
    %v9026 = vshrl.u32 %v9025, 7
    %v9027 = vsub.s32 0, %v9026
    %v9028 = vrot.slane %v7269, %v9027
    %v9030 = vadd.f32 %v9008, %v9028
    %v9031 = vadd.f32 %v9009, %v9028
    %v9032 = vadd.f32 %v9010, %v9028
    %v9033 = vadd.f32 %v9011, %v9028
    %v9034 = vadd.f32 %v9012, %v9028
    %v9035 = vadd.f32 %v9013, %v9028
    %v9036 = vadd.f32 %v9014, %v9028
    %v9037 = vadd.f32 %v9015, %v9028
    %v9038 = vadd.f32 %v9016, %v9028
    %v9039 = vadd.f32 %v9017, %v9028
    %v9040 = vadd.f32 %v9018, %v9028
    %v9041 = vadd.f32 %v9019, %v9028
    %v9042 = vadd.f32 %v9020, %v9028
    %v9043 = vadd.f32 %v9021, %v9028
    %v9044 = vadd.f32 %v9022, %v9028
    %v9045 = vadd.f32 %v9023, %v9028
    %v9046 = vmax.f32 %v9030, 0.0
    %v9047 = vmax.f32 %v9031, 0.0
    %v9048 = vmax.f32 %v9032, 0.0
    %v9049 = vmax.f32 %v9033, 0.0
    %v9050 = vmax.f32 %v9034, 0.0
    %v9051 = vmax.f32 %v9035, 0.0
    %v9052 = vmax.f32 %v9036, 0.0
    %v9053 = vmax.f32 %v9037, 0.0
    %v9054 = vmax.f32 %v9038, 0.0
    %v9055 = vmax.f32 %v9039, 0.0
    %v9056 = vmax.f32 %v9040, 0.0
    %v9057 = vmax.f32 %v9041, 0.0
    %v9058 = vmax.f32 %v9042, 0.0
    %v9059 = vmax.f32 %v9043, 0.0
    %v9060 = vmax.f32 %v9044, 0.0
    %v9061 = vmax.f32 %v9045, 0.0
    %v9062 = vpack.c.bf16 %v9046, %v9046
    %v9063 = vpack.c.bf16 %v9047, %v9047
    %v9064 = vpack.c.bf16 %v9048, %v9048
    %v9065 = vpack.c.bf16 %v9049, %v9049
    %v9066 = vpack.c.bf16 %v9050, %v9050
    %v9067 = vpack.c.bf16 %v9051, %v9051
    %v9068 = vpack.c.bf16 %v9052, %v9052
    %v9069 = vpack.c.bf16 %v9053, %v9053
    %v9070 = vpack.c.bf16 %v9054, %v9054
    %v9071 = vpack.c.bf16 %v9055, %v9055
    %v9072 = vpack.c.bf16 %v9056, %v9056
    %v9073 = vpack.c.bf16 %v9057, %v9057
    %v9074 = vpack.c.bf16 %v9058, %v9058
    %v9075 = vpack.c.bf16 %v9059, %v9059
    %v9076 = vpack.c.bf16 %v9060, %v9060
    %v9077 = vpack.c.bf16 %v9061, %v9061
    %v9078 = vld [vmem:[%s7] sm:$0xf]
    %v9079 = vld [vmem:[%s7 + $0x4] sm:$0xf]
    %v9080 = vld [vmem:[%s7 + $0x8] sm:$0xf]
    %v9081 = vld [vmem:[%s7 + $0xc] sm:$0xf]
    %v9082 = vld [vmem:[%s7 + $0x10] sm:$0xf]
    %v9083 = vld [vmem:[%s7 + $0x14] sm:$0xf]
    %v9084 = vld [vmem:[%s7 + $0x18] sm:$0xf]
    %v9085 = vld [vmem:[%s7 + $0x1c] sm:$0xf]
    %v9086 = vld [vmem:[%s7 + $0x20] sm:$0xf]
    %v9087 = vld [vmem:[%s7 + $0x24] sm:$0xf]
    %v9088 = vld [vmem:[%s7 + $0x28] sm:$0xf]
    %v9089 = vld [vmem:[%s7 + $0x2c] sm:$0xf]
    %v9090 = vld [vmem:[%s7 + $0x30] sm:$0xf]
    %v9091 = vld [vmem:[%s7 + $0x34] sm:$0xf]
    %v9092 = vld [vmem:[%s7 + $0x38] sm:$0xf]
    %v9093 = vld [vmem:[%s7 + $0x3c] sm:$0xf]
    %v9094 = vld [vmem:[%s7 + $0x40] sm:$0xf]
    %v9095 = vld [vmem:[%s7 + $0x44] sm:$0xf]
    %v9096 = vld [vmem:[%s7 + $0x48] sm:$0xf]
    %v9097 = vld [vmem:[%s7 + $0x4c] sm:$0xf]
    %v9098 = vld [vmem:[%s7 + $0x50] sm:$0xf]
    %v9099 = vld [vmem:[%s7 + $0x54] sm:$0xf]
    %v9100 = vld [vmem:[%s7 + $0x58] sm:$0xf]
    %v9101 = vld [vmem:[%s7 + $0x5c] sm:$0xf]
    %v9102 = vld [vmem:[%s7 + $0x60] sm:$0xf]
    %v9103 = vld [vmem:[%s7 + $0x64] sm:$0xf]
    %v9104 = vld [vmem:[%s7 + $0x68] sm:$0xf]
    %v9105 = vld [vmem:[%s7 + $0x6c] sm:$0xf]
    %v9106 = vld [vmem:[%s7 + $0x70] sm:$0xf]
    %v9107 = vld [vmem:[%s7 + $0x74] sm:$0xf]
    %v9108 = vld [vmem:[%s7 + $0x78] sm:$0xf]
    %v9109 = vld [vmem:[%s7 + $0x7c] sm:$0xf]
    %v9110 = vld [vmem:[%s7 + $0x80] sm:$0xf]
    %v9111 = vld [vmem:[%s7 + $0x84] sm:$0xf]
    %v9112 = vld [vmem:[%s7 + $0x88] sm:$0xf]
    %v9113 = vld [vmem:[%s7 + $0x8c] sm:$0xf]
    %v9114 = vld [vmem:[%s7 + $0x90] sm:$0xf]
    %v9115 = vld [vmem:[%s7 + $0x94] sm:$0xf]
    %v9116 = vld [vmem:[%s7 + $0x98] sm:$0xf]
    %v9117 = vld [vmem:[%s7 + $0x9c] sm:$0xf]
    %v9118 = vld [vmem:[%s7 + $0xa0] sm:$0xf]
    %v9119 = vld [vmem:[%s7 + $0xa4] sm:$0xf]
    %v9120 = vld [vmem:[%s7 + $0xa8] sm:$0xf]
    %v9121 = vld [vmem:[%s7 + $0xac] sm:$0xf]
    %v9122 = vld [vmem:[%s7 + $0xb0] sm:$0xf]
    %v9123 = vld [vmem:[%s7 + $0xb4] sm:$0xf]
    %v9124 = vld [vmem:[%s7 + $0xb8] sm:$0xf]
    %v9125 = vld [vmem:[%s7 + $0xbc] sm:$0xf]
    %v9126 = vld [vmem:[%s7 + $0xc0] sm:$0xf]
    %v9127 = vld [vmem:[%s7 + $0xc4] sm:$0xf]
    %v9128 = vld [vmem:[%s7 + $0xc8] sm:$0xf]
    %v9129 = vld [vmem:[%s7 + $0xcc] sm:$0xf]
    %v9130 = vld [vmem:[%s7 + $0xd0] sm:$0xf]
    %v9131 = vld [vmem:[%s7 + $0xd4] sm:$0xf]
    %v9132 = vld [vmem:[%s7 + $0xd8] sm:$0xf]
    %v9133 = vld [vmem:[%s7 + $0xdc] sm:$0xf]
    %v9134 = vld [vmem:[%s7 + $0xe0] sm:$0xf]
    %v9135 = vld [vmem:[%s7 + $0xe4] sm:$0xf]
    %v9136 = vld [vmem:[%s7 + $0xe8] sm:$0xf]
    %v9137 = vld [vmem:[%s7 + $0xec] sm:$0xf]
    %v9138 = vld [vmem:[%s7 + $0xf0] sm:$0xf]
    %v9139 = vld [vmem:[%s7 + $0xf4] sm:$0xf]
    %v9140 = vld [vmem:[%s7 + $0xf8] sm:$0xf]
    %v9141 = vld [vmem:[%s7 + $0xfc] sm:$0xf]
    %v9142 = vld [vmem:[%s7 + $0x100] sm:$0xf]
    %v9143 = vld [vmem:[%s7 + $0x104] sm:$0xf]
    %v9144 = vld [vmem:[%s7 + $0x108] sm:$0xf]
    %v9145 = vld [vmem:[%s7 + $0x10c] sm:$0xf]
    %v9146 = vld [vmem:[%s7 + $0x110] sm:$0xf]
    %v9147 = vld [vmem:[%s7 + $0x114] sm:$0xf]
    %v9148 = vld [vmem:[%s7 + $0x118] sm:$0xf]
    %v9149 = vld [vmem:[%s7 + $0x11c] sm:$0xf]
    %v9150 = vld [vmem:[%s7 + $0x120] sm:$0xf]
    %v9151 = vld [vmem:[%s7 + $0x124] sm:$0xf]
    %v9152 = vld [vmem:[%s7 + $0x128] sm:$0xf]
    %v9153 = vld [vmem:[%s7 + $0x12c] sm:$0xf]
    %v9154 = vld [vmem:[%s7 + $0x130] sm:$0xf]
    %v9155 = vld [vmem:[%s7 + $0x134] sm:$0xf]
    %v9156 = vld [vmem:[%s7 + $0x138] sm:$0xf]
    %v9157 = vld [vmem:[%s7 + $0x13c] sm:$0xf]
    %v9158 = vld [vmem:[%s7 + $0x140] sm:$0xf]
    %v9159 = vld [vmem:[%s7 + $0x144] sm:$0xf]
    %v9160 = vld [vmem:[%s7 + $0x148] sm:$0xf]
    %v9161 = vld [vmem:[%s7 + $0x14c] sm:$0xf]
    %v9162 = vld [vmem:[%s7 + $0x150] sm:$0xf]
    %v9163 = vld [vmem:[%s7 + $0x154] sm:$0xf]
    %v9164 = vld [vmem:[%s7 + $0x158] sm:$0xf]
    %v9165 = vld [vmem:[%s7 + $0x15c] sm:$0xf]
    %v9166 = vld [vmem:[%s7 + $0x160] sm:$0xf]
    %v9167 = vld [vmem:[%s7 + $0x164] sm:$0xf]
    %v9168 = vld [vmem:[%s7 + $0x168] sm:$0xf]
    %v9169 = vld [vmem:[%s7 + $0x16c] sm:$0xf]
    %v9170 = vld [vmem:[%s7 + $0x170] sm:$0xf]
    %v9171 = vld [vmem:[%s7 + $0x174] sm:$0xf]
    %v9172 = vld [vmem:[%s7 + $0x178] sm:$0xf]
    %v9173 = vld [vmem:[%s7 + $0x17c] sm:$0xf]
    %v9174 = vld [vmem:[%s7 + $0x180] sm:$0xf]
    %v9175 = vld [vmem:[%s7 + $0x184] sm:$0xf]
    %v9176 = vld [vmem:[%s7 + $0x188] sm:$0xf]
    %v9177 = vld [vmem:[%s7 + $0x18c] sm:$0xf]
    %v9178 = vld [vmem:[%s7 + $0x190] sm:$0xf]
    %v9179 = vld [vmem:[%s7 + $0x194] sm:$0xf]
    %v9180 = vld [vmem:[%s7 + $0x198] sm:$0xf]
    %v9181 = vld [vmem:[%s7 + $0x19c] sm:$0xf]
    %v9182 = vld [vmem:[%s7 + $0x1a0] sm:$0xf]
    %v9183 = vld [vmem:[%s7 + $0x1a4] sm:$0xf]
    %v9184 = vld [vmem:[%s7 + $0x1a8] sm:$0xf]
    %v9185 = vld [vmem:[%s7 + $0x1ac] sm:$0xf]
    %v9186 = vld [vmem:[%s7 + $0x1b0] sm:$0xf]
    %v9187 = vld [vmem:[%s7 + $0x1b4] sm:$0xf]
    %v9188 = vld [vmem:[%s7 + $0x1b8] sm:$0xf]
    %v9189 = vld [vmem:[%s7 + $0x1bc] sm:$0xf]
    %v9190 = vld [vmem:[%s7 + $0x1c0] sm:$0xf]
    %v9191 = vld [vmem:[%s7 + $0x1c4] sm:$0xf]
    %v9192 = vld [vmem:[%s7 + $0x1c8] sm:$0xf]
    %v9193 = vld [vmem:[%s7 + $0x1cc] sm:$0xf]
    %v9194 = vld [vmem:[%s7 + $0x1d0] sm:$0xf]
    %v9195 = vld [vmem:[%s7 + $0x1d4] sm:$0xf]
    %v9196 = vld [vmem:[%s7 + $0x1d8] sm:$0xf]
    %v9197 = vld [vmem:[%s7 + $0x1dc] sm:$0xf]
    %v9198 = vld [vmem:[%s7 + $0x1e0] sm:$0xf]
    %v9199 = vld [vmem:[%s7 + $0x1e4] sm:$0xf]
    %v9200 = vld [vmem:[%s7 + $0x1e8] sm:$0xf]
    %v9201 = vld [vmem:[%s7 + $0x1ec] sm:$0xf]
    %v9202 = vld [vmem:[%s7 + $0x1f0] sm:$0xf]
    %v9203 = vld [vmem:[%s7 + $0x1f4] sm:$0xf]
    %v9204 = vld [vmem:[%s7 + $0x1f8] sm:$0xf]
    %v9205 = vld [vmem:[%s7 + $0x1fc] sm:$0xf]
    %v9206 = vld [vmem:[%s7 + $0x200] sm:$0xf]
    %v9207 = vld [vmem:[%s7 + $0x204] sm:$0xf]
    %v9208 = vld [vmem:[%s7 + $0x208] sm:$0xf]
    %v9209 = vld [vmem:[%s7 + $0x20c] sm:$0xf]
    %v9210 = vld [vmem:[%s7 + $0x210] sm:$0xf]
    %v9211 = vld [vmem:[%s7 + $0x214] sm:$0xf]
    %v9212 = vld [vmem:[%s7 + $0x218] sm:$0xf]
    %v9213 = vld [vmem:[%s7 + $0x21c] sm:$0xf]
    %v9214 = vld [vmem:[%s7 + $0x220] sm:$0xf]
    %v9215 = vld [vmem:[%s7 + $0x224] sm:$0xf]
    %v9216 = vld [vmem:[%s7 + $0x228] sm:$0xf]
    %v9217 = vld [vmem:[%s7 + $0x22c] sm:$0xf]
    %v9218 = vld [vmem:[%s7 + $0x230] sm:$0xf]
    %v9219 = vld [vmem:[%s7 + $0x234] sm:$0xf]
    %v9220 = vld [vmem:[%s7 + $0x238] sm:$0xf]
    %v9221 = vld [vmem:[%s7 + $0x23c] sm:$0xf]
    %v9222 = vld [vmem:[%s8] sm:$0x1]
    %v9224 = vshrl.u32 %v9062, 16
    %v9226 = vrot.slane %v9224, 7
    %v9227 = vshll.u32 %v9062, 16
    %v9229 = vor.u32 %v9226, %v9227
    %v9231 = vshrl.u32 %v9063, 16
    %v9233 = vrot.slane %v9231, 7
    %v9234 = vshll.u32 %v9063, 16
    %v9236 = vor.u32 %v9233, %v9234
    %v9238 = vshrl.u32 %v9064, 16
    %v9240 = vrot.slane %v9238, 7
    %v9241 = vshll.u32 %v9064, 16
    %v9243 = vor.u32 %v9240, %v9241
    %v9245 = vshrl.u32 %v9065, 16
    %v9247 = vrot.slane %v9245, 7
    %v9248 = vshll.u32 %v9065, 16
    %v9250 = vor.u32 %v9247, %v9248
    %v9252 = vshrl.u32 %v9066, 16
    %v9254 = vrot.slane %v9252, 7
    %v9255 = vshll.u32 %v9066, 16
    %v9257 = vor.u32 %v9254, %v9255
    %v9259 = vshrl.u32 %v9067, 16
    %v9261 = vrot.slane %v9259, 7
    %v9262 = vshll.u32 %v9067, 16
    %v9264 = vor.u32 %v9261, %v9262
    %v9266 = vshrl.u32 %v9068, 16
    %v9268 = vrot.slane %v9266, 7
    %v9269 = vshll.u32 %v9068, 16
    %v9271 = vor.u32 %v9268, %v9269
    %v9273 = vshrl.u32 %v9069, 16
    %v9275 = vrot.slane %v9273, 7
    %v9276 = vshll.u32 %v9069, 16
    %v9278 = vor.u32 %v9275, %v9276
    %v9280 = vshrl.u32 %v9070, 16
    %v9282 = vrot.slane %v9280, 7
    %v9283 = vshll.u32 %v9070, 16
    %v9285 = vor.u32 %v9282, %v9283
    %v9287 = vshrl.u32 %v9071, 16
    %v9289 = vrot.slane %v9287, 7
    %v9290 = vshll.u32 %v9071, 16
    %v9292 = vor.u32 %v9289, %v9290
    %v9294 = vshrl.u32 %v9072, 16
    %v9296 = vrot.slane %v9294, 7
    %v9297 = vshll.u32 %v9072, 16
    %v9299 = vor.u32 %v9296, %v9297
    %v9301 = vshrl.u32 %v9073, 16
    %v9303 = vrot.slane %v9301, 7
    %v9304 = vshll.u32 %v9073, 16
    %v9306 = vor.u32 %v9303, %v9304
    %v9308 = vshrl.u32 %v9074, 16
    %v9310 = vrot.slane %v9308, 7
    %v9311 = vshll.u32 %v9074, 16
    %v9313 = vor.u32 %v9310, %v9311
    %v9315 = vshrl.u32 %v9075, 16
    %v9317 = vrot.slane %v9315, 7
    %v9318 = vshll.u32 %v9075, 16
    %v9320 = vor.u32 %v9317, %v9318
    %v9322 = vshrl.u32 %v9076, 16
    %v9324 = vrot.slane %v9322, 7
    %v9325 = vshll.u32 %v9076, 16
    %v9327 = vor.u32 %v9324, %v9325
    %v9329 = vshrl.u32 %v9077, 16
    %v9331 = vrot.slane %v9329, 7
    %v9332 = vshll.u32 %v9077, 16
    %v9334 = vor.u32 %v9331, %v9332
    %v9367 = vrot.slane %v9062, 7
    %v9368 = vrot.slane %v9063, 7
    %v9369 = vrot.slane %v9064, 7
    %v9370 = vrot.slane %v9065, 7
    %v9371 = vrot.slane %v9066, 7
    %v9372 = vrot.slane %v9067, 7
    %v9373 = vrot.slane %v9068, 7
    %v9374 = vrot.slane %v9069, 7
    %v9375 = vrot.slane %v9070, 7
    %v9376 = vrot.slane %v9071, 7
    %v9377 = vrot.slane %v9072, 7
    %v9378 = vrot.slane %v9073, 7
    %v9379 = vrot.slane %v9074, 7
    %v9380 = vrot.slane %v9075, 7
    %v9381 = vrot.slane %v9076, 7
    %v9382 = vrot.slane %v9077, 7
    %v9399 = vsel %vm524, %v9062, %v9229
    %v9400 = vsel %vm524, %v9063, %v9236
    %v9401 = vsel %vm524, %v9064, %v9243
    %v9402 = vsel %vm524, %v9065, %v9250
    %v9403 = vsel %vm524, %v9066, %v9257
    %v9404 = vsel %vm524, %v9067, %v9264
    %v9405 = vsel %vm524, %v9068, %v9271
    %v9406 = vsel %vm524, %v9069, %v9278
    %v9407 = vsel %vm524, %v9070, %v9285
    %v9408 = vsel %vm524, %v9071, %v9292
    %v9409 = vsel %vm524, %v9072, %v9299
    %v9410 = vsel %vm524, %v9073, %v9306
    %v9411 = vsel %vm524, %v9074, %v9313
    %v9412 = vsel %vm524, %v9075, %v9320
    %v9413 = vsel %vm524, %v9076, %v9327
    %v9414 = vsel %vm524, %v9077, %v9334
    %v9415 = vsel %vm7870, %v9399, %v9367
    %v9416 = vsel %vm7870, %v9400, %v9368
    %v9417 = vsel %vm7870, %v9401, %v9369
    %v9418 = vsel %vm7870, %v9402, %v9370
    %v9419 = vsel %vm7870, %v9403, %v9371
    %v9420 = vsel %vm7870, %v9404, %v9372
    %v9421 = vsel %vm7870, %v9405, %v9373
    %v9422 = vsel %vm7870, %v9406, %v9374
    %v9423 = vsel %vm7870, %v9407, %v9375
    %v9424 = vsel %vm7870, %v9408, %v9376
    %v9425 = vsel %vm7870, %v9409, %v9377
    %v9426 = vsel %vm7870, %v9410, %v9378
    %v9427 = vsel %vm7870, %v9411, %v9379
    %v9428 = vsel %vm7870, %v9412, %v9380
    %v9429 = vsel %vm7870, %v9413, %v9381
    %v9430 = vsel %vm7870, %v9414, %v9382
    %v9445 = vunpack.c.l.b16 %v9415
    %v9446 = vunpack.c.h.b16 %v9415
    %v9447 = vunpack.c.l.b16 %v9416
    %v9448 = vunpack.c.h.b16 %v9416
    %v9449 = vunpack.c.l.b16 %v9417
    %v9450 = vunpack.c.h.b16 %v9417
    %v9451 = vunpack.c.l.b16 %v9418
    %v9452 = vunpack.c.h.b16 %v9418
    %v9453 = vunpack.c.l.b16 %v9419
    %v9454 = vunpack.c.h.b16 %v9419
    %v9455 = vunpack.c.l.b16 %v9420
    %v9456 = vunpack.c.h.b16 %v9420
    %v9457 = vunpack.c.l.b16 %v9421
    %v9458 = vunpack.c.h.b16 %v9421
    %v9459 = vunpack.c.l.b16 %v9423
    %v9460 = vunpack.c.h.b16 %v9423
    %v9461 = vunpack.c.l.b16 %v9424
    %v9462 = vunpack.c.h.b16 %v9424
    %v9463 = vunpack.c.l.b16 %v9425
    %v9464 = vunpack.c.h.b16 %v9425
    %v9465 = vunpack.c.l.b16 %v9426
    %v9466 = vunpack.c.h.b16 %v9426
    %v9467 = vunpack.c.l.b16 %v9427
    %v9468 = vunpack.c.h.b16 %v9427
    %v9469 = vunpack.c.l.b16 %v9428
    %v9470 = vunpack.c.h.b16 %v9428
    %v9471 = vunpack.c.l.b16 %v9429
    %v9472 = vunpack.c.h.b16 %v9429
    %v9473 = vpack.c.b16 %v9445, %v9445
    %v9474 = vpack.c.b16 %v9446, %v9446
    %v9475 = vpack.c.b16 %v9447, %v9447
    %v9476 = vpack.c.b16 %v9448, %v9448
    %v9477 = vpack.c.b16 %v9449, %v9449
    %v9478 = vpack.c.b16 %v9450, %v9450
    %v9479 = vpack.c.b16 %v9451, %v9451
    %v9480 = vpack.c.b16 %v9452, %v9452
    %v9481 = vpack.c.b16 %v9453, %v9453
    %v9482 = vpack.c.b16 %v9454, %v9454
    %v9483 = vpack.c.b16 %v9455, %v9455
    %v9484 = vpack.c.b16 %v9456, %v9456
    %v9485 = vpack.c.b16 %v9457, %v9457
    %v9486 = vpack.c.b16 %v9458, %v9458
    %v9487 = vpack.c.b16 %v9459, %v9459
    %v9488 = vpack.c.b16 %v9460, %v9460
    %v9489 = vpack.c.b16 %v9461, %v9461
    %v9490 = vpack.c.b16 %v9462, %v9462
    %v9491 = vpack.c.b16 %v9463, %v9463
    %v9492 = vpack.c.b16 %v9464, %v9464
    %v9493 = vpack.c.b16 %v9465, %v9465
    %v9494 = vpack.c.b16 %v9466, %v9466
    %v9495 = vpack.c.b16 %v9467, %v9467
    %v9496 = vpack.c.b16 %v9468, %v9468
    %v9497 = vpack.c.b16 %v9469, %v9469
    %v9498 = vpack.c.b16 %v9470, %v9470
    %v9499 = vpack.c.b16 %v9471, %v9471
    %v9500 = vpack.c.b16 %v9472, %v9472
    %v9502 = vshrl.u32 %v9473, 16
    %v9504 = vrot.slane %v9502, 4
    %v9505 = vshll.u32 %v9473, 16
    %v9507 = vrot.slane %v9505, 5
    %v9508 = vor.u32 %v9504, %v9507
    %v9509 = vrot.slane %v9508, 4
    %v9511 = vshll.u32 %v9474, 16
    %v9513 = vrot.slane %v9511, 5
    %v9514 = vsel %vm7959, %v9509, %v9513
    %v9516 = vshrl.u32 %v9475, 16
    %v9518 = vrot.slane %v9516, 4
    %v9519 = vshll.u32 %v9475, 16
    %v9521 = vrot.slane %v9519, 5
    %v9522 = vor.u32 %v9518, %v9521
    %v9523 = vrot.slane %v9522, 4
    %v9525 = vshll.u32 %v9476, 16
    %v9527 = vrot.slane %v9525, 5
    %v9528 = vsel %vm7959, %v9523, %v9527
    %v9530 = vshrl.u32 %v9477, 16
    %v9532 = vrot.slane %v9530, 4
    %v9533 = vshll.u32 %v9477, 16
    %v9535 = vrot.slane %v9533, 5
    %v9536 = vor.u32 %v9532, %v9535
    %v9537 = vrot.slane %v9536, 4
    %v9539 = vshll.u32 %v9478, 16
    %v9541 = vrot.slane %v9539, 5
    %v9542 = vsel %vm7959, %v9537, %v9541
    %v9544 = vshrl.u32 %v9479, 16
    %v9546 = vrot.slane %v9544, 4
    %v9547 = vshll.u32 %v9479, 16
    %v9549 = vrot.slane %v9547, 5
    %v9550 = vor.u32 %v9546, %v9549
    %v9551 = vrot.slane %v9550, 4
    %v9553 = vshll.u32 %v9480, 16
    %v9555 = vrot.slane %v9553, 5
    %v9556 = vsel %vm7959, %v9551, %v9555
    %v9558 = vshrl.u32 %v9481, 16
    %v9560 = vrot.slane %v9558, 4
    %v9561 = vshll.u32 %v9481, 16
    %v9563 = vrot.slane %v9561, 5
    %v9564 = vor.u32 %v9560, %v9563
    %v9565 = vrot.slane %v9564, 4
    %v9567 = vshll.u32 %v9482, 16
    %v9569 = vrot.slane %v9567, 5
    %v9570 = vsel %vm7959, %v9565, %v9569
    %v9572 = vshrl.u32 %v9483, 16
    %v9574 = vrot.slane %v9572, 4
    %v9575 = vshll.u32 %v9483, 16
    %v9577 = vrot.slane %v9575, 5
    %v9578 = vor.u32 %v9574, %v9577
    %v9579 = vrot.slane %v9578, 4
    %v9581 = vshll.u32 %v9484, 16
    %v9583 = vrot.slane %v9581, 5
    %v9584 = vsel %vm7959, %v9579, %v9583
    %v9586 = vshrl.u32 %v9485, 16
    %v9588 = vrot.slane %v9586, 4
    %v9589 = vshll.u32 %v9485, 16
    %v9591 = vrot.slane %v9589, 5
    %v9592 = vor.u32 %v9588, %v9591
    %v9593 = vrot.slane %v9592, 4
    %v9595 = vshll.u32 %v9486, 16
    %v9597 = vrot.slane %v9595, 5
    %v9598 = vsel %vm7959, %v9593, %v9597
    %v9600 = vshrl.u32 %v9487, 16
    %v9602 = vrot.slane %v9600, 4
    %v9603 = vshll.u32 %v9487, 16
    %v9605 = vrot.slane %v9603, 5
    %v9606 = vor.u32 %v9602, %v9605
    %v9607 = vrot.slane %v9606, 4
    %v9609 = vshll.u32 %v9488, 16
    %v9611 = vrot.slane %v9609, 5
    %v9612 = vsel %vm7959, %v9607, %v9611
    %v9614 = vshrl.u32 %v9489, 16
    %v9616 = vrot.slane %v9614, 4
    %v9617 = vshll.u32 %v9489, 16
    %v9619 = vrot.slane %v9617, 5
    %v9620 = vor.u32 %v9616, %v9619
    %v9621 = vrot.slane %v9620, 4
    %v9623 = vshll.u32 %v9490, 16
    %v9625 = vrot.slane %v9623, 5
    %v9626 = vsel %vm7959, %v9621, %v9625
    %v9628 = vshrl.u32 %v9491, 16
    %v9630 = vrot.slane %v9628, 4
    %v9631 = vshll.u32 %v9491, 16
    %v9633 = vrot.slane %v9631, 5
    %v9634 = vor.u32 %v9630, %v9633
    %v9635 = vrot.slane %v9634, 4
    %v9637 = vshll.u32 %v9492, 16
    %v9639 = vrot.slane %v9637, 5
    %v9640 = vsel %vm7959, %v9635, %v9639
    %v9642 = vshrl.u32 %v9493, 16
    %v9644 = vrot.slane %v9642, 4
    %v9645 = vshll.u32 %v9493, 16
    %v9647 = vrot.slane %v9645, 5
    %v9648 = vor.u32 %v9644, %v9647
    %v9649 = vrot.slane %v9648, 4
    %v9651 = vshll.u32 %v9494, 16
    %v9653 = vrot.slane %v9651, 5
    %v9654 = vsel %vm7959, %v9649, %v9653
    %v9656 = vshrl.u32 %v9495, 16
    %v9658 = vrot.slane %v9656, 4
    %v9659 = vshll.u32 %v9495, 16
    %v9661 = vrot.slane %v9659, 5
    %v9662 = vor.u32 %v9658, %v9661
    %v9663 = vrot.slane %v9662, 4
    %v9665 = vshll.u32 %v9496, 16
    %v9667 = vrot.slane %v9665, 5
    %v9668 = vsel %vm7959, %v9663, %v9667
    %v9670 = vshrl.u32 %v9497, 16
    %v9672 = vrot.slane %v9670, 4
    %v9673 = vshll.u32 %v9497, 16
    %v9675 = vrot.slane %v9673, 5
    %v9676 = vor.u32 %v9672, %v9675
    %v9677 = vrot.slane %v9676, 4
    %v9679 = vshll.u32 %v9498, 16
    %v9681 = vrot.slane %v9679, 5
    %v9682 = vsel %vm7959, %v9677, %v9681
    %v9684 = vshrl.u32 %v9499, 16
    %v9686 = vrot.slane %v9684, 4
    %v9687 = vshll.u32 %v9499, 16
    %v9689 = vrot.slane %v9687, 5
    %v9690 = vor.u32 %v9686, %v9689
    %v9691 = vrot.slane %v9690, 4
    %v9693 = vshll.u32 %v9500, 16
    %v9695 = vrot.slane %v9693, 5
    %v9696 = vsel %vm7959, %v9691, %v9695
    %v9697 = vrot.slane %v9473, 5
    %v9698 = vrot.slane %v9697, 4
    %v9699 = vrot.slane %v9474, 5
    %v9700 = vsel %vm8158, %v9698, %v9699
    %v9701 = vrot.slane %v9475, 5
    %v9702 = vrot.slane %v9701, 4
    %v9703 = vrot.slane %v9476, 5
    %v9704 = vsel %vm8158, %v9702, %v9703
    %v9705 = vrot.slane %v9477, 5
    %v9706 = vrot.slane %v9705, 4
    %v9707 = vrot.slane %v9478, 5
    %v9708 = vsel %vm8158, %v9706, %v9707
    %v9709 = vrot.slane %v9479, 5
    %v9710 = vrot.slane %v9709, 4
    %v9711 = vrot.slane %v9480, 5
    %v9712 = vsel %vm8158, %v9710, %v9711
    %v9713 = vrot.slane %v9481, 5
    %v9714 = vrot.slane %v9713, 4
    %v9715 = vrot.slane %v9482, 5
    %v9716 = vsel %vm8158, %v9714, %v9715
    %v9717 = vrot.slane %v9483, 5
    %v9718 = vrot.slane %v9717, 4
    %v9719 = vrot.slane %v9484, 5
    %v9720 = vsel %vm8158, %v9718, %v9719
    %v9721 = vrot.slane %v9485, 5
    %v9722 = vrot.slane %v9721, 4
    %v9723 = vrot.slane %v9486, 5
    %v9724 = vsel %vm8158, %v9722, %v9723
    %v9725 = vrot.slane %v9487, 5
    %v9726 = vrot.slane %v9725, 4
    %v9727 = vrot.slane %v9488, 5
    %v9728 = vsel %vm8158, %v9726, %v9727
    %v9729 = vrot.slane %v9489, 5
    %v9730 = vrot.slane %v9729, 4
    %v9731 = vrot.slane %v9490, 5
    %v9732 = vsel %vm8158, %v9730, %v9731
    %v9733 = vrot.slane %v9491, 5
    %v9734 = vrot.slane %v9733, 4
    %v9735 = vrot.slane %v9492, 5
    %v9736 = vsel %vm8158, %v9734, %v9735
    %v9737 = vrot.slane %v9493, 5
    %v9738 = vrot.slane %v9737, 4
    %v9739 = vrot.slane %v9494, 5
    %v9740 = vsel %vm8158, %v9738, %v9739
    %v9741 = vrot.slane %v9495, 5
    %v9742 = vrot.slane %v9741, 4
    %v9743 = vrot.slane %v9496, 5
    %v9744 = vsel %vm8158, %v9742, %v9743
    %v9745 = vrot.slane %v9497, 5
    %v9746 = vrot.slane %v9745, 4
    %v9747 = vrot.slane %v9498, 5
    %v9748 = vsel %vm8158, %v9746, %v9747
    %v9749 = vrot.slane %v9499, 5
    %v9750 = vrot.slane %v9749, 4
    %v9751 = vrot.slane %v9500, 5
    %v9752 = vsel %vm8158, %v9750, %v9751
    %v9753 = vpack.c.b16 %v9449, %v9447
    %v9754 = vpack.c.b16 %v9453, %v9451
    %v9755 = vpack.c.b16 %v9457, %v9455
    %v9756 = vpack.c.b16 %v9463, %v9461
    %v9757 = vpack.c.b16 %v9467, %v9465
    %v9758 = vpack.c.b16 %v9471, %v9469
    %v9767 = vunpack.c.l.b16 %v9514
    %v9768 = vunpack.c.l.b16 %v9528
    %v9769 = vunpack.c.l.b16 %v9542
    %v9770 = vunpack.c.l.b16 %v9556
    %v9771 = vunpack.c.l.b16 %v9570
    %v9772 = vunpack.c.l.b16 %v9584
    %v9773 = vunpack.c.l.b16 %v9598
    %v9774 = vunpack.c.l.b16 %v9612
    %v9775 = vunpack.c.l.b16 %v9626
    %v9776 = vunpack.c.l.b16 %v9640
    %v9777 = vunpack.c.l.b16 %v9654
    %v9778 = vunpack.c.l.b16 %v9668
    %v9779 = vunpack.c.l.b16 %v9682
    %v9780 = vunpack.c.l.b16 %v9696
    %v9781 = vpack.c.b16 %v9767, %v9767
    %v9782 = vpack.c.b16 %v9769, %v9768
    %v9783 = vpack.c.b16 %v9771, %v9770
    %v9784 = vpack.c.b16 %v9773, %v9772
    %v9785 = vpack.c.b16 %v9774, %v9774
    %v9786 = vpack.c.b16 %v9776, %v9775
    %v9787 = vpack.c.b16 %v9778, %v9777
    %v9788 = vpack.c.b16 %v9780, %v9779
    %v9797 = vunpack.c.l.b16 %v9700
    %v9798 = vunpack.c.l.b16 %v9704
    %v9799 = vunpack.c.l.b16 %v9708
    %v9800 = vunpack.c.l.b16 %v9712
    %v9801 = vunpack.c.l.b16 %v9716
    %v9802 = vunpack.c.l.b16 %v9720
    %v9803 = vunpack.c.l.b16 %v9724
    %v9804 = vunpack.c.l.b16 %v9728
    %v9805 = vunpack.c.l.b16 %v9732
    %v9806 = vunpack.c.l.b16 %v9736
    %v9807 = vunpack.c.l.b16 %v9740
    %v9808 = vunpack.c.l.b16 %v9744
    %v9809 = vunpack.c.l.b16 %v9748
    %v9810 = vunpack.c.l.b16 %v9752
    %v9811 = vpack.c.b16 %v9797, %v9797
    %v9812 = vpack.c.b16 %v9799, %v9798
    %v9813 = vpack.c.b16 %v9801, %v9800
    %v9814 = vpack.c.b16 %v9803, %v9802
    %v9815 = vpack.c.b16 %v9804, %v9804
    %v9816 = vpack.c.b16 %v9806, %v9805
    %v9817 = vpack.c.b16 %v9808, %v9807
    %v9818 = vpack.c.b16 %v9810, %v9809
    %v9829 = vunpack.c.l.b16 %v9422
    %v9830 = vunpack.c.h.b16 %v9422
    %v9831 = vunpack.c.l.b16 %v9430
    %v9832 = vunpack.c.h.b16 %v9430
    %v9833 = vpack.c.b16 %v9829, %v9829
    %v9834 = vpack.c.b16 %v9830, %v9830
    %v9835 = vpack.c.b16 %v9831, %v9831
    %v9836 = vpack.c.b16 %v9832, %v9832
    %v9838 = vshrl.u32 %v9833, 16
    %v9840 = vrot.slane %v9838, 4
    %v9841 = vshll.u32 %v9833, 16
    %v9843 = vrot.slane %v9841, 5
    %v9844 = vor.u32 %v9840, %v9843
    %v9845 = vrot.slane %v9844, 4
    %v9847 = vshll.u32 %v9834, 16
    %v9849 = vrot.slane %v9847, 5
    %v9850 = vsel %vm7959, %v9845, %v9849
    %v9852 = vshrl.u32 %v9835, 16
    %v9854 = vrot.slane %v9852, 4
    %v9855 = vshll.u32 %v9835, 16
    %v9857 = vrot.slane %v9855, 5
    %v9858 = vor.u32 %v9854, %v9857
    %v9859 = vrot.slane %v9858, 4
    %v9861 = vshll.u32 %v9836, 16
    %v9863 = vrot.slane %v9861, 5
    %v9864 = vsel %vm7959, %v9859, %v9863
    %v9865 = vrot.slane %v9833, 5
    %v9866 = vrot.slane %v9865, 4
    %v9867 = vrot.slane %v9834, 5
    %v9868 = vsel %vm8158, %v9866, %v9867
    %v9869 = vrot.slane %v9835, 5
    %v9870 = vrot.slane %v9869, 4
    %v9871 = vrot.slane %v9836, 5
    %v9872 = vsel %vm8158, %v9870, %v9871
    %v9873 = vpack.c.b16 %v9447, %v9445
    %v9874 = vpack.c.b16 %v9451, %v9449
    %v9875 = vpack.c.b16 %v9455, %v9453
    %v9876 = vpack.c.b16 %v9829, %v9457
    %v9877 = vpack.c.b16 %v9461, %v9459
    %v9878 = vpack.c.b16 %v9465, %v9463
    %v9879 = vpack.c.b16 %v9469, %v9467
    %v9880 = vpack.c.b16 %v9831, %v9471
    %v9889 = vunpack.c.l.b16 %v9850
    %v9890 = vunpack.c.l.b16 %v9864
    %v9891 = vpack.c.b16 %v9768, %v9767
    %v9892 = vpack.c.b16 %v9770, %v9769
    %v9893 = vpack.c.b16 %v9772, %v9771
    %v9894 = vpack.c.b16 %v9889, %v9773
    %v9895 = vpack.c.b16 %v9775, %v9774
    %v9896 = vpack.c.b16 %v9777, %v9776
    %v9897 = vpack.c.b16 %v9779, %v9778
    %v9898 = vpack.c.b16 %v9890, %v9780
    %v9907 = vunpack.c.l.b16 %v9868
    %v9908 = vunpack.c.l.b16 %v9872
    %v9909 = vpack.c.b16 %v9798, %v9797
    %v9910 = vpack.c.b16 %v9800, %v9799
    %v9911 = vpack.c.b16 %v9802, %v9801
    %v9912 = vpack.c.b16 %v9907, %v9803
    %v9913 = vpack.c.b16 %v9805, %v9804
    %v9914 = vpack.c.b16 %v9807, %v9806
    %v9915 = vpack.c.b16 %v9809, %v9808
    %v9916 = vpack.c.b16 %v9908, %v9810
    %v9973 = vunpack.c.l.b16 %v9126
    %v9974 = vunpack.c.l.b16 %v9127
    %v9975 = vunpack.c.l.b16 %v9128
    %v9976 = vunpack.c.l.b16 %v9129
    %v9977 = vunpack.c.l.b16 %v9130
    %v9978 = vunpack.c.l.b16 %v9131
    %v9979 = vunpack.c.l.b16 %v9132
    %v9980 = vunpack.c.l.b16 %v9133
    %v9981 = vunpack.c.l.b16 %v9134
    %v9982 = vunpack.c.l.b16 %v9135
    %v9983 = vunpack.c.l.b16 %v9136
    %v9984 = vunpack.c.l.b16 %v9137
    %v9985 = vunpack.c.l.b16 %v9138
    %v9986 = vunpack.c.l.b16 %v9139
    %v9987 = vunpack.c.l.b16 %v9140
    %v9988 = vunpack.c.l.b16 %v9141
    %v9989 = vunpack.c.l.b16 %v9142
    %v9990 = vunpack.c.l.b16 %v9143
    %v9991 = vunpack.c.l.b16 %v9144
    %v9992 = vunpack.c.l.b16 %v9145
    %v9993 = vunpack.c.l.b16 %v9146
    %v9994 = vunpack.c.l.b16 %v9147
    %v9995 = vunpack.c.l.b16 %v9148
    %v9996 = vunpack.c.l.b16 %v9149
    %v9997 = vunpack.c.l.b16 %v9150
    %v9998 = vunpack.c.l.b16 %v9151
    %v9999 = vunpack.c.l.b16 %v9152
    %v10000 = vunpack.c.l.b16 %v9153
    %v10001 = vunpack.c.l.b16 %v9154
    %v10002 = vunpack.c.l.b16 %v9155
    %v10003 = vunpack.c.l.b16 %v9156
    %v10004 = vunpack.c.l.b16 %v9157
    %v10005 = vunpack.c.l.b16 %v9158
    %v10006 = vunpack.c.l.b16 %v9159
    %v10007 = vunpack.c.l.b16 %v9160
    %v10008 = vunpack.c.l.b16 %v9161
    %v10009 = vunpack.c.l.b16 %v9162
    %v10010 = vunpack.c.l.b16 %v9163
    %v10011 = vunpack.c.l.b16 %v9164
    %v10012 = vunpack.c.l.b16 %v9165
    %v10013 = vunpack.c.l.b16 %v9166
    %v10014 = vunpack.c.l.b16 %v9167
    %v10015 = vunpack.c.l.b16 %v9168
    %v10016 = vunpack.c.l.b16 %v9169
    %v10017 = vunpack.c.l.b16 %v9170
    %v10018 = vunpack.c.l.b16 %v9171
    %v10019 = vunpack.c.l.b16 %v9172
    %v10020 = vunpack.c.l.b16 %v9173
    %v10021 = vpack.c.b16 %v9974, %v9973
    %v10022 = vpack.c.b16 %v9976, %v9975
    %v10023 = vpack.c.b16 %v9978, %v9977
    %v10024 = vpack.c.b16 %v9980, %v9979
    %v10025 = vpack.c.b16 %v9982, %v9981
    %v10026 = vpack.c.b16 %v9984, %v9983
    %v10027 = vpack.c.b16 %v9986, %v9985
    %v10028 = vpack.c.b16 %v9988, %v9987
    %v10029 = vpack.c.b16 %v9990, %v9989
    %v10030 = vpack.c.b16 %v9992, %v9991
    %v10031 = vpack.c.b16 %v9994, %v9993
    %v10032 = vpack.c.b16 %v9996, %v9995
    %v10033 = vpack.c.b16 %v9998, %v9997
    %v10034 = vpack.c.b16 %v10000, %v9999
    %v10035 = vpack.c.b16 %v10002, %v10001
    %v10036 = vpack.c.b16 %v10004, %v10003
    %v10037 = vpack.c.b16 %v10006, %v10005
    %v10038 = vpack.c.b16 %v10008, %v10007
    %v10039 = vpack.c.b16 %v10010, %v10009
    %v10040 = vpack.c.b16 %v10012, %v10011
    %v10041 = vpack.c.b16 %v10014, %v10013
    %v10042 = vpack.c.b16 %v10016, %v10015
    %v10043 = vpack.c.b16 %v10018, %v10017
    %v10044 = vpack.c.b16 %v10020, %v10019
    %10069 = vmatprep.subr.bf16.mxu0 0
    %10070 = vmatpush1.bf16.msra.mxu0 %v10021
    %10071 = vmatprep.subr.bf16.mxu0 0
    %10072 = vmatpush1.bf16.msra.mxu0 %v10022
    %10073 = vmatprep.subr.bf16.mxu0 0
    %10074 = vmatpush1.bf16.msra.mxu0 %v10023
    %10075 = vmatprep.subr.bf16.mxu0 0
    %10076 = vmatpush1.bf16.msra.mxu0 %v10024
    %10077 = vmatprep.subr.bf16.mxu0 0
    %10078 = vmatpush1.bf16.msra.mxu0 %v10025
    %10079 = vmatprep.subr.bf16.mxu0 0
    %10080 = vmatpush1.bf16.msra.mxu0 %v10026
    %10081 = vmatprep.subr.bf16.mxu0 0
    %10082 = vmatpush1.bf16.msra.mxu0 %v10027
    %10083 = vmatprep.subr.bf16.mxu0 0
    %10084 = vmatpush1.bf16.msra.mxu0 %v10028
    %10085 = vmatprep.subr.bf16.mxu0 0
    %10086 = vmatpush1.bf16.msra.mxu0 %v10029
    %10087 = vmatprep.subr.bf16.mxu0 0
    %10088 = vmatpush1.bf16.msra.mxu0 %v10030
    %10089 = vmatprep.subr.bf16.mxu0 0
    %10090 = vmatpush1.bf16.msra.mxu0 %v10031
    %10091 = vmatprep.subr.bf16.mxu0 0
    %10092 = vmatpush1.bf16.msra.mxu0 %v10032
    %10093 = vmatprep.subr.bf16.mxu0 0
    %10094 = vmatpush1.bf16.msra.mxu0 %v10033
    %10095 = vmatprep.subr.bf16.mxu0 0
    %10096 = vmatpush1.bf16.msra.mxu0 %v10034
    %10097 = vmatprep.subr.bf16.mxu0 0
    %10098 = vmatpush1.bf16.msra.mxu0 %v10035
    %10099 = vmatprep.subr.bf16.mxu0 0
    %10100 = vmatpush1.bf16.msra.mxu0 %v10036
    %10101 = vmatprep.mubr.bf16.mxu0 %v9891
    %10102 = vmatmul.mubr.bf16.gmra.mrb[0].mxu0 %v9873
    %v10103 = vpop.f32.mrb[0].mxu0
    %v10104 = vadd.f32 0.0, %v10103
    %v10105 = vpop.f32.mrb[0].mxu0
    %v10106 = vpop.f32.mrb[0].mxu0
    %v10107 = vadd.f32 0.0, %v10106
    %v10108 = vpop.f32.mrb[0].mxu0
    %10109 = vmatprep.mubr.bf16.mxu0 %v9892
    %10110 = vmatmul.mubr.bf16.gmra.mrb[0].mxu0 %v9874
    %v10111 = vpop.f32.mrb[0].mxu0
    %v10112 = vadd.f32 0.0, %v10111
    %v10113 = vpop.f32.mrb[0].mxu0
    %v10114 = vpop.f32.mrb[0].mxu0
    %v10115 = vadd.f32 0.0, %v10114
    %v10116 = vpop.f32.mrb[0].mxu0
    %10117 = vmatprep.mubr.bf16.mxu0 %v9893
    %10118 = vmatmul.mubr.bf16.gmra.mrb[0].mxu0 %v9875
    %v10119 = vpop.f32.mrb[0].mxu0
    %v10120 = vadd.f32 0.0, %v10119
    %v10121 = vpop.f32.mrb[0].mxu0
    %v10122 = vpop.f32.mrb[0].mxu0
    %v10123 = vadd.f32 0.0, %v10122
    %v10124 = vpop.f32.mrb[0].mxu0
    %10125 = vmatprep.mubr.bf16.mxu0 %v9894
    %10126 = vmatmul.mubr.bf16.gmra.mrb[0].mxu0 %v9876
    %v10127 = vpop.f32.mrb[0].mxu0
    %v10128 = vadd.f32 0.0, %v10127
    %v10129 = vpop.f32.mrb[0].mxu0
    %v10130 = vpop.f32.mrb[0].mxu0
    %v10131 = vadd.f32 0.0, %v10130
    %v10132 = vpop.f32.mrb[0].mxu0
    %10133 = vmatprep.mubr.bf16.mxu0 %v9895
    %10134 = vmatmul.mubr.bf16.gmra.mrb[0].mxu0 %v9877
    %v10135 = vpop.f32.mrb[0].mxu0
    %v10136 = vadd.f32 0.0, %v10135
    %v10137 = vpop.f32.mrb[0].mxu0
    %v10138 = vpop.f32.mrb[0].mxu0
    %v10139 = vadd.f32 0.0, %v10138
    %v10140 = vpop.f32.mrb[0].mxu0
    %10141 = vmatprep.mubr.bf16.mxu0 %v9896
    %10142 = vmatmul.mubr.bf16.gmra.mrb[0].mxu0 %v9878
    %v10143 = vpop.f32.mrb[0].mxu0
    %v10144 = vadd.f32 0.0, %v10143
    %v10145 = vpop.f32.mrb[0].mxu0
    %v10146 = vpop.f32.mrb[0].mxu0
    %v10147 = vadd.f32 0.0, %v10146
    %v10148 = vpop.f32.mrb[0].mxu0
    %10149 = vmatprep.mubr.bf16.mxu0 %v9897
    %10150 = vmatmul.mubr.bf16.gmra.mrb[0].mxu0 %v9879
    %v10151 = vpop.f32.mrb[0].mxu0
    %v10152 = vadd.f32 0.0, %v10151
    %v10153 = vpop.f32.mrb[0].mxu0
    %v10154 = vpop.f32.mrb[0].mxu0
    %v10155 = vadd.f32 0.0, %v10154
    %v10156 = vpop.f32.mrb[0].mxu0
    %10157 = vmatprep.mubr.bf16.mxu0 %v9898
    %10158 = vmatmul.mubr.bf16.gmra.mrb[0].mxu0 %v9880
    %v10159 = vpop.f32.mrb[0].mxu0
    %v10160 = vadd.f32 0.0, %v10159
    %v10161 = vpop.f32.mrb[0].mxu0
    %v10162 = vpop.f32.mrb[0].mxu0
    %v10163 = vadd.f32 0.0, %v10162
    %v10164 = vpop.f32.mrb[0].mxu0
    %10165 = vdwg.mxu0
    %10166 = vmatprep.subr.bf16.mxu0 0
    %10167 = vmatpush1.bf16.msra.mxu0 %v10037
    %10168 = vmatprep.subr.bf16.mxu0 0
    %10169 = vmatpush1.bf16.msra.mxu0 %v10038
    %10170 = vmatprep.subr.bf16.mxu0 0
    %10171 = vmatpush1.bf16.msra.mxu0 %v10039
    %10172 = vmatprep.subr.bf16.mxu0 0
    %10173 = vmatpush1.bf16.msra.mxu0 %v10040
    %10174 = vmatprep.subr.bf16.mxu0 0
    %10175 = vmatpush1.bf16.msra.mxu0 %v10041
    %10176 = vmatprep.subr.bf16.mxu0 0
    %10177 = vmatpush1.bf16.msra.mxu0 %v10042
    %10178 = vmatprep.subr.bf16.mxu0 0
    %10179 = vmatpush1.bf16.msra.mxu0 %v10043
    %10180 = vmatprep.subr.bf16.mxu0 0
    %10181 = vmatpush1.bf16.msra.mxu0 %v10044
    %10182 = vmatprep.subr.bf16.mxu0 0
    %10183 = vmatpush1.bf16.msra.mxu0 0
    %10184 = vmatprep.subr.bf16.mxu0 0
    %10185 = vmatpush1.bf16.msra.mxu0 0
    %10186 = vmatprep.subr.bf16.mxu0 0
    %10187 = vmatpush1.bf16.msra.mxu0 0
    %10188 = vmatprep.subr.bf16.mxu0 0
    %10189 = vmatpush1.bf16.msra.mxu0 0
    %10190 = vmatprep.subr.bf16.mxu0 0
    %10191 = vmatpush1.bf16.msra.mxu0 0
    %10192 = vmatprep.subr.bf16.mxu0 0
    %10193 = vmatpush1.bf16.msra.mxu0 0
    %10194 = vmatprep.subr.bf16.mxu0 0
    %10195 = vmatpush1.bf16.msra.mxu0 0
    %10196 = vmatprep.subr.bf16.mxu0 0
    %10197 = vmatpush1.bf16.msra.mxu0 0
    %10198 = vmatprep.mubr.bf16.mxu0 0
    %10199 = vmatmul.mubr.bf16.gmra.mrb[0].mxu0 %v9909
    %v10200 = vpop.f32.mrb[0].mxu0
    %v10201 = vadd.f32 %v10104, %v10200
    %v10202 = vpop.f32.mrb[0].mxu0
    %v10203 = vpop.f32.mrb[0].mxu0
    %v10204 = vadd.f32 %v10107, %v10203
    %v10205 = vpop.f32.mrb[0].mxu0
    %10206 = vmatprep.mubr.bf16.mxu0 0
    %10207 = vmatmul.mubr.bf16.gmra.mrb[0].mxu0 %v9910
    %v10208 = vpop.f32.mrb[0].mxu0
    %v10209 = vadd.f32 %v10112, %v10208
    %v10210 = vpop.f32.mrb[0].mxu0
    %v10211 = vpop.f32.mrb[0].mxu0
    %v10212 = vadd.f32 %v10115, %v10211
    %v10213 = vpop.f32.mrb[0].mxu0
    %10214 = vmatprep.mubr.bf16.mxu0 0
    %10215 = vmatmul.mubr.bf16.gmra.mrb[0].mxu0 %v9911
    %v10216 = vpop.f32.mrb[0].mxu0
    %v10217 = vadd.f32 %v10120, %v10216
    %v10218 = vpop.f32.mrb[0].mxu0
    %v10219 = vpop.f32.mrb[0].mxu0
    %v10220 = vadd.f32 %v10123, %v10219
    %v10221 = vpop.f32.mrb[0].mxu0
    %10222 = vmatprep.mubr.bf16.mxu0 0
    %10223 = vmatmul.mubr.bf16.gmra.mrb[0].mxu0 %v9912
    %v10224 = vpop.f32.mrb[0].mxu0
    %v10225 = vadd.f32 %v10128, %v10224
    %v10226 = vpop.f32.mrb[0].mxu0
    %v10227 = vpop.f32.mrb[0].mxu0
    %v10228 = vadd.f32 %v10131, %v10227
    %v10229 = vpop.f32.mrb[0].mxu0
    %10230 = vmatprep.mubr.bf16.mxu0 0
    %10231 = vmatmul.mubr.bf16.gmra.mrb[0].mxu0 %v9913
    %v10232 = vpop.f32.mrb[0].mxu0
    %v10233 = vadd.f32 %v10136, %v10232
    %v10234 = vpop.f32.mrb[0].mxu0
    %v10235 = vpop.f32.mrb[0].mxu0
    %v10236 = vadd.f32 %v10139, %v10235
    %v10237 = vpop.f32.mrb[0].mxu0
    %10238 = vmatprep.mubr.bf16.mxu0 0
    %10239 = vmatmul.mubr.bf16.gmra.mrb[0].mxu0 %v9914
    %v10240 = vpop.f32.mrb[0].mxu0
    %v10241 = vadd.f32 %v10144, %v10240
    %v10242 = vpop.f32.mrb[0].mxu0
    %v10243 = vpop.f32.mrb[0].mxu0
    %v10244 = vadd.f32 %v10147, %v10243
    %v10245 = vpop.f32.mrb[0].mxu0
    %10246 = vmatprep.mubr.bf16.mxu0 0
    %10247 = vmatmul.mubr.bf16.gmra.mrb[0].mxu0 %v9915
    %v10248 = vpop.f32.mrb[0].mxu0
    %v10249 = vadd.f32 %v10152, %v10248
    %v10250 = vpop.f32.mrb[0].mxu0
    %v10251 = vpop.f32.mrb[0].mxu0
    %v10252 = vadd.f32 %v10155, %v10251
    %v10253 = vpop.f32.mrb[0].mxu0
    %10254 = vmatprep.mubr.bf16.mxu0 0
    %10255 = vmatmul.mubr.bf16.gmra.mrb[0].mxu0 %v9916
    %v10256 = vpop.f32.mrb[0].mxu0
    %v10257 = vadd.f32 %v10160, %v10256
    %v10258 = vpop.f32.mrb[0].mxu0
    %v10259 = vpop.f32.mrb[0].mxu0
    %v10260 = vadd.f32 %v10163, %v10259
    %v10261 = vpop.f32.mrb[0].mxu0
    %10262 = vdwg.mxu0
    %v10311 = vunpack.c.l.b16 %v9078
    %v10312 = vunpack.c.l.b16 %v9079
    %v10313 = vunpack.c.l.b16 %v9080
    %v10314 = vunpack.c.l.b16 %v9081
    %v10315 = vunpack.c.l.b16 %v9082
    %v10316 = vunpack.c.l.b16 %v9083
    %v10317 = vunpack.c.l.b16 %v9084
    %v10318 = vunpack.c.l.b16 %v9085
    %v10319 = vunpack.c.l.b16 %v9086
    %v10320 = vunpack.c.l.b16 %v9087
    %v10321 = vunpack.c.l.b16 %v9088
    %v10322 = vunpack.c.l.b16 %v9089
    %v10323 = vunpack.c.l.b16 %v9090
    %v10324 = vunpack.c.l.b16 %v9091
    %v10325 = vunpack.c.l.b16 %v9092
    %v10326 = vunpack.c.l.b16 %v9093
    %v10327 = vunpack.c.l.b16 %v9094
    %v10328 = vunpack.c.l.b16 %v9095
    %v10329 = vunpack.c.l.b16 %v9096
    %v10330 = vunpack.c.l.b16 %v9097
    %v10331 = vunpack.c.l.b16 %v9098
    %v10332 = vunpack.c.l.b16 %v9099
    %v10333 = vunpack.c.l.b16 %v9100
    %v10334 = vunpack.c.l.b16 %v9101
    %v10335 = vunpack.c.l.b16 %v9102
    %v10336 = vunpack.c.l.b16 %v9103
    %v10337 = vunpack.c.l.b16 %v9104
    %v10338 = vunpack.c.l.b16 %v9105
    %v10339 = vunpack.c.l.b16 %v9106
    %v10340 = vunpack.c.l.b16 %v9107
    %v10341 = vunpack.c.l.b16 %v9108
    %v10342 = vunpack.c.l.b16 %v9109
    %v10343 = vunpack.c.l.b16 %v9110
    %v10344 = vunpack.c.l.b16 %v9111
    %v10345 = vunpack.c.l.b16 %v9112
    %v10346 = vunpack.c.l.b16 %v9113
    %v10347 = vunpack.c.l.b16 %v9114
    %v10348 = vunpack.c.l.b16 %v9115
    %v10349 = vunpack.c.l.b16 %v9116
    %v10350 = vunpack.c.l.b16 %v9117
    %v10351 = vunpack.c.l.b16 %v9118
    %v10352 = vunpack.c.l.b16 %v9119
    %v10353 = vunpack.c.l.b16 %v9120
    %v10354 = vunpack.c.l.b16 %v9121
    %v10355 = vunpack.c.l.b16 %v9122
    %v10356 = vunpack.c.l.b16 %v9123
    %v10357 = vunpack.c.l.b16 %v9124
    %v10358 = vunpack.c.l.b16 %v9125
    %v10359 = vpack.c.b16 %v10312, %v10311
    %v10360 = vpack.c.b16 %v10314, %v10313
    %v10361 = vpack.c.b16 %v10316, %v10315
    %v10362 = vpack.c.b16 %v10318, %v10317
    %v10363 = vpack.c.b16 %v10320, %v10319
    %v10364 = vpack.c.b16 %v10322, %v10321
    %v10365 = vpack.c.b16 %v10324, %v10323
    %v10366 = vpack.c.b16 %v10326, %v10325
    %v10367 = vpack.c.b16 %v10328, %v10327
    %v10368 = vpack.c.b16 %v10330, %v10329
    %v10369 = vpack.c.b16 %v10332, %v10331
    %v10370 = vpack.c.b16 %v10334, %v10333
    %v10371 = vpack.c.b16 %v10336, %v10335
    %v10372 = vpack.c.b16 %v10338, %v10337
    %v10373 = vpack.c.b16 %v10340, %v10339
    %v10374 = vpack.c.b16 %v10342, %v10341
    %v10375 = vpack.c.b16 %v10344, %v10343
    %v10376 = vpack.c.b16 %v10346, %v10345
    %v10377 = vpack.c.b16 %v10348, %v10347
    %v10378 = vpack.c.b16 %v10350, %v10349
    %v10379 = vpack.c.b16 %v10352, %v10351
    %v10380 = vpack.c.b16 %v10354, %v10353
    %v10381 = vpack.c.b16 %v10356, %v10355
    %v10382 = vpack.c.b16 %v10358, %v10357
    %10407 = vmatprep.subr.bf16.mxu0 0
    %10408 = vmatpush1.bf16.msra.mxu0 %v10359
    %10409 = vmatprep.subr.bf16.mxu0 0
    %10410 = vmatpush1.bf16.msra.mxu0 %v10360
    %10411 = vmatprep.subr.bf16.mxu0 0
    %10412 = vmatpush1.bf16.msra.mxu0 %v10361
    %10413 = vmatprep.subr.bf16.mxu0 0
    %10414 = vmatpush1.bf16.msra.mxu0 %v10362
    %10415 = vmatprep.subr.bf16.mxu0 0
    %10416 = vmatpush1.bf16.msra.mxu0 %v10363
    %10417 = vmatprep.subr.bf16.mxu0 0
    %10418 = vmatpush1.bf16.msra.mxu0 %v10364
    %10419 = vmatprep.subr.bf16.mxu0 0
    %10420 = vmatpush1.bf16.msra.mxu0 %v10365
    %10421 = vmatprep.subr.bf16.mxu0 0
    %10422 = vmatpush1.bf16.msra.mxu0 %v10366
    %10423 = vmatprep.subr.bf16.mxu0 0
    %10424 = vmatpush1.bf16.msra.mxu0 %v10367
    %10425 = vmatprep.subr.bf16.mxu0 0
    %10426 = vmatpush1.bf16.msra.mxu0 %v10368
    %10427 = vmatprep.subr.bf16.mxu0 0
    %10428 = vmatpush1.bf16.msra.mxu0 %v10369
    %10429 = vmatprep.subr.bf16.mxu0 0
    %10430 = vmatpush1.bf16.msra.mxu0 %v10370
    %10431 = vmatprep.subr.bf16.mxu0 0
    %10432 = vmatpush1.bf16.msra.mxu0 %v10371
    %10433 = vmatprep.subr.bf16.mxu0 0
    %10434 = vmatpush1.bf16.msra.mxu0 %v10372
    %10435 = vmatprep.subr.bf16.mxu0 0
    %10436 = vmatpush1.bf16.msra.mxu0 %v10373
    %10437 = vmatprep.subr.bf16.mxu0 0
    %10438 = vmatpush1.bf16.msra.mxu0 %v10374
    %10439 = vmatprep.mubr.bf16.mxu0 %v9781
    %10440 = vmatmul.mubr.bf16.gmra.mrb[0].mxu0 %v9473
    %v10441 = vpop.f32.mrb[0].mxu0
    %v10442 = vadd.f32 %v10201, %v10441
    %v10443 = vpop.f32.mrb[0].mxu0
    %v10444 = vpop.f32.mrb[0].mxu0
    %v10445 = vadd.f32 %v10204, %v10444
    %v10446 = vpop.f32.mrb[0].mxu0
    %10447 = vmatprep.mubr.bf16.mxu0 %v9782
    %10448 = vmatmul.mubr.bf16.gmra.mrb[0].mxu0 %v9753
    %v10449 = vpop.f32.mrb[0].mxu0
    %v10450 = vadd.f32 %v10209, %v10449
    %v10451 = vpop.f32.mrb[0].mxu0
    %v10452 = vpop.f32.mrb[0].mxu0
    %v10453 = vadd.f32 %v10212, %v10452
    %v10454 = vpop.f32.mrb[0].mxu0
    %10455 = vmatprep.mubr.bf16.mxu0 %v9783
    %10456 = vmatmul.mubr.bf16.gmra.mrb[0].mxu0 %v9754
    %v10457 = vpop.f32.mrb[0].mxu0
    %v10458 = vadd.f32 %v10217, %v10457
    %v10459 = vpop.f32.mrb[0].mxu0
    %v10460 = vpop.f32.mrb[0].mxu0
    %v10461 = vadd.f32 %v10220, %v10460
    %v10462 = vpop.f32.mrb[0].mxu0
    %10463 = vmatprep.mubr.bf16.mxu0 %v9784
    %10464 = vmatmul.mubr.bf16.gmra.mrb[0].mxu0 %v9755
    %v10465 = vpop.f32.mrb[0].mxu0
    %v10466 = vadd.f32 %v10225, %v10465
    %v10467 = vpop.f32.mrb[0].mxu0
    %v10468 = vpop.f32.mrb[0].mxu0
    %v10469 = vadd.f32 %v10228, %v10468
    %v10470 = vpop.f32.mrb[0].mxu0
    %10471 = vmatprep.mubr.bf16.mxu0 %v9785
    %10472 = vmatmul.mubr.bf16.gmra.mrb[0].mxu0 %v9487
    %v10473 = vpop.f32.mrb[0].mxu0
    %v10474 = vadd.f32 %v10233, %v10473
    %v10475 = vpop.f32.mrb[0].mxu0
    %v10476 = vpop.f32.mrb[0].mxu0
    %v10477 = vadd.f32 %v10236, %v10476
    %v10478 = vpop.f32.mrb[0].mxu0
    %10479 = vmatprep.mubr.bf16.mxu0 %v9786
    %10480 = vmatmul.mubr.bf16.gmra.mrb[0].mxu0 %v9756
    %v10481 = vpop.f32.mrb[0].mxu0
    %v10482 = vadd.f32 %v10241, %v10481
    %v10483 = vpop.f32.mrb[0].mxu0
    %v10484 = vpop.f32.mrb[0].mxu0
    %v10485 = vadd.f32 %v10244, %v10484
    %v10486 = vpop.f32.mrb[0].mxu0
    %10487 = vmatprep.mubr.bf16.mxu0 %v9787
    %10488 = vmatmul.mubr.bf16.gmra.mrb[0].mxu0 %v9757
    %v10489 = vpop.f32.mrb[0].mxu0
    %v10490 = vadd.f32 %v10249, %v10489
    %v10491 = vpop.f32.mrb[0].mxu0
    %v10492 = vpop.f32.mrb[0].mxu0
    %v10493 = vadd.f32 %v10252, %v10492
    %v10494 = vpop.f32.mrb[0].mxu0
    %10495 = vmatprep.mubr.bf16.mxu0 %v9788
    %10496 = vmatmul.mubr.bf16.gmra.mrb[0].mxu0 %v9758
    %v10497 = vpop.f32.mrb[0].mxu0
    %v10498 = vadd.f32 %v10257, %v10497
    %v10499 = vpop.f32.mrb[0].mxu0
    %v10500 = vpop.f32.mrb[0].mxu0
    %v10501 = vadd.f32 %v10260, %v10500
    %v10502 = vpop.f32.mrb[0].mxu0
    %10503 = vdwg.mxu0
    %10504 = vmatprep.subr.bf16.mxu0 0
    %10505 = vmatpush1.bf16.msra.mxu0 %v10375
    %10506 = vmatprep.subr.bf16.mxu0 0
    %10507 = vmatpush1.bf16.msra.mxu0 %v10376
    %10508 = vmatprep.subr.bf16.mxu0 0
    %10509 = vmatpush1.bf16.msra.mxu0 %v10377
    %10510 = vmatprep.subr.bf16.mxu0 0
    %10511 = vmatpush1.bf16.msra.mxu0 %v10378
    %10512 = vmatprep.subr.bf16.mxu0 0
    %10513 = vmatpush1.bf16.msra.mxu0 %v10379
    %10514 = vmatprep.subr.bf16.mxu0 0
    %10515 = vmatpush1.bf16.msra.mxu0 %v10380
    %10516 = vmatprep.subr.bf16.mxu0 0
    %10517 = vmatpush1.bf16.msra.mxu0 %v10381
    %10518 = vmatprep.subr.bf16.mxu0 0
    %10519 = vmatpush1.bf16.msra.mxu0 %v10382
    %10520 = vmatprep.subr.bf16.mxu0 0
    %10521 = vmatpush1.bf16.msra.mxu0 0
    %10522 = vmatprep.subr.bf16.mxu0 0
    %10523 = vmatpush1.bf16.msra.mxu0 0
    %10524 = vmatprep.subr.bf16.mxu0 0
    %10525 = vmatpush1.bf16.msra.mxu0 0
    %10526 = vmatprep.subr.bf16.mxu0 0
    %10527 = vmatpush1.bf16.msra.mxu0 0
    %10528 = vmatprep.subr.bf16.mxu0 0
    %10529 = vmatpush1.bf16.msra.mxu0 0
    %10530 = vmatprep.subr.bf16.mxu0 0
    %10531 = vmatpush1.bf16.msra.mxu0 0
    %10532 = vmatprep.subr.bf16.mxu0 0
    %10533 = vmatpush1.bf16.msra.mxu0 0
    %10534 = vmatprep.subr.bf16.mxu0 0
    %10535 = vmatpush1.bf16.msra.mxu0 0
    %10536 = vmatprep.mubr.bf16.mxu0 0
    %10537 = vmatmul.mubr.bf16.gmra.mrb[0].mxu0 %v9811
    %v10538 = vpop.f32.mrb[0].mxu0
    %v10539 = vadd.f32 %v10442, %v10538
    %v10540 = vpop.f32.mrb[0].mxu0
    %v10541 = vpop.f32.mrb[0].mxu0
    %v10542 = vadd.f32 %v10445, %v10541
    %v10543 = vpop.f32.mrb[0].mxu0
    %10544 = vmatprep.mubr.bf16.mxu0 0
    %10545 = vmatmul.mubr.bf16.gmra.mrb[0].mxu0 %v9812
    %v10546 = vpop.f32.mrb[0].mxu0
    %v10547 = vadd.f32 %v10450, %v10546
    %v10548 = vpop.f32.mrb[0].mxu0
    %v10549 = vpop.f32.mrb[0].mxu0
    %v10550 = vadd.f32 %v10453, %v10549
    %v10551 = vpop.f32.mrb[0].mxu0
    %10552 = vmatprep.mubr.bf16.mxu0 0
    %10553 = vmatmul.mubr.bf16.gmra.mrb[0].mxu0 %v9813
    %v10554 = vpop.f32.mrb[0].mxu0
    %v10555 = vadd.f32 %v10458, %v10554
    %v10556 = vpop.f32.mrb[0].mxu0
    %v10557 = vpop.f32.mrb[0].mxu0
    %v10558 = vadd.f32 %v10461, %v10557
    %v10559 = vpop.f32.mrb[0].mxu0
    %10560 = vmatprep.mubr.bf16.mxu0 0
    %10561 = vmatmul.mubr.bf16.gmra.mrb[0].mxu0 %v9814
    %v10562 = vpop.f32.mrb[0].mxu0
    %v10563 = vadd.f32 %v10466, %v10562
    %v10564 = vpop.f32.mrb[0].mxu0
    %v10565 = vpop.f32.mrb[0].mxu0
    %v10566 = vadd.f32 %v10469, %v10565
    %v10567 = vpop.f32.mrb[0].mxu0
    %10568 = vmatprep.mubr.bf16.mxu0 0
    %10569 = vmatmul.mubr.bf16.gmra.mrb[0].mxu0 %v9815
    %v10570 = vpop.f32.mrb[0].mxu0
    %v10571 = vadd.f32 %v10474, %v10570
    %v10572 = vpop.f32.mrb[0].mxu0
    %v10573 = vpop.f32.mrb[0].mxu0
    %v10574 = vadd.f32 %v10477, %v10573
    %v10575 = vpop.f32.mrb[0].mxu0
    %10576 = vmatprep.mubr.bf16.mxu0 0
    %10577 = vmatmul.mubr.bf16.gmra.mrb[0].mxu0 %v9816
    %v10578 = vpop.f32.mrb[0].mxu0
    %v10579 = vadd.f32 %v10482, %v10578
    %v10580 = vpop.f32.mrb[0].mxu0
    %v10581 = vpop.f32.mrb[0].mxu0
    %v10582 = vadd.f32 %v10485, %v10581
    %v10583 = vpop.f32.mrb[0].mxu0
    %10584 = vmatprep.mubr.bf16.mxu0 0
    %10585 = vmatmul.mubr.bf16.gmra.mrb[0].mxu0 %v9817
    %v10586 = vpop.f32.mrb[0].mxu0
    %v10587 = vadd.f32 %v10490, %v10586
    %v10588 = vpop.f32.mrb[0].mxu0
    %v10589 = vpop.f32.mrb[0].mxu0
    %v10590 = vadd.f32 %v10493, %v10589
    %v10591 = vpop.f32.mrb[0].mxu0
    %10592 = vmatprep.mubr.bf16.mxu0 0
    %10593 = vmatmul.mubr.bf16.gmra.mrb[0].mxu0 %v9818
    %v10594 = vpop.f32.mrb[0].mxu0
    %v10595 = vadd.f32 %v10498, %v10594
    %v10596 = vpop.f32.mrb[0].mxu0
    %v10597 = vpop.f32.mrb[0].mxu0
    %v10598 = vadd.f32 %v10501, %v10597
    %v10599 = vpop.f32.mrb[0].mxu0
    %10600 = vdwg.mxu0
    %v10603 = vpack.c.b16 %v9889, %v9889
    %v10604 = vpack.c.b16 %v9890, %v9890
    %v10607 = vpack.c.b16 %v9907, %v9907
    %v10608 = vpack.c.b16 %v9908, %v9908
    %v10659 = vunpack.c.l.b16 %v9174
    %v10660 = vunpack.c.l.b16 %v9175
    %v10661 = vunpack.c.l.b16 %v9176
    %v10662 = vunpack.c.l.b16 %v9177
    %v10663 = vunpack.c.l.b16 %v9178
    %v10664 = vunpack.c.l.b16 %v9179
    %v10665 = vunpack.c.l.b16 %v9180
    %v10666 = vunpack.c.l.b16 %v9181
    %v10667 = vunpack.c.l.b16 %v9182
    %v10668 = vunpack.c.l.b16 %v9183
    %v10669 = vunpack.c.l.b16 %v9184
    %v10670 = vunpack.c.l.b16 %v9185
    %v10671 = vunpack.c.l.b16 %v9186
    %v10672 = vunpack.c.l.b16 %v9187
    %v10673 = vunpack.c.l.b16 %v9188
    %v10674 = vunpack.c.l.b16 %v9189
    %v10675 = vunpack.c.l.b16 %v9190
    %v10676 = vunpack.c.l.b16 %v9191
    %v10677 = vunpack.c.l.b16 %v9192
    %v10678 = vunpack.c.l.b16 %v9193
    %v10679 = vunpack.c.l.b16 %v9194
    %v10680 = vunpack.c.l.b16 %v9195
    %v10681 = vunpack.c.l.b16 %v9196
    %v10682 = vunpack.c.l.b16 %v9197
    %v10683 = vunpack.c.l.b16 %v9198
    %v10684 = vunpack.c.l.b16 %v9199
    %v10685 = vunpack.c.l.b16 %v9200
    %v10686 = vunpack.c.l.b16 %v9201
    %v10687 = vunpack.c.l.b16 %v9202
    %v10688 = vunpack.c.l.b16 %v9203
    %v10689 = vunpack.c.l.b16 %v9204
    %v10690 = vunpack.c.l.b16 %v9205
    %v10691 = vunpack.c.l.b16 %v9206
    %v10692 = vunpack.c.l.b16 %v9207
    %v10693 = vunpack.c.l.b16 %v9208
    %v10694 = vunpack.c.l.b16 %v9209
    %v10695 = vunpack.c.l.b16 %v9210
    %v10696 = vunpack.c.l.b16 %v9211
    %v10697 = vunpack.c.l.b16 %v9212
    %v10698 = vunpack.c.l.b16 %v9213
    %v10699 = vunpack.c.l.b16 %v9214
    %v10700 = vunpack.c.l.b16 %v9215
    %v10701 = vunpack.c.l.b16 %v9216
    %v10702 = vunpack.c.l.b16 %v9217
    %v10703 = vunpack.c.l.b16 %v9218
    %v10704 = vunpack.c.l.b16 %v9219
    %v10705 = vunpack.c.l.b16 %v9220
    %v10706 = vunpack.c.l.b16 %v9221
    %v10707 = vpack.c.b16 %v10660, %v10659
    %v10708 = vpack.c.b16 %v10662, %v10661
    %v10709 = vpack.c.b16 %v10664, %v10663
    %v10710 = vpack.c.b16 %v10666, %v10665
    %v10711 = vpack.c.b16 %v10668, %v10667
    %v10712 = vpack.c.b16 %v10670, %v10669
    %v10713 = vpack.c.b16 %v10672, %v10671
    %v10714 = vpack.c.b16 %v10674, %v10673
    %v10715 = vpack.c.b16 %v10676, %v10675
    %v10716 = vpack.c.b16 %v10678, %v10677
    %v10717 = vpack.c.b16 %v10680, %v10679
    %v10718 = vpack.c.b16 %v10682, %v10681
    %v10719 = vpack.c.b16 %v10684, %v10683
    %v10720 = vpack.c.b16 %v10686, %v10685
    %v10721 = vpack.c.b16 %v10688, %v10687
    %v10722 = vpack.c.b16 %v10690, %v10689
    %v10723 = vpack.c.b16 %v10692, %v10691
    %v10724 = vpack.c.b16 %v10694, %v10693
    %v10725 = vpack.c.b16 %v10696, %v10695
    %v10726 = vpack.c.b16 %v10698, %v10697
    %v10727 = vpack.c.b16 %v10700, %v10699
    %v10728 = vpack.c.b16 %v10702, %v10701
    %v10729 = vpack.c.b16 %v10704, %v10703
    %v10730 = vpack.c.b16 %v10706, %v10705
    %10755 = vmatprep.subr.bf16.mxu0 0
    %10756 = vmatpush1.bf16.msra.mxu0 %v10707
    %10757 = vmatprep.subr.bf16.mxu0 0
    %10758 = vmatpush1.bf16.msra.mxu0 %v10708
    %10759 = vmatprep.subr.bf16.mxu0 0
    %10760 = vmatpush1.bf16.msra.mxu0 %v10709
    %10761 = vmatprep.subr.bf16.mxu0 0
    %10762 = vmatpush1.bf16.msra.mxu0 %v10710
    %10763 = vmatprep.subr.bf16.mxu0 0
    %10764 = vmatpush1.bf16.msra.mxu0 %v10711
    %10765 = vmatprep.subr.bf16.mxu0 0
    %10766 = vmatpush1.bf16.msra.mxu0 %v10712
    %10767 = vmatprep.subr.bf16.mxu0 0
    %10768 = vmatpush1.bf16.msra.mxu0 %v10713
    %10769 = vmatprep.subr.bf16.mxu0 0
    %10770 = vmatpush1.bf16.msra.mxu0 %v10714
    %10771 = vmatprep.subr.bf16.mxu0 0
    %10772 = vmatpush1.bf16.msra.mxu0 %v10715
    %10773 = vmatprep.subr.bf16.mxu0 0
    %10774 = vmatpush1.bf16.msra.mxu0 %v10716
    %10775 = vmatprep.subr.bf16.mxu0 0
    %10776 = vmatpush1.bf16.msra.mxu0 %v10717
    %10777 = vmatprep.subr.bf16.mxu0 0
    %10778 = vmatpush1.bf16.msra.mxu0 %v10718
    %10779 = vmatprep.subr.bf16.mxu0 0
    %10780 = vmatpush1.bf16.msra.mxu0 %v10719
    %10781 = vmatprep.subr.bf16.mxu0 0
    %10782 = vmatpush1.bf16.msra.mxu0 %v10720
    %10783 = vmatprep.subr.bf16.mxu0 0
    %10784 = vmatpush1.bf16.msra.mxu0 %v10721
    %10785 = vmatprep.subr.bf16.mxu0 0
    %10786 = vmatpush1.bf16.msra.mxu0 %v10722
    %10787 = vmatprep.mubr.bf16.mxu0 %v9782
    %10788 = vmatmul.mubr.bf16.gmra.mrb[0].mxu0 %v9753
    %v10789 = vpop.f32.mrb[0].mxu0
    %v10790 = vadd.f32 0.0, %v10789
    %v10791 = vpop.f32.mrb[0].mxu0
    %v10792 = vpop.f32.mrb[0].mxu0
    %v10793 = vadd.f32 0.0, %v10792
    %v10794 = vpop.f32.mrb[0].mxu0
    %10795 = vmatprep.mubr.bf16.mxu0 %v9783
    %10796 = vmatmul.mubr.bf16.gmra.mrb[0].mxu0 %v9754
    %v10797 = vpop.f32.mrb[0].mxu0
    %v10798 = vadd.f32 0.0, %v10797
    %v10799 = vpop.f32.mrb[0].mxu0
    %v10800 = vpop.f32.mrb[0].mxu0
    %v10801 = vadd.f32 0.0, %v10800
    %v10802 = vpop.f32.mrb[0].mxu0
    %10803 = vmatprep.mubr.bf16.mxu0 %v9784
    %10804 = vmatmul.mubr.bf16.gmra.mrb[0].mxu0 %v9755
    %v10805 = vpop.f32.mrb[0].mxu0
    %v10806 = vadd.f32 0.0, %v10805
    %v10807 = vpop.f32.mrb[0].mxu0
    %v10808 = vpop.f32.mrb[0].mxu0
    %v10809 = vadd.f32 0.0, %v10808
    %v10810 = vpop.f32.mrb[0].mxu0
    %10811 = vmatprep.mubr.bf16.mxu0 %v10603
    %10812 = vmatmul.mubr.bf16.gmra.mrb[0].mxu0 %v9833
    %v10813 = vpop.f32.mrb[0].mxu0
    %v10814 = vadd.f32 0.0, %v10813
    %v10815 = vpop.f32.mrb[0].mxu0
    %v10816 = vpop.f32.mrb[0].mxu0
    %v10817 = vadd.f32 0.0, %v10816
    %v10818 = vpop.f32.mrb[0].mxu0
    %10819 = vmatprep.mubr.bf16.mxu0 %v9786
    %10820 = vmatmul.mubr.bf16.gmra.mrb[0].mxu0 %v9756
    %v10821 = vpop.f32.mrb[0].mxu0
    %v10822 = vadd.f32 0.0, %v10821
    %v10823 = vpop.f32.mrb[0].mxu0
    %v10824 = vpop.f32.mrb[0].mxu0
    %v10825 = vadd.f32 0.0, %v10824
    %v10826 = vpop.f32.mrb[0].mxu0
    %10827 = vmatprep.mubr.bf16.mxu0 %v9787
    %10828 = vmatmul.mubr.bf16.gmra.mrb[0].mxu0 %v9757
    %v10829 = vpop.f32.mrb[0].mxu0
    %v10830 = vadd.f32 0.0, %v10829
    %v10831 = vpop.f32.mrb[0].mxu0
    %v10832 = vpop.f32.mrb[0].mxu0
    %v10833 = vadd.f32 0.0, %v10832
    %v10834 = vpop.f32.mrb[0].mxu0
    %10835 = vmatprep.mubr.bf16.mxu0 %v9788
    %10836 = vmatmul.mubr.bf16.gmra.mrb[0].mxu0 %v9758
    %v10837 = vpop.f32.mrb[0].mxu0
    %v10838 = vadd.f32 0.0, %v10837
    %v10839 = vpop.f32.mrb[0].mxu0
    %v10840 = vpop.f32.mrb[0].mxu0
    %v10841 = vadd.f32 0.0, %v10840
    %v10842 = vpop.f32.mrb[0].mxu0
    %10843 = vmatprep.mubr.bf16.mxu0 %v10604
    %10844 = vmatmul.mubr.bf16.gmra.mrb[0].mxu0 %v9835
    %v10845 = vpop.f32.mrb[0].mxu0
    %v10846 = vadd.f32 0.0, %v10845
    %v10847 = vpop.f32.mrb[0].mxu0
    %v10848 = vpop.f32.mrb[0].mxu0
    %v10849 = vadd.f32 0.0, %v10848
    %v10850 = vpop.f32.mrb[0].mxu0
    %10851 = vdwg.mxu0
    %10852 = vmatprep.subr.bf16.mxu0 0
    %10853 = vmatpush1.bf16.msra.mxu0 %v10723
    %10854 = vmatprep.subr.bf16.mxu0 0
    %10855 = vmatpush1.bf16.msra.mxu0 %v10724
    %10856 = vmatprep.subr.bf16.mxu0 0
    %10857 = vmatpush1.bf16.msra.mxu0 %v10725
    %10858 = vmatprep.subr.bf16.mxu0 0
    %10859 = vmatpush1.bf16.msra.mxu0 %v10726
    %10860 = vmatprep.subr.bf16.mxu0 0
    %10861 = vmatpush1.bf16.msra.mxu0 %v10727
    %10862 = vmatprep.subr.bf16.mxu0 0
    %10863 = vmatpush1.bf16.msra.mxu0 %v10728
    %10864 = vmatprep.subr.bf16.mxu0 0
    %10865 = vmatpush1.bf16.msra.mxu0 %v10729
    %10866 = vmatprep.subr.bf16.mxu0 0
    %10867 = vmatpush1.bf16.msra.mxu0 %v10730
    %10868 = vmatprep.subr.bf16.mxu0 0
    %10869 = vmatpush1.bf16.msra.mxu0 0
    %10870 = vmatprep.subr.bf16.mxu0 0
    %10871 = vmatpush1.bf16.msra.mxu0 0
    %10872 = vmatprep.subr.bf16.mxu0 0
    %10873 = vmatpush1.bf16.msra.mxu0 0
    %10874 = vmatprep.subr.bf16.mxu0 0
    %10875 = vmatpush1.bf16.msra.mxu0 0
    %10876 = vmatprep.subr.bf16.mxu0 0
    %10877 = vmatpush1.bf16.msra.mxu0 0
    %10878 = vmatprep.subr.bf16.mxu0 0
    %10879 = vmatpush1.bf16.msra.mxu0 0
    %10880 = vmatprep.subr.bf16.mxu0 0
    %10881 = vmatpush1.bf16.msra.mxu0 0
    %10882 = vmatprep.subr.bf16.mxu0 0
    %10883 = vmatpush1.bf16.msra.mxu0 0
    %10884 = vmatprep.mubr.bf16.mxu0 0
    %10885 = vmatmul.mubr.bf16.gmra.mrb[0].mxu0 %v9812
    %v10886 = vpop.f32.mrb[0].mxu0
    %v10887 = vadd.f32 %v10790, %v10886
    %v10888 = vpop.f32.mrb[0].mxu0
    %v10889 = vpop.f32.mrb[0].mxu0
    %v10890 = vadd.f32 %v10793, %v10889
    %v10891 = vpop.f32.mrb[0].mxu0
    %10892 = vmatprep.mubr.bf16.mxu0 0
    %10893 = vmatmul.mubr.bf16.gmra.mrb[0].mxu0 %v9813
    %v10894 = vpop.f32.mrb[0].mxu0
    %v10895 = vadd.f32 %v10798, %v10894
    %v10896 = vpop.f32.mrb[0].mxu0
    %v10897 = vpop.f32.mrb[0].mxu0
    %v10898 = vadd.f32 %v10801, %v10897
    %v10899 = vpop.f32.mrb[0].mxu0
    %10900 = vmatprep.mubr.bf16.mxu0 0
    %10901 = vmatmul.mubr.bf16.gmra.mrb[0].mxu0 %v9814
    %v10902 = vpop.f32.mrb[0].mxu0
    %v10903 = vadd.f32 %v10806, %v10902
    %v10904 = vpop.f32.mrb[0].mxu0
    %v10905 = vpop.f32.mrb[0].mxu0
    %v10906 = vadd.f32 %v10809, %v10905
    %v10907 = vpop.f32.mrb[0].mxu0
    %10908 = vmatprep.mubr.bf16.mxu0 0
    %10909 = vmatmul.mubr.bf16.gmra.mrb[0].mxu0 %v10607
    %v10910 = vpop.f32.mrb[0].mxu0
    %v10911 = vadd.f32 %v10814, %v10910
    %v10912 = vpop.f32.mrb[0].mxu0
    %v10913 = vpop.f32.mrb[0].mxu0
    %v10914 = vadd.f32 %v10817, %v10913
    %v10915 = vpop.f32.mrb[0].mxu0
    %10916 = vmatprep.mubr.bf16.mxu0 0
    %10917 = vmatmul.mubr.bf16.gmra.mrb[0].mxu0 %v9816
    %v10918 = vpop.f32.mrb[0].mxu0
    %v10919 = vadd.f32 %v10822, %v10918
    %v10920 = vpop.f32.mrb[0].mxu0
    %v10921 = vpop.f32.mrb[0].mxu0
    %v10922 = vadd.f32 %v10825, %v10921
    %v10923 = vpop.f32.mrb[0].mxu0
    %10924 = vmatprep.mubr.bf16.mxu0 0
    %10925 = vmatmul.mubr.bf16.gmra.mrb[0].mxu0 %v9817
    %v10926 = vpop.f32.mrb[0].mxu0
    %v10927 = vadd.f32 %v10830, %v10926
    %v10928 = vpop.f32.mrb[0].mxu0
    %v10929 = vpop.f32.mrb[0].mxu0
    %v10930 = vadd.f32 %v10833, %v10929
    %v10931 = vpop.f32.mrb[0].mxu0
    %10932 = vmatprep.mubr.bf16.mxu0 0
    %10933 = vmatmul.mubr.bf16.gmra.mrb[0].mxu0 %v9818
    %v10934 = vpop.f32.mrb[0].mxu0
    %v10935 = vadd.f32 %v10838, %v10934
    %v10936 = vpop.f32.mrb[0].mxu0
    %v10937 = vpop.f32.mrb[0].mxu0
    %v10938 = vadd.f32 %v10841, %v10937
    %v10939 = vpop.f32.mrb[0].mxu0
    %10940 = vmatprep.mubr.bf16.mxu0 0
    %10941 = vmatmul.mubr.bf16.gmra.mrb[0].mxu0 %v10608
    %v10942 = vpop.f32.mrb[0].mxu0
    %v10943 = vadd.f32 %v10846, %v10942
    %v10944 = vpop.f32.mrb[0].mxu0
    %v10945 = vpop.f32.mrb[0].mxu0
    %v10946 = vadd.f32 %v10849, %v10945
    %v10947 = vpop.f32.mrb[0].mxu0
    %10948 = vdwg.mxu0
    %v10949 = vadd.f32 %v10539, %v10887
    %v10950 = vadd.f32 %v10542, %v10890
    %v10951 = vadd.f32 %v10547, %v10895
    %v10952 = vadd.f32 %v10550, %v10898
    %v10953 = vadd.f32 %v10555, %v10903
    %v10954 = vadd.f32 %v10558, %v10906
    %v10955 = vadd.f32 %v10563, %v10911
    %v10956 = vadd.f32 %v10566, %v10914
    %v10957 = vadd.f32 %v10571, %v10919
    %v10958 = vadd.f32 %v10574, %v10922
    %v10959 = vadd.f32 %v10579, %v10927
    %v10960 = vadd.f32 %v10582, %v10930
    %v10961 = vadd.f32 %v10587, %v10935
    %v10962 = vadd.f32 %v10590, %v10938
    %v10963 = vadd.f32 %v10595, %v10943
    %v10964 = vadd.f32 %v10598, %v10946
    %v10966 = vlaneseq
    %v10967 = vshrl.u32 %v10966, 7
    %v10968 = vsub.s32 0, %v10967
    %v10969 = vrot.slane %v9222, %v10968
    %v10971 = vadd.f32 %v10949, %v10969
    %v10972 = vadd.f32 %v10950, %v10969
    %v10973 = vadd.f32 %v10951, %v10969
    %v10974 = vadd.f32 %v10952, %v10969
    %v10975 = vadd.f32 %v10953, %v10969
    %v10976 = vadd.f32 %v10954, %v10969
    %v10977 = vadd.f32 %v10955, %v10969
    %v10978 = vadd.f32 %v10956, %v10969
    %v10979 = vadd.f32 %v10957, %v10969
    %v10980 = vadd.f32 %v10958, %v10969
    %v10981 = vadd.f32 %v10959, %v10969
    %v10982 = vadd.f32 %v10960, %v10969
    %v10983 = vadd.f32 %v10961, %v10969
    %v10984 = vadd.f32 %v10962, %v10969
    %v10985 = vadd.f32 %v10963, %v10969
    %v10986 = vadd.f32 %v10964, %v10969
    %v10987 = vmax.f32 %v10971, 0.0
    %v10988 = vmax.f32 %v10972, 0.0
    %v10989 = vmax.f32 %v10973, 0.0
    %v10990 = vmax.f32 %v10974, 0.0
    %v10991 = vmax.f32 %v10975, 0.0
    %v10992 = vmax.f32 %v10976, 0.0
    %v10993 = vmax.f32 %v10977, 0.0
    %v10994 = vmax.f32 %v10978, 0.0
    %v10995 = vmax.f32 %v10979, 0.0
    %v10996 = vmax.f32 %v10980, 0.0
    %v10997 = vmax.f32 %v10981, 0.0
    %v10998 = vmax.f32 %v10982, 0.0
    %v10999 = vmax.f32 %v10983, 0.0
    %v11000 = vmax.f32 %v10984, 0.0
    %v11001 = vmax.f32 %v10985, 0.0
    %v11002 = vmax.f32 %v10986, 0.0
    %11003 = vxpose.xlu0.b32.start [1/16] %v10987, 128
    %11004 = vxpose.xlu0.b32.cont [2/16] %v10988, 128
    %11005 = vxpose.xlu0.b32.cont [3/16] %v10989, 128
    %11006 = vxpose.xlu0.b32.cont [4/16] %v10990, 128
    %11007 = vxpose.xlu0.b32.cont [5/16] %v10991, 128
    %11008 = vxpose.xlu0.b32.cont [6/16] %v10992, 128
    %11009 = vxpose.xlu0.b32.cont [7/16] %v10993, 128
    %11010 = vxpose.xlu0.b32.cont [8/16] %v10994, 128
    %11011 = vxpose.xlu0.b32.cont [9/16] 0.0, 128
    %11012 = vxpose.xlu0.b32.cont [10/16] 0.0, 128
    %11013 = vxpose.xlu0.b32.cont [11/16] 0.0, 128
    %11014 = vxpose.xlu0.b32.cont [12/16] 0.0, 128
    %11015 = vxpose.xlu0.b32.cont [13/16] 0.0, 128
    %11016 = vxpose.xlu0.b32.cont [14/16] 0.0, 128
    %11017 = vxpose.xlu0.b32.cont [15/16] 0.0, 128
    %11018 = vxpose.xlu0.b32.end [16/16] 0.0, 128
    %v11019 = vpop.trf.xlu0
    %v11020 = vpop.trf.xlu0
    %v11021 = vpop.trf.xlu0
    %v11022 = vpop.trf.xlu0
    %v11023 = vpop.trf.xlu0
    %v11024 = vpop.trf.xlu0
    %v11025 = vpop.trf.xlu0
    %v11026 = vpop.trf.xlu0
    %v11027 = vpop.trf.xlu0
    %v11028 = vpop.trf.xlu0
    %v11029 = vpop.trf.xlu0
    %v11030 = vpop.trf.xlu0
    %v11031 = vpop.trf.xlu0
    %v11032 = vpop.trf.xlu0
    %v11033 = vpop.trf.xlu0
    %v11034 = vpop.trf.xlu0
    %11035 = vst.msk [vmem:[%s10] sm:$0xff] %vm3699, %v11019
    %11036 = vst.msk [vmem:[%s10 + $0x8] sm:$0xff] %vm3699, %v11020
    %11037 = vst.msk [vmem:[%s10 + $0x10] sm:$0xff] %vm3699, %v11021
    %11038 = vst.msk [vmem:[%s10 + $0x18] sm:$0xff] %vm3699, %v11022
    %11039 = vst.msk [vmem:[%s10 + $0x20] sm:$0xff] %vm3699, %v11023
    %11040 = vst.msk [vmem:[%s10 + $0x28] sm:$0xff] %vm3699, %v11024
    %11041 = vst.msk [vmem:[%s10 + $0x30] sm:$0xff] %vm3699, %v11025
    %11042 = vst.msk [vmem:[%s10 + $0x38] sm:$0xff] %vm3699, %v11026
    %11043 = vst.msk [vmem:[%s10 + $0x40] sm:$0xff] %vm3699, %v11027
    %11044 = vst.msk [vmem:[%s10 + $0x48] sm:$0xff] %vm3699, %v11028
    %11045 = vst.msk [vmem:[%s10 + $0x50] sm:$0xff] %vm3699, %v11029
    %11046 = vst.msk [vmem:[%s10 + $0x58] sm:$0xff] %vm3699, %v11030
    %11047 = vst.msk [vmem:[%s10 + $0x60] sm:$0xff] %vm3699, %v11031
    %11048 = vst.msk [vmem:[%s10 + $0x68] sm:$0xff] %vm3699, %v11032
    %11049 = vst.msk [vmem:[%s10 + $0x70] sm:$0xff] %vm3699, %v11033
    %11050 = vst.msk [vmem:[%s10 + $0x78] sm:$0xff] %vm3699, %v11034
    %11051 = vxpose.xlu0.b32.start [1/16] %v10995, 128
    %11052 = vxpose.xlu0.b32.cont [2/16] %v10996, 128
    %11053 = vxpose.xlu0.b32.cont [3/16] %v10997, 128
    %11054 = vxpose.xlu0.b32.cont [4/16] %v10998, 128
    %11055 = vxpose.xlu0.b32.cont [5/16] %v10999, 128
    %11056 = vxpose.xlu0.b32.cont [6/16] %v11000, 128
    %11057 = vxpose.xlu0.b32.cont [7/16] %v11001, 128
    %11058 = vxpose.xlu0.b32.cont [8/16] %v11002, 128
    %11059 = vxpose.xlu0.b32.cont [9/16] 0.0, 128
    %11060 = vxpose.xlu0.b32.cont [10/16] 0.0, 128
    %11061 = vxpose.xlu0.b32.cont [11/16] 0.0, 128
    %11062 = vxpose.xlu0.b32.cont [12/16] 0.0, 128
    %11063 = vxpose.xlu0.b32.cont [13/16] 0.0, 128
    %11064 = vxpose.xlu0.b32.cont [14/16] 0.0, 128
    %11065 = vxpose.xlu0.b32.cont [15/16] 0.0, 128
    %11066 = vxpose.xlu0.b32.end [16/16] 0.0, 128
    %v11067 = vpop.trf.xlu0
    %v11068 = vpop.trf.xlu0
    %v11069 = vpop.trf.xlu0
    %v11070 = vpop.trf.xlu0
    %v11071 = vpop.trf.xlu0
    %v11072 = vpop.trf.xlu0
    %v11073 = vpop.trf.xlu0
    %v11074 = vpop.trf.xlu0
    %v11075 = vpop.trf.xlu0
    %v11076 = vpop.trf.xlu0
    %v11077 = vpop.trf.xlu0
    %v11078 = vpop.trf.xlu0
    %v11079 = vpop.trf.xlu0
    %v11080 = vpop.trf.xlu0
    %v11081 = vpop.trf.xlu0
    %v11082 = vpop.trf.xlu0
    %s11083 = scalar_lea.vmem %s10, 128
    %11084 = vst.msk [vmem:[%s11083] sm:$0xff] %vm3699, %v11067
    %11085 = vst.msk [vmem:[%s11083 + $0x8] sm:$0xff] %vm3699, %v11068
    %11086 = vst.msk [vmem:[%s11083 + $0x10] sm:$0xff] %vm3699, %v11069
    %11087 = vst.msk [vmem:[%s11083 + $0x18] sm:$0xff] %vm3699, %v11070
    %11088 = vst.msk [vmem:[%s11083 + $0x20] sm:$0xff] %vm3699, %v11071
    %11089 = vst.msk [vmem:[%s11083 + $0x28] sm:$0xff] %vm3699, %v11072
    %11090 = vst.msk [vmem:[%s11083 + $0x30] sm:$0xff] %vm3699, %v11073
    %11091 = vst.msk [vmem:[%s11083 + $0x38] sm:$0xff] %vm3699, %v11074
    %11092 = vst.msk [vmem:[%s11083 + $0x40] sm:$0xff] %vm3699, %v11075
    %11093 = vst.msk [vmem:[%s11083 + $0x48] sm:$0xff] %vm3699, %v11076
    %11094 = vst.msk [vmem:[%s11083 + $0x50] sm:$0xff] %vm3699, %v11077
    %11095 = vst.msk [vmem:[%s11083 + $0x58] sm:$0xff] %vm3699, %v11078
    %11096 = vst.msk [vmem:[%s11083 + $0x60] sm:$0xff] %vm3699, %v11079
    %11097 = vst.msk [vmem:[%s11083 + $0x68] sm:$0xff] %vm3699, %v11080
    %11098 = vst.msk [vmem:[%s11083 + $0x70] sm:$0xff] %vm3699, %v11081
    %11099 = vst.msk [vmem:[%s11083 + $0x78] sm:$0xff] %vm3699, %v11082
    // Predicated region
    $region38: #{tpu_custom_call.1} parent=1 // pred_check
      _
    $region39: #{tpu_custom_call.1} parent=1 // pred_check_branch
      %11101 = sbr.rel (0) target = $region41
    $region40: #{tpu_custom_call.1} parent=1 // pred_region
      %s11103 = ssub.s32 4096, 4096
      %11104 = vsyncadd [#allocation3], %s11103
      %s11105 = sshll.u32 [#allocation2], 4
      %s11106 = int_to_ptr.vmem [resolvable:$true] %s11105
      %11111 = dma.vmem_to_hbm [thread:$0]  %s11106, 4096, %s9, [#allocation3], 256, 256, 16
    $region41: #{tpu_custom_call.1} parent=1 // pred_fallthru
      _
    // Predicated region
    $region42: #{tpu_custom_call.1} parent=1 // pred_check
      _
    $region43: #{tpu_custom_call.1} parent=1 // pred_check_branch
      %11113 = sbr.rel (0) target = $region45
    $region44: #{tpu_custom_call.1} parent=1 // pred_region
      _
    $region45: #{tpu_custom_call.1} parent=1 // pred_fallthru
      _
    // Predicated region
    $region46: #{tpu_custom_call.1} parent=1 // pred_check
      _
    $region47: #{tpu_custom_call.1} parent=1 // pred_check_branch
      %11115 = sbr.rel (0) target = $region49
    $region48: #{tpu_custom_call.1} parent=1 // pred_region
      %11116 = dma.done [#allocation3], 4096
    $region49: #{tpu_custom_call.1} parent=1 // pred_fallthru
      _
    // Predicated region
    $region50: #{tpu_custom_call.1} parent=1 // pred_check
      _
    $region51: #{tpu_custom_call.1} parent=1 // pred_check_branch
      %11118 = sbr.rel (0) target = $region53
    $region52: #{tpu_custom_call.1} parent=1 // pred_region
      _
    $region53: #{tpu_custom_call.1} parent=1 // pred_fallthru
      _
    %11119 = vsyncpa [#allocation3], 1

</llo_original>
